<compile_context>
chip_gen: v7x
topology: tpu7x:2x2x1
jax: 0.10.0
libtpu: 0.0.40
codegen_flags: <defaults>
</compile_context>

<pallas_src>
import functools

import jax
import jax.numpy as jnp
import numpy as np
from jax import lax
from jax.experimental import pallas as pl
from jax.experimental.pallas import tpu as pltpu


def _round_up(n, m):
    return ((n + m - 1) // m) * m


# ----------------------------------------------------------------------------
# Shared in-kernel helpers
# ----------------------------------------------------------------------------
def _zero_scratch_borders(xh_ref, wo):
    """Zero the SAME-padding border (and alignment-pad columns) of the bf16 scratch.

    Only the cells the interior store never touches are written; done every grid step so
    the kernel stays correct under core-parallel grid sharding / uninitialized scratch."""
    Hp, WS, C = xh_ref.shape
    xh_ref[0:1, :, :] = jnp.zeros((1, WS, C), jnp.bfloat16)
    xh_ref[Hp - 1:Hp, :, :] = jnp.zeros((1, WS, C), jnp.bfloat16)
    xh_ref[:, 0:1, :] = jnp.zeros((Hp, 1, C), jnp.bfloat16)
    xh_ref[:, wo + 1:WS, :] = jnp.zeros((Hp, WS - wo - 1, C), jnp.bfloat16)


def _conv3x3_same(xh_ref, w_ref, wm):
    """3x3 SAME conv from the zero-padded bf16 activation scratch.

    xh_ref: (Ho+2, WS, C) bf16; activation sits at rows 1..Ho, cols 1..Wo, zeros elsewhere.
    w_ref : (3, 3C, Cout) bf16 — the 3 W-taps folded into K (fat-K MXU matmuls).
    wm    : patch width per row group, a multiple of 8 (>= Wo).

    Returns an f32 (Ho*wm, Cout) accumulator; columns w >= Wo of each row group are junk
    (finite) and must be masked / dropped by the caller.  Because wm % 8 == 0, the
    (Hp, wm, 3C) -> (Hp*wm, 3C) reshape is layout-preserving and the p*wm row offsets of
    the matmul operand slices are sublane-aligned (no relayout copies of the operand)."""
    Hp, WS, C = xh_ref.shape
    Ho = Hp - 2
    Cout = w_ref.shape[-1]

    xh = xh_ref[...]                                                    # (Hp, WS, C) bf16
    # Three W-tap views (q = 0,1,2), K-concatenated along the lane (channel) axis.
    xcat = jnp.concatenate([xh[:, q:q + wm, :] for q in range(3)], axis=-1)   # (Hp, wm, 3C)
    flat = xcat.reshape(Hp * wm, 3 * C)                                 # layout-preserving

    acc = jnp.zeros((Ho * wm, Cout), jnp.float32)
    for p in range(3):                                                  # 8-aligned offsets
        acc = acc + jnp.dot(flat[p * wm:(p + Ho) * wm, :], w_ref[p],
                            preferred_element_type=jnp.float32)
    return acc


# ----------------------------------------------------------------------------
# Kernel A: depthwise cross-correlation + conv1 (3x3, SAME) + BN partial sums
# ----------------------------------------------------------------------------
def xcorr_conv1_kernel(x_ref, z_ref, w1_ref, b1_ref,
                       res_ref, y1_ref, sum_ref, sq_ref, xh_ref):
    # x_ref: (1, Hx, Wx, C) f32     z_ref: (1, Hz, Wz, C) f32
    # w1_ref: (3, 3C, C) bf16       b1_ref: (1, C) f32
    # res_ref: (1, Ho, Wo, C) f32   y1_ref: (1, Ho, WM, C) bf16 (cols >= Wo junk)
    # sum_ref / sq_ref: (1, 1, C) f32 per-image BatchNorm partial sums
    # xh_ref: (Ho+2, WM+8, C) bf16 scratch (SAME-padded conv input)
    _, Hx, Wx, C = x_ref.shape
    _, Hz, Wz, _ = z_ref.shape
    _, Ho, Wo, _ = res_ref.shape
    WM = y1_ref.shape[2]

    _zero_scratch_borders(xh_ref, Wo)

    # ---- depthwise cross-correlation (f32 VPU accumulation) --------------------
    xv = x_ref[0]                                                 # (Hx, Wx, C), loaded once
    zv = z_ref[0]                                                 # (Hz, Wz, C), loaded once
    x_sh = [xv[:, q:q + Wo, :] for q in range(Wz)]                # hoisted W-shifts
    z_sl = [[zv[p:p + 1, q:q + 1, :] for q in range(Wz)] for p in range(Hz)]

    acc = jnp.zeros((Ho, Wo, C), jnp.float32)
    for q in range(Wz):
        xq = x_sh[q]
        for p in range(Hz):
            acc = acc + xq[p:p + Ho, :, :] * z_sl[p][q]
    res_ref[0] = acc
    # bf16 cast written exactly once into the SAME-padded conv-input scratch.
    xh_ref[1:1 + Ho, 1:1 + Wo, :] = acc.astype(jnp.bfloat16)

    # ---- conv1 (3x3, SAME) as 3 fat-K MXU matmuls -------------------------------
    y1 = _conv3x3_same(xh_ref, w1_ref, WM) + b1_ref[...]          # (Ho*WM, C) f32
    y1_ref[0] = y1.reshape(Ho, WM, C).astype(jnp.bfloat16)

    # ---- per-image BatchNorm partial sums over the valid (w < Wo) positions -----
    col = lax.broadcasted_iota(jnp.int32, (Ho * WM, C), 0) % WM
    y1_valid = jnp.where(col < Wo, y1, 0.0)
    sum_ref[0] = jnp.sum(y1_valid, axis=0, keepdims=True)
    sq_ref[0] = jnp.sum(y1_valid * y1, axis=0, keepdims=True)


# ----------------------------------------------------------------------------
# Kernel B: BatchNorm (pre-fused affine) + ReLU + conv2 (3x3, SAME)
# ----------------------------------------------------------------------------
def bn_relu_conv2_kernel(y1_ref, scale_ref, shift_ref, w2_ref, b2_ref,
                         out_ref, xh_ref, *, wo):
    # y1_ref: (1, Ho, WM, C) bf16   scale/shift: (1, 1, C) f32
    # w2_ref: (3, 3C, CoP) bf16     b2_ref: (1, CoP) f32
    # out_ref: (1, Ho, WM, CoP) f32 (lane-dense; cols >= wo and channels >= 4 are junk)
    # xh_ref: (Ho+2, WM+8, C) bf16 scratch
    _, Ho, WM, C = y1_ref.shape
    CoP = out_ref.shape[-1]

    _zero_scratch_borders(xh_ref, wo)

    # Fused BatchNorm (training-mode batch stats folded into scale/shift) + ReLU;
    # only the valid columns enter the conv scratch, junk columns are dropped here.
    y = jnp.maximum(y1_ref[0] * scale_ref[...] + shift_ref[...], 0.0)   # (Ho, WM, C) f32
    xh_ref[1:1 + Ho, 1:1 + wo, :] = y[:, :wo, :].astype(jnp.bfloat16)

    acc = _conv3x3_same(xh_ref, w2_ref, WM) + b2_ref[...]               # (Ho*WM, CoP) f32
    out_ref[0] = acc.reshape(Ho, WM, CoP)


# ----------------------------------------------------------------------------
# Wrapper (layout transposes, weight repacking, O(C) BN affine between the calls)
# ----------------------------------------------------------------------------
def grader_forward(x_nchw, z_nchw, w1_pt, b1, gamma, beta, w2_pt, b2):
    """x_nchw: (B,C,Hx,Wx), z_nchw: (B,C,Hz,Wz) — PyTorch layouts, conv weights OIHW.
    Returns (shape_pred, res) in NCHW, matching grader.forward."""
    x = jnp.transpose(x_nchw, (0, 2, 3, 1)).astype(jnp.float32)          # NHWC
    z = jnp.transpose(z_nchw, (0, 2, 3, 1)).astype(jnp.float32)
    B, Hx, Wx, C = x.shape
    _, Hz, Wz, _ = z.shape
    Ho, Wo = Hx - Hz + 1, Wx - Wz + 1
    WM = _round_up(Wo, 8)                 # sublane-aligned patch / output width
    WS = WM + 8                           # SAME-padded scratch width (>= WM + 2, mult of 8)
    Hp = Ho + 2
    Co = w2_pt.shape[0]
    CoP = 128                             # lane-dense conv2 output width

    # Weights: OIHW -> (kh, kw, Cin, Cout); fold the 3 W-taps into one K = 3*Cin dim,
    # matching the in-kernel channel concatenation order [q=0 | q=1 | q=2].
    w1_hwio = jnp.transpose(w1_pt, (2, 3, 1, 0)).astype(jnp.float32)      # (3,3,C,C)
    w2_hwio = jnp.transpose(w2_pt, (2, 3, 1, 0)).astype(jnp.float32)      # (3,3,C,Co)
    w2_hwio = jnp.pad(w2_hwio, ((0, 0), (0, 0), (0, 0), (0, CoP - Co)))   # Cout -> 128
    w1_cat = jnp.stack([jnp.concatenate([w1_hwio[p, q] for q in range(3)], axis=0)
                        for p in range(3)], axis=0).astype(jnp.bfloat16)  # (3, 3C, C)
    w2_cat = jnp.stack([jnp.concatenate([w2_hwio[p, q] for q in range(3)], axis=0)
                        for p in range(3)], axis=0).astype(jnp.bfloat16)  # (3, 3C, CoP)
    b1_2d = b1.reshape(1, C).astype(jnp.float32)
    b2_2d = jnp.pad(b2.astype(jnp.float32), (0, CoP - Co)).reshape(1, CoP)

    # Per-step VMEM footprint is ~1.5 MiB at C=128 (<8 MiB at C=384); 16 MiB leaves
    # plenty of headroom (incl. on v7x's 64 MiB/TC VMEM).
    cparams = pltpu.CompilerParams(dimension_semantics=("parallel",),
                                   vmem_limit_bytes=16 * 1024 * 1024)

    # ---- kernel A: xcorr + conv1 + per-image BN partial sums --------------------
    flops_a = 2 * B * Ho * Wo * C * (Hz * Wz) + 2 * B * (Ho * WM) * (3 * C) * C * 3
    bytes_a = 4 * B * (Hx * Wx + Hz * Wz + Ho * Wo) * C \
        + 2 * B * Ho * WM * C + 2 * (9 * C * C) + 12 * B * C
    res, y1p, bn_sum, bn_sq = pl.pallas_call(
        xcorr_conv1_kernel,
        out_shape=(jax.ShapeDtypeStruct((B, Ho, Wo, C), jnp.float32),
                   jax.ShapeDtypeStruct((B, Ho, WM, C), jnp.bfloat16),
                   jax.ShapeDtypeStruct((B, 1, C), jnp.float32),
                   jax.ShapeDtypeStruct((B, 1, C), jnp.float32)),
        grid=(B,),
        in_specs=[
            pl.BlockSpec((1, Hx, Wx, C), lambda b: (b, 0, 0, 0)),
            pl.BlockSpec((1, Hz, Wz, C), lambda b: (b, 0, 0, 0)),
            pl.BlockSpec((3, 3 * C, C), lambda b: (0, 0, 0)),
            pl.BlockSpec((1, C), lambda b: (0, 0)),
        ],
        out_specs=(pl.BlockSpec((1, Ho, Wo, C), lambda b: (b, 0, 0, 0)),
                   pl.BlockSpec((1, Ho, WM, C), lambda b: (b, 0, 0, 0)),
                   pl.BlockSpec((1, 1, C), lambda b: (b, 0, 0)),
                   pl.BlockSpec((1, 1, C), lambda b: (b, 0, 0))),
        scratch_shapes=[pltpu.VMEM((Hp, WS, C), jnp.bfloat16)],
        compiler_params=cparams,
        cost_estimate=pl.CostEstimate(flops=flops_a, transcendentals=0,
                                      bytes_accessed=bytes_a),
    )(x, z, w1_cat, b1_2d)

    # ---- BatchNorm2d training-mode affine from the per-image partial sums -------
    # O(C) work only; no full-tensor re-read of y1.
    cnt = jnp.float32(B * Ho * Wo)
    mean = jnp.sum(bn_sum, axis=0) / cnt                                   # (1, C)
    var = jnp.maximum(jnp.sum(bn_sq, axis=0) / cnt - mean * mean, 0.0)     # biased var
    scale_c = gamma.reshape(1, C).astype(jnp.float32) * lax.rsqrt(var + 1e-5)
    shift_c = beta.reshape(1, C).astype(jnp.float32) - mean * scale_c
    scale = scale_c.reshape(1, 1, C)
    shift = shift_c.reshape(1, 1, C)

    # ---- kernel B: BN + ReLU + conv2, lane-dense padded output ------------------
    flops_b = 2 * B * (Ho * WM) * (3 * C) * CoP * 3
    bytes_b = 2 * B * Ho * WM * C + 4 * B * Ho * WM * CoP + 2 * (9 * C * CoP) + 16 * C
    out = pl.pallas_call(
        functools.partial(bn_relu_conv2_kernel, wo=Wo),
        out_shape=jax.ShapeDtypeStruct((B, Ho, WM, CoP), jnp.float32),
        grid=(B,),
        in_specs=[
            pl.BlockSpec((1, Ho, WM, C), lambda b: (b, 0, 0, 0)),
            pl.BlockSpec((1, 1, C), lambda b: (0, 0, 0)),
            pl.BlockSpec((1, 1, C), lambda b: (0, 0, 0)),
            pl.BlockSpec((3, 3 * C, CoP), lambda b: (0, 0, 0)),
            pl.BlockSpec((1, CoP), lambda b: (0, 0)),
        ],
        out_specs=pl.BlockSpec((1, Ho, WM, CoP), lambda b: (b, 0, 0, 0)),
        scratch_shapes=[pltpu.VMEM((Hp, WS, C), jnp.bfloat16)],
        compiler_params=cparams,
        cost_estimate=pl.CostEstimate(flops=flops_b, transcendentals=0,
                                      bytes_accessed=bytes_b),
    )(y1p, scale, shift, w2_cat, b2_2d)

    # Drop the alignment-pad columns and the lane-pad channels.
    shape_pred = out[:, :, :Wo, :Co]                                       # (B, Ho, Wo, Co)

    # back to PyTorch NCHW
    return (jnp.transpose(shape_pred, (0, 3, 1, 2)),
            jnp.transpose(res, (0, 3, 1, 2)))


# ----------------------------------------------------------------------------
# Pure-JAX reference (for correctness check)
# ----------------------------------------------------------------------------
def ref_forward(x, z, w1_pt, b1, gamma, beta, w2_pt, b2):
    B, C, Hx, Wx = x.shape
    _, _, Hz, Wz = z.shape
    Co = w2_pt.shape[0]
    hp = jax.lax.Precision.HIGHEST
    dn = ("NCHW", "OIHW", "NCHW")

    xv = x.reshape(1, B * C, Hx, Wx)
    kv = z.reshape(B * C, 1, Hz, Wz)
    res = jax.lax.conv_general_dilated(xv, kv, (1, 1), "VALID",
                                       dimension_numbers=dn,
                                       feature_group_count=B * C, precision=hp)
    res = res.reshape(B, C, res.shape[2], res.shape[3])

    y = jax.lax.conv_general_dilated(res, w1_pt, (1, 1), ((1, 1), (1, 1)),
                                     dimension_numbers=dn, precision=hp)
    y = y + b1.reshape(1, C, 1, 1)
    mean = jnp.mean(y, axis=(0, 2, 3), keepdims=True)
    var = jnp.mean((y - mean) ** 2, axis=(0, 2, 3), keepdims=True)
    y = (y - mean) * jax.lax.rsqrt(var + 1e-5)
    y = y * gamma.reshape(1, C, 1, 1) + beta.reshape(1, C, 1, 1)
    y = jnp.maximum(y, 0.0)
    sp = jax.lax.conv_general_dilated(y, w2_pt, (1, 1), ((1, 1), (1, 1)),
                                      dimension_numbers=dn, precision=hp)
    sp = sp + b2.reshape(1, Co, 1, 1)
    return sp, res


if __name__ == "__main__":
    # Small shapes consistent with the module (original uses channels=384; 128 keeps the
    # channel/lane axis a full native lane tile while staying small).
    B, C = 2, 128
    Hx = Wx = 16
    Hz = Wz = 5

    key = jax.random.PRNGKey(0)
    k1, k2, k3, k4 = jax.random.split(key, 4)
    x = jax.random.normal(k1, (B, C, Hx, Wx), jnp.float32)
    z = jax.random.normal(k2, (B, C, Hz, Wz), jnp.float32)

    # Parameter init mirroring the module's __init__:
    # conv weights ~ N(0, 0.01), conv biases = 0; BN gamma=1, beta=0.
    w1_pt = 0.01 * jax.random.normal(k3, (C, C, 3, 3), jnp.float32)
    w2_pt = 0.01 * jax.random.normal(k4, (4, C, 3, 3), jnp.float32)
    b1 = jnp.zeros((C,), jnp.float32)
    b2 = jnp.zeros((4,), jnp.float32)
    gamma = jnp.ones((C,), jnp.float32)
    beta = jnp.zeros((C,), jnp.float32)

    fwd = jax.jit(grader_forward)
    shape_pred, res = fwd(x, z, w1_pt, b1, gamma, beta, w2_pt, b2)
    jax.block_until_ready((shape_pred, res))

    sp_expected, res_expected = ref_forward(x, z, w1_pt, b1, gamma, beta, w2_pt, b2)
    np.testing.assert_allclose(np.asarray(res), np.asarray(res_expected),
                               atol=1e-2, rtol=1e-2)
    np.testing.assert_allclose(np.asarray(shape_pred), np.asarray(sp_expected),
                               atol=2e-2, rtol=2e-2)
    print("KERNEL_OK")
</pallas_src>

<mosaic_0001>
module attributes {stable_mosaic.version = 11 : i64} {
  func.func @xcorr_conv1_kernel(%arg0: i32, %arg1: memref<1x16x16x128xf32, #tpu.memory_space<vmem>>, %arg2: memref<1x5x5x128xf32, #tpu.memory_space<vmem>>, %arg3: memref<3x384x128xbf16, #tpu.memory_space<vmem>>, %arg4: memref<1x128xf32, #tpu.memory_space<vmem>>, %arg5: memref<1x12x12x128xf32, #tpu.memory_space<vmem>>, %arg6: memref<1x12x16x128xbf16, #tpu.memory_space<vmem>>, %arg7: memref<1x1x128xf32, #tpu.memory_space<vmem>>, %arg8: memref<1x1x128xf32, #tpu.memory_space<vmem>>, %arg9: memref<14x24x128xbf16, #tpu.memory_space<vmem>>) attributes {dimension_semantics = [#tpu.dimension_semantics<parallel>], iteration_bounds = array<i64: 2>, scalar_prefetch = 0 : i64, scratch_operands = 1 : i64, tpu.core_type = #tpu.core_type<tc>, window_params = [{transform_indices = @transform_0, window_bounds = array<i64: 1, 16, 16, 128>}, {transform_indices = @transform_1, window_bounds = array<i64: 1, 5, 5, 128>}, {pipeline_mode = #tpu.pipeline_mode<synchronous>, transform_indices = @transform_2, window_bounds = array<i64: 3, 384, 128>}, {pipeline_mode = #tpu.pipeline_mode<synchronous>, transform_indices = @transform_3, window_bounds = array<i64: 1, 128>}, {transform_indices = @transform_4, window_bounds = array<i64: 1, 12, 12, 128>}, {transform_indices = @transform_5, window_bounds = array<i64: 1, 12, 16, 128>}, {transform_indices = @transform_6, window_bounds = array<i64: 1, 1, 128>}, {transform_indices = @transform_7, window_bounds = array<i64: 1, 1, 128>}]} {
    %cst = arith.constant 0.000000e+00 : bf16
    %0 = vector.broadcast %cst : bf16 to vector<1x24x128xbf16>
    %c0 = arith.constant 0 : index
    %c0_0 = arith.constant 0 : index
    %c0_1 = arith.constant 0 : index
    %1 = vector.load %arg9[%c0, %c0_0, %c0_1] : memref<14x24x128xbf16, #tpu.memory_space<vmem>>, vector<1x24x128xbf16>
    tpu.vector_store %arg9[%c0, %c0_0, %c0_1], %0 {strides = array<i32>} : memref<14x24x128xbf16, #tpu.memory_space<vmem>>, vector<1x24x128xbf16>,
    %cst_2 = arith.constant 0.000000e+00 : bf16
    %2 = vector.broadcast %cst_2 : bf16 to vector<1x24x128xbf16>
    %c13 = arith.constant 13 : index
    %c0_3 = arith.constant 0 : index
    %c0_4 = arith.constant 0 : index
    %3 = vector.load %arg9[%c13, %c0_3, %c0_4] : memref<14x24x128xbf16, #tpu.memory_space<vmem>>, vector<1x24x128xbf16>
    tpu.vector_store %arg9[%c13, %c0_3, %c0_4], %2 {strides = array<i32>} : memref<14x24x128xbf16, #tpu.memory_space<vmem>>, vector<1x24x128xbf16>,
    %cst_5 = arith.constant 0.000000e+00 : bf16
    %4 = vector.broadcast %cst_5 : bf16 to vector<14x1x128xbf16>
    %c0_6 = arith.constant 0 : index
    %c0_7 = arith.constant 0 : index
    %c0_8 = arith.constant 0 : index
    %5 = vector.load %arg9[%c0_6, %c0_7, %c0_8] : memref<14x24x128xbf16, #tpu.memory_space<vmem>>, vector<14x1x128xbf16>
    tpu.vector_store %arg9[%c0_6, %c0_7, %c0_8], %4 {strides = array<i32>} : memref<14x24x128xbf16, #tpu.memory_space<vmem>>, vector<14x1x128xbf16>,
    %cst_9 = arith.constant 0.000000e+00 : bf16
    %6 = vector.broadcast %cst_9 : bf16 to vector<14x11x128xbf16>
    %c0_10 = arith.constant 0 : index
    %c13_11 = arith.constant 13 : index
    %c0_12 = arith.constant 0 : index
    %7 = vector.load %arg9[%c0_10, %c13_11, %c0_12] : memref<14x24x128xbf16, #tpu.memory_space<vmem>>, vector<14x11x128xbf16>
    tpu.vector_store %arg9[%c0_10, %c13_11, %c0_12], %6 {strides = array<i32>} : memref<14x24x128xbf16, #tpu.memory_space<vmem>>, vector<14x11x128xbf16>,
    %c0_13 = arith.constant 0 : index
    %c0_14 = arith.constant 0 : index
    %c0_15 = arith.constant 0 : index
    %c0_16 = arith.constant 0 : index
    %8 = vector.load %arg1[%c0_13, %c0_14, %c0_15, %c0_16] : memref<1x16x16x128xf32, #tpu.memory_space<vmem>>, vector<1x16x16x128xf32>
    %9 = vector.shape_cast %8 : vector<1x16x16x128xf32> to vector<16x16x128xf32>
    %c0_17 = arith.constant 0 : index
    %c0_18 = arith.constant 0 : index
    %c0_19 = arith.constant 0 : index
    %c0_20 = arith.constant 0 : index
    %10 = vector.load %arg2[%c0_17, %c0_18, %c0_19, %c0_20] : memref<1x5x5x128xf32, #tpu.memory_space<vmem>>, vector<1x5x5x128xf32>
    %11 = vector.shape_cast %10 : vector<1x5x5x128xf32> to vector<5x5x128xf32>
    %12 = vector.extract_strided_slice %9 {offsets = [0, 0, 0], sizes = [16, 12, 128], strides = [1, 1, 1]} : vector<16x16x128xf32> to vector<16x12x128xf32>
    %13 = vector.extract_strided_slice %9 {offsets = [0, 1, 0], sizes = [16, 12, 128], strides = [1, 1, 1]} : vector<16x16x128xf32> to vector<16x12x128xf32>
    %14 = vector.extract_strided_slice %9 {offsets = [0, 2, 0], sizes = [16, 12, 128], strides = [1, 1, 1]} : vector<16x16x128xf32> to vector<16x12x128xf32>
    %15 = vector.extract_strided_slice %9 {offsets = [0, 3, 0], sizes = [16, 12, 128], strides = [1, 1, 1]} : vector<16x16x128xf32> to vector<16x12x128xf32>
    %16 = vector.extract_strided_slice %9 {offsets = [0, 4, 0], sizes = [16, 12, 128], strides = [1, 1, 1]} : vector<16x16x128xf32> to vector<16x12x128xf32>
    %17 = vector.extract_strided_slice %11 {offsets = [0, 0, 0], sizes = [1, 1, 128], strides = [1, 1, 1]} : vector<5x5x128xf32> to vector<1x1x128xf32>
    %18 = vector.extract_strided_slice %11 {offsets = [0, 1, 0], sizes = [1, 1, 128], strides = [1, 1, 1]} : vector<5x5x128xf32> to vector<1x1x128xf32>
    %19 = vector.extract_strided_slice %11 {offsets = [0, 2, 0], sizes = [1, 1, 128], strides = [1, 1, 1]} : vector<5x5x128xf32> to vector<1x1x128xf32>
    %20 = vector.extract_strided_slice %11 {offsets = [0, 3, 0], sizes = [1, 1, 128], strides = [1, 1, 1]} : vector<5x5x128xf32> to vector<1x1x128xf32>
    %21 = vector.extract_strided_slice %11 {offsets = [0, 4, 0], sizes = [1, 1, 128], strides = [1, 1, 1]} : vector<5x5x128xf32> to vector<1x1x128xf32>
    %22 = vector.extract_strided_slice %11 {offsets = [1, 0, 0], sizes = [1, 1, 128], strides = [1, 1, 1]} : vector<5x5x128xf32> to vector<1x1x128xf32>
    %23 = vector.extract_strided_slice %11 {offsets = [1, 1, 0], sizes = [1, 1, 128], strides = [1, 1, 1]} : vector<5x5x128xf32> to vector<1x1x128xf32>
    %24 = vector.extract_strided_slice %11 {offsets = [1, 2, 0], sizes = [1, 1, 128], strides = [1, 1, 1]} : vector<5x5x128xf32> to vector<1x1x128xf32>
    %25 = vector.extract_strided_slice %11 {offsets = [1, 3, 0], sizes = [1, 1, 128], strides = [1, 1, 1]} : vector<5x5x128xf32> to vector<1x1x128xf32>
    %26 = vector.extract_strided_slice %11 {offsets = [1, 4, 0], sizes = [1, 1, 128], strides = [1, 1, 1]} : vector<5x5x128xf32> to vector<1x1x128xf32>
    %27 = vector.extract_strided_slice %11 {offsets = [2, 0, 0], sizes = [1, 1, 128], strides = [1, 1, 1]} : vector<5x5x128xf32> to vector<1x1x128xf32>
    %28 = vector.extract_strided_slice %11 {offsets = [2, 1, 0], sizes = [1, 1, 128], strides = [1, 1, 1]} : vector<5x5x128xf32> to vector<1x1x128xf32>
    %29 = vector.extract_strided_slice %11 {offsets = [2, 2, 0], sizes = [1, 1, 128], strides = [1, 1, 1]} : vector<5x5x128xf32> to vector<1x1x128xf32>
    %30 = vector.extract_strided_slice %11 {offsets = [2, 3, 0], sizes = [1, 1, 128], strides = [1, 1, 1]} : vector<5x5x128xf32> to vector<1x1x128xf32>
    %31 = vector.extract_strided_slice %11 {offsets = [2, 4, 0], sizes = [1, 1, 128], strides = [1, 1, 1]} : vector<5x5x128xf32> to vector<1x1x128xf32>
    %32 = vector.extract_strided_slice %11 {offsets = [3, 0, 0], sizes = [1, 1, 128], strides = [1, 1, 1]} : vector<5x5x128xf32> to vector<1x1x128xf32>
    %33 = vector.extract_strided_slice %11 {offsets = [3, 1, 0], sizes = [1, 1, 128], strides = [1, 1, 1]} : vector<5x5x128xf32> to vector<1x1x128xf32>
    %34 = vector.extract_strided_slice %11 {offsets = [3, 2, 0], sizes = [1, 1, 128], strides = [1, 1, 1]} : vector<5x5x128xf32> to vector<1x1x128xf32>
    %35 = vector.extract_strided_slice %11 {offsets = [3, 3, 0], sizes = [1, 1, 128], strides = [1, 1, 1]} : vector<5x5x128xf32> to vector<1x1x128xf32>
    %36 = vector.extract_strided_slice %11 {offsets = [3, 4, 0], sizes = [1, 1, 128], strides = [1, 1, 1]} : vector<5x5x128xf32> to vector<1x1x128xf32>
    %37 = vector.extract_strided_slice %11 {offsets = [4, 0, 0], sizes = [1, 1, 128], strides = [1, 1, 1]} : vector<5x5x128xf32> to vector<1x1x128xf32>
    %38 = vector.extract_strided_slice %11 {offsets = [4, 1, 0], sizes = [1, 1, 128], strides = [1, 1, 1]} : vector<5x5x128xf32> to vector<1x1x128xf32>
    %39 = vector.extract_strided_slice %11 {offsets = [4, 2, 0], sizes = [1, 1, 128], strides = [1, 1, 1]} : vector<5x5x128xf32> to vector<1x1x128xf32>
    %40 = vector.extract_strided_slice %11 {offsets = [4, 3, 0], sizes = [1, 1, 128], strides = [1, 1, 1]} : vector<5x5x128xf32> to vector<1x1x128xf32>
    %41 = vector.extract_strided_slice %11 {offsets = [4, 4, 0], sizes = [1, 1, 128], strides = [1, 1, 1]} : vector<5x5x128xf32> to vector<1x1x128xf32>
    %cst_21 = arith.constant 0.000000e+00 : f32
    %42 = vector.broadcast %cst_21 : f32 to vector<12x12x128xf32>
    %43 = vector.extract_strided_slice %12 {offsets = [0, 0, 0], sizes = [12, 12, 128], strides = [1, 1, 1]} : vector<16x12x128xf32> to vector<12x12x128xf32>
    %44 = vector.broadcast %17 : vector<1x1x128xf32> to vector<12x12x128xf32>
    %45 = arith.mulf %43, %44 : vector<12x12x128xf32>
    %46 = arith.addf %42, %45 : vector<12x12x128xf32>
    %47 = vector.extract_strided_slice %12 {offsets = [1, 0, 0], sizes = [12, 12, 128], strides = [1, 1, 1]} : vector<16x12x128xf32> to vector<12x12x128xf32>
    %48 = vector.broadcast %22 : vector<1x1x128xf32> to vector<12x12x128xf32>
    %49 = arith.mulf %47, %48 : vector<12x12x128xf32>
    %50 = arith.addf %46, %49 : vector<12x12x128xf32>
    %51 = vector.extract_strided_slice %12 {offsets = [2, 0, 0], sizes = [12, 12, 128], strides = [1, 1, 1]} : vector<16x12x128xf32> to vector<12x12x128xf32>
    %52 = vector.broadcast %27 : vector<1x1x128xf32> to vector<12x12x128xf32>
    %53 = arith.mulf %51, %52 : vector<12x12x128xf32>
    %54 = arith.addf %50, %53 : vector<12x12x128xf32>
    %55 = vector.extract_strided_slice %12 {offsets = [3, 0, 0], sizes = [12, 12, 128], strides = [1, 1, 1]} : vector<16x12x128xf32> to vector<12x12x128xf32>
    %56 = vector.broadcast %32 : vector<1x1x128xf32> to vector<12x12x128xf32>
    %57 = arith.mulf %55, %56 : vector<12x12x128xf32>
    %58 = arith.addf %54, %57 : vector<12x12x128xf32>
    %59 = vector.extract_strided_slice %12 {offsets = [4, 0, 0], sizes = [12, 12, 128], strides = [1, 1, 1]} : vector<16x12x128xf32> to vector<12x12x128xf32>
    %60 = vector.broadcast %37 : vector<1x1x128xf32> to vector<12x12x128xf32>
    %61 = arith.mulf %59, %60 : vector<12x12x128xf32>
    %62 = arith.addf %58, %61 : vector<12x12x128xf32>
    %63 = vector.extract_strided_slice %13 {offsets = [0, 0, 0], sizes = [12, 12, 128], strides = [1, 1, 1]} : vector<16x12x128xf32> to vector<12x12x128xf32>
    %64 = vector.broadcast %18 : vector<1x1x128xf32> to vector<12x12x128xf32>
    %65 = arith.mulf %63, %64 : vector<12x12x128xf32>
    %66 = arith.addf %62, %65 : vector<12x12x128xf32>
    %67 = vector.extract_strided_slice %13 {offsets = [1, 0, 0], sizes = [12, 12, 128], strides = [1, 1, 1]} : vector<16x12x128xf32> to vector<12x12x128xf32>
    %68 = vector.broadcast %23 : vector<1x1x128xf32> to vector<12x12x128xf32>
    %69 = arith.mulf %67, %68 : vector<12x12x128xf32>
    %70 = arith.addf %66, %69 : vector<12x12x128xf32>
    %71 = vector.extract_strided_slice %13 {offsets = [2, 0, 0], sizes = [12, 12, 128], strides = [1, 1, 1]} : vector<16x12x128xf32> to vector<12x12x128xf32>
    %72 = vector.broadcast %28 : vector<1x1x128xf32> to vector<12x12x128xf32>
    %73 = arith.mulf %71, %72 : vector<12x12x128xf32>
    %74 = arith.addf %70, %73 : vector<12x12x128xf32>
    %75 = vector.extract_strided_slice %13 {offsets = [3, 0, 0], sizes = [12, 12, 128], strides = [1, 1, 1]} : vector<16x12x128xf32> to vector<12x12x128xf32>
    %76 = vector.broadcast %33 : vector<1x1x128xf32> to vector<12x12x128xf32>
    %77 = arith.mulf %75, %76 : vector<12x12x128xf32>
    %78 = arith.addf %74, %77 : vector<12x12x128xf32>
    %79 = vector.extract_strided_slice %13 {offsets = [4, 0, 0], sizes = [12, 12, 128], strides = [1, 1, 1]} : vector<16x12x128xf32> to vector<12x12x128xf32>
    %80 = vector.broadcast %38 : vector<1x1x128xf32> to vector<12x12x128xf32>
    %81 = arith.mulf %79, %80 : vector<12x12x128xf32>
    %82 = arith.addf %78, %81 : vector<12x12x128xf32>
    %83 = vector.extract_strided_slice %14 {offsets = [0, 0, 0], sizes = [12, 12, 128], strides = [1, 1, 1]} : vector<16x12x128xf32> to vector<12x12x128xf32>
    %84 = vector.broadcast %19 : vector<1x1x128xf32> to vector<12x12x128xf32>
    %85 = arith.mulf %83, %84 : vector<12x12x128xf32>
    %86 = arith.addf %82, %85 : vector<12x12x128xf32>
    %87 = vector.extract_strided_slice %14 {offsets = [1, 0, 0], sizes = [12, 12, 128], strides = [1, 1, 1]} : vector<16x12x128xf32> to vector<12x12x128xf32>
    %88 = vector.broadcast %24 : vector<1x1x128xf32> to vector<12x12x128xf32>
    %89 = arith.mulf %87, %88 : vector<12x12x128xf32>
    %90 = arith.addf %86, %89 : vector<12x12x128xf32>
    %91 = vector.extract_strided_slice %14 {offsets = [2, 0, 0], sizes = [12, 12, 128], strides = [1, 1, 1]} : vector<16x12x128xf32> to vector<12x12x128xf32>
    %92 = vector.broadcast %29 : vector<1x1x128xf32> to vector<12x12x128xf32>
    %93 = arith.mulf %91, %92 : vector<12x12x128xf32>
    %94 = arith.addf %90, %93 : vector<12x12x128xf32>
    %95 = vector.extract_strided_slice %14 {offsets = [3, 0, 0], sizes = [12, 12, 128], strides = [1, 1, 1]} : vector<16x12x128xf32> to vector<12x12x128xf32>
    %96 = vector.broadcast %34 : vector<1x1x128xf32> to vector<12x12x128xf32>
    %97 = arith.mulf %95, %96 : vector<12x12x128xf32>
    %98 = arith.addf %94, %97 : vector<12x12x128xf32>
    %99 = vector.extract_strided_slice %14 {offsets = [4, 0, 0], sizes = [12, 12, 128], strides = [1, 1, 1]} : vector<16x12x128xf32> to vector<12x12x128xf32>
    %100 = vector.broadcast %39 : vector<1x1x128xf32> to vector<12x12x128xf32>
    %101 = arith.mulf %99, %100 : vector<12x12x128xf32>
    %102 = arith.addf %98, %101 : vector<12x12x128xf32>
    %103 = vector.extract_strided_slice %15 {offsets = [0, 0, 0], sizes = [12, 12, 128], strides = [1, 1, 1]} : vector<16x12x128xf32> to vector<12x12x128xf32>
    %104 = vector.broadcast %20 : vector<1x1x128xf32> to vector<12x12x128xf32>
    %105 = arith.mulf %103, %104 : vector<12x12x128xf32>
    %106 = arith.addf %102, %105 : vector<12x12x128xf32>
    %107 = vector.extract_strided_slice %15 {offsets = [1, 0, 0], sizes = [12, 12, 128], strides = [1, 1, 1]} : vector<16x12x128xf32> to vector<12x12x128xf32>
    %108 = vector.broadcast %25 : vector<1x1x128xf32> to vector<12x12x128xf32>
    %109 = arith.mulf %107, %108 : vector<12x12x128xf32>
    %110 = arith.addf %106, %109 : vector<12x12x128xf32>
    %111 = vector.extract_strided_slice %15 {offsets = [2, 0, 0], sizes = [12, 12, 128], strides = [1, 1, 1]} : vector<16x12x128xf32> to vector<12x12x128xf32>
    %112 = vector.broadcast %30 : vector<1x1x128xf32> to vector<12x12x128xf32>
    %113 = arith.mulf %111, %112 : vector<12x12x128xf32>
    %114 = arith.addf %110, %113 : vector<12x12x128xf32>
    %115 = vector.extract_strided_slice %15 {offsets = [3, 0, 0], sizes = [12, 12, 128], strides = [1, 1, 1]} : vector<16x12x128xf32> to vector<12x12x128xf32>
    %116 = vector.broadcast %35 : vector<1x1x128xf32> to vector<12x12x128xf32>
    %117 = arith.mulf %115, %116 : vector<12x12x128xf32>
    %118 = arith.addf %114, %117 : vector<12x12x128xf32>
    %119 = vector.extract_strided_slice %15 {offsets = [4, 0, 0], sizes = [12, 12, 128], strides = [1, 1, 1]} : vector<16x12x128xf32> to vector<12x12x128xf32>
    %120 = vector.broadcast %40 : vector<1x1x128xf32> to vector<12x12x128xf32>
    %121 = arith.mulf %119, %120 : vector<12x12x128xf32>
    %122 = arith.addf %118, %121 : vector<12x12x128xf32>
    %123 = vector.extract_strided_slice %16 {offsets = [0, 0, 0], sizes = [12, 12, 128], strides = [1, 1, 1]} : vector<16x12x128xf32> to vector<12x12x128xf32>
    %124 = vector.broadcast %21 : vector<1x1x128xf32> to vector<12x12x128xf32>
    %125 = arith.mulf %123, %124 : vector<12x12x128xf32>
    %126 = arith.addf %122, %125 : vector<12x12x128xf32>
    %127 = vector.extract_strided_slice %16 {offsets = [1, 0, 0], sizes = [12, 12, 128], strides = [1, 1, 1]} : vector<16x12x128xf32> to vector<12x12x128xf32>
    %128 = vector.broadcast %26 : vector<1x1x128xf32> to vector<12x12x128xf32>
    %129 = arith.mulf %127, %128 : vector<12x12x128xf32>
    %130 = arith.addf %126, %129 : vector<12x12x128xf32>
    %131 = vector.extract_strided_slice %16 {offsets = [2, 0, 0], sizes = [12, 12, 128], strides = [1, 1, 1]} : vector<16x12x128xf32> to vector<12x12x128xf32>
    %132 = vector.broadcast %31 : vector<1x1x128xf32> to vector<12x12x128xf32>
    %133 = arith.mulf %131, %132 : vector<12x12x128xf32>
    %134 = arith.addf %130, %133 : vector<12x12x128xf32>
    %135 = vector.extract_strided_slice %16 {offsets = [3, 0, 0], sizes = [12, 12, 128], strides = [1, 1, 1]} : vector<16x12x128xf32> to vector<12x12x128xf32>
    %136 = vector.broadcast %36 : vector<1x1x128xf32> to vector<12x12x128xf32>
    %137 = arith.mulf %135, %136 : vector<12x12x128xf32>
    %138 = arith.addf %134, %137 : vector<12x12x128xf32>
    %139 = vector.extract_strided_slice %16 {offsets = [4, 0, 0], sizes = [12, 12, 128], strides = [1, 1, 1]} : vector<16x12x128xf32> to vector<12x12x128xf32>
    %140 = vector.broadcast %41 : vector<1x1x128xf32> to vector<12x12x128xf32>
    %141 = arith.mulf %139, %140 : vector<12x12x128xf32>
    %142 = arith.addf %138, %141 : vector<12x12x128xf32>
    %c0_22 = arith.constant 0 : index
    %c0_23 = arith.constant 0 : index
    %c0_24 = arith.constant 0 : index
    %c0_25 = arith.constant 0 : index
    %143 = vector.load %arg5[%c0_22, %c0_23, %c0_24, %c0_25] : memref<1x12x12x128xf32, #tpu.memory_space<vmem>>, vector<1x12x12x128xf32>
    %144 = vector.shape_cast %143 : vector<1x12x12x128xf32> to vector<12x12x128xf32>
    %145 = vector.shape_cast %142 : vector<12x12x128xf32> to vector<1x12x12x128xf32>
    tpu.vector_store %arg5[%c0_22, %c0_23, %c0_24, %c0_25], %145 {strides = array<i32>} : memref<1x12x12x128xf32, #tpu.memory_space<vmem>>, vector<1x12x12x128xf32>,
    %146 = arith.truncf %142 : vector<12x12x128xf32> to vector<12x12x128xbf16>
    %c1 = arith.constant 1 : index
    %c1_26 = arith.constant 1 : index
    %c0_27 = arith.constant 0 : index
    %147 = vector.load %arg9[%c1, %c1_26, %c0_27] : memref<14x24x128xbf16, #tpu.memory_space<vmem>>, vector<12x12x128xbf16>
    tpu.vector_store %arg9[%c1, %c1_26, %c0_27], %146 {strides = array<i32>} : memref<14x24x128xbf16, #tpu.memory_space<vmem>>, vector<12x12x128xbf16>,
    %c0_28 = arith.constant 0 : index
    %c0_29 = arith.constant 0 : index
    %c0_30 = arith.constant 0 : index
    %148 = vector.load %arg9[%c0_28, %c0_29, %c0_30] : memref<14x24x128xbf16, #tpu.memory_space<vmem>>, vector<14x24x128xbf16>
    %149 = vector.extract_strided_slice %148 {offsets = [0, 0, 0], sizes = [14, 16, 128], strides = [1, 1, 1]} : vector<14x24x128xbf16> to vector<14x16x128xbf16>
    %150 = vector.extract_strided_slice %148 {offsets = [0, 1, 0], sizes = [14, 16, 128], strides = [1, 1, 1]} : vector<14x24x128xbf16> to vector<14x16x128xbf16>
    %151 = vector.extract_strided_slice %148 {offsets = [0, 2, 0], sizes = [14, 16, 128], strides = [1, 1, 1]} : vector<14x24x128xbf16> to vector<14x16x128xbf16>
    %152 = tpu.concatenate %149, %150, %151 in 2 : vector<14x16x128xbf16>, vector<14x16x128xbf16>, vector<14x16x128xbf16> -> vector<14x16x384xbf16>
    %153 = vector.shape_cast %152 : vector<14x16x384xbf16> to vector<224x384xbf16>
    %cst_31 = arith.constant 0.000000e+00 : f32
    %154 = vector.broadcast %cst_31 : f32 to vector<192x128xf32>
    %155 = vector.extract_strided_slice %153 {offsets = [0, 0], sizes = [192, 384], strides = [1, 1]} : vector<224x384xbf16> to vector<192x384xbf16>
    %c0_32 = arith.constant 0 : index
    %c0_33 = arith.constant 0 : index
    %c0_34 = arith.constant 0 : index
    %156 = vector.load %arg3[%c0_32, %c0_33, %c0_34] : memref<3x384x128xbf16, #tpu.memory_space<vmem>>, vector<1x384x128xbf16>
    %157 = vector.shape_cast %156 : vector<1x384x128xbf16> to vector<384x128xbf16>
    %cst_35 = arith.constant dense<0.000000e+00> : vector<192x128xf32>
    %158 = tpu.matmul %155, %157, %cst_35 {dimension_numbers = #tpu.dot_dimension_numbers<[1], [0], [0], [1], [0, 0, 1, 1], [], []>} : vector<192x384xbf16>, vector<384x128xbf16>, vector<192x128xf32> -> vector<192x128xf32>
    %159 = arith.addf %154, %158 : vector<192x128xf32>
    %160 = vector.extract_strided_slice %153 {offsets = [16, 0], sizes = [192, 384], strides = [1, 1]} : vector<224x384xbf16> to vector<192x384xbf16>
    %c1_36 = arith.constant 1 : index
    %c0_37 = arith.constant 0 : index
    %c0_38 = arith.constant 0 : index
    %161 = vector.load %arg3[%c1_36, %c0_37, %c0_38] : memref<3x384x128xbf16, #tpu.memory_space<vmem>>, vector<1x384x128xbf16>
    %162 = vector.shape_cast %161 : vector<1x384x128xbf16> to vector<384x128xbf16>
    %cst_39 = arith.constant dense<0.000000e+00> : vector<192x128xf32>
    %163 = tpu.matmul %160, %162, %cst_39 {dimension_numbers = #tpu.dot_dimension_numbers<[1], [0], [0], [1], [0, 0, 1, 1], [], []>} : vector<192x384xbf16>, vector<384x128xbf16>, vector<192x128xf32> -> vector<192x128xf32>
    %164 = arith.addf %159, %163 : vector<192x128xf32>
    %165 = vector.extract_strided_slice %153 {offsets = [32, 0], sizes = [192, 384], strides = [1, 1]} : vector<224x384xbf16> to vector<192x384xbf16>
    %c2 = arith.constant 2 : index
    %c0_40 = arith.constant 0 : index
    %c0_41 = arith.constant 0 : index
    %166 = vector.load %arg3[%c2, %c0_40, %c0_41] : memref<3x384x128xbf16, #tpu.memory_space<vmem>>, vector<1x384x128xbf16>
    %167 = vector.shape_cast %166 : vector<1x384x128xbf16> to vector<384x128xbf16>
    %cst_42 = arith.constant dense<0.000000e+00> : vector<192x128xf32>
    %168 = tpu.matmul %165, %167, %cst_42 {dimension_numbers = #tpu.dot_dimension_numbers<[1], [0], [0], [1], [0, 0, 1, 1], [], []>} : vector<192x384xbf16>, vector<384x128xbf16>, vector<192x128xf32> -> vector<192x128xf32>
    %169 = arith.addf %164, %168 : vector<192x128xf32>
    %c0_43 = arith.constant 0 : index
    %c0_44 = arith.constant 0 : index
    %170 = vector.load %arg4[%c0_43, %c0_44] : memref<1x128xf32, #tpu.memory_space<vmem>>, vector<1x128xf32>
    %171 = vector.broadcast %170 : vector<1x128xf32> to vector<192x128xf32>
    %172 = arith.addf %169, %171 : vector<192x128xf32>
    %173 = vector.shape_cast %172 : vector<192x128xf32> to vector<12x16x128xf32>
    %174 = arith.truncf %173 : vector<12x16x128xf32> to vector<12x16x128xbf16>
    %c0_45 = arith.constant 0 : index
    %c0_46 = arith.constant 0 : index
    %c0_47 = arith.constant 0 : index
    %c0_48 = arith.constant 0 : index
    %175 = vector.load %arg6[%c0_45, %c0_46, %c0_47, %c0_48] : memref<1x12x16x128xbf16, #tpu.memory_space<vmem>>, vector<1x12x16x128xbf16>
    %176 = vector.shape_cast %175 : vector<1x12x16x128xbf16> to vector<12x16x128xbf16>
    %177 = vector.shape_cast %174 : vector<12x16x128xbf16> to vector<1x12x16x128xbf16>
    tpu.vector_store %arg6[%c0_45, %c0_46, %c0_47, %c0_48], %177 {strides = array<i32>} : memref<1x12x16x128xbf16, #tpu.memory_space<vmem>>, vector<1x12x16x128xbf16>,
    %178 = tpu.iota {dimensions = array<i32: 0>} : vector<192x128xi32>
    %c16_i32 = arith.constant 16 : i32
    %c0_i32 = arith.constant 0 : i32
    %179 = arith.cmpi eq, %c16_i32, %c0_i32 : i32
    %c1_i32 = arith.constant 1 : i32
    %180 = arith.select %179, %c1_i32, %c16_i32 : i32
    %181 = vector.broadcast %180 : i32 to vector<192x128xi32>
    %182 = arith.remsi %178, %181 : vector<192x128xi32>
    %c0_i32_49 = arith.constant 0 : i32
    %183 = vector.broadcast %c0_i32_49 : i32 to vector<192x128xi32>
    %184 = arith.cmpi ne, %182, %183 : vector<192x128xi32>
    %c0_i32_50 = arith.constant 0 : i32
    %185 = vector.broadcast %c0_i32_50 : i32 to vector<192x128xi32>
    %186 = arith.cmpi slt, %182, %185 : vector<192x128xi32>
    %c0_i32_51 = arith.constant 0 : i32
    %187 = arith.cmpi slt, %180, %c0_i32_51 : i32
    %188 = vector.broadcast %187 : i1 to vector<192x128xi1>
    %189 = vector.broadcast %188 : vector<192x128xi1> to vector<192x128xi1>
    %190 = arith.xori %186, %189 : vector<192x128xi1>
    %191 = arith.andi %190, %184 : vector<192x128xi1>
    %192 = vector.broadcast %180 : i32 to vector<192x128xi32>
    %193 = arith.addi %182, %192 : vector<192x128xi32>
    %194 = arith.select %191, %193, %182 : vector<192x128xi1>, vector<192x128xi32>
    %c12_i32 = arith.constant 12 : i32
    %195 = vector.broadcast %c12_i32 : i32 to vector<192x128xi32>
    %196 = arith.cmpi slt, %194, %195 : vector<192x128xi32>
    %cst_52 = arith.constant 0.000000e+00 : f32
    %197 = vector.broadcast %cst_52 : f32 to vector<192x128xf32>
    %198 = arith.select %196, %172, %197 : vector<192x128xi1>, vector<192x128xf32>
    %cst_53 = arith.constant dense<0.000000e+00> : vector<128xf32>
    %199 = vector.multi_reduction <add>, %198, %cst_53 [0] : vector<192x128xf32> to vector<128xf32>
    %200 = vector.shape_cast %199 : vector<128xf32> to vector<1x128xf32>
    %c0_54 = arith.constant 0 : index
    %c0_55 = arith.constant 0 : index
    %c0_56 = arith.constant 0 : index
    %201 = vector.load %arg7[%c0_54, %c0_55, %c0_56] : memref<1x1x128xf32, #tpu.memory_space<vmem>>, vector<1x1x128xf32>
    %202 = vector.shape_cast %201 : vector<1x1x128xf32> to vector<1x128xf32>
    %203 = vector.shape_cast %200 : vector<1x128xf32> to vector<1x1x128xf32>
    tpu.vector_store %arg7[%c0_54, %c0_55, %c0_56], %203 {strides = array<i32>} : memref<1x1x128xf32, #tpu.memory_space<vmem>>, vector<1x1x128xf32>,
    %204 = arith.mulf %198, %172 : vector<192x128xf32>
    %cst_57 = arith.constant dense<0.000000e+00> : vector<128xf32>
    %205 = vector.multi_reduction <add>, %204, %cst_57 [0] : vector<192x128xf32> to vector<128xf32>
    %206 = vector.shape_cast %205 : vector<128xf32> to vector<1x128xf32>
    %c0_58 = arith.constant 0 : index
    %c0_59 = arith.constant 0 : index
    %c0_60 = arith.constant 0 : index
    %207 = vector.load %arg8[%c0_58, %c0_59, %c0_60] : memref<1x1x128xf32, #tpu.memory_space<vmem>>, vector<1x1x128xf32>
    %208 = vector.shape_cast %207 : vector<1x1x128xf32> to vector<1x128xf32>
    %209 = vector.shape_cast %206 : vector<1x128xf32> to vector<1x1x128xf32>
    tpu.vector_store %arg8[%c0_58, %c0_59, %c0_60], %209 {strides = array<i32>} : memref<1x1x128xf32, #tpu.memory_space<vmem>>, vector<1x1x128xf32>,
    return
  }
  func.func @transform_0(%arg0: i32) -> (i32, i32, i32, i32) {
    %c0_i32 = arith.constant 0 : i32
    %c0_i32_0 = arith.constant 0 : i32
    %c0_i32_1 = arith.constant 0 : i32
    %c0_i32_2 = arith.constant 0 : i32
    return %arg0, %c0_i32, %c0_i32_0, %c0_i32_1 : i32, i32, i32, i32
  }
  func.func @transform_1(%arg0: i32) -> (i32, i32, i32, i32) {
    %c0_i32 = arith.constant 0 : i32
    %c0_i32_0 = arith.constant 0 : i32
    %c0_i32_1 = arith.constant 0 : i32
    %c0_i32_2 = arith.constant 0 : i32
    return %arg0, %c0_i32, %c0_i32_0, %c0_i32_1 : i32, i32, i32, i32
  }
  func.func @transform_2(%arg0: i32) -> (i32, i32, i32) {
    %c0_i32 = arith.constant 0 : i32
    %c0_i32_0 = arith.constant 0 : i32
    %c0_i32_1 = arith.constant 0 : i32
    %c0_i32_2 = arith.constant 0 : i32
    return %c0_i32, %c0_i32_0, %c0_i32_1 : i32, i32, i32
  }
  func.func @transform_3(%arg0: i32) -> (i32, i32) {
    %c0_i32 = arith.constant 0 : i32
    %c0_i32_0 = arith.constant 0 : i32
    %c0_i32_1 = arith.constant 0 : i32
    return %c0_i32, %c0_i32_0 : i32, i32
  }
  func.func @transform_4(%arg0: i32) -> (i32, i32, i32, i32) {
    %c0_i32 = arith.constant 0 : i32
    %c0_i32_0 = arith.constant 0 : i32
    %c0_i32_1 = arith.constant 0 : i32
    %c0_i32_2 = arith.constant 0 : i32
    return %arg0, %c0_i32, %c0_i32_0, %c0_i32_1 : i32, i32, i32, i32
  }
  func.func @transform_5(%arg0: i32) -> (i32, i32, i32, i32) {
    %c0_i32 = arith.constant 0 : i32
    %c0_i32_0 = arith.constant 0 : i32
    %c0_i32_1 = arith.constant 0 : i32
    %c0_i32_2 = arith.constant 0 : i32
    return %arg0, %c0_i32, %c0_i32_0, %c0_i32_1 : i32, i32, i32, i32
  }
  func.func @transform_6(%arg0: i32) -> (i32, i32, i32) {
    %c0_i32 = arith.constant 0 : i32
    %c0_i32_0 = arith.constant 0 : i32
    %c0_i32_1 = arith.constant 0 : i32
    return %arg0, %c0_i32, %c0_i32_0 : i32, i32, i32
  }
  func.func @transform_7(%arg0: i32) -> (i32, i32, i32) {
    %c0_i32 = arith.constant 0 : i32
    %c0_i32_0 = arith.constant 0 : i32
    %c0_i32_1 = arith.constant 0 : i32
    return %arg0, %c0_i32, %c0_i32_0 : i32, i32, i32
  }
}

module attributes {stable_mosaic.version = 11 : i64} {
  func.func @bn_relu_conv2_kernel(%arg0: i32, %arg1: memref<1x12x16x128xbf16, #tpu.memory_space<vmem>>, %arg2: memref<1x1x128xf32, #tpu.memory_space<vmem>>, %arg3: memref<1x1x128xf32, #tpu.memory_space<vmem>>, %arg4: memref<3x384x128xbf16, #tpu.memory_space<vmem>>, %arg5: memref<1x128xf32, #tpu.memory_space<vmem>>, %arg6: memref<1x12x16x128xf32, #tpu.memory_space<vmem>>, %arg7: memref<14x24x128xbf16, #tpu.memory_space<vmem>>) attributes {dimension_semantics = [#tpu.dimension_semantics<parallel>], iteration_bounds = array<i64: 2>, scalar_prefetch = 0 : i64, scratch_operands = 1 : i64, tpu.core_type = #tpu.core_type<tc>, window_params = [{transform_indices = @transform_0, window_bounds = array<i64: 1, 12, 16, 128>}, {pipeline_mode = #tpu.pipeline_mode<synchronous>, transform_indices = @transform_1, window_bounds = array<i64: 1, 1, 128>}, {pipeline_mode = #tpu.pipeline_mode<synchronous>, transform_indices = @transform_2, window_bounds = array<i64: 1, 1, 128>}, {pipeline_mode = #tpu.pipeline_mode<synchronous>, transform_indices = @transform_3, window_bounds = array<i64: 3, 384, 128>}, {pipeline_mode = #tpu.pipeline_mode<synchronous>, transform_indices = @transform_4, window_bounds = array<i64: 1, 128>}, {transform_indices = @transform_5, window_bounds = array<i64: 1, 12, 16, 128>}]} {
    %cst = arith.constant 0.000000e+00 : bf16
    %0 = vector.broadcast %cst : bf16 to vector<1x24x128xbf16>
    %c0 = arith.constant 0 : index
    %c0_0 = arith.constant 0 : index
    %c0_1 = arith.constant 0 : index
    %1 = vector.load %arg7[%c0, %c0_0, %c0_1] : memref<14x24x128xbf16, #tpu.memory_space<vmem>>, vector<1x24x128xbf16>
    tpu.vector_store %arg7[%c0, %c0_0, %c0_1], %0 {strides = array<i32>} : memref<14x24x128xbf16, #tpu.memory_space<vmem>>, vector<1x24x128xbf16>,
    %cst_2 = arith.constant 0.000000e+00 : bf16
    %2 = vector.broadcast %cst_2 : bf16 to vector<1x24x128xbf16>
    %c13 = arith.constant 13 : index
    %c0_3 = arith.constant 0 : index
    %c0_4 = arith.constant 0 : index
    %3 = vector.load %arg7[%c13, %c0_3, %c0_4] : memref<14x24x128xbf16, #tpu.memory_space<vmem>>, vector<1x24x128xbf16>
    tpu.vector_store %arg7[%c13, %c0_3, %c0_4], %2 {strides = array<i32>} : memref<14x24x128xbf16, #tpu.memory_space<vmem>>, vector<1x24x128xbf16>,
    %cst_5 = arith.constant 0.000000e+00 : bf16
    %4 = vector.broadcast %cst_5 : bf16 to vector<14x1x128xbf16>
    %c0_6 = arith.constant 0 : index
    %c0_7 = arith.constant 0 : index
    %c0_8 = arith.constant 0 : index
    %5 = vector.load %arg7[%c0_6, %c0_7, %c0_8] : memref<14x24x128xbf16, #tpu.memory_space<vmem>>, vector<14x1x128xbf16>
    tpu.vector_store %arg7[%c0_6, %c0_7, %c0_8], %4 {strides = array<i32>} : memref<14x24x128xbf16, #tpu.memory_space<vmem>>, vector<14x1x128xbf16>,
    %cst_9 = arith.constant 0.000000e+00 : bf16
    %6 = vector.broadcast %cst_9 : bf16 to vector<14x11x128xbf16>
    %c0_10 = arith.constant 0 : index
    %c13_11 = arith.constant 13 : index
    %c0_12 = arith.constant 0 : index
    %7 = vector.load %arg7[%c0_10, %c13_11, %c0_12] : memref<14x24x128xbf16, #tpu.memory_space<vmem>>, vector<14x11x128xbf16>
    tpu.vector_store %arg7[%c0_10, %c13_11, %c0_12], %6 {strides = array<i32>} : memref<14x24x128xbf16, #tpu.memory_space<vmem>>, vector<14x11x128xbf16>,
    %c0_13 = arith.constant 0 : index
    %c0_14 = arith.constant 0 : index
    %c0_15 = arith.constant 0 : index
    %c0_16 = arith.constant 0 : index
    %8 = vector.load %arg1[%c0_13, %c0_14, %c0_15, %c0_16] : memref<1x12x16x128xbf16, #tpu.memory_space<vmem>>, vector<1x12x16x128xbf16>
    %9 = vector.shape_cast %8 : vector<1x12x16x128xbf16> to vector<12x16x128xbf16>
    %c0_17 = arith.constant 0 : index
    %c0_18 = arith.constant 0 : index
    %c0_19 = arith.constant 0 : index
    %10 = vector.load %arg2[%c0_17, %c0_18, %c0_19] : memref<1x1x128xf32, #tpu.memory_space<vmem>>, vector<1x1x128xf32>
    %11 = arith.extf %9 : vector<12x16x128xbf16> to vector<12x16x128xf32>
    %12 = vector.broadcast %10 : vector<1x1x128xf32> to vector<12x16x128xf32>
    %13 = arith.mulf %11, %12 : vector<12x16x128xf32>
    %c0_20 = arith.constant 0 : index
    %c0_21 = arith.constant 0 : index
    %c0_22 = arith.constant 0 : index
    %14 = vector.load %arg3[%c0_20, %c0_21, %c0_22] : memref<1x1x128xf32, #tpu.memory_space<vmem>>, vector<1x1x128xf32>
    %15 = vector.broadcast %14 : vector<1x1x128xf32> to vector<12x16x128xf32>
    %16 = arith.addf %13, %15 : vector<12x16x128xf32>
    %cst_23 = arith.constant 0.000000e+00 : f32
    %17 = vector.broadcast %cst_23 : f32 to vector<12x16x128xf32>
    %18 = arith.maximumf %16, %17 : vector<12x16x128xf32>
    %19 = vector.extract_strided_slice %18 {offsets = [0, 0, 0], sizes = [12, 12, 128], strides = [1, 1, 1]} : vector<12x16x128xf32> to vector<12x12x128xf32>
    %20 = arith.truncf %19 : vector<12x12x128xf32> to vector<12x12x128xbf16>
    %c1 = arith.constant 1 : index
    %c1_24 = arith.constant 1 : index
    %c0_25 = arith.constant 0 : index
    %21 = vector.load %arg7[%c1, %c1_24, %c0_25] : memref<14x24x128xbf16, #tpu.memory_space<vmem>>, vector<12x12x128xbf16>
    tpu.vector_store %arg7[%c1, %c1_24, %c0_25], %20 {strides = array<i32>} : memref<14x24x128xbf16, #tpu.memory_space<vmem>>, vector<12x12x128xbf16>,
    %c0_26 = arith.constant 0 : index
    %c0_27 = arith.constant 0 : index
    %c0_28 = arith.constant 0 : index
    %22 = vector.load %arg7[%c0_26, %c0_27, %c0_28] : memref<14x24x128xbf16, #tpu.memory_space<vmem>>, vector<14x24x128xbf16>
    %23 = vector.extract_strided_slice %22 {offsets = [0, 0, 0], sizes = [14, 16, 128], strides = [1, 1, 1]} : vector<14x24x128xbf16> to vector<14x16x128xbf16>
    %24 = vector.extract_strided_slice %22 {offsets = [0, 1, 0], sizes = [14, 16, 128], strides = [1, 1, 1]} : vector<14x24x128xbf16> to vector<14x16x128xbf16>
    %25 = vector.extract_strided_slice %22 {offsets = [0, 2, 0], sizes = [14, 16, 128], strides = [1, 1, 1]} : vector<14x24x128xbf16> to vector<14x16x128xbf16>
    %26 = tpu.concatenate %23, %24, %25 in 2 : vector<14x16x128xbf16>, vector<14x16x128xbf16>, vector<14x16x128xbf16> -> vector<14x16x384xbf16>
    %27 = vector.shape_cast %26 : vector<14x16x384xbf16> to vector<224x384xbf16>
    %cst_29 = arith.constant 0.000000e+00 : f32
    %28 = vector.broadcast %cst_29 : f32 to vector<192x128xf32>
    %29 = vector.extract_strided_slice %27 {offsets = [0, 0], sizes = [192, 384], strides = [1, 1]} : vector<224x384xbf16> to vector<192x384xbf16>
    %c0_30 = arith.constant 0 : index
    %c0_31 = arith.constant 0 : index
    %c0_32 = arith.constant 0 : index
    %30 = vector.load %arg4[%c0_30, %c0_31, %c0_32] : memref<3x384x128xbf16, #tpu.memory_space<vmem>>, vector<1x384x128xbf16>
    %31 = vector.shape_cast %30 : vector<1x384x128xbf16> to vector<384x128xbf16>
    %cst_33 = arith.constant dense<0.000000e+00> : vector<192x128xf32>
    %32 = tpu.matmul %29, %31, %cst_33 {dimension_numbers = #tpu.dot_dimension_numbers<[1], [0], [0], [1], [0, 0, 1, 1], [], []>} : vector<192x384xbf16>, vector<384x128xbf16>, vector<192x128xf32> -> vector<192x128xf32>
    %33 = arith.addf %28, %32 : vector<192x128xf32>
    %34 = vector.extract_strided_slice %27 {offsets = [16, 0], sizes = [192, 384], strides = [1, 1]} : vector<224x384xbf16> to vector<192x384xbf16>
    %c1_34 = arith.constant 1 : index
    %c0_35 = arith.constant 0 : index
    %c0_36 = arith.constant 0 : index
    %35 = vector.load %arg4[%c1_34, %c0_35, %c0_36] : memref<3x384x128xbf16, #tpu.memory_space<vmem>>, vector<1x384x128xbf16>
    %36 = vector.shape_cast %35 : vector<1x384x128xbf16> to vector<384x128xbf16>
    %cst_37 = arith.constant dense<0.000000e+00> : vector<192x128xf32>
    %37 = tpu.matmul %34, %36, %cst_37 {dimension_numbers = #tpu.dot_dimension_numbers<[1], [0], [0], [1], [0, 0, 1, 1], [], []>} : vector<192x384xbf16>, vector<384x128xbf16>, vector<192x128xf32> -> vector<192x128xf32>
    %38 = arith.addf %33, %37 : vector<192x128xf32>
    %39 = vector.extract_strided_slice %27 {offsets = [32, 0], sizes = [192, 384], strides = [1, 1]} : vector<224x384xbf16> to vector<192x384xbf16>
    %c2 = arith.constant 2 : index
    %c0_38 = arith.constant 0 : index
    %c0_39 = arith.constant 0 : index
    %40 = vector.load %arg4[%c2, %c0_38, %c0_39] : memref<3x384x128xbf16, #tpu.memory_space<vmem>>, vector<1x384x128xbf16>
    %41 = vector.shape_cast %40 : vector<1x384x128xbf16> to vector<384x128xbf16>
    %cst_40 = arith.constant dense<0.000000e+00> : vector<192x128xf32>
    %42 = tpu.matmul %39, %41, %cst_40 {dimension_numbers = #tpu.dot_dimension_numbers<[1], [0], [0], [1], [0, 0, 1, 1], [], []>} : vector<192x384xbf16>, vector<384x128xbf16>, vector<192x128xf32> -> vector<192x128xf32>
    %43 = arith.addf %38, %42 : vector<192x128xf32>
    %c0_41 = arith.constant 0 : index
    %c0_42 = arith.constant 0 : index
    %44 = vector.load %arg5[%c0_41, %c0_42] : memref<1x128xf32, #tpu.memory_space<vmem>>, vector<1x128xf32>
    %45 = vector.broadcast %44 : vector<1x128xf32> to vector<192x128xf32>
    %46 = arith.addf %43, %45 : vector<192x128xf32>
    %47 = vector.shape_cast %46 : vector<192x128xf32> to vector<12x16x128xf32>
    %c0_43 = arith.constant 0 : index
    %c0_44 = arith.constant 0 : index
    %c0_45 = arith.constant 0 : index
    %c0_46 = arith.constant 0 : index
    %48 = vector.load %arg6[%c0_43, %c0_44, %c0_45, %c0_46] : memref<1x12x16x128xf32, #tpu.memory_space<vmem>>, vector<1x12x16x128xf32>
    %49 = vector.shape_cast %48 : vector<1x12x16x128xf32> to vector<12x16x128xf32>
    %50 = vector.shape_cast %47 : vector<12x16x128xf32> to vector<1x12x16x128xf32>
    tpu.vector_store %arg6[%c0_43, %c0_44, %c0_45, %c0_46], %50 {strides = array<i32>} : memref<1x12x16x128xf32, #tpu.memory_space<vmem>>, vector<1x12x16x128xf32>,
    return
  }
  func.func @transform_0(%arg0: i32) -> (i32, i32, i32, i32) {
    %c0_i32 = arith.constant 0 : i32
    %c0_i32_0 = arith.constant 0 : i32
    %c0_i32_1 = arith.constant 0 : i32
    %c0_i32_2 = arith.constant 0 : i32
    return %arg0, %c0_i32, %c0_i32_0, %c0_i32_1 : i32, i32, i32, i32
  }
  func.func @transform_1(%arg0: i32) -> (i32, i32, i32) {
    %c0_i32 = arith.constant 0 : i32
    %c0_i32_0 = arith.constant 0 : i32
    %c0_i32_1 = arith.constant 0 : i32
    %c0_i32_2 = arith.constant 0 : i32
    return %c0_i32, %c0_i32_0, %c0_i32_1 : i32, i32, i32
  }
  func.func @transform_2(%arg0: i32) -> (i32, i32, i32) {
    %c0_i32 = arith.constant 0 : i32
    %c0_i32_0 = arith.constant 0 : i32
    %c0_i32_1 = arith.constant 0 : i32
    %c0_i32_2 = arith.constant 0 : i32
    return %c0_i32, %c0_i32_0, %c0_i32_1 : i32, i32, i32
  }
  func.func @transform_3(%arg0: i32) -> (i32, i32, i32) {
    %c0_i32 = arith.constant 0 : i32
    %c0_i32_0 = arith.constant 0 : i32
    %c0_i32_1 = arith.constant 0 : i32
    %c0_i32_2 = arith.constant 0 : i32
    return %c0_i32, %c0_i32_0, %c0_i32_1 : i32, i32, i32
  }
  func.func @transform_4(%arg0: i32) -> (i32, i32) {
    %c0_i32 = arith.constant 0 : i32
    %c0_i32_0 = arith.constant 0 : i32
    %c0_i32_1 = arith.constant 0 : i32
    return %c0_i32, %c0_i32_0 : i32, i32
  }
  func.func @transform_5(%arg0: i32) -> (i32, i32, i32, i32) {
    %c0_i32 = arith.constant 0 : i32
    %c0_i32_0 = arith.constant 0 : i32
    %c0_i32_1 = arith.constant 0 : i32
    %c0_i32_2 = arith.constant 0 : i32
    return %arg0, %c0_i32, %c0_i32_0, %c0_i32_1 : i32, i32, i32, i32
  }
}

</mosaic_0001>

<llo_original>
// kernel: grader_forward.3
$region0: #{grader_forward.3}
  #allocation0 [shape = 'u32[]', space=smem, size = 0x4, offset = 0x4, fixed_abs, tag = 'smem constant byte address 0x4 - core index']
  #allocation1 [shape = 'u32[144,128]{1,0:T(1,128)}', space=vmem, size = 0x12000, scoped, tag = 'internal scratch']
  #allocation2 [shape = 'bf16[14,24,128]{2,1,0:T(8,128)(2,1)}', space=vmem, size = 0x15000, scoped, tag = 'scratch operand']
  %s0 = inlined_call_operand.vmem [shape: bf16[2,12,16,128], index: 0, kind: input, shape index: {}]
  %s1 = inlined_call_operand.vmem [shape: f32[1,1,128], index: 1, kind: input, shape index: {}]
  %s2 = inlined_call_operand.vmem [shape: f32[1,1,128], index: 2, kind: input, shape index: {}]
  %s3 = inlined_call_operand.vmem [shape: bf16[3,384,128], index: 3, kind: input, shape index: {}]
  %s4 = inlined_call_operand.vmem [shape: f32[1,128], index: 4, kind: input, shape index: {}]
  %s5 = inlined_call_operand.vmem [shape: f32[2,12,16,128], index: 5, kind: output, shape index: {}]
  %s6 = sld [smem:[#allocation0]]
  $region53: #{grader_forward.3} parent=0
    _
  %s8 = ssub.s32 1, %s6
  %s9 = scalar_select 0, %s8, %s6
  loop: start=0, step=1, limit=4
  $region2: #{grader_forward.3} parent=0 // loop_pre_header
    _
  $region3: #{grader_forward.3} parent=0 // loop_header
    %s11 = sphi 0, %s15
    %p12 = scmp.ge.s32.totalorder %s11, 4
    %s21 = sphi 0, %s23
    %s24 = sphi 0, %s21
    %s25 = sphi 0, %s24
    %s41 = sphi 0, %s25
    %s45 = sphi 0, %s45
    %s47 = sphi 0, %s45
    %s48 = sphi 0, %s47
    %s62 = sphi 0, %s48
    %s66 = sphi 0, %s66
    %s68 = sphi 0, %s66
    %s69 = sphi 0, %s68
    %s83 = sphi 0, %s69
    %s87 = sphi 0, %s87
    %s89 = sphi 0, %s87
    %s90 = sphi 0, %s89
    %s104 = sphi 0, %s90
    %s108 = sphi 0, %s108
    %s110 = sphi 0, %s108
    %s111 = sphi 0, %s110
    %s125 = sphi 0, %s111
    %s131 = sphi 0, %s133
    %s134 = sphi 0, %s131
    %s135 = sphi 0, %s134
    %s151 = sphi 0, %s135
  $region4: #{grader_forward.3} parent=0 // loop_header_branch
    %14 = sbr.rel (%p12) target = $region8
  $region5: #{grader_forward.3} parent=0 // loop_body
    %s16 = ssub.s32 %s11, 1
    %s17 = ssub.s32 %s11, 2
    %s18 = sadd.s32 %s11, 1
    %s19 = ssub.s32 %s11, %s18
    %p20 = scmp.eq.s32.totalorder %s19, 0
    %s22 = sadd.s32 %s21, 1
    %s23 = scalar_select %p20, %s21, %s22
    %p26 = pneg %p20
    %p27 = scmp.eq.s32.totalorder %s11, 1
    %p28 = por %p26, %p27
    %p29 = scmp.ne.s32.totalorder %s21, %s24
    %p30 = scmp.eq.s32.totalorder %s11, 0
    %p31 = por %p29, %p30
    %p32 = scmp.ne.s32.totalorder %s21, %s24
    %p33 = scmp.eq.s32.totalorder %s16, 1
    %p34 = por %p32, %p33
    %p35 = scmp.ne.s32.totalorder %s24, %s25
    %p36 = scmp.eq.s32.totalorder %s16, 0
    %p37 = por %p35, %p36
    %p38 = scmp.ne.s32.totalorder %s24, %s25
    %p39 = scmp.eq.s32.totalorder %s17, 1
    %p40 = por %p38, %p39
    %p42 = scmp.ne.s32.totalorder %s25, %s41
    %p43 = scmp.eq.s32.totalorder %s17, 0
    %p44 = por %p42, %p43
    %s46 = sadd.s32 %s45, 1
    %p49 = scmp.eq.s32.totalorder %s11, 1
    %p50 = scmp.ne.s32.totalorder %s45, %s47
    %p51 = scmp.eq.s32.totalorder %s11, 0
    %p52 = por %p50, %p51
    %p53 = scmp.ne.s32.totalorder %s45, %s47
    %p54 = scmp.eq.s32.totalorder %s16, 1
    %p55 = por %p53, %p54
    %p56 = scmp.ne.s32.totalorder %s47, %s48
    %p57 = scmp.eq.s32.totalorder %s16, 0
    %p58 = por %p56, %p57
    %p59 = scmp.ne.s32.totalorder %s47, %s48
    %p60 = scmp.eq.s32.totalorder %s17, 1
    %p61 = por %p59, %p60
    %p63 = scmp.ne.s32.totalorder %s48, %s62
    %p64 = scmp.eq.s32.totalorder %s17, 0
    %p65 = por %p63, %p64
    %s67 = sadd.s32 %s66, 1
    %p70 = scmp.eq.s32.totalorder %s11, 1
    %p71 = scmp.ne.s32.totalorder %s66, %s68
    %p72 = scmp.eq.s32.totalorder %s11, 0
    %p73 = por %p71, %p72
    %p74 = scmp.ne.s32.totalorder %s66, %s68
    %p75 = scmp.eq.s32.totalorder %s16, 1
    %p76 = por %p74, %p75
    %p77 = scmp.ne.s32.totalorder %s68, %s69
    %p78 = scmp.eq.s32.totalorder %s16, 0
    %p79 = por %p77, %p78
    %p80 = scmp.ne.s32.totalorder %s68, %s69
    %p81 = scmp.eq.s32.totalorder %s17, 1
    %p82 = por %p80, %p81
    %p84 = scmp.ne.s32.totalorder %s69, %s83
    %p85 = scmp.eq.s32.totalorder %s17, 0
    %p86 = por %p84, %p85
    %s88 = sadd.s32 %s87, 1
    %p91 = scmp.eq.s32.totalorder %s11, 1
    %p92 = scmp.ne.s32.totalorder %s87, %s89
    %p93 = scmp.eq.s32.totalorder %s11, 0
    %p94 = por %p92, %p93
    %p95 = scmp.ne.s32.totalorder %s87, %s89
    %p96 = scmp.eq.s32.totalorder %s16, 1
    %p97 = por %p95, %p96
    %p98 = scmp.ne.s32.totalorder %s89, %s90
    %p99 = scmp.eq.s32.totalorder %s16, 0
    %p100 = por %p98, %p99
    %p101 = scmp.ne.s32.totalorder %s89, %s90
    %p102 = scmp.eq.s32.totalorder %s17, 1
    %p103 = por %p101, %p102
    %p105 = scmp.ne.s32.totalorder %s90, %s104
    %p106 = scmp.eq.s32.totalorder %s17, 0
    %p107 = por %p105, %p106
    %s109 = sadd.s32 %s108, 1
    %p112 = scmp.eq.s32.totalorder %s11, 1
    %p113 = scmp.ne.s32.totalorder %s108, %s110
    %p114 = scmp.eq.s32.totalorder %s11, 0
    %p115 = por %p113, %p114
    %p116 = scmp.ne.s32.totalorder %s108, %s110
    %p117 = scmp.eq.s32.totalorder %s16, 1
    %p118 = por %p116, %p117
    %p119 = scmp.ne.s32.totalorder %s110, %s111
    %p120 = scmp.eq.s32.totalorder %s16, 0
    %p121 = por %p119, %p120
    %p122 = scmp.ne.s32.totalorder %s110, %s111
    %p123 = scmp.eq.s32.totalorder %s17, 1
    %p124 = por %p122, %p123
    %p126 = scmp.ne.s32.totalorder %s111, %s125
    %p127 = scmp.eq.s32.totalorder %s17, 0
    %p128 = por %p126, %p127
    %s129 = ssub.s32 %s11, %s18
    %p130 = scmp.eq.s32.totalorder %s129, 0
    %s132 = sadd.s32 %s131, 1
    %s133 = scalar_select %p130, %s131, %s132
    %p136 = pneg %p130
    %p137 = scmp.eq.s32.totalorder %s11, 1
    %p138 = por %p136, %p137
    %p139 = scmp.ne.s32.totalorder %s131, %s134
    %p140 = scmp.eq.s32.totalorder %s11, 0
    %p141 = por %p139, %p140
    %p142 = scmp.ne.s32.totalorder %s131, %s134
    %p143 = scmp.eq.s32.totalorder %s16, 1
    %p144 = por %p142, %p143
    %p145 = scmp.ne.s32.totalorder %s134, %s135
    %p146 = scmp.eq.s32.totalorder %s16, 0
    %p147 = por %p145, %p146
    %p148 = scmp.ne.s32.totalorder %s134, %s135
    %p149 = scmp.eq.s32.totalorder %s17, 1
    %p150 = por %p148, %p149
    %p152 = scmp.ne.s32.totalorder %s135, %s151
    %p153 = scmp.eq.s32.totalorder %s17, 0
    %p154 = por %p152, %p153
    %p155 = scmp.le.s32.totalorder 1, %s11
    %p156 = scmp.lt.s32.totalorder %s11, 3
    %p157 = pnand %p155, %p156
    %p158 = pneg %p157
    // Predicated region
    $region9: #{grader_forward.3} parent=5 // pred_check
      _
    $region10: #{grader_forward.3} parent=5 // pred_check_branch
      %160 = sbr.rel (%p157) target = $region12
    $region11: #{grader_forward.3} parent=5 // pred_region
      %s161 = ssub.s32 %s11, 1
      // Predicated region
      $region13: #{grader_forward.3} parent=11 // pred_check
        %p162 = pneg %p58
      $region14: #{grader_forward.3} parent=11 // pred_check_branch
        %164 = sbr.rel (%p162) target = $region16
      $region15: #{grader_forward.3} parent=11 // pred_region
        _
      $region16: #{grader_forward.3} parent=11 // pred_fallthru
        _
      // Predicated region
      $region17: #{grader_forward.3} parent=11 // pred_check
        %p165 = pneg %p79
      $region18: #{grader_forward.3} parent=11 // pred_check_branch
        %167 = sbr.rel (%p165) target = $region20
      $region19: #{grader_forward.3} parent=11 // pred_region
        _
      $region20: #{grader_forward.3} parent=11 // pred_fallthru
        _
      // Predicated region
      $region21: #{grader_forward.3} parent=11 // pred_check
        %p168 = pneg %p100
      $region22: #{grader_forward.3} parent=11 // pred_check_branch
        %170 = sbr.rel (%p168) target = $region24
      $region23: #{grader_forward.3} parent=11 // pred_region
        _
      $region24: #{grader_forward.3} parent=11 // pred_fallthru
        _
      // Predicated region
      $region25: #{grader_forward.3} parent=11 // pred_check
        %p171 = pneg %p121
      $region26: #{grader_forward.3} parent=11 // pred_check_branch
        %173 = sbr.rel (%p171) target = $region28
      $region27: #{grader_forward.3} parent=11 // pred_region
        _
      $region28: #{grader_forward.3} parent=11 // pred_fallthru
        _
    $region12: #{grader_forward.3} parent=5 // pred_fallthru
      _
    %p174 = scmp.lt.s32.totalorder %s11, 2
    // Predicated region
    $region29: #{grader_forward.3} parent=5 // pred_check
      %p175 = pneg %p174
    $region30: #{grader_forward.3} parent=5 // pred_check_branch
      %177 = sbr.rel (%p175) target = $region32
    $region31: #{grader_forward.3} parent=5 // pred_region
      // Predicated region
      $region33: #{grader_forward.3} parent=31 // pred_check
        %p178 = pneg %p31
      $region34: #{grader_forward.3} parent=31 // pred_check_branch
        %180 = sbr.rel (%p178) target = $region36
      $region35: #{grader_forward.3} parent=31 // pred_region
        %p181 = scmp.lt.s32.totalorder %s11, 1
        %s182 = scalar_select %p181, %s11, 1
        %s183 = smul.addr %s182, 24
        %s184 = smul.addr %s183, 4
        %s185 = scalar_lea.vmem %s0, %s184
      $region36: #{grader_forward.3} parent=31 // pred_fallthru
        _
    $region32: #{grader_forward.3} parent=5 // pred_fallthru
      _
    %p186 = scmp.le.s32.totalorder 1, %s11
    %p187 = scmp.lt.s32.totalorder %s11, 3
    %p188 = pnand %p186, %p187
    %p189 = pneg %p188
    // Predicated region
    $region37: #{grader_forward.3} parent=5 // pred_check
      _
    $region38: #{grader_forward.3} parent=5 // pred_check_branch
      %191 = sbr.rel (%p188) target = $region40
    $region39: #{grader_forward.3} parent=5 // pred_region
      %s192 = ssub.s32 %s11, 1
      %p193 = scmp.lt.s32.totalorder %s16, 1
      %s194 = scalar_select %p193, %s16, 1
      %s195 = smul.addr %s194, 24
      %s196 = smul.addr %s195, 4
      %s197 = scalar_lea.vmem %s0, %s196
      %p198 = pneg %p37
      %p199 = pneg %p34
      %p200 = pneg %p58
      %p201 = pneg %p55
      %p202 = pneg %p79
      %p203 = pneg %p76
      %p204 = pneg %p100
      %p205 = pneg %p97
      %p206 = pneg %p121
      %p207 = pneg %p118
      %p208 = pneg %p147
      %p209 = pneg %p144
      %p210 = scmp.lt.s32.totalorder %s16, 1
      %s211 = scalar_select %p210, %s16, 1
      %s212 = smul.addr %s211, 24
      %s213 = smul.addr %s212, 8
      %s214 = scalar_lea.vmem %s5, %s213
      %p215 = scmp.lt.s32.totalorder %s16, 1
      %s216 = scalar_select %p215, %s16, 1
      %s217 = smul.addr %s216, 24
      %s218 = smul.addr %s217, 4
      %s219 = scalar_lea.vmem %s0, %s218
      %p220 = scmp.lt.s32.totalorder %s16, 1
      %s221 = scalar_select %p220, %s16, 1
      %s222 = smul.addr %s221, 24
      %s223 = smul.addr %s222, 8
      %s224 = scalar_lea.vmem %s5, %s223
      %226 = vst [vmem:[#allocation2] sm:$0xf] 0
      %227 = vst [vmem:[#allocation2 + $0x4] sm:$0xf] 0
      %228 = vst [vmem:[#allocation2 + $0x8] sm:$0xf] 0
      %s229 = scalar_lea.vmem [#allocation2], 156
      %230 = vst [vmem:[%s229] sm:$0xf] 0
      %231 = vst [vmem:[%s229 + $0x4] sm:$0xf] 0
      %232 = vst [vmem:[%s229 + $0x8] sm:$0xf] 0
      %vm233 = vcmask 1040384
      %vm234 = vsmask.f32 256
      %vm235 = vmand %vm233, %vm234
      %v236 = vld [vmem:[#allocation2] sm:$0x1]
      %v237 = vsel %vm235, 0, %v236
      %238 = vst [vmem:[#allocation2] sm:$0x1] %v237
      %v239 = vld [vmem:[#allocation2 + $0xc] sm:$0x1]
      %v240 = vsel %vm235, 0, %v239
      %241 = vst [vmem:[#allocation2 + $0xc] sm:$0x1] %v240
      %v242 = vld [vmem:[#allocation2 + $0x18] sm:$0x1]
      %v243 = vsel %vm235, 0, %v242
      %244 = vst [vmem:[#allocation2 + $0x18] sm:$0x1] %v243
      %v245 = vld [vmem:[#allocation2 + $0x24] sm:$0x1]
      %v246 = vsel %vm235, 0, %v245
      %247 = vst [vmem:[#allocation2 + $0x24] sm:$0x1] %v246
      %v248 = vld [vmem:[#allocation2 + $0x30] sm:$0x1]
      %v249 = vsel %vm235, 0, %v248
      %250 = vst [vmem:[#allocation2 + $0x30] sm:$0x1] %v249
      %v251 = vld [vmem:[#allocation2 + $0x3c] sm:$0x1]
      %v252 = vsel %vm235, 0, %v251
      %253 = vst [vmem:[#allocation2 + $0x3c] sm:$0x1] %v252
      %v254 = vld [vmem:[#allocation2 + $0x48] sm:$0x1]
      %v255 = vsel %vm235, 0, %v254
      %256 = vst [vmem:[#allocation2 + $0x48] sm:$0x1] %v255
      %v257 = vld [vmem:[#allocation2 + $0x54] sm:$0x1]
      %v258 = vsel %vm235, 0, %v257
      %259 = vst [vmem:[#allocation2 + $0x54] sm:$0x1] %v258
      %v260 = vld [vmem:[#allocation2 + $0x60] sm:$0x1]
      %v261 = vsel %vm235, 0, %v260
      %262 = vst [vmem:[#allocation2 + $0x60] sm:$0x1] %v261
      %v263 = vld [vmem:[#allocation2 + $0x6c] sm:$0x1]
      %v264 = vsel %vm235, 0, %v263
      %265 = vst [vmem:[#allocation2 + $0x6c] sm:$0x1] %v264
      %v266 = vld [vmem:[#allocation2 + $0x78] sm:$0x1]
      %v267 = vsel %vm235, 0, %v266
      %268 = vst [vmem:[#allocation2 + $0x78] sm:$0x1] %v267
      %v269 = vld [vmem:[#allocation2 + $0x84] sm:$0x1]
      %v270 = vsel %vm235, 0, %v269
      %271 = vst [vmem:[#allocation2 + $0x84] sm:$0x1] %v270
      %v272 = vld [vmem:[#allocation2 + $0x90] sm:$0x1]
      %v273 = vsel %vm235, 0, %v272
      %274 = vst [vmem:[#allocation2 + $0x90] sm:$0x1] %v273
      %v275 = vld [vmem:[#allocation2 + $0x9c] sm:$0x1]
      %v276 = vsel %vm235, 0, %v275
      %277 = vst [vmem:[#allocation2 + $0x9c] sm:$0x1] %v276
      %vm278 = vcmask 1043458
      %vm279 = vsmask.f32 7946
      %vm280 = vmand %vm278, %vm279
      %v281 = vld [vmem:[#allocation2 + $0x4] sm:$0xc]
      %v282 = vsel %vm280, 0, %v281
      %283 = vst [vmem:[#allocation2 + $0x4] sm:$0xc] %v282
      %284 = vst [vmem:[#allocation2 + $0x8] sm:$0xf] 0
      %v285 = vld [vmem:[#allocation2 + $0x10] sm:$0xc]
      %v286 = vsel %vm280, 0, %v285
      %287 = vst [vmem:[#allocation2 + $0x10] sm:$0xc] %v286
      %288 = vst [vmem:[#allocation2 + $0x14] sm:$0xf] 0
      %v289 = vld [vmem:[#allocation2 + $0x1c] sm:$0xc]
      %v290 = vsel %vm280, 0, %v289
      %291 = vst [vmem:[#allocation2 + $0x1c] sm:$0xc] %v290
      %292 = vst [vmem:[#allocation2 + $0x20] sm:$0xf] 0
      %v293 = vld [vmem:[#allocation2 + $0x28] sm:$0xc]
      %v294 = vsel %vm280, 0, %v293
      %295 = vst [vmem:[#allocation2 + $0x28] sm:$0xc] %v294
      %296 = vst [vmem:[#allocation2 + $0x2c] sm:$0xf] 0
      %v297 = vld [vmem:[#allocation2 + $0x34] sm:$0xc]
      %v298 = vsel %vm280, 0, %v297
      %299 = vst [vmem:[#allocation2 + $0x34] sm:$0xc] %v298
      %300 = vst [vmem:[#allocation2 + $0x38] sm:$0xf] 0
      %v301 = vld [vmem:[#allocation2 + $0x40] sm:$0xc]
      %v302 = vsel %vm280, 0, %v301
      %303 = vst [vmem:[#allocation2 + $0x40] sm:$0xc] %v302
      %304 = vst [vmem:[#allocation2 + $0x44] sm:$0xf] 0
      %v305 = vld [vmem:[#allocation2 + $0x4c] sm:$0xc]
      %v306 = vsel %vm280, 0, %v305
      %307 = vst [vmem:[#allocation2 + $0x4c] sm:$0xc] %v306
      %308 = vst [vmem:[#allocation2 + $0x50] sm:$0xf] 0
      %v309 = vld [vmem:[#allocation2 + $0x58] sm:$0xc]
      %v310 = vsel %vm280, 0, %v309
      %311 = vst [vmem:[#allocation2 + $0x58] sm:$0xc] %v310
      %312 = vst [vmem:[#allocation2 + $0x5c] sm:$0xf] 0
      %v313 = vld [vmem:[#allocation2 + $0x64] sm:$0xc]
      %v314 = vsel %vm280, 0, %v313
      %315 = vst [vmem:[#allocation2 + $0x64] sm:$0xc] %v314
      %316 = vst [vmem:[#allocation2 + $0x68] sm:$0xf] 0
      %v317 = vld [vmem:[#allocation2 + $0x70] sm:$0xc]
      %v318 = vsel %vm280, 0, %v317
      %319 = vst [vmem:[#allocation2 + $0x70] sm:$0xc] %v318
      %320 = vst [vmem:[#allocation2 + $0x74] sm:$0xf] 0
      %v321 = vld [vmem:[#allocation2 + $0x7c] sm:$0xc]
      %v322 = vsel %vm280, 0, %v321
      %323 = vst [vmem:[#allocation2 + $0x7c] sm:$0xc] %v322
      %324 = vst [vmem:[#allocation2 + $0x80] sm:$0xf] 0
      %v325 = vld [vmem:[#allocation2 + $0x88] sm:$0xc]
      %v326 = vsel %vm280, 0, %v325
      %327 = vst [vmem:[#allocation2 + $0x88] sm:$0xc] %v326
      %328 = vst [vmem:[#allocation2 + $0x8c] sm:$0xf] 0
      %v329 = vld [vmem:[#allocation2 + $0x94] sm:$0xc]
      %v330 = vsel %vm280, 0, %v329
      %331 = vst [vmem:[#allocation2 + $0x94] sm:$0xc] %v330
      %332 = vst [vmem:[#allocation2 + $0x98] sm:$0xf] 0
      %v333 = vld [vmem:[#allocation2 + $0xa0] sm:$0xc]
      %v334 = vsel %vm280, 0, %v333
      %335 = vst [vmem:[#allocation2 + $0xa0] sm:$0xc] %v334
      %336 = vst [vmem:[#allocation2 + $0xa4] sm:$0xf] 0
      %v337 = vld [vmem:[%s219] sm:$0xf]
      %v338 = vld [vmem:[%s219 + $0x4] sm:$0xf]
      %v339 = vld [vmem:[%s219 + $0x8] sm:$0xf]
      %v340 = vld [vmem:[%s219 + $0xc] sm:$0xf]
      %v341 = vld [vmem:[%s219 + $0x10] sm:$0xf]
      %v342 = vld [vmem:[%s219 + $0x14] sm:$0xf]
      %v343 = vld [vmem:[%s219 + $0x18] sm:$0xf]
      %v344 = vld [vmem:[%s219 + $0x1c] sm:$0xf]
      %v345 = vld [vmem:[%s219 + $0x20] sm:$0xf]
      %v346 = vld [vmem:[%s219 + $0x24] sm:$0xf]
      %v347 = vld [vmem:[%s219 + $0x28] sm:$0xf]
      %v348 = vld [vmem:[%s219 + $0x2c] sm:$0xf]
      %v349 = vld [vmem:[%s219 + $0x30] sm:$0xf]
      %v350 = vld [vmem:[%s219 + $0x34] sm:$0xf]
      %v351 = vld [vmem:[%s219 + $0x38] sm:$0xf]
      %v352 = vld [vmem:[%s219 + $0x3c] sm:$0xf]
      %v353 = vld [vmem:[%s219 + $0x40] sm:$0xf]
      %v354 = vld [vmem:[%s219 + $0x44] sm:$0xf]
      %v355 = vld [vmem:[%s219 + $0x48] sm:$0xf]
      %v356 = vld [vmem:[%s219 + $0x4c] sm:$0xf]
      %v357 = vld [vmem:[%s219 + $0x50] sm:$0xf]
      %v358 = vld [vmem:[%s219 + $0x54] sm:$0xf]
      %v359 = vld [vmem:[%s219 + $0x58] sm:$0xf]
      %v360 = vld [vmem:[%s219 + $0x5c] sm:$0xf]
      %v361 = vld [vmem:[%s1] sm:$0x1]
      %v362 = vunpack.c.l.bf16 %v337
      %v363 = vunpack.c.l.bf16 %v338
      %v364 = vunpack.c.l.bf16 %v339
      %v365 = vunpack.c.l.bf16 %v340
      %v366 = vunpack.c.l.bf16 %v341
      %v367 = vunpack.c.l.bf16 %v342
      %v368 = vunpack.c.l.bf16 %v343
      %v369 = vunpack.c.l.bf16 %v344
      %v370 = vunpack.c.l.bf16 %v345
      %v371 = vunpack.c.l.bf16 %v346
      %v372 = vunpack.c.l.bf16 %v347
      %v373 = vunpack.c.l.bf16 %v348
      %v374 = vunpack.c.l.bf16 %v349
      %v375 = vunpack.c.l.bf16 %v350
      %v376 = vunpack.c.l.bf16 %v351
      %v377 = vunpack.c.l.bf16 %v352
      %v378 = vunpack.c.l.bf16 %v353
      %v379 = vunpack.c.l.bf16 %v354
      %v380 = vunpack.c.l.bf16 %v355
      %v381 = vunpack.c.l.bf16 %v356
      %v382 = vunpack.c.l.bf16 %v357
      %v383 = vunpack.c.l.bf16 %v358
      %v384 = vunpack.c.l.bf16 %v359
      %v385 = vunpack.c.l.bf16 %v360
      %v387 = vlaneseq
      %v388 = vshrl.u32 %v387, 7
      %v389 = vsub.s32 0, %v388
      %v390 = vrot.slane %v361, %v389
      %v392 = vmul.f32 %v362, %v390
      %v393 = vmul.f32 %v363, %v390
      %v394 = vmul.f32 %v364, %v390
      %v395 = vmul.f32 %v365, %v390
      %v396 = vmul.f32 %v366, %v390
      %v397 = vmul.f32 %v367, %v390
      %v398 = vmul.f32 %v368, %v390
      %v399 = vmul.f32 %v369, %v390
      %v400 = vmul.f32 %v370, %v390
      %v401 = vmul.f32 %v371, %v390
      %v402 = vmul.f32 %v372, %v390
      %v403 = vmul.f32 %v373, %v390
      %v404 = vmul.f32 %v374, %v390
      %v405 = vmul.f32 %v375, %v390
      %v406 = vmul.f32 %v376, %v390
      %v407 = vmul.f32 %v377, %v390
      %v408 = vmul.f32 %v378, %v390
      %v409 = vmul.f32 %v379, %v390
      %v410 = vmul.f32 %v380, %v390
      %v411 = vmul.f32 %v381, %v390
      %v412 = vmul.f32 %v382, %v390
      %v413 = vmul.f32 %v383, %v390
      %v414 = vmul.f32 %v384, %v390
      %v415 = vmul.f32 %v385, %v390
      %v416 = vld [vmem:[%s2] sm:$0x1]
      %v418 = vlaneseq
      %v419 = vshrl.u32 %v418, 7
      %v420 = vsub.s32 0, %v419
      %v421 = vrot.slane %v416, %v420
      %v423 = vadd.f32 %v392, %v421
      %v424 = vadd.f32 %v393, %v421
      %v425 = vadd.f32 %v394, %v421
      %v426 = vadd.f32 %v395, %v421
      %v427 = vadd.f32 %v396, %v421
      %v428 = vadd.f32 %v397, %v421
      %v429 = vadd.f32 %v398, %v421
      %v430 = vadd.f32 %v399, %v421
      %v431 = vadd.f32 %v400, %v421
      %v432 = vadd.f32 %v401, %v421
      %v433 = vadd.f32 %v402, %v421
      %v434 = vadd.f32 %v403, %v421
      %v435 = vadd.f32 %v404, %v421
      %v436 = vadd.f32 %v405, %v421
      %v437 = vadd.f32 %v406, %v421
      %v438 = vadd.f32 %v407, %v421
      %v439 = vadd.f32 %v408, %v421
      %v440 = vadd.f32 %v409, %v421
      %v441 = vadd.f32 %v410, %v421
      %v442 = vadd.f32 %v411, %v421
      %v443 = vadd.f32 %v412, %v421
      %v444 = vadd.f32 %v413, %v421
      %v445 = vadd.f32 %v414, %v421
      %v446 = vadd.f32 %v415, %v421
      %v447 = vmax.f32 %v423, 0.0
      %v448 = vmax.f32 %v424, 0.0
      %v449 = vmax.f32 %v425, 0.0
      %v450 = vmax.f32 %v426, 0.0
      %v451 = vmax.f32 %v427, 0.0
      %v452 = vmax.f32 %v428, 0.0
      %v453 = vmax.f32 %v429, 0.0
      %v454 = vmax.f32 %v430, 0.0
      %v455 = vmax.f32 %v431, 0.0
      %v456 = vmax.f32 %v432, 0.0
      %v457 = vmax.f32 %v433, 0.0
      %v458 = vmax.f32 %v434, 0.0
      %v459 = vmax.f32 %v435, 0.0
      %v460 = vmax.f32 %v436, 0.0
      %v461 = vmax.f32 %v437, 0.0
      %v462 = vmax.f32 %v438, 0.0
      %v463 = vmax.f32 %v439, 0.0
      %v464 = vmax.f32 %v440, 0.0
      %v465 = vmax.f32 %v441, 0.0
      %v466 = vmax.f32 %v442, 0.0
      %v467 = vmax.f32 %v443, 0.0
      %v468 = vmax.f32 %v444, 0.0
      %v469 = vmax.f32 %v445, 0.0
      %v470 = vmax.f32 %v446, 0.0
      %v471 = vpack.c.bf16 %v448, %v447
      %v472 = vpack.c.bf16 %v450, %v449
      %v473 = vpack.c.bf16 %v452, %v451
      %v474 = vpack.c.bf16 %v454, %v453
      %v475 = vpack.c.bf16 %v456, %v455
      %v476 = vpack.c.bf16 %v458, %v457
      %v477 = vpack.c.bf16 %v460, %v459
      %v478 = vpack.c.bf16 %v462, %v461
      %v479 = vpack.c.bf16 %v464, %v463
      %v480 = vpack.c.bf16 %v466, %v465
      %v481 = vpack.c.bf16 %v468, %v467
      %v482 = vpack.c.bf16 %v470, %v469
      %v495 = vunpack.c.l.b16 %v471
      %v496 = vunpack.c.h.b16 %v471
      %v497 = vunpack.c.l.b16 %v472
      %v498 = vunpack.c.h.b16 %v472
      %v499 = vunpack.c.l.b16 %v473
      %v500 = vunpack.c.h.b16 %v473
      %v501 = vunpack.c.l.b16 %v474
      %v502 = vunpack.c.h.b16 %v474
      %v503 = vunpack.c.l.b16 %v475
      %v504 = vunpack.c.h.b16 %v475
      %v505 = vunpack.c.l.b16 %v476
      %v506 = vunpack.c.h.b16 %v476
      %v507 = vunpack.c.l.b16 %v477
      %v508 = vunpack.c.h.b16 %v477
      %v509 = vunpack.c.l.b16 %v478
      %v510 = vunpack.c.h.b16 %v478
      %v511 = vunpack.c.l.b16 %v479
      %v512 = vunpack.c.h.b16 %v479
      %v513 = vunpack.c.l.b16 %v480
      %v514 = vunpack.c.h.b16 %v480
      %v515 = vunpack.c.l.b16 %v481
      %v516 = vunpack.c.h.b16 %v481
      %v517 = vunpack.c.l.b16 %v482
      %v518 = vunpack.c.h.b16 %v482
      %v519 = vpack.c.b16 %v495, %v495
      %v520 = vpack.c.b16 %v496, %v496
      %v521 = vpack.c.b16 %v497, %v497
      %v522 = vpack.c.b16 %v498, %v498
      %v523 = vpack.c.b16 %v499, %v499
      %v524 = vpack.c.b16 %v500, %v500
      %v525 = vpack.c.b16 %v501, %v501
      %v526 = vpack.c.b16 %v502, %v502
      %v527 = vpack.c.b16 %v503, %v503
      %v528 = vpack.c.b16 %v504, %v504
      %v529 = vpack.c.b16 %v505, %v505
      %v530 = vpack.c.b16 %v506, %v506
      %v531 = vpack.c.b16 %v507, %v507
      %v532 = vpack.c.b16 %v508, %v508
      %v533 = vpack.c.b16 %v509, %v509
      %v534 = vpack.c.b16 %v510, %v510
      %v535 = vpack.c.b16 %v511, %v511
      %v536 = vpack.c.b16 %v512, %v512
      %v537 = vpack.c.b16 %v513, %v513
      %v538 = vpack.c.b16 %v514, %v514
      %v539 = vpack.c.b16 %v515, %v515
      %v540 = vpack.c.b16 %v516, %v516
      %v541 = vpack.c.b16 %v517, %v517
      %v542 = vpack.c.b16 %v518, %v518
      %vm543 = vsmask.f32 4368
      %vm544 = vmor %vm234, %vm543
      %v546 = vshrl.u32 %v519, 16
      %v548 = vrot.slane %v546, 7
      %v549 = vshll.u32 %v519, 16
      %v551 = vor.u32 %v548, %v549
      %v552 = vrot.slane %v548, 4
      %v554 = vshrl.u32 %v520, 16
      %v556 = vrot.slane %v554, 7
      %v557 = vshll.u32 %v520, 16
      %v559 = vor.u32 %v556, %v557
      %v560 = vsel %vm544, %v552, %v559
      %v562 = vshrl.u32 %v521, 16
      %v564 = vrot.slane %v562, 7
      %v565 = vshll.u32 %v521, 16
      %v567 = vor.u32 %v564, %v565
      %v568 = vrot.slane %v564, 4
      %v570 = vshrl.u32 %v522, 16
      %v572 = vrot.slane %v570, 7
      %v573 = vshll.u32 %v522, 16
      %v575 = vor.u32 %v572, %v573
      %v576 = vsel %vm544, %v568, %v575
      %v578 = vshrl.u32 %v523, 16
      %v580 = vrot.slane %v578, 7
      %v581 = vshll.u32 %v523, 16
      %v583 = vor.u32 %v580, %v581
      %v584 = vrot.slane %v580, 4
      %v586 = vshrl.u32 %v524, 16
      %v588 = vrot.slane %v586, 7
      %v589 = vshll.u32 %v524, 16
      %v591 = vor.u32 %v588, %v589
      %v592 = vsel %vm544, %v584, %v591
      %v594 = vshrl.u32 %v525, 16
      %v596 = vrot.slane %v594, 7
      %v597 = vshll.u32 %v525, 16
      %v599 = vor.u32 %v596, %v597
      %v600 = vrot.slane %v596, 4
      %v602 = vshrl.u32 %v526, 16
      %v604 = vrot.slane %v602, 7
      %v605 = vshll.u32 %v526, 16
      %v607 = vor.u32 %v604, %v605
      %v608 = vsel %vm544, %v600, %v607
      %v610 = vshrl.u32 %v527, 16
      %v612 = vrot.slane %v610, 7
      %v613 = vshll.u32 %v527, 16
      %v615 = vor.u32 %v612, %v613
      %v616 = vrot.slane %v612, 4
      %v618 = vshrl.u32 %v528, 16
      %v620 = vrot.slane %v618, 7
      %v621 = vshll.u32 %v528, 16
      %v623 = vor.u32 %v620, %v621
      %v624 = vsel %vm544, %v616, %v623
      %v626 = vshrl.u32 %v529, 16
      %v628 = vrot.slane %v626, 7
      %v629 = vshll.u32 %v529, 16
      %v631 = vor.u32 %v628, %v629
      %v632 = vrot.slane %v628, 4
      %v634 = vshrl.u32 %v530, 16
      %v636 = vrot.slane %v634, 7
      %v637 = vshll.u32 %v530, 16
      %v639 = vor.u32 %v636, %v637
      %v640 = vsel %vm544, %v632, %v639
      %v642 = vshrl.u32 %v531, 16
      %v644 = vrot.slane %v642, 7
      %v645 = vshll.u32 %v531, 16
      %v647 = vor.u32 %v644, %v645
      %v648 = vrot.slane %v644, 4
      %v650 = vshrl.u32 %v532, 16
      %v652 = vrot.slane %v650, 7
      %v653 = vshll.u32 %v532, 16
      %v655 = vor.u32 %v652, %v653
      %v656 = vsel %vm544, %v648, %v655
      %v658 = vshrl.u32 %v533, 16
      %v660 = vrot.slane %v658, 7
      %v661 = vshll.u32 %v533, 16
      %v663 = vor.u32 %v660, %v661
      %v664 = vrot.slane %v660, 4
      %v666 = vshrl.u32 %v534, 16
      %v668 = vrot.slane %v666, 7
      %v669 = vshll.u32 %v534, 16
      %v671 = vor.u32 %v668, %v669
      %v672 = vsel %vm544, %v664, %v671
      %v674 = vshrl.u32 %v535, 16
      %v676 = vrot.slane %v674, 7
      %v677 = vshll.u32 %v535, 16
      %v679 = vor.u32 %v676, %v677
      %v680 = vrot.slane %v676, 4
      %v682 = vshrl.u32 %v536, 16
      %v684 = vrot.slane %v682, 7
      %v685 = vshll.u32 %v536, 16
      %v687 = vor.u32 %v684, %v685
      %v688 = vsel %vm544, %v680, %v687
      %v690 = vshrl.u32 %v537, 16
      %v692 = vrot.slane %v690, 7
      %v693 = vshll.u32 %v537, 16
      %v695 = vor.u32 %v692, %v693
      %v696 = vrot.slane %v692, 4
      %v698 = vshrl.u32 %v538, 16
      %v700 = vrot.slane %v698, 7
      %v701 = vshll.u32 %v538, 16
      %v703 = vor.u32 %v700, %v701
      %v704 = vsel %vm544, %v696, %v703
      %v706 = vshrl.u32 %v539, 16
      %v708 = vrot.slane %v706, 7
      %v709 = vshll.u32 %v539, 16
      %v711 = vor.u32 %v708, %v709
      %v712 = vrot.slane %v708, 4
      %v714 = vshrl.u32 %v540, 16
      %v716 = vrot.slane %v714, 7
      %v717 = vshll.u32 %v540, 16
      %v719 = vor.u32 %v716, %v717
      %v720 = vsel %vm544, %v712, %v719
      %v722 = vshrl.u32 %v541, 16
      %v724 = vrot.slane %v722, 7
      %v725 = vshll.u32 %v541, 16
      %v727 = vor.u32 %v724, %v725
      %v728 = vrot.slane %v724, 4
      %v730 = vshrl.u32 %v542, 16
      %v732 = vrot.slane %v730, 7
      %v733 = vshll.u32 %v542, 16
      %v735 = vor.u32 %v732, %v733
      %v736 = vsel %vm544, %v728, %v735
      %s761 = scalar_lea.vmem [#allocation2], 12
      %vm762 = vcmask 1043456
      %vm763 = vsmask.f32 7938
      %vm764 = vmand %vm762, %vm763
      %v765 = vld [vmem:[%s761] sm:$0xf]
      %v766 = vsel %vm764, %v551, %v765
      %767 = vst [vmem:[%s761] sm:$0xf] %v766
      %vm768 = vcmask 1042432
      %vm769 = vsmask.f32 2304
      %vm770 = vmand %vm768, %vm769
      %v771 = vld [vmem:[%s761 + $0x4] sm:$0x7]
      %v772 = vsel %vm770, %v560, %v771
      %773 = vst [vmem:[%s761 + $0x4] sm:$0x7] %v772
      %v774 = vld [vmem:[%s761 + $0xc] sm:$0xf]
      %v775 = vsel %vm764, %v567, %v774
      %776 = vst [vmem:[%s761 + $0xc] sm:$0xf] %v775
      %v777 = vld [vmem:[%s761 + $0x10] sm:$0x7]
      %v778 = vsel %vm770, %v576, %v777
      %779 = vst [vmem:[%s761 + $0x10] sm:$0x7] %v778
      %v780 = vld [vmem:[%s761 + $0x18] sm:$0xf]
      %v781 = vsel %vm764, %v583, %v780
      %782 = vst [vmem:[%s761 + $0x18] sm:$0xf] %v781
      %v783 = vld [vmem:[%s761 + $0x1c] sm:$0x7]
      %v784 = vsel %vm770, %v592, %v783
      %785 = vst [vmem:[%s761 + $0x1c] sm:$0x7] %v784
      %v786 = vld [vmem:[%s761 + $0x24] sm:$0xf]
      %v787 = vsel %vm764, %v599, %v786
      %788 = vst [vmem:[%s761 + $0x24] sm:$0xf] %v787
      %v789 = vld [vmem:[%s761 + $0x28] sm:$0x7]
      %v790 = vsel %vm770, %v608, %v789
      %791 = vst [vmem:[%s761 + $0x28] sm:$0x7] %v790
      %v792 = vld [vmem:[%s761 + $0x30] sm:$0xf]
      %v793 = vsel %vm764, %v615, %v792
      %794 = vst [vmem:[%s761 + $0x30] sm:$0xf] %v793
      %v795 = vld [vmem:[%s761 + $0x34] sm:$0x7]
      %v796 = vsel %vm770, %v624, %v795
      %797 = vst [vmem:[%s761 + $0x34] sm:$0x7] %v796
      %v798 = vld [vmem:[%s761 + $0x3c] sm:$0xf]
      %v799 = vsel %vm764, %v631, %v798
      %800 = vst [vmem:[%s761 + $0x3c] sm:$0xf] %v799
      %v801 = vld [vmem:[%s761 + $0x40] sm:$0x7]
      %v802 = vsel %vm770, %v640, %v801
      %803 = vst [vmem:[%s761 + $0x40] sm:$0x7] %v802
      %v804 = vld [vmem:[%s761 + $0x48] sm:$0xf]
      %v805 = vsel %vm764, %v647, %v804
      %806 = vst [vmem:[%s761 + $0x48] sm:$0xf] %v805
      %v807 = vld [vmem:[%s761 + $0x4c] sm:$0x7]
      %v808 = vsel %vm770, %v656, %v807
      %809 = vst [vmem:[%s761 + $0x4c] sm:$0x7] %v808
      %v810 = vld [vmem:[%s761 + $0x54] sm:$0xf]
      %v811 = vsel %vm764, %v663, %v810
      %812 = vst [vmem:[%s761 + $0x54] sm:$0xf] %v811
      %v813 = vld [vmem:[%s761 + $0x58] sm:$0x7]
      %v814 = vsel %vm770, %v672, %v813
      %815 = vst [vmem:[%s761 + $0x58] sm:$0x7] %v814
      %v816 = vld [vmem:[%s761 + $0x60] sm:$0xf]
      %v817 = vsel %vm764, %v679, %v816
      %818 = vst [vmem:[%s761 + $0x60] sm:$0xf] %v817
      %v819 = vld [vmem:[%s761 + $0x64] sm:$0x7]
      %v820 = vsel %vm770, %v688, %v819
      %821 = vst [vmem:[%s761 + $0x64] sm:$0x7] %v820
      %v822 = vld [vmem:[%s761 + $0x6c] sm:$0xf]
      %v823 = vsel %vm764, %v695, %v822
      %824 = vst [vmem:[%s761 + $0x6c] sm:$0xf] %v823
      %v825 = vld [vmem:[%s761 + $0x70] sm:$0x7]
      %v826 = vsel %vm770, %v704, %v825
      %827 = vst [vmem:[%s761 + $0x70] sm:$0x7] %v826
      %v828 = vld [vmem:[%s761 + $0x78] sm:$0xf]
      %v829 = vsel %vm764, %v711, %v828
      %830 = vst [vmem:[%s761 + $0x78] sm:$0xf] %v829
      %v831 = vld [vmem:[%s761 + $0x7c] sm:$0x7]
      %v832 = vsel %vm770, %v720, %v831
      %833 = vst [vmem:[%s761 + $0x7c] sm:$0x7] %v832
      %v834 = vld [vmem:[%s761 + $0x84] sm:$0xf]
      %v835 = vsel %vm764, %v727, %v834
      %836 = vst [vmem:[%s761 + $0x84] sm:$0xf] %v835
      %v837 = vld [vmem:[%s761 + $0x88] sm:$0x7]
      %v838 = vsel %vm770, %v736, %v837
      %839 = vst [vmem:[%s761 + $0x88] sm:$0x7] %v838
      %v840 = vld [vmem:[#allocation2] sm:$0xf]
      %v841 = vld [vmem:[#allocation2 + $0x4] sm:$0xf]
      %v842 = vld [vmem:[#allocation2 + $0x8] sm:$0xf]
      %v843 = vld [vmem:[#allocation2 + $0xc] sm:$0xf]
      %v844 = vld [vmem:[#allocation2 + $0x10] sm:$0xf]
      %v845 = vld [vmem:[#allocation2 + $0x14] sm:$0xf]
      %v846 = vld [vmem:[#allocation2 + $0x18] sm:$0xf]
      %v847 = vld [vmem:[#allocation2 + $0x1c] sm:$0xf]
      %v848 = vld [vmem:[#allocation2 + $0x20] sm:$0xf]
      %v849 = vld [vmem:[#allocation2 + $0x24] sm:$0xf]
      %v850 = vld [vmem:[#allocation2 + $0x28] sm:$0xf]
      %v851 = vld [vmem:[#allocation2 + $0x2c] sm:$0xf]
      %v852 = vld [vmem:[#allocation2 + $0x30] sm:$0xf]
      %v853 = vld [vmem:[#allocation2 + $0x34] sm:$0xf]
      %v854 = vld [vmem:[#allocation2 + $0x38] sm:$0xf]
      %v855 = vld [vmem:[#allocation2 + $0x3c] sm:$0xf]
      %v856 = vld [vmem:[#allocation2 + $0x40] sm:$0xf]
      %v857 = vld [vmem:[#allocation2 + $0x44] sm:$0xf]
      %v858 = vld [vmem:[#allocation2 + $0x48] sm:$0xf]
      %v859 = vld [vmem:[#allocation2 + $0x4c] sm:$0xf]
      %v860 = vld [vmem:[#allocation2 + $0x50] sm:$0xf]
      %v861 = vld [vmem:[#allocation2 + $0x54] sm:$0xf]
      %v862 = vld [vmem:[#allocation2 + $0x58] sm:$0xf]
      %v863 = vld [vmem:[#allocation2 + $0x5c] sm:$0xf]
      %v864 = vld [vmem:[#allocation2 + $0x60] sm:$0xf]
      %v865 = vld [vmem:[#allocation2 + $0x64] sm:$0xf]
      %v866 = vld [vmem:[#allocation2 + $0x68] sm:$0xf]
      %v867 = vld [vmem:[#allocation2 + $0x6c] sm:$0xf]
      %v868 = vld [vmem:[#allocation2 + $0x70] sm:$0xf]
      %v869 = vld [vmem:[#allocation2 + $0x74] sm:$0xf]
      %v870 = vld [vmem:[#allocation2 + $0x78] sm:$0xf]
      %v871 = vld [vmem:[#allocation2 + $0x7c] sm:$0xf]
      %v872 = vld [vmem:[#allocation2 + $0x80] sm:$0xf]
      %v873 = vld [vmem:[#allocation2 + $0x84] sm:$0xf]
      %v874 = vld [vmem:[#allocation2 + $0x88] sm:$0xf]
      %v875 = vld [vmem:[#allocation2 + $0x8c] sm:$0xf]
      %v876 = vld [vmem:[#allocation2 + $0x90] sm:$0xf]
      %v877 = vld [vmem:[#allocation2 + $0x94] sm:$0xf]
      %v878 = vld [vmem:[#allocation2 + $0x98] sm:$0xf]
      %v879 = vld [vmem:[#allocation2 + $0x9c] sm:$0xf]
      %v880 = vld [vmem:[#allocation2 + $0xa0] sm:$0xf]
      %v881 = vld [vmem:[#allocation2 + $0xa4] sm:$0xf]
      %v910 = vunpack.c.l.b16 %v840
      %v911 = vunpack.c.l.b16 %v841
      %v912 = vunpack.c.l.b16 %v843
      %v913 = vunpack.c.l.b16 %v844
      %v914 = vunpack.c.l.b16 %v846
      %v915 = vunpack.c.l.b16 %v847
      %v916 = vunpack.c.l.b16 %v849
      %v917 = vunpack.c.l.b16 %v850
      %v918 = vunpack.c.l.b16 %v852
      %v919 = vunpack.c.l.b16 %v853
      %v920 = vunpack.c.l.b16 %v855
      %v921 = vunpack.c.l.b16 %v856
      %v922 = vunpack.c.l.b16 %v858
      %v923 = vunpack.c.l.b16 %v859
      %v924 = vunpack.c.l.b16 %v861
      %v925 = vunpack.c.l.b16 %v862
      %v926 = vunpack.c.l.b16 %v864
      %v927 = vunpack.c.l.b16 %v865
      %v928 = vunpack.c.l.b16 %v867
      %v929 = vunpack.c.l.b16 %v868
      %v930 = vunpack.c.l.b16 %v870
      %v931 = vunpack.c.l.b16 %v871
      %v932 = vunpack.c.l.b16 %v873
      %v933 = vunpack.c.l.b16 %v874
      %v934 = vunpack.c.l.b16 %v876
      %v935 = vunpack.c.l.b16 %v877
      %v936 = vunpack.c.l.b16 %v879
      %v937 = vunpack.c.l.b16 %v880
      %v938 = vpack.c.b16 %v911, %v910
      %v939 = vpack.c.b16 %v913, %v912
      %v940 = vpack.c.b16 %v915, %v914
      %v941 = vpack.c.b16 %v917, %v916
      %v942 = vpack.c.b16 %v919, %v918
      %v943 = vpack.c.b16 %v921, %v920
      %v944 = vpack.c.b16 %v923, %v922
      %v945 = vpack.c.b16 %v925, %v924
      %v946 = vpack.c.b16 %v927, %v926
      %v947 = vpack.c.b16 %v929, %v928
      %v948 = vpack.c.b16 %v931, %v930
      %v949 = vpack.c.b16 %v933, %v932
      %v950 = vpack.c.b16 %v935, %v934
      %v951 = vpack.c.b16 %v937, %v936
      %v980 = vunpack.c.l.b16 %v842
      %v981 = vunpack.c.l.b16 %v845
      %v982 = vunpack.c.l.b16 %v848
      %v983 = vunpack.c.l.b16 %v851
      %v984 = vunpack.c.l.b16 %v854
      %v985 = vunpack.c.l.b16 %v857
      %v986 = vunpack.c.l.b16 %v860
      %v987 = vunpack.c.l.b16 %v863
      %v988 = vunpack.c.l.b16 %v866
      %v989 = vunpack.c.l.b16 %v869
      %v990 = vunpack.c.l.b16 %v872
      %v991 = vunpack.c.l.b16 %v875
      %v992 = vunpack.c.l.b16 %v878
      %v993 = vunpack.c.l.b16 %v881
      %v994 = vpack.c.b16 %v980, %v980
      %v995 = vpack.c.b16 %v981, %v981
      %v996 = vpack.c.b16 %v982, %v982
      %v997 = vpack.c.b16 %v983, %v983
      %v998 = vpack.c.b16 %v984, %v984
      %v999 = vpack.c.b16 %v985, %v985
      %v1000 = vpack.c.b16 %v986, %v986
      %v1001 = vpack.c.b16 %v987, %v987
      %v1002 = vpack.c.b16 %v988, %v988
      %v1003 = vpack.c.b16 %v989, %v989
      %v1004 = vpack.c.b16 %v990, %v990
      %v1005 = vpack.c.b16 %v991, %v991
      %v1006 = vpack.c.b16 %v992, %v992
      %v1007 = vpack.c.b16 %v993, %v993
      %vm1008 = vsmask.f32 7424
      %v1010 = vshrl.u32 %v938, 16
      %v1012 = vshll.u32 %v938, 16
      %v1014 = vrot.slane %v1012, 1
      %v1015 = vor.u32 %v1010, %v1014
      %v1017 = vshll.u32 %v994, 16
      %v1019 = vrot.slane %v1017, 1
      %v1020 = vsel %vm1008, %v1015, %v1019
      %v1022 = vshrl.u32 %v939, 16
      %v1024 = vshll.u32 %v939, 16
      %v1026 = vrot.slane %v1024, 1
      %v1027 = vor.u32 %v1022, %v1026
      %v1029 = vshll.u32 %v995, 16
      %v1031 = vrot.slane %v1029, 1
      %v1032 = vsel %vm1008, %v1027, %v1031
      %v1034 = vshrl.u32 %v940, 16
      %v1036 = vshll.u32 %v940, 16
      %v1038 = vrot.slane %v1036, 1
      %v1039 = vor.u32 %v1034, %v1038
      %v1041 = vshll.u32 %v996, 16
      %v1043 = vrot.slane %v1041, 1
      %v1044 = vsel %vm1008, %v1039, %v1043
      %v1046 = vshrl.u32 %v941, 16
      %v1048 = vshll.u32 %v941, 16
      %v1050 = vrot.slane %v1048, 1
      %v1051 = vor.u32 %v1046, %v1050
      %v1053 = vshll.u32 %v997, 16
      %v1055 = vrot.slane %v1053, 1
      %v1056 = vsel %vm1008, %v1051, %v1055
      %v1058 = vshrl.u32 %v942, 16
      %v1060 = vshll.u32 %v942, 16
      %v1062 = vrot.slane %v1060, 1
      %v1063 = vor.u32 %v1058, %v1062
      %v1065 = vshll.u32 %v998, 16
      %v1067 = vrot.slane %v1065, 1
      %v1068 = vsel %vm1008, %v1063, %v1067
      %v1070 = vshrl.u32 %v943, 16
      %v1072 = vshll.u32 %v943, 16
      %v1074 = vrot.slane %v1072, 1
      %v1075 = vor.u32 %v1070, %v1074
      %v1077 = vshll.u32 %v999, 16
      %v1079 = vrot.slane %v1077, 1
      %v1080 = vsel %vm1008, %v1075, %v1079
      %v1082 = vshrl.u32 %v944, 16
      %v1084 = vshll.u32 %v944, 16
      %v1086 = vrot.slane %v1084, 1
      %v1087 = vor.u32 %v1082, %v1086
      %v1089 = vshll.u32 %v1000, 16
      %v1091 = vrot.slane %v1089, 1
      %v1092 = vsel %vm1008, %v1087, %v1091
      %v1094 = vshrl.u32 %v945, 16
      %v1096 = vshll.u32 %v945, 16
      %v1098 = vrot.slane %v1096, 1
      %v1099 = vor.u32 %v1094, %v1098
      %v1101 = vshll.u32 %v1001, 16
      %v1103 = vrot.slane %v1101, 1
      %v1104 = vsel %vm1008, %v1099, %v1103
      %v1106 = vshrl.u32 %v946, 16
      %v1108 = vshll.u32 %v946, 16
      %v1110 = vrot.slane %v1108, 1
      %v1111 = vor.u32 %v1106, %v1110
      %v1113 = vshll.u32 %v1002, 16
      %v1115 = vrot.slane %v1113, 1
      %v1116 = vsel %vm1008, %v1111, %v1115
      %v1118 = vshrl.u32 %v947, 16
      %v1120 = vshll.u32 %v947, 16
      %v1122 = vrot.slane %v1120, 1
      %v1123 = vor.u32 %v1118, %v1122
      %v1125 = vshll.u32 %v1003, 16
      %v1127 = vrot.slane %v1125, 1
      %v1128 = vsel %vm1008, %v1123, %v1127
      %v1130 = vshrl.u32 %v948, 16
      %v1132 = vshll.u32 %v948, 16
      %v1134 = vrot.slane %v1132, 1
      %v1135 = vor.u32 %v1130, %v1134
      %v1137 = vshll.u32 %v1004, 16
      %v1139 = vrot.slane %v1137, 1
      %v1140 = vsel %vm1008, %v1135, %v1139
      %v1142 = vshrl.u32 %v949, 16
      %v1144 = vshll.u32 %v949, 16
      %v1146 = vrot.slane %v1144, 1
      %v1147 = vor.u32 %v1142, %v1146
      %v1149 = vshll.u32 %v1005, 16
      %v1151 = vrot.slane %v1149, 1
      %v1152 = vsel %vm1008, %v1147, %v1151
      %v1154 = vshrl.u32 %v950, 16
      %v1156 = vshll.u32 %v950, 16
      %v1158 = vrot.slane %v1156, 1
      %v1159 = vor.u32 %v1154, %v1158
      %v1161 = vshll.u32 %v1006, 16
      %v1163 = vrot.slane %v1161, 1
      %v1164 = vsel %vm1008, %v1159, %v1163
      %v1166 = vshrl.u32 %v951, 16
      %v1168 = vshll.u32 %v951, 16
      %v1170 = vrot.slane %v1168, 1
      %v1171 = vor.u32 %v1166, %v1170
      %v1173 = vshll.u32 %v1007, 16
      %v1175 = vrot.slane %v1173, 1
      %v1176 = vsel %vm1008, %v1171, %v1175
      %vm1191 = vcmask 1046528
      %v1192 = vrot.slane %v938, 1
      %v1193 = vrot.slane %v994, 1
      %v1194 = vsel %vm1191, %v1192, %v1193
      %v1195 = vrot.slane %v939, 1
      %v1196 = vrot.slane %v995, 1
      %v1197 = vsel %vm1191, %v1195, %v1196
      %v1198 = vrot.slane %v940, 1
      %v1199 = vrot.slane %v996, 1
      %v1200 = vsel %vm1191, %v1198, %v1199
      %v1201 = vrot.slane %v941, 1
      %v1202 = vrot.slane %v997, 1
      %v1203 = vsel %vm1191, %v1201, %v1202
      %v1204 = vrot.slane %v942, 1
      %v1205 = vrot.slane %v998, 1
      %v1206 = vsel %vm1191, %v1204, %v1205
      %v1207 = vrot.slane %v943, 1
      %v1208 = vrot.slane %v999, 1
      %v1209 = vsel %vm1191, %v1207, %v1208
      %v1210 = vrot.slane %v944, 1
      %v1211 = vrot.slane %v1000, 1
      %v1212 = vsel %vm1191, %v1210, %v1211
      %v1213 = vrot.slane %v945, 1
      %v1214 = vrot.slane %v1001, 1
      %v1215 = vsel %vm1191, %v1213, %v1214
      %v1216 = vrot.slane %v946, 1
      %v1217 = vrot.slane %v1002, 1
      %v1218 = vsel %vm1191, %v1216, %v1217
      %v1219 = vrot.slane %v947, 1
      %v1220 = vrot.slane %v1003, 1
      %v1221 = vsel %vm1191, %v1219, %v1220
      %v1222 = vrot.slane %v948, 1
      %v1223 = vrot.slane %v1004, 1
      %v1224 = vsel %vm1191, %v1222, %v1223
      %v1225 = vrot.slane %v949, 1
      %v1226 = vrot.slane %v1005, 1
      %v1227 = vsel %vm1191, %v1225, %v1226
      %v1228 = vrot.slane %v950, 1
      %v1229 = vrot.slane %v1006, 1
      %v1230 = vsel %vm1191, %v1228, %v1229
      %v1231 = vrot.slane %v951, 1
      %v1232 = vrot.slane %v1007, 1
      %v1233 = vsel %vm1191, %v1231, %v1232
      %v1248 = vld [vmem:[%s3] sm:$0xf]
      %v1249 = vld [vmem:[%s3 + $0x4] sm:$0xf]
      %v1250 = vld [vmem:[%s3 + $0x8] sm:$0xf]
      %v1251 = vld [vmem:[%s3 + $0xc] sm:$0xf]
      %v1252 = vld [vmem:[%s3 + $0x10] sm:$0xf]
      %v1253 = vld [vmem:[%s3 + $0x14] sm:$0xf]
      %v1254 = vld [vmem:[%s3 + $0x18] sm:$0xf]
      %v1255 = vld [vmem:[%s3 + $0x1c] sm:$0xf]
      %v1256 = vld [vmem:[%s3 + $0x20] sm:$0xf]
      %v1257 = vld [vmem:[%s3 + $0x24] sm:$0xf]
      %v1258 = vld [vmem:[%s3 + $0x28] sm:$0xf]
      %v1259 = vld [vmem:[%s3 + $0x2c] sm:$0xf]
      %v1260 = vld [vmem:[%s3 + $0x30] sm:$0xf]
      %v1261 = vld [vmem:[%s3 + $0x34] sm:$0xf]
      %v1262 = vld [vmem:[%s3 + $0x38] sm:$0xf]
      %v1263 = vld [vmem:[%s3 + $0x3c] sm:$0xf]
      %v1264 = vld [vmem:[%s3 + $0x40] sm:$0xf]
      %v1265 = vld [vmem:[%s3 + $0x44] sm:$0xf]
      %v1266 = vld [vmem:[%s3 + $0x48] sm:$0xf]
      %v1267 = vld [vmem:[%s3 + $0x4c] sm:$0xf]
      %v1268 = vld [vmem:[%s3 + $0x50] sm:$0xf]
      %v1269 = vld [vmem:[%s3 + $0x54] sm:$0xf]
      %v1270 = vld [vmem:[%s3 + $0x58] sm:$0xf]
      %v1271 = vld [vmem:[%s3 + $0x5c] sm:$0xf]
      %v1272 = vld [vmem:[%s3 + $0x60] sm:$0xf]
      %v1273 = vld [vmem:[%s3 + $0x64] sm:$0xf]
      %v1274 = vld [vmem:[%s3 + $0x68] sm:$0xf]
      %v1275 = vld [vmem:[%s3 + $0x6c] sm:$0xf]
      %v1276 = vld [vmem:[%s3 + $0x70] sm:$0xf]
      %v1277 = vld [vmem:[%s3 + $0x74] sm:$0xf]
      %v1278 = vld [vmem:[%s3 + $0x78] sm:$0xf]
      %v1279 = vld [vmem:[%s3 + $0x7c] sm:$0xf]
      %v1280 = vld [vmem:[%s3 + $0x80] sm:$0xf]
      %v1281 = vld [vmem:[%s3 + $0x84] sm:$0xf]
      %v1282 = vld [vmem:[%s3 + $0x88] sm:$0xf]
      %v1283 = vld [vmem:[%s3 + $0x8c] sm:$0xf]
      %v1284 = vld [vmem:[%s3 + $0x90] sm:$0xf]
      %v1285 = vld [vmem:[%s3 + $0x94] sm:$0xf]
      %v1286 = vld [vmem:[%s3 + $0x98] sm:$0xf]
      %v1287 = vld [vmem:[%s3 + $0x9c] sm:$0xf]
      %v1288 = vld [vmem:[%s3 + $0xa0] sm:$0xf]
      %v1289 = vld [vmem:[%s3 + $0xa4] sm:$0xf]
      %v1290 = vld [vmem:[%s3 + $0xa8] sm:$0xf]
      %v1291 = vld [vmem:[%s3 + $0xac] sm:$0xf]
      %v1292 = vld [vmem:[%s3 + $0xb0] sm:$0xf]
      %v1293 = vld [vmem:[%s3 + $0xb4] sm:$0xf]
      %v1294 = vld [vmem:[%s3 + $0xb8] sm:$0xf]
      %v1295 = vld [vmem:[%s3 + $0xbc] sm:$0xf]
      %s1296 = scalar_lea.vmem %s3, 192
      %v1297 = vld [vmem:[%s1296] sm:$0xf]
      %v1298 = vld [vmem:[%s1296 + $0x4] sm:$0xf]
      %v1299 = vld [vmem:[%s1296 + $0x8] sm:$0xf]
      %v1300 = vld [vmem:[%s1296 + $0xc] sm:$0xf]
      %v1301 = vld [vmem:[%s1296 + $0x10] sm:$0xf]
      %v1302 = vld [vmem:[%s1296 + $0x14] sm:$0xf]
      %v1303 = vld [vmem:[%s1296 + $0x18] sm:$0xf]
      %v1304 = vld [vmem:[%s1296 + $0x1c] sm:$0xf]
      %v1305 = vld [vmem:[%s1296 + $0x20] sm:$0xf]
      %v1306 = vld [vmem:[%s1296 + $0x24] sm:$0xf]
      %v1307 = vld [vmem:[%s1296 + $0x28] sm:$0xf]
      %v1308 = vld [vmem:[%s1296 + $0x2c] sm:$0xf]
      %v1309 = vld [vmem:[%s1296 + $0x30] sm:$0xf]
      %v1310 = vld [vmem:[%s1296 + $0x34] sm:$0xf]
      %v1311 = vld [vmem:[%s1296 + $0x38] sm:$0xf]
      %v1312 = vld [vmem:[%s1296 + $0x3c] sm:$0xf]
      %v1313 = vld [vmem:[%s1296 + $0x40] sm:$0xf]
      %v1314 = vld [vmem:[%s1296 + $0x44] sm:$0xf]
      %v1315 = vld [vmem:[%s1296 + $0x48] sm:$0xf]
      %v1316 = vld [vmem:[%s1296 + $0x4c] sm:$0xf]
      %v1317 = vld [vmem:[%s1296 + $0x50] sm:$0xf]
      %v1318 = vld [vmem:[%s1296 + $0x54] sm:$0xf]
      %v1319 = vld [vmem:[%s1296 + $0x58] sm:$0xf]
      %v1320 = vld [vmem:[%s1296 + $0x5c] sm:$0xf]
      %v1321 = vld [vmem:[%s1296 + $0x60] sm:$0xf]
      %v1322 = vld [vmem:[%s1296 + $0x64] sm:$0xf]
      %v1323 = vld [vmem:[%s1296 + $0x68] sm:$0xf]
      %v1324 = vld [vmem:[%s1296 + $0x6c] sm:$0xf]
      %v1325 = vld [vmem:[%s1296 + $0x70] sm:$0xf]
      %v1326 = vld [vmem:[%s1296 + $0x74] sm:$0xf]
      %v1327 = vld [vmem:[%s1296 + $0x78] sm:$0xf]
      %v1328 = vld [vmem:[%s1296 + $0x7c] sm:$0xf]
      %v1329 = vld [vmem:[%s1296 + $0x80] sm:$0xf]
      %v1330 = vld [vmem:[%s1296 + $0x84] sm:$0xf]
      %v1331 = vld [vmem:[%s1296 + $0x88] sm:$0xf]
      %v1332 = vld [vmem:[%s1296 + $0x8c] sm:$0xf]
      %v1333 = vld [vmem:[%s1296 + $0x90] sm:$0xf]
      %v1334 = vld [vmem:[%s1296 + $0x94] sm:$0xf]
      %v1335 = vld [vmem:[%s1296 + $0x98] sm:$0xf]
      %v1336 = vld [vmem:[%s1296 + $0x9c] sm:$0xf]
      %v1337 = vld [vmem:[%s1296 + $0xa0] sm:$0xf]
      %v1338 = vld [vmem:[%s1296 + $0xa4] sm:$0xf]
      %v1339 = vld [vmem:[%s1296 + $0xa8] sm:$0xf]
      %v1340 = vld [vmem:[%s1296 + $0xac] sm:$0xf]
      %v1341 = vld [vmem:[%s1296 + $0xb0] sm:$0xf]
      %v1342 = vld [vmem:[%s1296 + $0xb4] sm:$0xf]
      %v1343 = vld [vmem:[%s1296 + $0xb8] sm:$0xf]
      %v1344 = vld [vmem:[%s1296 + $0xbc] sm:$0xf]
      %v1393 = vunpack.c.l.b16 %v1297
      %v1394 = vunpack.c.l.b16 %v1298
      %v1395 = vunpack.c.l.b16 %v1299
      %v1396 = vunpack.c.l.b16 %v1300
      %v1397 = vunpack.c.l.b16 %v1301
      %v1398 = vunpack.c.l.b16 %v1302
      %v1399 = vunpack.c.l.b16 %v1303
      %v1400 = vunpack.c.l.b16 %v1304
      %v1401 = vunpack.c.l.b16 %v1305
      %v1402 = vunpack.c.l.b16 %v1306
      %v1403 = vunpack.c.l.b16 %v1307
      %v1404 = vunpack.c.l.b16 %v1308
      %v1405 = vunpack.c.l.b16 %v1309
      %v1406 = vunpack.c.l.b16 %v1310
      %v1407 = vunpack.c.l.b16 %v1311
      %v1408 = vunpack.c.l.b16 %v1312
      %v1409 = vunpack.c.l.b16 %v1313
      %v1410 = vunpack.c.l.b16 %v1314
      %v1411 = vunpack.c.l.b16 %v1315
      %v1412 = vunpack.c.l.b16 %v1316
      %v1413 = vunpack.c.l.b16 %v1317
      %v1414 = vunpack.c.l.b16 %v1318
      %v1415 = vunpack.c.l.b16 %v1319
      %v1416 = vunpack.c.l.b16 %v1320
      %v1417 = vunpack.c.l.b16 %v1321
      %v1418 = vunpack.c.l.b16 %v1322
      %v1419 = vunpack.c.l.b16 %v1323
      %v1420 = vunpack.c.l.b16 %v1324
      %v1421 = vunpack.c.l.b16 %v1325
      %v1422 = vunpack.c.l.b16 %v1326
      %v1423 = vunpack.c.l.b16 %v1327
      %v1424 = vunpack.c.l.b16 %v1328
      %v1425 = vunpack.c.l.b16 %v1329
      %v1426 = vunpack.c.l.b16 %v1330
      %v1427 = vunpack.c.l.b16 %v1331
      %v1428 = vunpack.c.l.b16 %v1332
      %v1429 = vunpack.c.l.b16 %v1333
      %v1430 = vunpack.c.l.b16 %v1334
      %v1431 = vunpack.c.l.b16 %v1335
      %v1432 = vunpack.c.l.b16 %v1336
      %v1433 = vunpack.c.l.b16 %v1337
      %v1434 = vunpack.c.l.b16 %v1338
      %v1435 = vunpack.c.l.b16 %v1339
      %v1436 = vunpack.c.l.b16 %v1340
      %v1437 = vunpack.c.l.b16 %v1341
      %v1438 = vunpack.c.l.b16 %v1342
      %v1439 = vunpack.c.l.b16 %v1343
      %v1440 = vunpack.c.l.b16 %v1344
      %v1441 = vpack.c.b16 %v1394, %v1393
      %v1442 = vpack.c.b16 %v1396, %v1395
      %v1443 = vpack.c.b16 %v1398, %v1397
      %v1444 = vpack.c.b16 %v1400, %v1399
      %v1445 = vpack.c.b16 %v1402, %v1401
      %v1446 = vpack.c.b16 %v1404, %v1403
      %v1447 = vpack.c.b16 %v1406, %v1405
      %v1448 = vpack.c.b16 %v1408, %v1407
      %v1449 = vpack.c.b16 %v1410, %v1409
      %v1450 = vpack.c.b16 %v1412, %v1411
      %v1451 = vpack.c.b16 %v1414, %v1413
      %v1452 = vpack.c.b16 %v1416, %v1415
      %v1453 = vpack.c.b16 %v1418, %v1417
      %v1454 = vpack.c.b16 %v1420, %v1419
      %v1455 = vpack.c.b16 %v1422, %v1421
      %v1456 = vpack.c.b16 %v1424, %v1423
      %v1457 = vpack.c.b16 %v1426, %v1425
      %v1458 = vpack.c.b16 %v1428, %v1427
      %v1459 = vpack.c.b16 %v1430, %v1429
      %v1460 = vpack.c.b16 %v1432, %v1431
      %v1461 = vpack.c.b16 %v1434, %v1433
      %v1462 = vpack.c.b16 %v1436, %v1435
      %v1463 = vpack.c.b16 %v1438, %v1437
      %v1464 = vpack.c.b16 %v1440, %v1439
      %1489 = vmatprep.subr.bf16.mxu0 0
      %1490 = vmatpush1.bf16.msra.mxu0 %v1441
      %1491 = vmatprep.subr.bf16.mxu0 0
      %1492 = vmatpush1.bf16.msra.mxu0 %v1442
      %1493 = vmatprep.subr.bf16.mxu0 0
      %1494 = vmatpush1.bf16.msra.mxu0 %v1443
      %1495 = vmatprep.subr.bf16.mxu0 0
      %1496 = vmatpush1.bf16.msra.mxu0 %v1444
      %1497 = vmatprep.subr.bf16.mxu0 0
      %1498 = vmatpush1.bf16.msra.mxu0 %v1445
      %1499 = vmatprep.subr.bf16.mxu0 0
      %1500 = vmatpush1.bf16.msra.mxu0 %v1446
      %1501 = vmatprep.subr.bf16.mxu0 0
      %1502 = vmatpush1.bf16.msra.mxu0 %v1447
      %1503 = vmatprep.subr.bf16.mxu0 0
      %1504 = vmatpush1.bf16.msra.mxu0 %v1448
      %1505 = vmatprep.subr.bf16.mxu0 0
      %1506 = vmatpush1.bf16.msra.mxu0 %v1449
      %1507 = vmatprep.subr.bf16.mxu0 0
      %1508 = vmatpush1.bf16.msra.mxu0 %v1450
      %1509 = vmatprep.subr.bf16.mxu0 0
      %1510 = vmatpush1.bf16.msra.mxu0 %v1451
      %1511 = vmatprep.subr.bf16.mxu0 0
      %1512 = vmatpush1.bf16.msra.mxu0 %v1452
      %1513 = vmatprep.subr.bf16.mxu0 0
      %1514 = vmatpush1.bf16.msra.mxu0 %v1453
      %1515 = vmatprep.subr.bf16.mxu0 0
      %1516 = vmatpush1.bf16.msra.mxu0 %v1454
      %1517 = vmatprep.subr.bf16.mxu0 0
      %1518 = vmatpush1.bf16.msra.mxu0 %v1455
      %1519 = vmatprep.subr.bf16.mxu0 0
      %1520 = vmatpush1.bf16.msra.mxu0 %v1456
      %1521 = vmatprep.mubr.bf16.mxu0 %v1032
      %1522 = vmatmul.mubr.bf16.gmra.mrb[0].mxu0 %v939
      %v1523 = vpop.f32.mrb[0].mxu0
      %v1524 = vadd.f32 0.0, %v1523
      %v1525 = vpop.f32.mrb[0].mxu0
      %v1526 = vpop.f32.mrb[0].mxu0
      %v1527 = vadd.f32 0.0, %v1526
      %v1528 = vpop.f32.mrb[0].mxu0
      %1529 = vmatprep.mubr.bf16.mxu0 %v1044
      %1530 = vmatmul.mubr.bf16.gmra.mrb[0].mxu0 %v940
      %v1531 = vpop.f32.mrb[0].mxu0
      %v1532 = vadd.f32 0.0, %v1531
      %v1533 = vpop.f32.mrb[0].mxu0
      %v1534 = vpop.f32.mrb[0].mxu0
      %v1535 = vadd.f32 0.0, %v1534
      %v1536 = vpop.f32.mrb[0].mxu0
      %1537 = vmatprep.mubr.bf16.mxu0 %v1056
      %1538 = vmatmul.mubr.bf16.gmra.mrb[0].mxu0 %v941
      %v1539 = vpop.f32.mrb[0].mxu0
      %v1540 = vadd.f32 0.0, %v1539
      %v1541 = vpop.f32.mrb[0].mxu0
      %v1542 = vpop.f32.mrb[0].mxu0
      %v1543 = vadd.f32 0.0, %v1542
      %v1544 = vpop.f32.mrb[0].mxu0
      %1545 = vmatprep.mubr.bf16.mxu0 %v1068
      %1546 = vmatmul.mubr.bf16.gmra.mrb[0].mxu0 %v942
      %v1547 = vpop.f32.mrb[0].mxu0
      %v1548 = vadd.f32 0.0, %v1547
      %v1549 = vpop.f32.mrb[0].mxu0
      %v1550 = vpop.f32.mrb[0].mxu0
      %v1551 = vadd.f32 0.0, %v1550
      %v1552 = vpop.f32.mrb[0].mxu0
      %1553 = vmatprep.mubr.bf16.mxu0 %v1080
      %1554 = vmatmul.mubr.bf16.gmra.mrb[0].mxu0 %v943
      %v1555 = vpop.f32.mrb[0].mxu0
      %v1556 = vadd.f32 0.0, %v1555
      %v1557 = vpop.f32.mrb[0].mxu0
      %v1558 = vpop.f32.mrb[0].mxu0
      %v1559 = vadd.f32 0.0, %v1558
      %v1560 = vpop.f32.mrb[0].mxu0
      %1561 = vmatprep.mubr.bf16.mxu0 %v1092
      %1562 = vmatmul.mubr.bf16.gmra.mrb[0].mxu0 %v944
      %v1563 = vpop.f32.mrb[0].mxu0
      %v1564 = vadd.f32 0.0, %v1563
      %v1565 = vpop.f32.mrb[0].mxu0
      %v1566 = vpop.f32.mrb[0].mxu0
      %v1567 = vadd.f32 0.0, %v1566
      %v1568 = vpop.f32.mrb[0].mxu0
      %1569 = vmatprep.mubr.bf16.mxu0 %v1104
      %1570 = vmatmul.mubr.bf16.gmra.mrb[0].mxu0 %v945
      %v1571 = vpop.f32.mrb[0].mxu0
      %v1572 = vadd.f32 0.0, %v1571
      %v1573 = vpop.f32.mrb[0].mxu0
      %v1574 = vpop.f32.mrb[0].mxu0
      %v1575 = vadd.f32 0.0, %v1574
      %v1576 = vpop.f32.mrb[0].mxu0
      %1577 = vmatprep.mubr.bf16.mxu0 %v1116
      %1578 = vmatmul.mubr.bf16.gmra.mrb[0].mxu0 %v946
      %v1579 = vpop.f32.mrb[0].mxu0
      %v1580 = vadd.f32 0.0, %v1579
      %v1581 = vpop.f32.mrb[0].mxu0
      %v1582 = vpop.f32.mrb[0].mxu0
      %v1583 = vadd.f32 0.0, %v1582
      %v1584 = vpop.f32.mrb[0].mxu0
      %1585 = vmatprep.mubr.bf16.mxu0 %v1128
      %1586 = vmatmul.mubr.bf16.gmra.mrb[0].mxu0 %v947
      %v1587 = vpop.f32.mrb[0].mxu0
      %v1588 = vadd.f32 0.0, %v1587
      %v1589 = vpop.f32.mrb[0].mxu0
      %v1590 = vpop.f32.mrb[0].mxu0
      %v1591 = vadd.f32 0.0, %v1590
      %v1592 = vpop.f32.mrb[0].mxu0
      %1593 = vmatprep.mubr.bf16.mxu0 %v1140
      %1594 = vmatmul.mubr.bf16.gmra.mrb[0].mxu0 %v948
      %v1595 = vpop.f32.mrb[0].mxu0
      %v1596 = vadd.f32 0.0, %v1595
      %v1597 = vpop.f32.mrb[0].mxu0
      %v1598 = vpop.f32.mrb[0].mxu0
      %v1599 = vadd.f32 0.0, %v1598
      %v1600 = vpop.f32.mrb[0].mxu0
      %1601 = vmatprep.mubr.bf16.mxu0 %v1152
      %1602 = vmatmul.mubr.bf16.gmra.mrb[0].mxu0 %v949
      %v1603 = vpop.f32.mrb[0].mxu0
      %v1604 = vadd.f32 0.0, %v1603
      %v1605 = vpop.f32.mrb[0].mxu0
      %v1606 = vpop.f32.mrb[0].mxu0
      %v1607 = vadd.f32 0.0, %v1606
      %v1608 = vpop.f32.mrb[0].mxu0
      %1609 = vmatprep.mubr.bf16.mxu0 %v1164
      %1610 = vmatmul.mubr.bf16.gmra.mrb[0].mxu0 %v950
      %v1611 = vpop.f32.mrb[0].mxu0
      %v1612 = vadd.f32 0.0, %v1611
      %v1613 = vpop.f32.mrb[0].mxu0
      %v1614 = vpop.f32.mrb[0].mxu0
      %v1615 = vadd.f32 0.0, %v1614
      %v1616 = vpop.f32.mrb[0].mxu0
      %1617 = vdwg.mxu0
      %1618 = vmatprep.subr.bf16.mxu0 0
      %1619 = vmatpush1.bf16.msra.mxu0 %v1457
      %1620 = vmatprep.subr.bf16.mxu0 0
      %1621 = vmatpush1.bf16.msra.mxu0 %v1458
      %1622 = vmatprep.subr.bf16.mxu0 0
      %1623 = vmatpush1.bf16.msra.mxu0 %v1459
      %1624 = vmatprep.subr.bf16.mxu0 0
      %1625 = vmatpush1.bf16.msra.mxu0 %v1460
      %1626 = vmatprep.subr.bf16.mxu0 0
      %1627 = vmatpush1.bf16.msra.mxu0 %v1461
      %1628 = vmatprep.subr.bf16.mxu0 0
      %1629 = vmatpush1.bf16.msra.mxu0 %v1462
      %1630 = vmatprep.subr.bf16.mxu0 0
      %1631 = vmatpush1.bf16.msra.mxu0 %v1463
      %1632 = vmatprep.subr.bf16.mxu0 0
      %1633 = vmatpush1.bf16.msra.mxu0 %v1464
      %1634 = vmatprep.subr.bf16.mxu0 0
      %1635 = vmatpush1.bf16.msra.mxu0 0
      %1636 = vmatprep.subr.bf16.mxu0 0
      %1637 = vmatpush1.bf16.msra.mxu0 0
      %1638 = vmatprep.subr.bf16.mxu0 0
      %1639 = vmatpush1.bf16.msra.mxu0 0
      %1640 = vmatprep.subr.bf16.mxu0 0
      %1641 = vmatpush1.bf16.msra.mxu0 0
      %1642 = vmatprep.subr.bf16.mxu0 0
      %1643 = vmatpush1.bf16.msra.mxu0 0
      %1644 = vmatprep.subr.bf16.mxu0 0
      %1645 = vmatpush1.bf16.msra.mxu0 0
      %1646 = vmatprep.subr.bf16.mxu0 0
      %1647 = vmatpush1.bf16.msra.mxu0 0
      %1648 = vmatprep.subr.bf16.mxu0 0
      %1649 = vmatpush1.bf16.msra.mxu0 0
      %1650 = vmatprep.mubr.bf16.mxu0 0
      %1651 = vmatmul.mubr.bf16.gmra.mrb[0].mxu0 %v1197
      %v1652 = vpop.f32.mrb[0].mxu0
      %v1653 = vadd.f32 %v1524, %v1652
      %v1654 = vpop.f32.mrb[0].mxu0
      %v1655 = vpop.f32.mrb[0].mxu0
      %v1656 = vadd.f32 %v1527, %v1655
      %v1657 = vpop.f32.mrb[0].mxu0
      %1658 = vmatprep.mubr.bf16.mxu0 0
      %1659 = vmatmul.mubr.bf16.gmra.mrb[0].mxu0 %v1200
      %v1660 = vpop.f32.mrb[0].mxu0
      %v1661 = vadd.f32 %v1532, %v1660
      %v1662 = vpop.f32.mrb[0].mxu0
      %v1663 = vpop.f32.mrb[0].mxu0
      %v1664 = vadd.f32 %v1535, %v1663
      %v1665 = vpop.f32.mrb[0].mxu0
      %1666 = vmatprep.mubr.bf16.mxu0 0
      %1667 = vmatmul.mubr.bf16.gmra.mrb[0].mxu0 %v1203
      %v1668 = vpop.f32.mrb[0].mxu0
      %v1669 = vadd.f32 %v1540, %v1668
      %v1670 = vpop.f32.mrb[0].mxu0
      %v1671 = vpop.f32.mrb[0].mxu0
      %v1672 = vadd.f32 %v1543, %v1671
      %v1673 = vpop.f32.mrb[0].mxu0
      %1674 = vmatprep.mubr.bf16.mxu0 0
      %1675 = vmatmul.mubr.bf16.gmra.mrb[0].mxu0 %v1206
      %v1676 = vpop.f32.mrb[0].mxu0
      %v1677 = vadd.f32 %v1548, %v1676
      %v1678 = vpop.f32.mrb[0].mxu0
      %v1679 = vpop.f32.mrb[0].mxu0
      %v1680 = vadd.f32 %v1551, %v1679
      %v1681 = vpop.f32.mrb[0].mxu0
      %1682 = vmatprep.mubr.bf16.mxu0 0
      %1683 = vmatmul.mubr.bf16.gmra.mrb[0].mxu0 %v1209
      %v1684 = vpop.f32.mrb[0].mxu0
      %v1685 = vadd.f32 %v1556, %v1684
      %v1686 = vpop.f32.mrb[0].mxu0
      %v1687 = vpop.f32.mrb[0].mxu0
      %v1688 = vadd.f32 %v1559, %v1687
      %v1689 = vpop.f32.mrb[0].mxu0
      %1690 = vmatprep.mubr.bf16.mxu0 0
      %1691 = vmatmul.mubr.bf16.gmra.mrb[0].mxu0 %v1212
      %v1692 = vpop.f32.mrb[0].mxu0
      %v1693 = vadd.f32 %v1564, %v1692
      %v1694 = vpop.f32.mrb[0].mxu0
      %v1695 = vpop.f32.mrb[0].mxu0
      %v1696 = vadd.f32 %v1567, %v1695
      %v1697 = vpop.f32.mrb[0].mxu0
      %1698 = vmatprep.mubr.bf16.mxu0 0
      %1699 = vmatmul.mubr.bf16.gmra.mrb[0].mxu0 %v1215
      %v1700 = vpop.f32.mrb[0].mxu0
      %v1701 = vadd.f32 %v1572, %v1700
      %v1702 = vpop.f32.mrb[0].mxu0
      %v1703 = vpop.f32.mrb[0].mxu0
      %v1704 = vadd.f32 %v1575, %v1703
      %v1705 = vpop.f32.mrb[0].mxu0
      %1706 = vmatprep.mubr.bf16.mxu0 0
      %1707 = vmatmul.mubr.bf16.gmra.mrb[0].mxu0 %v1218
      %v1708 = vpop.f32.mrb[0].mxu0
      %v1709 = vadd.f32 %v1580, %v1708
      %v1710 = vpop.f32.mrb[0].mxu0
      %v1711 = vpop.f32.mrb[0].mxu0
      %v1712 = vadd.f32 %v1583, %v1711
      %v1713 = vpop.f32.mrb[0].mxu0
      %1714 = vmatprep.mubr.bf16.mxu0 0
      %1715 = vmatmul.mubr.bf16.gmra.mrb[0].mxu0 %v1221
      %v1716 = vpop.f32.mrb[0].mxu0
      %v1717 = vadd.f32 %v1588, %v1716
      %v1718 = vpop.f32.mrb[0].mxu0
      %v1719 = vpop.f32.mrb[0].mxu0
      %v1720 = vadd.f32 %v1591, %v1719
      %v1721 = vpop.f32.mrb[0].mxu0
      %1722 = vmatprep.mubr.bf16.mxu0 0
      %1723 = vmatmul.mubr.bf16.gmra.mrb[0].mxu0 %v1224
      %v1724 = vpop.f32.mrb[0].mxu0
      %v1725 = vadd.f32 %v1596, %v1724
      %v1726 = vpop.f32.mrb[0].mxu0
      %v1727 = vpop.f32.mrb[0].mxu0
      %v1728 = vadd.f32 %v1599, %v1727
      %v1729 = vpop.f32.mrb[0].mxu0
      %1730 = vmatprep.mubr.bf16.mxu0 0
      %1731 = vmatmul.mubr.bf16.gmra.mrb[0].mxu0 %v1227
      %v1732 = vpop.f32.mrb[0].mxu0
      %v1733 = vadd.f32 %v1604, %v1732
      %v1734 = vpop.f32.mrb[0].mxu0
      %v1735 = vpop.f32.mrb[0].mxu0
      %v1736 = vadd.f32 %v1607, %v1735
      %v1737 = vpop.f32.mrb[0].mxu0
      %1738 = vmatprep.mubr.bf16.mxu0 0
      %1739 = vmatmul.mubr.bf16.gmra.mrb[0].mxu0 %v1230
      %v1740 = vpop.f32.mrb[0].mxu0
      %v1741 = vadd.f32 %v1612, %v1740
      %v1742 = vpop.f32.mrb[0].mxu0
      %v1743 = vpop.f32.mrb[0].mxu0
      %v1744 = vadd.f32 %v1615, %v1743
      %v1745 = vpop.f32.mrb[0].mxu0
      %1746 = vdwg.mxu0
      %v1795 = vunpack.c.l.b16 %v1248
      %v1796 = vunpack.c.l.b16 %v1249
      %v1797 = vunpack.c.l.b16 %v1250
      %v1798 = vunpack.c.l.b16 %v1251
      %v1799 = vunpack.c.l.b16 %v1252
      %v1800 = vunpack.c.l.b16 %v1253
      %v1801 = vunpack.c.l.b16 %v1254
      %v1802 = vunpack.c.l.b16 %v1255
      %v1803 = vunpack.c.l.b16 %v1256
      %v1804 = vunpack.c.l.b16 %v1257
      %v1805 = vunpack.c.l.b16 %v1258
      %v1806 = vunpack.c.l.b16 %v1259
      %v1807 = vunpack.c.l.b16 %v1260
      %v1808 = vunpack.c.l.b16 %v1261
      %v1809 = vunpack.c.l.b16 %v1262
      %v1810 = vunpack.c.l.b16 %v1263
      %v1811 = vunpack.c.l.b16 %v1264
      %v1812 = vunpack.c.l.b16 %v1265
      %v1813 = vunpack.c.l.b16 %v1266
      %v1814 = vunpack.c.l.b16 %v1267
      %v1815 = vunpack.c.l.b16 %v1268
      %v1816 = vunpack.c.l.b16 %v1269
      %v1817 = vunpack.c.l.b16 %v1270
      %v1818 = vunpack.c.l.b16 %v1271
      %v1819 = vunpack.c.l.b16 %v1272
      %v1820 = vunpack.c.l.b16 %v1273
      %v1821 = vunpack.c.l.b16 %v1274
      %v1822 = vunpack.c.l.b16 %v1275
      %v1823 = vunpack.c.l.b16 %v1276
      %v1824 = vunpack.c.l.b16 %v1277
      %v1825 = vunpack.c.l.b16 %v1278
      %v1826 = vunpack.c.l.b16 %v1279
      %v1827 = vunpack.c.l.b16 %v1280
      %v1828 = vunpack.c.l.b16 %v1281
      %v1829 = vunpack.c.l.b16 %v1282
      %v1830 = vunpack.c.l.b16 %v1283
      %v1831 = vunpack.c.l.b16 %v1284
      %v1832 = vunpack.c.l.b16 %v1285
      %v1833 = vunpack.c.l.b16 %v1286
      %v1834 = vunpack.c.l.b16 %v1287
      %v1835 = vunpack.c.l.b16 %v1288
      %v1836 = vunpack.c.l.b16 %v1289
      %v1837 = vunpack.c.l.b16 %v1290
      %v1838 = vunpack.c.l.b16 %v1291
      %v1839 = vunpack.c.l.b16 %v1292
      %v1840 = vunpack.c.l.b16 %v1293
      %v1841 = vunpack.c.l.b16 %v1294
      %v1842 = vunpack.c.l.b16 %v1295
      %v1843 = vpack.c.b16 %v1796, %v1795
      %v1844 = vpack.c.b16 %v1798, %v1797
      %v1845 = vpack.c.b16 %v1800, %v1799
      %v1846 = vpack.c.b16 %v1802, %v1801
      %v1847 = vpack.c.b16 %v1804, %v1803
      %v1848 = vpack.c.b16 %v1806, %v1805
      %v1849 = vpack.c.b16 %v1808, %v1807
      %v1850 = vpack.c.b16 %v1810, %v1809
      %v1851 = vpack.c.b16 %v1812, %v1811
      %v1852 = vpack.c.b16 %v1814, %v1813
      %v1853 = vpack.c.b16 %v1816, %v1815
      %v1854 = vpack.c.b16 %v1818, %v1817
      %v1855 = vpack.c.b16 %v1820, %v1819
      %v1856 = vpack.c.b16 %v1822, %v1821
      %v1857 = vpack.c.b16 %v1824, %v1823
      %v1858 = vpack.c.b16 %v1826, %v1825
      %v1859 = vpack.c.b16 %v1828, %v1827
      %v1860 = vpack.c.b16 %v1830, %v1829
      %v1861 = vpack.c.b16 %v1832, %v1831
      %v1862 = vpack.c.b16 %v1834, %v1833
      %v1863 = vpack.c.b16 %v1836, %v1835
      %v1864 = vpack.c.b16 %v1838, %v1837
      %v1865 = vpack.c.b16 %v1840, %v1839
      %v1866 = vpack.c.b16 %v1842, %v1841
      %1891 = vmatprep.subr.bf16.mxu0 0
      %1892 = vmatpush1.bf16.msra.mxu0 %v1843
      %1893 = vmatprep.subr.bf16.mxu0 0
      %1894 = vmatpush1.bf16.msra.mxu0 %v1844
      %1895 = vmatprep.subr.bf16.mxu0 0
      %1896 = vmatpush1.bf16.msra.mxu0 %v1845
      %1897 = vmatprep.subr.bf16.mxu0 0
      %1898 = vmatpush1.bf16.msra.mxu0 %v1846
      %1899 = vmatprep.subr.bf16.mxu0 0
      %1900 = vmatpush1.bf16.msra.mxu0 %v1847
      %1901 = vmatprep.subr.bf16.mxu0 0
      %1902 = vmatpush1.bf16.msra.mxu0 %v1848
      %1903 = vmatprep.subr.bf16.mxu0 0
      %1904 = vmatpush1.bf16.msra.mxu0 %v1849
      %1905 = vmatprep.subr.bf16.mxu0 0
      %1906 = vmatpush1.bf16.msra.mxu0 %v1850
      %1907 = vmatprep.subr.bf16.mxu0 0
      %1908 = vmatpush1.bf16.msra.mxu0 %v1851
      %1909 = vmatprep.subr.bf16.mxu0 0
      %1910 = vmatpush1.bf16.msra.mxu0 %v1852
      %1911 = vmatprep.subr.bf16.mxu0 0
      %1912 = vmatpush1.bf16.msra.mxu0 %v1853
      %1913 = vmatprep.subr.bf16.mxu0 0
      %1914 = vmatpush1.bf16.msra.mxu0 %v1854
      %1915 = vmatprep.subr.bf16.mxu0 0
      %1916 = vmatpush1.bf16.msra.mxu0 %v1855
      %1917 = vmatprep.subr.bf16.mxu0 0
      %1918 = vmatpush1.bf16.msra.mxu0 %v1856
      %1919 = vmatprep.subr.bf16.mxu0 0
      %1920 = vmatpush1.bf16.msra.mxu0 %v1857
      %1921 = vmatprep.subr.bf16.mxu0 0
      %1922 = vmatpush1.bf16.msra.mxu0 %v1858
      %1923 = vmatprep.mubr.bf16.mxu0 %v1020
      %1924 = vmatmul.mubr.bf16.gmra.mrb[0].mxu0 %v938
      %v1925 = vpop.f32.mrb[0].mxu0
      %v1926 = vadd.f32 %v1653, %v1925
      %v1927 = vpop.f32.mrb[0].mxu0
      %v1928 = vpop.f32.mrb[0].mxu0
      %v1929 = vadd.f32 %v1656, %v1928
      %v1930 = vpop.f32.mrb[0].mxu0
      %1931 = vmatprep.mubr.bf16.mxu0 %v1032
      %1932 = vmatmul.mubr.bf16.gmra.mrb[0].mxu0 %v939
      %v1933 = vpop.f32.mrb[0].mxu0
      %v1934 = vadd.f32 %v1661, %v1933
      %v1935 = vpop.f32.mrb[0].mxu0
      %v1936 = vpop.f32.mrb[0].mxu0
      %v1937 = vadd.f32 %v1664, %v1936
      %v1938 = vpop.f32.mrb[0].mxu0
      %1939 = vmatprep.mubr.bf16.mxu0 %v1044
      %1940 = vmatmul.mubr.bf16.gmra.mrb[0].mxu0 %v940
      %v1941 = vpop.f32.mrb[0].mxu0
      %v1942 = vadd.f32 %v1669, %v1941
      %v1943 = vpop.f32.mrb[0].mxu0
      %v1944 = vpop.f32.mrb[0].mxu0
      %v1945 = vadd.f32 %v1672, %v1944
      %v1946 = vpop.f32.mrb[0].mxu0
      %1947 = vmatprep.mubr.bf16.mxu0 %v1056
      %1948 = vmatmul.mubr.bf16.gmra.mrb[0].mxu0 %v941
      %v1949 = vpop.f32.mrb[0].mxu0
      %v1950 = vadd.f32 %v1677, %v1949
      %v1951 = vpop.f32.mrb[0].mxu0
      %v1952 = vpop.f32.mrb[0].mxu0
      %v1953 = vadd.f32 %v1680, %v1952
      %v1954 = vpop.f32.mrb[0].mxu0
      %1955 = vmatprep.mubr.bf16.mxu0 %v1068
      %1956 = vmatmul.mubr.bf16.gmra.mrb[0].mxu0 %v942
      %v1957 = vpop.f32.mrb[0].mxu0
      %v1958 = vadd.f32 %v1685, %v1957
      %v1959 = vpop.f32.mrb[0].mxu0
      %v1960 = vpop.f32.mrb[0].mxu0
      %v1961 = vadd.f32 %v1688, %v1960
      %v1962 = vpop.f32.mrb[0].mxu0
      %1963 = vmatprep.mubr.bf16.mxu0 %v1080
      %1964 = vmatmul.mubr.bf16.gmra.mrb[0].mxu0 %v943
      %v1965 = vpop.f32.mrb[0].mxu0
      %v1966 = vadd.f32 %v1693, %v1965
      %v1967 = vpop.f32.mrb[0].mxu0
      %v1968 = vpop.f32.mrb[0].mxu0
      %v1969 = vadd.f32 %v1696, %v1968
      %v1970 = vpop.f32.mrb[0].mxu0
      %1971 = vmatprep.mubr.bf16.mxu0 %v1092
      %1972 = vmatmul.mubr.bf16.gmra.mrb[0].mxu0 %v944
      %v1973 = vpop.f32.mrb[0].mxu0
      %v1974 = vadd.f32 %v1701, %v1973
      %v1975 = vpop.f32.mrb[0].mxu0
      %v1976 = vpop.f32.mrb[0].mxu0
      %v1977 = vadd.f32 %v1704, %v1976
      %v1978 = vpop.f32.mrb[0].mxu0
      %1979 = vmatprep.mubr.bf16.mxu0 %v1104
      %1980 = vmatmul.mubr.bf16.gmra.mrb[0].mxu0 %v945
      %v1981 = vpop.f32.mrb[0].mxu0
      %v1982 = vadd.f32 %v1709, %v1981
      %v1983 = vpop.f32.mrb[0].mxu0
      %v1984 = vpop.f32.mrb[0].mxu0
      %v1985 = vadd.f32 %v1712, %v1984
      %v1986 = vpop.f32.mrb[0].mxu0
      %1987 = vmatprep.mubr.bf16.mxu0 %v1116
      %1988 = vmatmul.mubr.bf16.gmra.mrb[0].mxu0 %v946
      %v1989 = vpop.f32.mrb[0].mxu0
      %v1990 = vadd.f32 %v1717, %v1989
      %v1991 = vpop.f32.mrb[0].mxu0
      %v1992 = vpop.f32.mrb[0].mxu0
      %v1993 = vadd.f32 %v1720, %v1992
      %v1994 = vpop.f32.mrb[0].mxu0
      %1995 = vmatprep.mubr.bf16.mxu0 %v1128
      %1996 = vmatmul.mubr.bf16.gmra.mrb[0].mxu0 %v947
      %v1997 = vpop.f32.mrb[0].mxu0
      %v1998 = vadd.f32 %v1725, %v1997
      %v1999 = vpop.f32.mrb[0].mxu0
      %v2000 = vpop.f32.mrb[0].mxu0
      %v2001 = vadd.f32 %v1728, %v2000
      %v2002 = vpop.f32.mrb[0].mxu0
      %2003 = vmatprep.mubr.bf16.mxu0 %v1140
      %2004 = vmatmul.mubr.bf16.gmra.mrb[0].mxu0 %v948
      %v2005 = vpop.f32.mrb[0].mxu0
      %v2006 = vadd.f32 %v1733, %v2005
      %v2007 = vpop.f32.mrb[0].mxu0
      %v2008 = vpop.f32.mrb[0].mxu0
      %v2009 = vadd.f32 %v1736, %v2008
      %v2010 = vpop.f32.mrb[0].mxu0
      %2011 = vmatprep.mubr.bf16.mxu0 %v1152
      %2012 = vmatmul.mubr.bf16.gmra.mrb[0].mxu0 %v949
      %v2013 = vpop.f32.mrb[0].mxu0
      %v2014 = vadd.f32 %v1741, %v2013
      %v2015 = vpop.f32.mrb[0].mxu0
      %v2016 = vpop.f32.mrb[0].mxu0
      %v2017 = vadd.f32 %v1744, %v2016
      %v2018 = vpop.f32.mrb[0].mxu0
      %2019 = vdwg.mxu0
      %2020 = vmatprep.subr.bf16.mxu0 0
      %2021 = vmatpush1.bf16.msra.mxu0 %v1859
      %2022 = vmatprep.subr.bf16.mxu0 0
      %2023 = vmatpush1.bf16.msra.mxu0 %v1860
      %2024 = vmatprep.subr.bf16.mxu0 0
      %2025 = vmatpush1.bf16.msra.mxu0 %v1861
      %2026 = vmatprep.subr.bf16.mxu0 0
      %2027 = vmatpush1.bf16.msra.mxu0 %v1862
      %2028 = vmatprep.subr.bf16.mxu0 0
      %2029 = vmatpush1.bf16.msra.mxu0 %v1863
      %2030 = vmatprep.subr.bf16.mxu0 0
      %2031 = vmatpush1.bf16.msra.mxu0 %v1864
      %2032 = vmatprep.subr.bf16.mxu0 0
      %2033 = vmatpush1.bf16.msra.mxu0 %v1865
      %2034 = vmatprep.subr.bf16.mxu0 0
      %2035 = vmatpush1.bf16.msra.mxu0 %v1866
      %2036 = vmatprep.subr.bf16.mxu0 0
      %2037 = vmatpush1.bf16.msra.mxu0 0
      %2038 = vmatprep.subr.bf16.mxu0 0
      %2039 = vmatpush1.bf16.msra.mxu0 0
      %2040 = vmatprep.subr.bf16.mxu0 0
      %2041 = vmatpush1.bf16.msra.mxu0 0
      %2042 = vmatprep.subr.bf16.mxu0 0
      %2043 = vmatpush1.bf16.msra.mxu0 0
      %2044 = vmatprep.subr.bf16.mxu0 0
      %2045 = vmatpush1.bf16.msra.mxu0 0
      %2046 = vmatprep.subr.bf16.mxu0 0
      %2047 = vmatpush1.bf16.msra.mxu0 0
      %2048 = vmatprep.subr.bf16.mxu0 0
      %2049 = vmatpush1.bf16.msra.mxu0 0
      %2050 = vmatprep.subr.bf16.mxu0 0
      %2051 = vmatpush1.bf16.msra.mxu0 0
      %2052 = vmatprep.mubr.bf16.mxu0 0
      %2053 = vmatmul.mubr.bf16.gmra.mrb[0].mxu0 %v1194
      %v2054 = vpop.f32.mrb[0].mxu0
      %v2055 = vadd.f32 %v1926, %v2054
      %v2056 = vpop.f32.mrb[0].mxu0
      %v2057 = vpop.f32.mrb[0].mxu0
      %v2058 = vadd.f32 %v1929, %v2057
      %v2059 = vpop.f32.mrb[0].mxu0
      %2060 = vmatprep.mubr.bf16.mxu0 0
      %2061 = vmatmul.mubr.bf16.gmra.mrb[0].mxu0 %v1197
      %v2062 = vpop.f32.mrb[0].mxu0
      %v2063 = vadd.f32 %v1934, %v2062
      %v2064 = vpop.f32.mrb[0].mxu0
      %v2065 = vpop.f32.mrb[0].mxu0
      %v2066 = vadd.f32 %v1937, %v2065
      %v2067 = vpop.f32.mrb[0].mxu0
      %2068 = vmatprep.mubr.bf16.mxu0 0
      %2069 = vmatmul.mubr.bf16.gmra.mrb[0].mxu0 %v1200
      %v2070 = vpop.f32.mrb[0].mxu0
      %v2071 = vadd.f32 %v1942, %v2070
      %v2072 = vpop.f32.mrb[0].mxu0
      %v2073 = vpop.f32.mrb[0].mxu0
      %v2074 = vadd.f32 %v1945, %v2073
      %v2075 = vpop.f32.mrb[0].mxu0
      %2076 = vmatprep.mubr.bf16.mxu0 0
      %2077 = vmatmul.mubr.bf16.gmra.mrb[0].mxu0 %v1203
      %v2078 = vpop.f32.mrb[0].mxu0
      %v2079 = vadd.f32 %v1950, %v2078
      %v2080 = vpop.f32.mrb[0].mxu0
      %v2081 = vpop.f32.mrb[0].mxu0
      %v2082 = vadd.f32 %v1953, %v2081
      %v2083 = vpop.f32.mrb[0].mxu0
      %2084 = vmatprep.mubr.bf16.mxu0 0
      %2085 = vmatmul.mubr.bf16.gmra.mrb[0].mxu0 %v1206
      %v2086 = vpop.f32.mrb[0].mxu0
      %v2087 = vadd.f32 %v1958, %v2086
      %v2088 = vpop.f32.mrb[0].mxu0
      %v2089 = vpop.f32.mrb[0].mxu0
      %v2090 = vadd.f32 %v1961, %v2089
      %v2091 = vpop.f32.mrb[0].mxu0
      %2092 = vmatprep.mubr.bf16.mxu0 0
      %2093 = vmatmul.mubr.bf16.gmra.mrb[0].mxu0 %v1209
      %v2094 = vpop.f32.mrb[0].mxu0
      %v2095 = vadd.f32 %v1966, %v2094
      %v2096 = vpop.f32.mrb[0].mxu0
      %v2097 = vpop.f32.mrb[0].mxu0
      %v2098 = vadd.f32 %v1969, %v2097
      %v2099 = vpop.f32.mrb[0].mxu0
      %2100 = vmatprep.mubr.bf16.mxu0 0
      %2101 = vmatmul.mubr.bf16.gmra.mrb[0].mxu0 %v1212
      %v2102 = vpop.f32.mrb[0].mxu0
      %v2103 = vadd.f32 %v1974, %v2102
      %v2104 = vpop.f32.mrb[0].mxu0
      %v2105 = vpop.f32.mrb[0].mxu0
      %v2106 = vadd.f32 %v1977, %v2105
      %v2107 = vpop.f32.mrb[0].mxu0
      %2108 = vmatprep.mubr.bf16.mxu0 0
      %2109 = vmatmul.mubr.bf16.gmra.mrb[0].mxu0 %v1215
      %v2110 = vpop.f32.mrb[0].mxu0
      %v2111 = vadd.f32 %v1982, %v2110
      %v2112 = vpop.f32.mrb[0].mxu0
      %v2113 = vpop.f32.mrb[0].mxu0
      %v2114 = vadd.f32 %v1985, %v2113
      %v2115 = vpop.f32.mrb[0].mxu0
      %2116 = vmatprep.mubr.bf16.mxu0 0
      %2117 = vmatmul.mubr.bf16.gmra.mrb[0].mxu0 %v1218
      %v2118 = vpop.f32.mrb[0].mxu0
      %v2119 = vadd.f32 %v1990, %v2118
      %v2120 = vpop.f32.mrb[0].mxu0
      %v2121 = vpop.f32.mrb[0].mxu0
      %v2122 = vadd.f32 %v1993, %v2121
      %v2123 = vpop.f32.mrb[0].mxu0
      %2124 = vmatprep.mubr.bf16.mxu0 0
      %2125 = vmatmul.mubr.bf16.gmra.mrb[0].mxu0 %v1221
      %v2126 = vpop.f32.mrb[0].mxu0
      %v2127 = vadd.f32 %v1998, %v2126
      %v2128 = vpop.f32.mrb[0].mxu0
      %v2129 = vpop.f32.mrb[0].mxu0
      %v2130 = vadd.f32 %v2001, %v2129
      %v2131 = vpop.f32.mrb[0].mxu0
      %2132 = vmatprep.mubr.bf16.mxu0 0
      %2133 = vmatmul.mubr.bf16.gmra.mrb[0].mxu0 %v1224
      %v2134 = vpop.f32.mrb[0].mxu0
      %v2135 = vadd.f32 %v2006, %v2134
      %v2136 = vpop.f32.mrb[0].mxu0
      %v2137 = vpop.f32.mrb[0].mxu0
      %v2138 = vadd.f32 %v2009, %v2137
      %v2139 = vpop.f32.mrb[0].mxu0
      %2140 = vmatprep.mubr.bf16.mxu0 0
      %2141 = vmatmul.mubr.bf16.gmra.mrb[0].mxu0 %v1227
      %v2142 = vpop.f32.mrb[0].mxu0
      %v2143 = vadd.f32 %v2014, %v2142
      %v2144 = vpop.f32.mrb[0].mxu0
      %v2145 = vpop.f32.mrb[0].mxu0
      %v2146 = vadd.f32 %v2017, %v2145
      %v2147 = vpop.f32.mrb[0].mxu0
      %2148 = vdwg.mxu0
      %s2149 = scalar_lea.vmem %s3, 384
      %v2150 = vld [vmem:[%s2149] sm:$0xf]
      %v2151 = vld [vmem:[%s2149 + $0x4] sm:$0xf]
      %v2152 = vld [vmem:[%s2149 + $0x8] sm:$0xf]
      %v2153 = vld [vmem:[%s2149 + $0xc] sm:$0xf]
      %v2154 = vld [vmem:[%s2149 + $0x10] sm:$0xf]
      %v2155 = vld [vmem:[%s2149 + $0x14] sm:$0xf]
      %v2156 = vld [vmem:[%s2149 + $0x18] sm:$0xf]
      %v2157 = vld [vmem:[%s2149 + $0x1c] sm:$0xf]
      %v2158 = vld [vmem:[%s2149 + $0x20] sm:$0xf]
      %v2159 = vld [vmem:[%s2149 + $0x24] sm:$0xf]
      %v2160 = vld [vmem:[%s2149 + $0x28] sm:$0xf]
      %v2161 = vld [vmem:[%s2149 + $0x2c] sm:$0xf]
      %v2162 = vld [vmem:[%s2149 + $0x30] sm:$0xf]
      %v2163 = vld [vmem:[%s2149 + $0x34] sm:$0xf]
      %v2164 = vld [vmem:[%s2149 + $0x38] sm:$0xf]
      %v2165 = vld [vmem:[%s2149 + $0x3c] sm:$0xf]
      %v2166 = vld [vmem:[%s2149 + $0x40] sm:$0xf]
      %v2167 = vld [vmem:[%s2149 + $0x44] sm:$0xf]
      %v2168 = vld [vmem:[%s2149 + $0x48] sm:$0xf]
      %v2169 = vld [vmem:[%s2149 + $0x4c] sm:$0xf]
      %v2170 = vld [vmem:[%s2149 + $0x50] sm:$0xf]
      %v2171 = vld [vmem:[%s2149 + $0x54] sm:$0xf]
      %v2172 = vld [vmem:[%s2149 + $0x58] sm:$0xf]
      %v2173 = vld [vmem:[%s2149 + $0x5c] sm:$0xf]
      %v2174 = vld [vmem:[%s2149 + $0x60] sm:$0xf]
      %v2175 = vld [vmem:[%s2149 + $0x64] sm:$0xf]
      %v2176 = vld [vmem:[%s2149 + $0x68] sm:$0xf]
      %v2177 = vld [vmem:[%s2149 + $0x6c] sm:$0xf]
      %v2178 = vld [vmem:[%s2149 + $0x70] sm:$0xf]
      %v2179 = vld [vmem:[%s2149 + $0x74] sm:$0xf]
      %v2180 = vld [vmem:[%s2149 + $0x78] sm:$0xf]
      %v2181 = vld [vmem:[%s2149 + $0x7c] sm:$0xf]
      %v2182 = vld [vmem:[%s2149 + $0x80] sm:$0xf]
      %v2183 = vld [vmem:[%s2149 + $0x84] sm:$0xf]
      %v2184 = vld [vmem:[%s2149 + $0x88] sm:$0xf]
      %v2185 = vld [vmem:[%s2149 + $0x8c] sm:$0xf]
      %v2186 = vld [vmem:[%s2149 + $0x90] sm:$0xf]
      %v2187 = vld [vmem:[%s2149 + $0x94] sm:$0xf]
      %v2188 = vld [vmem:[%s2149 + $0x98] sm:$0xf]
      %v2189 = vld [vmem:[%s2149 + $0x9c] sm:$0xf]
      %v2190 = vld [vmem:[%s2149 + $0xa0] sm:$0xf]
      %v2191 = vld [vmem:[%s2149 + $0xa4] sm:$0xf]
      %v2192 = vld [vmem:[%s2149 + $0xa8] sm:$0xf]
      %v2193 = vld [vmem:[%s2149 + $0xac] sm:$0xf]
      %v2194 = vld [vmem:[%s2149 + $0xb0] sm:$0xf]
      %v2195 = vld [vmem:[%s2149 + $0xb4] sm:$0xf]
      %v2196 = vld [vmem:[%s2149 + $0xb8] sm:$0xf]
      %v2197 = vld [vmem:[%s2149 + $0xbc] sm:$0xf]
      %v2246 = vunpack.c.l.b16 %v2150
      %v2247 = vunpack.c.l.b16 %v2151
      %v2248 = vunpack.c.l.b16 %v2152
      %v2249 = vunpack.c.l.b16 %v2153
      %v2250 = vunpack.c.l.b16 %v2154
      %v2251 = vunpack.c.l.b16 %v2155
      %v2252 = vunpack.c.l.b16 %v2156
      %v2253 = vunpack.c.l.b16 %v2157
      %v2254 = vunpack.c.l.b16 %v2158
      %v2255 = vunpack.c.l.b16 %v2159
      %v2256 = vunpack.c.l.b16 %v2160
      %v2257 = vunpack.c.l.b16 %v2161
      %v2258 = vunpack.c.l.b16 %v2162
      %v2259 = vunpack.c.l.b16 %v2163
      %v2260 = vunpack.c.l.b16 %v2164
      %v2261 = vunpack.c.l.b16 %v2165
      %v2262 = vunpack.c.l.b16 %v2166
      %v2263 = vunpack.c.l.b16 %v2167
      %v2264 = vunpack.c.l.b16 %v2168
      %v2265 = vunpack.c.l.b16 %v2169
      %v2266 = vunpack.c.l.b16 %v2170
      %v2267 = vunpack.c.l.b16 %v2171
      %v2268 = vunpack.c.l.b16 %v2172
      %v2269 = vunpack.c.l.b16 %v2173
      %v2270 = vunpack.c.l.b16 %v2174
      %v2271 = vunpack.c.l.b16 %v2175
      %v2272 = vunpack.c.l.b16 %v2176
      %v2273 = vunpack.c.l.b16 %v2177
      %v2274 = vunpack.c.l.b16 %v2178
      %v2275 = vunpack.c.l.b16 %v2179
      %v2276 = vunpack.c.l.b16 %v2180
      %v2277 = vunpack.c.l.b16 %v2181
      %v2278 = vunpack.c.l.b16 %v2182
      %v2279 = vunpack.c.l.b16 %v2183
      %v2280 = vunpack.c.l.b16 %v2184
      %v2281 = vunpack.c.l.b16 %v2185
      %v2282 = vunpack.c.l.b16 %v2186
      %v2283 = vunpack.c.l.b16 %v2187
      %v2284 = vunpack.c.l.b16 %v2188
      %v2285 = vunpack.c.l.b16 %v2189
      %v2286 = vunpack.c.l.b16 %v2190
      %v2287 = vunpack.c.l.b16 %v2191
      %v2288 = vunpack.c.l.b16 %v2192
      %v2289 = vunpack.c.l.b16 %v2193
      %v2290 = vunpack.c.l.b16 %v2194
      %v2291 = vunpack.c.l.b16 %v2195
      %v2292 = vunpack.c.l.b16 %v2196
      %v2293 = vunpack.c.l.b16 %v2197
      %v2294 = vpack.c.b16 %v2247, %v2246
      %v2295 = vpack.c.b16 %v2249, %v2248
      %v2296 = vpack.c.b16 %v2251, %v2250
      %v2297 = vpack.c.b16 %v2253, %v2252
      %v2298 = vpack.c.b16 %v2255, %v2254
      %v2299 = vpack.c.b16 %v2257, %v2256
      %v2300 = vpack.c.b16 %v2259, %v2258
      %v2301 = vpack.c.b16 %v2261, %v2260
      %v2302 = vpack.c.b16 %v2263, %v2262
      %v2303 = vpack.c.b16 %v2265, %v2264
      %v2304 = vpack.c.b16 %v2267, %v2266
      %v2305 = vpack.c.b16 %v2269, %v2268
      %v2306 = vpack.c.b16 %v2271, %v2270
      %v2307 = vpack.c.b16 %v2273, %v2272
      %v2308 = vpack.c.b16 %v2275, %v2274
      %v2309 = vpack.c.b16 %v2277, %v2276
      %v2310 = vpack.c.b16 %v2279, %v2278
      %v2311 = vpack.c.b16 %v2281, %v2280
      %v2312 = vpack.c.b16 %v2283, %v2282
      %v2313 = vpack.c.b16 %v2285, %v2284
      %v2314 = vpack.c.b16 %v2287, %v2286
      %v2315 = vpack.c.b16 %v2289, %v2288
      %v2316 = vpack.c.b16 %v2291, %v2290
      %v2317 = vpack.c.b16 %v2293, %v2292
      %2342 = vmatprep.subr.bf16.mxu0 0
      %2343 = vmatpush1.bf16.msra.mxu0 %v2294
      %2344 = vmatprep.subr.bf16.mxu0 0
      %2345 = vmatpush1.bf16.msra.mxu0 %v2295
      %2346 = vmatprep.subr.bf16.mxu0 0
      %2347 = vmatpush1.bf16.msra.mxu0 %v2296
      %2348 = vmatprep.subr.bf16.mxu0 0
      %2349 = vmatpush1.bf16.msra.mxu0 %v2297
      %2350 = vmatprep.subr.bf16.mxu0 0
      %2351 = vmatpush1.bf16.msra.mxu0 %v2298
      %2352 = vmatprep.subr.bf16.mxu0 0
      %2353 = vmatpush1.bf16.msra.mxu0 %v2299
      %2354 = vmatprep.subr.bf16.mxu0 0
      %2355 = vmatpush1.bf16.msra.mxu0 %v2300
      %2356 = vmatprep.subr.bf16.mxu0 0
      %2357 = vmatpush1.bf16.msra.mxu0 %v2301
      %2358 = vmatprep.subr.bf16.mxu0 0
      %2359 = vmatpush1.bf16.msra.mxu0 %v2302
      %2360 = vmatprep.subr.bf16.mxu0 0
      %2361 = vmatpush1.bf16.msra.mxu0 %v2303
      %2362 = vmatprep.subr.bf16.mxu0 0
      %2363 = vmatpush1.bf16.msra.mxu0 %v2304
      %2364 = vmatprep.subr.bf16.mxu0 0
      %2365 = vmatpush1.bf16.msra.mxu0 %v2305
      %2366 = vmatprep.subr.bf16.mxu0 0
      %2367 = vmatpush1.bf16.msra.mxu0 %v2306
      %2368 = vmatprep.subr.bf16.mxu0 0
      %2369 = vmatpush1.bf16.msra.mxu0 %v2307
      %2370 = vmatprep.subr.bf16.mxu0 0
      %2371 = vmatpush1.bf16.msra.mxu0 %v2308
      %2372 = vmatprep.subr.bf16.mxu0 0
      %2373 = vmatpush1.bf16.msra.mxu0 %v2309
      %2374 = vmatprep.mubr.bf16.mxu0 %v1044
      %2375 = vmatmul.mubr.bf16.gmra.mrb[0].mxu0 %v940
      %v2376 = vpop.f32.mrb[0].mxu0
      %v2377 = vadd.f32 0.0, %v2376
      %v2378 = vpop.f32.mrb[0].mxu0
      %v2379 = vpop.f32.mrb[0].mxu0
      %v2380 = vadd.f32 0.0, %v2379
      %v2381 = vpop.f32.mrb[0].mxu0
      %2382 = vmatprep.mubr.bf16.mxu0 %v1056
      %2383 = vmatmul.mubr.bf16.gmra.mrb[0].mxu0 %v941
      %v2384 = vpop.f32.mrb[0].mxu0
      %v2385 = vadd.f32 0.0, %v2384
      %v2386 = vpop.f32.mrb[0].mxu0
      %v2387 = vpop.f32.mrb[0].mxu0
      %v2388 = vadd.f32 0.0, %v2387
      %v2389 = vpop.f32.mrb[0].mxu0
      %2390 = vmatprep.mubr.bf16.mxu0 %v1068
      %2391 = vmatmul.mubr.bf16.gmra.mrb[0].mxu0 %v942
      %v2392 = vpop.f32.mrb[0].mxu0
      %v2393 = vadd.f32 0.0, %v2392
      %v2394 = vpop.f32.mrb[0].mxu0
      %v2395 = vpop.f32.mrb[0].mxu0
      %v2396 = vadd.f32 0.0, %v2395
      %v2397 = vpop.f32.mrb[0].mxu0
      %2398 = vmatprep.mubr.bf16.mxu0 %v1080
      %2399 = vmatmul.mubr.bf16.gmra.mrb[0].mxu0 %v943
      %v2400 = vpop.f32.mrb[0].mxu0
      %v2401 = vadd.f32 0.0, %v2400
      %v2402 = vpop.f32.mrb[0].mxu0
      %v2403 = vpop.f32.mrb[0].mxu0
      %v2404 = vadd.f32 0.0, %v2403
      %v2405 = vpop.f32.mrb[0].mxu0
      %2406 = vmatprep.mubr.bf16.mxu0 %v1092
      %2407 = vmatmul.mubr.bf16.gmra.mrb[0].mxu0 %v944
      %v2408 = vpop.f32.mrb[0].mxu0
      %v2409 = vadd.f32 0.0, %v2408
      %v2410 = vpop.f32.mrb[0].mxu0
      %v2411 = vpop.f32.mrb[0].mxu0
      %v2412 = vadd.f32 0.0, %v2411
      %v2413 = vpop.f32.mrb[0].mxu0
      %2414 = vmatprep.mubr.bf16.mxu0 %v1104
      %2415 = vmatmul.mubr.bf16.gmra.mrb[0].mxu0 %v945
      %v2416 = vpop.f32.mrb[0].mxu0
      %v2417 = vadd.f32 0.0, %v2416
      %v2418 = vpop.f32.mrb[0].mxu0
      %v2419 = vpop.f32.mrb[0].mxu0
      %v2420 = vadd.f32 0.0, %v2419
      %v2421 = vpop.f32.mrb[0].mxu0
      %2422 = vmatprep.mubr.bf16.mxu0 %v1116
      %2423 = vmatmul.mubr.bf16.gmra.mrb[0].mxu0 %v946
      %v2424 = vpop.f32.mrb[0].mxu0
      %v2425 = vadd.f32 0.0, %v2424
      %v2426 = vpop.f32.mrb[0].mxu0
      %v2427 = vpop.f32.mrb[0].mxu0
      %v2428 = vadd.f32 0.0, %v2427
      %v2429 = vpop.f32.mrb[0].mxu0
      %2430 = vmatprep.mubr.bf16.mxu0 %v1128
      %2431 = vmatmul.mubr.bf16.gmra.mrb[0].mxu0 %v947
      %v2432 = vpop.f32.mrb[0].mxu0
      %v2433 = vadd.f32 0.0, %v2432
      %v2434 = vpop.f32.mrb[0].mxu0
      %v2435 = vpop.f32.mrb[0].mxu0
      %v2436 = vadd.f32 0.0, %v2435
      %v2437 = vpop.f32.mrb[0].mxu0
      %2438 = vmatprep.mubr.bf16.mxu0 %v1140
      %2439 = vmatmul.mubr.bf16.gmra.mrb[0].mxu0 %v948
      %v2440 = vpop.f32.mrb[0].mxu0
      %v2441 = vadd.f32 0.0, %v2440
      %v2442 = vpop.f32.mrb[0].mxu0
      %v2443 = vpop.f32.mrb[0].mxu0
      %v2444 = vadd.f32 0.0, %v2443
      %v2445 = vpop.f32.mrb[0].mxu0
      %2446 = vmatprep.mubr.bf16.mxu0 %v1152
      %2447 = vmatmul.mubr.bf16.gmra.mrb[0].mxu0 %v949
      %v2448 = vpop.f32.mrb[0].mxu0
      %v2449 = vadd.f32 0.0, %v2448
      %v2450 = vpop.f32.mrb[0].mxu0
      %v2451 = vpop.f32.mrb[0].mxu0
      %v2452 = vadd.f32 0.0, %v2451
      %v2453 = vpop.f32.mrb[0].mxu0
      %2454 = vmatprep.mubr.bf16.mxu0 %v1164
      %2455 = vmatmul.mubr.bf16.gmra.mrb[0].mxu0 %v950
      %v2456 = vpop.f32.mrb[0].mxu0
      %v2457 = vadd.f32 0.0, %v2456
      %v2458 = vpop.f32.mrb[0].mxu0
      %v2459 = vpop.f32.mrb[0].mxu0
      %v2460 = vadd.f32 0.0, %v2459
      %v2461 = vpop.f32.mrb[0].mxu0
      %2462 = vmatprep.mubr.bf16.mxu0 %v1176
      %2463 = vmatmul.mubr.bf16.gmra.mrb[0].mxu0 %v951
      %v2464 = vpop.f32.mrb[0].mxu0
      %v2465 = vadd.f32 0.0, %v2464
      %v2466 = vpop.f32.mrb[0].mxu0
      %v2467 = vpop.f32.mrb[0].mxu0
      %v2468 = vadd.f32 0.0, %v2467
      %v2469 = vpop.f32.mrb[0].mxu0
      %2470 = vdwg.mxu0
      %2471 = vmatprep.subr.bf16.mxu0 0
      %2472 = vmatpush1.bf16.msra.mxu0 %v2310
      %2473 = vmatprep.subr.bf16.mxu0 0
      %2474 = vmatpush1.bf16.msra.mxu0 %v2311
      %2475 = vmatprep.subr.bf16.mxu0 0
      %2476 = vmatpush1.bf16.msra.mxu0 %v2312
      %2477 = vmatprep.subr.bf16.mxu0 0
      %2478 = vmatpush1.bf16.msra.mxu0 %v2313
      %2479 = vmatprep.subr.bf16.mxu0 0
      %2480 = vmatpush1.bf16.msra.mxu0 %v2314
      %2481 = vmatprep.subr.bf16.mxu0 0
      %2482 = vmatpush1.bf16.msra.mxu0 %v2315
      %2483 = vmatprep.subr.bf16.mxu0 0
      %2484 = vmatpush1.bf16.msra.mxu0 %v2316
      %2485 = vmatprep.subr.bf16.mxu0 0
      %2486 = vmatpush1.bf16.msra.mxu0 %v2317
      %2487 = vmatprep.subr.bf16.mxu0 0
      %2488 = vmatpush1.bf16.msra.mxu0 0
      %2489 = vmatprep.subr.bf16.mxu0 0
      %2490 = vmatpush1.bf16.msra.mxu0 0
      %2491 = vmatprep.subr.bf16.mxu0 0
      %2492 = vmatpush1.bf16.msra.mxu0 0
      %2493 = vmatprep.subr.bf16.mxu0 0
      %2494 = vmatpush1.bf16.msra.mxu0 0
      %2495 = vmatprep.subr.bf16.mxu0 0
      %2496 = vmatpush1.bf16.msra.mxu0 0
      %2497 = vmatprep.subr.bf16.mxu0 0
      %2498 = vmatpush1.bf16.msra.mxu0 0
      %2499 = vmatprep.subr.bf16.mxu0 0
      %2500 = vmatpush1.bf16.msra.mxu0 0
      %2501 = vmatprep.subr.bf16.mxu0 0
      %2502 = vmatpush1.bf16.msra.mxu0 0
      %2503 = vmatprep.mubr.bf16.mxu0 0
      %2504 = vmatmul.mubr.bf16.gmra.mrb[0].mxu0 %v1200
      %v2505 = vpop.f32.mrb[0].mxu0
      %v2506 = vadd.f32 %v2377, %v2505
      %v2507 = vpop.f32.mrb[0].mxu0
      %v2508 = vpop.f32.mrb[0].mxu0
      %v2509 = vadd.f32 %v2380, %v2508
      %v2510 = vpop.f32.mrb[0].mxu0
      %2511 = vmatprep.mubr.bf16.mxu0 0
      %2512 = vmatmul.mubr.bf16.gmra.mrb[0].mxu0 %v1203
      %v2513 = vpop.f32.mrb[0].mxu0
      %v2514 = vadd.f32 %v2385, %v2513
      %v2515 = vpop.f32.mrb[0].mxu0
      %v2516 = vpop.f32.mrb[0].mxu0
      %v2517 = vadd.f32 %v2388, %v2516
      %v2518 = vpop.f32.mrb[0].mxu0
      %2519 = vmatprep.mubr.bf16.mxu0 0
      %2520 = vmatmul.mubr.bf16.gmra.mrb[0].mxu0 %v1206
      %v2521 = vpop.f32.mrb[0].mxu0
      %v2522 = vadd.f32 %v2393, %v2521
      %v2523 = vpop.f32.mrb[0].mxu0
      %v2524 = vpop.f32.mrb[0].mxu0
      %v2525 = vadd.f32 %v2396, %v2524
      %v2526 = vpop.f32.mrb[0].mxu0
      %2527 = vmatprep.mubr.bf16.mxu0 0
      %2528 = vmatmul.mubr.bf16.gmra.mrb[0].mxu0 %v1209
      %v2529 = vpop.f32.mrb[0].mxu0
      %v2530 = vadd.f32 %v2401, %v2529
      %v2531 = vpop.f32.mrb[0].mxu0
      %v2532 = vpop.f32.mrb[0].mxu0
      %v2533 = vadd.f32 %v2404, %v2532
      %v2534 = vpop.f32.mrb[0].mxu0
      %2535 = vmatprep.mubr.bf16.mxu0 0
      %2536 = vmatmul.mubr.bf16.gmra.mrb[0].mxu0 %v1212
      %v2537 = vpop.f32.mrb[0].mxu0
      %v2538 = vadd.f32 %v2409, %v2537
      %v2539 = vpop.f32.mrb[0].mxu0
      %v2540 = vpop.f32.mrb[0].mxu0
      %v2541 = vadd.f32 %v2412, %v2540
      %v2542 = vpop.f32.mrb[0].mxu0
      %2543 = vmatprep.mubr.bf16.mxu0 0
      %2544 = vmatmul.mubr.bf16.gmra.mrb[0].mxu0 %v1215
      %v2545 = vpop.f32.mrb[0].mxu0
      %v2546 = vadd.f32 %v2417, %v2545
      %v2547 = vpop.f32.mrb[0].mxu0
      %v2548 = vpop.f32.mrb[0].mxu0
      %v2549 = vadd.f32 %v2420, %v2548
      %v2550 = vpop.f32.mrb[0].mxu0
      %2551 = vmatprep.mubr.bf16.mxu0 0
      %2552 = vmatmul.mubr.bf16.gmra.mrb[0].mxu0 %v1218
      %v2553 = vpop.f32.mrb[0].mxu0
      %v2554 = vadd.f32 %v2425, %v2553
      %v2555 = vpop.f32.mrb[0].mxu0
      %v2556 = vpop.f32.mrb[0].mxu0
      %v2557 = vadd.f32 %v2428, %v2556
      %v2558 = vpop.f32.mrb[0].mxu0
      %2559 = vmatprep.mubr.bf16.mxu0 0
      %2560 = vmatmul.mubr.bf16.gmra.mrb[0].mxu0 %v1221
      %v2561 = vpop.f32.mrb[0].mxu0
      %v2562 = vadd.f32 %v2433, %v2561
      %v2563 = vpop.f32.mrb[0].mxu0
      %v2564 = vpop.f32.mrb[0].mxu0
      %v2565 = vadd.f32 %v2436, %v2564
      %v2566 = vpop.f32.mrb[0].mxu0
      %2567 = vmatprep.mubr.bf16.mxu0 0
      %2568 = vmatmul.mubr.bf16.gmra.mrb[0].mxu0 %v1224
      %v2569 = vpop.f32.mrb[0].mxu0
      %v2570 = vadd.f32 %v2441, %v2569
      %v2571 = vpop.f32.mrb[0].mxu0
      %v2572 = vpop.f32.mrb[0].mxu0
      %v2573 = vadd.f32 %v2444, %v2572
      %v2574 = vpop.f32.mrb[0].mxu0
      %2575 = vmatprep.mubr.bf16.mxu0 0
      %2576 = vmatmul.mubr.bf16.gmra.mrb[0].mxu0 %v1227
      %v2577 = vpop.f32.mrb[0].mxu0
      %v2578 = vadd.f32 %v2449, %v2577
      %v2579 = vpop.f32.mrb[0].mxu0
      %v2580 = vpop.f32.mrb[0].mxu0
      %v2581 = vadd.f32 %v2452, %v2580
      %v2582 = vpop.f32.mrb[0].mxu0
      %2583 = vmatprep.mubr.bf16.mxu0 0
      %2584 = vmatmul.mubr.bf16.gmra.mrb[0].mxu0 %v1230
      %v2585 = vpop.f32.mrb[0].mxu0
      %v2586 = vadd.f32 %v2457, %v2585
      %v2587 = vpop.f32.mrb[0].mxu0
      %v2588 = vpop.f32.mrb[0].mxu0
      %v2589 = vadd.f32 %v2460, %v2588
      %v2590 = vpop.f32.mrb[0].mxu0
      %2591 = vmatprep.mubr.bf16.mxu0 0
      %2592 = vmatmul.mubr.bf16.gmra.mrb[0].mxu0 %v1233
      %v2593 = vpop.f32.mrb[0].mxu0
      %v2594 = vadd.f32 %v2465, %v2593
      %v2595 = vpop.f32.mrb[0].mxu0
      %v2596 = vpop.f32.mrb[0].mxu0
      %v2597 = vadd.f32 %v2468, %v2596
      %v2598 = vpop.f32.mrb[0].mxu0
      %2599 = vdwg.mxu0
      %v2600 = vadd.f32 %v2055, %v2506
      %v2601 = vadd.f32 %v2058, %v2509
      %v2602 = vadd.f32 %v2063, %v2514
      %v2603 = vadd.f32 %v2066, %v2517
      %v2604 = vadd.f32 %v2071, %v2522
      %v2605 = vadd.f32 %v2074, %v2525
      %v2606 = vadd.f32 %v2079, %v2530
      %v2607 = vadd.f32 %v2082, %v2533
      %v2608 = vadd.f32 %v2087, %v2538
      %v2609 = vadd.f32 %v2090, %v2541
      %v2610 = vadd.f32 %v2095, %v2546
      %v2611 = vadd.f32 %v2098, %v2549
      %v2612 = vadd.f32 %v2103, %v2554
      %v2613 = vadd.f32 %v2106, %v2557
      %v2614 = vadd.f32 %v2111, %v2562
      %v2615 = vadd.f32 %v2114, %v2565
      %v2616 = vadd.f32 %v2119, %v2570
      %v2617 = vadd.f32 %v2122, %v2573
      %v2618 = vadd.f32 %v2127, %v2578
      %v2619 = vadd.f32 %v2130, %v2581
      %v2620 = vadd.f32 %v2135, %v2586
      %v2621 = vadd.f32 %v2138, %v2589
      %v2622 = vadd.f32 %v2143, %v2594
      %v2623 = vadd.f32 %v2146, %v2597
      %v2624 = vld [vmem:[%s4] sm:$0x1]
      %v2626 = vlaneseq
      %v2627 = vshrl.u32 %v2626, 7
      %v2628 = vsub.s32 0, %v2627
      %v2629 = vrot.slane %v2624, %v2628
      %v2631 = vadd.f32 %v2600, %v2629
      %v2632 = vadd.f32 %v2601, %v2629
      %v2633 = vadd.f32 %v2602, %v2629
      %v2634 = vadd.f32 %v2603, %v2629
      %v2635 = vadd.f32 %v2604, %v2629
      %v2636 = vadd.f32 %v2605, %v2629
      %v2637 = vadd.f32 %v2606, %v2629
      %v2638 = vadd.f32 %v2607, %v2629
      %v2639 = vadd.f32 %v2608, %v2629
      %v2640 = vadd.f32 %v2609, %v2629
      %v2641 = vadd.f32 %v2610, %v2629
      %v2642 = vadd.f32 %v2611, %v2629
      %v2643 = vadd.f32 %v2612, %v2629
      %v2644 = vadd.f32 %v2613, %v2629
      %v2645 = vadd.f32 %v2614, %v2629
      %v2646 = vadd.f32 %v2615, %v2629
      %v2647 = vadd.f32 %v2616, %v2629
      %v2648 = vadd.f32 %v2617, %v2629
      %v2649 = vadd.f32 %v2618, %v2629
      %v2650 = vadd.f32 %v2619, %v2629
      %v2651 = vadd.f32 %v2620, %v2629
      %v2652 = vadd.f32 %v2621, %v2629
      %v2653 = vadd.f32 %v2622, %v2629
      %v2654 = vadd.f32 %v2623, %v2629
      %2655 = vst [vmem:[%s224] sm:$0xff] %v2631
      %2656 = vst [vmem:[%s224 + $0x8] sm:$0xff] %v2632
      %2657 = vst [vmem:[%s224 + $0x10] sm:$0xff] %v2633
      %2658 = vst [vmem:[%s224 + $0x18] sm:$0xff] %v2634
      %2659 = vst [vmem:[%s224 + $0x20] sm:$0xff] %v2635
      %2660 = vst [vmem:[%s224 + $0x28] sm:$0xff] %v2636
      %2661 = vst [vmem:[%s224 + $0x30] sm:$0xff] %v2637
      %2662 = vst [vmem:[%s224 + $0x38] sm:$0xff] %v2638
      %2663 = vst [vmem:[%s224 + $0x40] sm:$0xff] %v2639
      %2664 = vst [vmem:[%s224 + $0x48] sm:$0xff] %v2640
      %2665 = vst [vmem:[%s224 + $0x50] sm:$0xff] %v2641
      %2666 = vst [vmem:[%s224 + $0x58] sm:$0xff] %v2642
      %2667 = vst [vmem:[%s224 + $0x60] sm:$0xff] %v2643
      %2668 = vst [vmem:[%s224 + $0x68] sm:$0xff] %v2644
      %2669 = vst [vmem:[%s224 + $0x70] sm:$0xff] %v2645
      %2670 = vst [vmem:[%s224 + $0x78] sm:$0xff] %v2646
      %2671 = vst [vmem:[%s224 + $0x80] sm:$0xff] %v2647
      %2672 = vst [vmem:[%s224 + $0x88] sm:$0xff] %v2648
      %2673 = vst [vmem:[%s224 + $0x90] sm:$0xff] %v2649
      %2674 = vst [vmem:[%s224 + $0x98] sm:$0xff] %v2650
      %2675 = vst [vmem:[%s224 + $0xa0] sm:$0xff] %v2651
      %2676 = vst [vmem:[%s224 + $0xa8] sm:$0xff] %v2652
      %2677 = vst [vmem:[%s224 + $0xb0] sm:$0xff] %v2653
      %2678 = vst [vmem:[%s224 + $0xb8] sm:$0xff] %v2654
      %p2679 = scmp.lt.s32.totalorder %s16, 1
      %s2680 = scalar_select %p2679, %s16, 1
      %s2681 = smul.addr %s2680, 24
      %s2682 = smul.addr %s2681, 8
      %s2683 = scalar_lea.vmem %s5, %s2682
      // Predicated region
      $region41: #{grader_forward.3} parent=39 // pred_check
        %p2684 = pneg %p144
      $region42: #{grader_forward.3} parent=39 // pred_check_branch
        %2686 = sbr.rel (%p2684) target = $region44
      $region43: #{grader_forward.3} parent=39 // pred_region
        _
      $region44: #{grader_forward.3} parent=39 // pred_fallthru
        _
    $region40: #{grader_forward.3} parent=5 // pred_fallthru
      _
    %p2687 = scmp.le.s32.totalorder 2, %s11
    // Predicated region
    $region45: #{grader_forward.3} parent=5 // pred_check
      %p2688 = pneg %p2687
    $region46: #{grader_forward.3} parent=5 // pred_check_branch
      %2690 = sbr.rel (%p2688) target = $region48
    $region47: #{grader_forward.3} parent=5 // pred_region
      %s2691 = ssub.s32 %s11, 2
      // Predicated region
      $region49: #{grader_forward.3} parent=47 // pred_check
        %p2692 = pneg %p150
      $region50: #{grader_forward.3} parent=47 // pred_check_branch
        %2694 = sbr.rel (%p2692) target = $region52
      $region51: #{grader_forward.3} parent=47 // pred_region
        %p2695 = scmp.lt.s32.totalorder %s17, 1
        %s2696 = scalar_select %p2695, %s17, 1
        %s2697 = smul.addr %s2696, 24
        %s2698 = smul.addr %s2697, 8
        %s2699 = scalar_lea.vmem %s5, %s2698
      $region52: #{grader_forward.3} parent=47 // pred_fallthru
        _
    $region48: #{grader_forward.3} parent=5 // pred_fallthru
      _
  $region6: #{grader_forward.3} parent=0 // loop_footer
    %s15 = sadd.s32 1, %s11
  $region7: #{grader_forward.3} parent=0 // loop_footer_branch
    %10 = sbr.rel target = $region3
  $region8: #{grader_forward.3} parent=0 // loop_exit
    _

// kernel: grader_forward.2
$region0: #{grader_forward.2}
  #allocation0 [shape = 'u32[]', space=smem, size = 0x4, offset = 0x4, fixed_abs, tag = 'smem constant byte address 0x4 - core index']
  #allocation1 [shape = 'u32[144,128]{1,0:T(1,128)}', space=vmem, size = 0x12000, scoped, tag = 'internal scratch']
  #allocation2 [shape = 'bf16[14,24,128]{2,1,0:T(8,128)(2,1)}', space=vmem, size = 0x15000, scoped, tag = 'scratch operand']
  %s0 = inlined_call_operand.vmem [shape: f32[2,16,16,128], index: 0, kind: input, shape index: {}]
  %s1 = inlined_call_operand.vmem [shape: f32[2,5,5,128], index: 1, kind: input, shape index: {}]
  %s2 = inlined_call_operand.vmem [shape: bf16[3,384,128], index: 2, kind: input, shape index: {}]
  %s3 = inlined_call_operand.vmem [shape: f32[1,128], index: 3, kind: input, shape index: {}]
  %s4 = inlined_call_operand.vmem [shape: f32[2,12,12,128], index: 4, kind: output, shape index: {0}]
  %s5 = inlined_call_operand.vmem [shape: bf16[2,12,16,128], index: 5, kind: output, shape index: {1}]
  %s6 = inlined_call_operand.vmem [shape: f32[2,1,128], index: 6, kind: output, shape index: {2}]
  %s7 = inlined_call_operand.vmem [shape: f32[2,1,128], index: 7, kind: output, shape index: {3}]
  %8 = xla_tuple %s4, %s5, %s6, %s7
  %s9 = sld [smem:[#allocation0]]
  $region73: #{grader_forward.2} parent=0
    _
  %s11 = ssub.s32 1, %s9
  %s12 = scalar_select 0, %s11, %s9
  loop: start=0, step=1, limit=4
  $region2: #{grader_forward.2} parent=0 // loop_pre_header
    _
  $region3: #{grader_forward.2} parent=0 // loop_header
    %s14 = sphi 0, %s18
    %p15 = scmp.ge.s32.totalorder %s14, 4
    %s24 = sphi 0, %s26
    %s27 = sphi 0, %s24
    %s28 = sphi 0, %s27
    %s44 = sphi 0, %s28
    %s50 = sphi 0, %s52
    %s53 = sphi 0, %s50
    %s54 = sphi 0, %s53
    %s70 = sphi 0, %s54
    %s74 = sphi 0, %s74
    %s76 = sphi 0, %s74
    %s77 = sphi 0, %s76
    %s91 = sphi 0, %s77
    %s95 = sphi 0, %s95
    %s97 = sphi 0, %s95
    %s98 = sphi 0, %s97
    %s112 = sphi 0, %s98
    %s118 = sphi 0, %s120
    %s121 = sphi 0, %s118
    %s122 = sphi 0, %s121
    %s138 = sphi 0, %s122
    %s144 = sphi 0, %s146
    %s147 = sphi 0, %s144
    %s148 = sphi 0, %s147
    %s164 = sphi 0, %s148
    %s170 = sphi 0, %s172
    %s173 = sphi 0, %s170
    %s174 = sphi 0, %s173
    %s190 = sphi 0, %s174
    %s196 = sphi 0, %s198
    %s199 = sphi 0, %s196
    %s200 = sphi 0, %s199
    %s216 = sphi 0, %s200
  $region4: #{grader_forward.2} parent=0 // loop_header_branch
    %17 = sbr.rel (%p15) target = $region8
  $region5: #{grader_forward.2} parent=0 // loop_body
    %s19 = ssub.s32 %s14, 1
    %s20 = ssub.s32 %s14, 2
    %s21 = sadd.s32 %s14, 1
    %s22 = ssub.s32 %s14, %s21
    %p23 = scmp.eq.s32.totalorder %s22, 0
    %s25 = sadd.s32 %s24, 1
    %s26 = scalar_select %p23, %s24, %s25
    %p29 = pneg %p23
    %p30 = scmp.eq.s32.totalorder %s14, 1
    %p31 = por %p29, %p30
    %p32 = scmp.ne.s32.totalorder %s24, %s27
    %p33 = scmp.eq.s32.totalorder %s14, 0
    %p34 = por %p32, %p33
    %p35 = scmp.ne.s32.totalorder %s24, %s27
    %p36 = scmp.eq.s32.totalorder %s19, 1
    %p37 = por %p35, %p36
    %p38 = scmp.ne.s32.totalorder %s27, %s28
    %p39 = scmp.eq.s32.totalorder %s19, 0
    %p40 = por %p38, %p39
    %p41 = scmp.ne.s32.totalorder %s27, %s28
    %p42 = scmp.eq.s32.totalorder %s20, 1
    %p43 = por %p41, %p42
    %p45 = scmp.ne.s32.totalorder %s28, %s44
    %p46 = scmp.eq.s32.totalorder %s20, 0
    %p47 = por %p45, %p46
    %s48 = ssub.s32 %s14, %s21
    %p49 = scmp.eq.s32.totalorder %s48, 0
    %s51 = sadd.s32 %s50, 1
    %s52 = scalar_select %p49, %s50, %s51
    %p55 = pneg %p49
    %p56 = scmp.eq.s32.totalorder %s14, 1
    %p57 = por %p55, %p56
    %p58 = scmp.ne.s32.totalorder %s50, %s53
    %p59 = scmp.eq.s32.totalorder %s14, 0
    %p60 = por %p58, %p59
    %p61 = scmp.ne.s32.totalorder %s50, %s53
    %p62 = scmp.eq.s32.totalorder %s19, 1
    %p63 = por %p61, %p62
    %p64 = scmp.ne.s32.totalorder %s53, %s54
    %p65 = scmp.eq.s32.totalorder %s19, 0
    %p66 = por %p64, %p65
    %p67 = scmp.ne.s32.totalorder %s53, %s54
    %p68 = scmp.eq.s32.totalorder %s20, 1
    %p69 = por %p67, %p68
    %p71 = scmp.ne.s32.totalorder %s54, %s70
    %p72 = scmp.eq.s32.totalorder %s20, 0
    %p73 = por %p71, %p72
    %s75 = sadd.s32 %s74, 1
    %p78 = scmp.eq.s32.totalorder %s14, 1
    %p79 = scmp.ne.s32.totalorder %s74, %s76
    %p80 = scmp.eq.s32.totalorder %s14, 0
    %p81 = por %p79, %p80
    %p82 = scmp.ne.s32.totalorder %s74, %s76
    %p83 = scmp.eq.s32.totalorder %s19, 1
    %p84 = por %p82, %p83
    %p85 = scmp.ne.s32.totalorder %s76, %s77
    %p86 = scmp.eq.s32.totalorder %s19, 0
    %p87 = por %p85, %p86
    %p88 = scmp.ne.s32.totalorder %s76, %s77
    %p89 = scmp.eq.s32.totalorder %s20, 1
    %p90 = por %p88, %p89
    %p92 = scmp.ne.s32.totalorder %s77, %s91
    %p93 = scmp.eq.s32.totalorder %s20, 0
    %p94 = por %p92, %p93
    %s96 = sadd.s32 %s95, 1
    %p99 = scmp.eq.s32.totalorder %s14, 1
    %p100 = scmp.ne.s32.totalorder %s95, %s97
    %p101 = scmp.eq.s32.totalorder %s14, 0
    %p102 = por %p100, %p101
    %p103 = scmp.ne.s32.totalorder %s95, %s97
    %p104 = scmp.eq.s32.totalorder %s19, 1
    %p105 = por %p103, %p104
    %p106 = scmp.ne.s32.totalorder %s97, %s98
    %p107 = scmp.eq.s32.totalorder %s19, 0
    %p108 = por %p106, %p107
    %p109 = scmp.ne.s32.totalorder %s97, %s98
    %p110 = scmp.eq.s32.totalorder %s20, 1
    %p111 = por %p109, %p110
    %p113 = scmp.ne.s32.totalorder %s98, %s112
    %p114 = scmp.eq.s32.totalorder %s20, 0
    %p115 = por %p113, %p114
    %s116 = ssub.s32 %s14, %s21
    %p117 = scmp.eq.s32.totalorder %s116, 0
    %s119 = sadd.s32 %s118, 1
    %s120 = scalar_select %p117, %s118, %s119
    %p123 = pneg %p117
    %p124 = scmp.eq.s32.totalorder %s14, 1
    %p125 = por %p123, %p124
    %p126 = scmp.ne.s32.totalorder %s118, %s121
    %p127 = scmp.eq.s32.totalorder %s14, 0
    %p128 = por %p126, %p127
    %p129 = scmp.ne.s32.totalorder %s118, %s121
    %p130 = scmp.eq.s32.totalorder %s19, 1
    %p131 = por %p129, %p130
    %p132 = scmp.ne.s32.totalorder %s121, %s122
    %p133 = scmp.eq.s32.totalorder %s19, 0
    %p134 = por %p132, %p133
    %p135 = scmp.ne.s32.totalorder %s121, %s122
    %p136 = scmp.eq.s32.totalorder %s20, 1
    %p137 = por %p135, %p136
    %p139 = scmp.ne.s32.totalorder %s122, %s138
    %p140 = scmp.eq.s32.totalorder %s20, 0
    %p141 = por %p139, %p140
    %s142 = ssub.s32 %s14, %s21
    %p143 = scmp.eq.s32.totalorder %s142, 0
    %s145 = sadd.s32 %s144, 1
    %s146 = scalar_select %p143, %s144, %s145
    %p149 = pneg %p143
    %p150 = scmp.eq.s32.totalorder %s14, 1
    %p151 = por %p149, %p150
    %p152 = scmp.ne.s32.totalorder %s144, %s147
    %p153 = scmp.eq.s32.totalorder %s14, 0
    %p154 = por %p152, %p153
    %p155 = scmp.ne.s32.totalorder %s144, %s147
    %p156 = scmp.eq.s32.totalorder %s19, 1
    %p157 = por %p155, %p156
    %p158 = scmp.ne.s32.totalorder %s147, %s148
    %p159 = scmp.eq.s32.totalorder %s19, 0
    %p160 = por %p158, %p159
    %p161 = scmp.ne.s32.totalorder %s147, %s148
    %p162 = scmp.eq.s32.totalorder %s20, 1
    %p163 = por %p161, %p162
    %p165 = scmp.ne.s32.totalorder %s148, %s164
    %p166 = scmp.eq.s32.totalorder %s20, 0
    %p167 = por %p165, %p166
    %s168 = ssub.s32 %s14, %s21
    %p169 = scmp.eq.s32.totalorder %s168, 0
    %s171 = sadd.s32 %s170, 1
    %s172 = scalar_select %p169, %s170, %s171
    %p175 = pneg %p169
    %p176 = scmp.eq.s32.totalorder %s14, 1
    %p177 = por %p175, %p176
    %p178 = scmp.ne.s32.totalorder %s170, %s173
    %p179 = scmp.eq.s32.totalorder %s14, 0
    %p180 = por %p178, %p179
    %p181 = scmp.ne.s32.totalorder %s170, %s173
    %p182 = scmp.eq.s32.totalorder %s19, 1
    %p183 = por %p181, %p182
    %p184 = scmp.ne.s32.totalorder %s173, %s174
    %p185 = scmp.eq.s32.totalorder %s19, 0
    %p186 = por %p184, %p185
    %p187 = scmp.ne.s32.totalorder %s173, %s174
    %p188 = scmp.eq.s32.totalorder %s20, 1
    %p189 = por %p187, %p188
    %p191 = scmp.ne.s32.totalorder %s174, %s190
    %p192 = scmp.eq.s32.totalorder %s20, 0
    %p193 = por %p191, %p192
    %s194 = ssub.s32 %s14, %s21
    %p195 = scmp.eq.s32.totalorder %s194, 0
    %s197 = sadd.s32 %s196, 1
    %s198 = scalar_select %p195, %s196, %s197
    %p201 = pneg %p195
    %p202 = scmp.eq.s32.totalorder %s14, 1
    %p203 = por %p201, %p202
    %p204 = scmp.ne.s32.totalorder %s196, %s199
    %p205 = scmp.eq.s32.totalorder %s14, 0
    %p206 = por %p204, %p205
    %p207 = scmp.ne.s32.totalorder %s196, %s199
    %p208 = scmp.eq.s32.totalorder %s19, 1
    %p209 = por %p207, %p208
    %p210 = scmp.ne.s32.totalorder %s199, %s200
    %p211 = scmp.eq.s32.totalorder %s19, 0
    %p212 = por %p210, %p211
    %p213 = scmp.ne.s32.totalorder %s199, %s200
    %p214 = scmp.eq.s32.totalorder %s20, 1
    %p215 = por %p213, %p214
    %p217 = scmp.ne.s32.totalorder %s200, %s216
    %p218 = scmp.eq.s32.totalorder %s20, 0
    %p219 = por %p217, %p218
    %p220 = scmp.le.s32.totalorder 1, %s14
    %p221 = scmp.lt.s32.totalorder %s14, 3
    %p222 = pnand %p220, %p221
    %p223 = pneg %p222
    // Predicated region
    $region9: #{grader_forward.2} parent=5 // pred_check
      _
    $region10: #{grader_forward.2} parent=5 // pred_check_branch
      %225 = sbr.rel (%p222) target = $region12
    $region11: #{grader_forward.2} parent=5 // pred_region
      %s226 = ssub.s32 %s14, 1
      // Predicated region
      $region13: #{grader_forward.2} parent=11 // pred_check
        %p227 = pneg %p87
      $region14: #{grader_forward.2} parent=11 // pred_check_branch
        %229 = sbr.rel (%p227) target = $region16
      $region15: #{grader_forward.2} parent=11 // pred_region
        _
      $region16: #{grader_forward.2} parent=11 // pred_fallthru
        _
      // Predicated region
      $region17: #{grader_forward.2} parent=11 // pred_check
        %p230 = pneg %p108
      $region18: #{grader_forward.2} parent=11 // pred_check_branch
        %232 = sbr.rel (%p230) target = $region20
      $region19: #{grader_forward.2} parent=11 // pred_region
        _
      $region20: #{grader_forward.2} parent=11 // pred_fallthru
        _
    $region12: #{grader_forward.2} parent=5 // pred_fallthru
      _
    %p233 = scmp.lt.s32.totalorder %s14, 2
    // Predicated region
    $region21: #{grader_forward.2} parent=5 // pred_check
      %p234 = pneg %p233
    $region22: #{grader_forward.2} parent=5 // pred_check_branch
      %236 = sbr.rel (%p234) target = $region24
    $region23: #{grader_forward.2} parent=5 // pred_region
      // Predicated region
      $region25: #{grader_forward.2} parent=23 // pred_check
        %p237 = pneg %p34
      $region26: #{grader_forward.2} parent=23 // pred_check_branch
        %239 = sbr.rel (%p237) target = $region28
      $region27: #{grader_forward.2} parent=23 // pred_region
        %p240 = scmp.lt.s32.totalorder %s14, 1
        %s241 = scalar_select %p240, %s14, 1
        %s242 = smul.addr %s241, 32
        %s243 = smul.addr %s242, 8
        %s244 = scalar_lea.vmem %s0, %s243
      $region28: #{grader_forward.2} parent=23 // pred_fallthru
        _
      // Predicated region
      $region29: #{grader_forward.2} parent=23 // pred_check
        %p245 = pneg %p60
      $region30: #{grader_forward.2} parent=23 // pred_check_branch
        %247 = sbr.rel (%p245) target = $region32
      $region31: #{grader_forward.2} parent=23 // pred_region
        %p248 = scmp.lt.s32.totalorder %s14, 1
        %s249 = scalar_select %p248, %s14, 1
        %s250 = smul.addr %s249, 5
        %s251 = smul.addr %s250, 8
        %s252 = scalar_lea.vmem %s1, %s251
      $region32: #{grader_forward.2} parent=23 // pred_fallthru
        _
    $region24: #{grader_forward.2} parent=5 // pred_fallthru
      _
    %p253 = scmp.le.s32.totalorder 1, %s14
    %p254 = scmp.lt.s32.totalorder %s14, 3
    %p255 = pnand %p253, %p254
    %p256 = pneg %p255
    // Predicated region
    $region33: #{grader_forward.2} parent=5 // pred_check
      _
    $region34: #{grader_forward.2} parent=5 // pred_check_branch
      %258 = sbr.rel (%p255) target = $region36
    $region35: #{grader_forward.2} parent=5 // pred_region
      %s259 = ssub.s32 %s14, 1
      %p260 = scmp.lt.s32.totalorder %s19, 1
      %s261 = scalar_select %p260, %s19, 1
      %s262 = smul.addr %s261, 32
      %s263 = smul.addr %s262, 8
      %s264 = scalar_lea.vmem %s0, %s263
      %p265 = pneg %p40
      %p266 = pneg %p37
      %p267 = scmp.lt.s32.totalorder %s19, 1
      %s268 = scalar_select %p267, %s19, 1
      %s269 = smul.addr %s268, 5
      %s270 = smul.addr %s269, 8
      %s271 = scalar_lea.vmem %s1, %s270
      %p272 = pneg %p66
      %p273 = pneg %p63
      %p274 = pneg %p87
      %p275 = pneg %p84
      %p276 = pneg %p108
      %p277 = pneg %p105
      %p278 = pneg %p134
      %p279 = pneg %p131
      %p280 = scmp.lt.s32.totalorder %s19, 1
      %s281 = scalar_select %p280, %s19, 1
      %s282 = smul.addr %s281, 24
      %s283 = smul.addr %s282, 8
      %s284 = scalar_lea.vmem %s4, %s283
      %p285 = pneg %p160
      %p286 = pneg %p157
      %p287 = scmp.lt.s32.totalorder %s19, 1
      %s288 = scalar_select %p287, %s19, 1
      %s289 = smul.addr %s288, 24
      %s290 = smul.addr %s289, 4
      %s291 = scalar_lea.vmem %s5, %s290
      %p292 = pneg %p186
      %p293 = pneg %p183
      %p294 = scmp.lt.s32.totalorder %s19, 1
      %s295 = scalar_select %p294, %s19, 1
      %s296 = scalar_lea.vmem %s6, %s295
      %p297 = pneg %p212
      %p298 = pneg %p209
      %p299 = scmp.lt.s32.totalorder %s19, 1
      %s300 = scalar_select %p299, %s19, 1
      %s301 = scalar_lea.vmem %s7, %s300
      %p302 = scmp.lt.s32.totalorder %s19, 1
      %s303 = scalar_select %p302, %s19, 1
      %s304 = smul.addr %s303, 32
      %s305 = smul.addr %s304, 8
      %s306 = scalar_lea.vmem %s0, %s305
      %p307 = scmp.lt.s32.totalorder %s19, 1
      %s308 = scalar_select %p307, %s19, 1
      %s309 = smul.addr %s308, 5
      %s310 = smul.addr %s309, 8
      %s311 = scalar_lea.vmem %s1, %s310
      %p312 = scmp.lt.s32.totalorder %s19, 1
      %s313 = scalar_select %p312, %s19, 1
      %s314 = smul.addr %s313, 24
      %s315 = smul.addr %s314, 8
      %s316 = scalar_lea.vmem %s4, %s315
      %p317 = scmp.lt.s32.totalorder %s19, 1
      %s318 = scalar_select %p317, %s19, 1
      %s319 = smul.addr %s318, 24
      %s320 = smul.addr %s319, 4
      %s321 = scalar_lea.vmem %s5, %s320
      %p322 = scmp.lt.s32.totalorder %s19, 1
      %s323 = scalar_select %p322, %s19, 1
      %s324 = scalar_lea.vmem %s6, %s323
      %p325 = scmp.lt.s32.totalorder %s19, 1
      %s326 = scalar_select %p325, %s19, 1
      %s327 = scalar_lea.vmem %s7, %s326
      %329 = vst [vmem:[#allocation2] sm:$0xf] 0
      %330 = vst [vmem:[#allocation2 + $0x4] sm:$0xf] 0
      %331 = vst [vmem:[#allocation2 + $0x8] sm:$0xf] 0
      %s332 = scalar_lea.vmem [#allocation2], 156
      %333 = vst [vmem:[%s332] sm:$0xf] 0
      %334 = vst [vmem:[%s332 + $0x4] sm:$0xf] 0
      %335 = vst [vmem:[%s332 + $0x8] sm:$0xf] 0
      %vm336 = vcmask 1040384
      %vm337 = vsmask.f32 256
      %vm338 = vmand %vm336, %vm337
      %v339 = vld [vmem:[#allocation2] sm:$0x1]
      %v340 = vsel %vm338, 0, %v339
      %341 = vst [vmem:[#allocation2] sm:$0x1] %v340
      %v342 = vld [vmem:[#allocation2 + $0xc] sm:$0x1]
      %v343 = vsel %vm338, 0, %v342
      %344 = vst [vmem:[#allocation2 + $0xc] sm:$0x1] %v343
      %v345 = vld [vmem:[#allocation2 + $0x18] sm:$0x1]
      %v346 = vsel %vm338, 0, %v345
      %347 = vst [vmem:[#allocation2 + $0x18] sm:$0x1] %v346
      %v348 = vld [vmem:[#allocation2 + $0x24] sm:$0x1]
      %v349 = vsel %vm338, 0, %v348
      %350 = vst [vmem:[#allocation2 + $0x24] sm:$0x1] %v349
      %v351 = vld [vmem:[#allocation2 + $0x30] sm:$0x1]
      %v352 = vsel %vm338, 0, %v351
      %353 = vst [vmem:[#allocation2 + $0x30] sm:$0x1] %v352
      %v354 = vld [vmem:[#allocation2 + $0x3c] sm:$0x1]
      %v355 = vsel %vm338, 0, %v354
      %356 = vst [vmem:[#allocation2 + $0x3c] sm:$0x1] %v355
      %v357 = vld [vmem:[#allocation2 + $0x48] sm:$0x1]
      %v358 = vsel %vm338, 0, %v357
      %359 = vst [vmem:[#allocation2 + $0x48] sm:$0x1] %v358
      %v360 = vld [vmem:[#allocation2 + $0x54] sm:$0x1]
      %v361 = vsel %vm338, 0, %v360
      %362 = vst [vmem:[#allocation2 + $0x54] sm:$0x1] %v361
      %v363 = vld [vmem:[#allocation2 + $0x60] sm:$0x1]
      %v364 = vsel %vm338, 0, %v363
      %365 = vst [vmem:[#allocation2 + $0x60] sm:$0x1] %v364
      %v366 = vld [vmem:[#allocation2 + $0x6c] sm:$0x1]
      %v367 = vsel %vm338, 0, %v366
      %368 = vst [vmem:[#allocation2 + $0x6c] sm:$0x1] %v367
      %v369 = vld [vmem:[#allocation2 + $0x78] sm:$0x1]
      %v370 = vsel %vm338, 0, %v369
      %371 = vst [vmem:[#allocation2 + $0x78] sm:$0x1] %v370
      %v372 = vld [vmem:[#allocation2 + $0x84] sm:$0x1]
      %v373 = vsel %vm338, 0, %v372
      %374 = vst [vmem:[#allocation2 + $0x84] sm:$0x1] %v373
      %v375 = vld [vmem:[#allocation2 + $0x90] sm:$0x1]
      %v376 = vsel %vm338, 0, %v375
      %377 = vst [vmem:[#allocation2 + $0x90] sm:$0x1] %v376
      %v378 = vld [vmem:[#allocation2 + $0x9c] sm:$0x1]
      %v379 = vsel %vm338, 0, %v378
      %380 = vst [vmem:[#allocation2 + $0x9c] sm:$0x1] %v379
      %vm381 = vcmask 1043458
      %vm382 = vsmask.f32 7946
      %vm383 = vmand %vm381, %vm382
      %v384 = vld [vmem:[#allocation2 + $0x4] sm:$0xc]
      %v385 = vsel %vm383, 0, %v384
      %386 = vst [vmem:[#allocation2 + $0x4] sm:$0xc] %v385
      %387 = vst [vmem:[#allocation2 + $0x8] sm:$0xf] 0
      %v388 = vld [vmem:[#allocation2 + $0x10] sm:$0xc]
      %v389 = vsel %vm383, 0, %v388
      %390 = vst [vmem:[#allocation2 + $0x10] sm:$0xc] %v389
      %391 = vst [vmem:[#allocation2 + $0x14] sm:$0xf] 0
      %v392 = vld [vmem:[#allocation2 + $0x1c] sm:$0xc]
      %v393 = vsel %vm383, 0, %v392
      %394 = vst [vmem:[#allocation2 + $0x1c] sm:$0xc] %v393
      %395 = vst [vmem:[#allocation2 + $0x20] sm:$0xf] 0
      %v396 = vld [vmem:[#allocation2 + $0x28] sm:$0xc]
      %v397 = vsel %vm383, 0, %v396
      %398 = vst [vmem:[#allocation2 + $0x28] sm:$0xc] %v397
      %399 = vst [vmem:[#allocation2 + $0x2c] sm:$0xf] 0
      %v400 = vld [vmem:[#allocation2 + $0x34] sm:$0xc]
      %v401 = vsel %vm383, 0, %v400
      %402 = vst [vmem:[#allocation2 + $0x34] sm:$0xc] %v401
      %403 = vst [vmem:[#allocation2 + $0x38] sm:$0xf] 0
      %v404 = vld [vmem:[#allocation2 + $0x40] sm:$0xc]
      %v405 = vsel %vm383, 0, %v404
      %406 = vst [vmem:[#allocation2 + $0x40] sm:$0xc] %v405
      %407 = vst [vmem:[#allocation2 + $0x44] sm:$0xf] 0
      %v408 = vld [vmem:[#allocation2 + $0x4c] sm:$0xc]
      %v409 = vsel %vm383, 0, %v408
      %410 = vst [vmem:[#allocation2 + $0x4c] sm:$0xc] %v409
      %411 = vst [vmem:[#allocation2 + $0x50] sm:$0xf] 0
      %v412 = vld [vmem:[#allocation2 + $0x58] sm:$0xc]
      %v413 = vsel %vm383, 0, %v412
      %414 = vst [vmem:[#allocation2 + $0x58] sm:$0xc] %v413
      %415 = vst [vmem:[#allocation2 + $0x5c] sm:$0xf] 0
      %v416 = vld [vmem:[#allocation2 + $0x64] sm:$0xc]
      %v417 = vsel %vm383, 0, %v416
      %418 = vst [vmem:[#allocation2 + $0x64] sm:$0xc] %v417
      %419 = vst [vmem:[#allocation2 + $0x68] sm:$0xf] 0
      %v420 = vld [vmem:[#allocation2 + $0x70] sm:$0xc]
      %v421 = vsel %vm383, 0, %v420
      %422 = vst [vmem:[#allocation2 + $0x70] sm:$0xc] %v421
      %423 = vst [vmem:[#allocation2 + $0x74] sm:$0xf] 0
      %v424 = vld [vmem:[#allocation2 + $0x7c] sm:$0xc]
      %v425 = vsel %vm383, 0, %v424
      %426 = vst [vmem:[#allocation2 + $0x7c] sm:$0xc] %v425
      %427 = vst [vmem:[#allocation2 + $0x80] sm:$0xf] 0
      %v428 = vld [vmem:[#allocation2 + $0x88] sm:$0xc]
      %v429 = vsel %vm383, 0, %v428
      %430 = vst [vmem:[#allocation2 + $0x88] sm:$0xc] %v429
      %431 = vst [vmem:[#allocation2 + $0x8c] sm:$0xf] 0
      %v432 = vld [vmem:[#allocation2 + $0x94] sm:$0xc]
      %v433 = vsel %vm383, 0, %v432
      %434 = vst [vmem:[#allocation2 + $0x94] sm:$0xc] %v433
      %435 = vst [vmem:[#allocation2 + $0x98] sm:$0xf] 0
      %v436 = vld [vmem:[#allocation2 + $0xa0] sm:$0xc]
      %v437 = vsel %vm383, 0, %v436
      %438 = vst [vmem:[#allocation2 + $0xa0] sm:$0xc] %v437
      %439 = vst [vmem:[#allocation2 + $0xa4] sm:$0xf] 0
      %v440 = vld [vmem:[%s306] sm:$0xff]
      %v441 = vld [vmem:[%s306 + $0x8] sm:$0xff]
      %v442 = vld [vmem:[%s306 + $0x10] sm:$0xff]
      %v443 = vld [vmem:[%s306 + $0x18] sm:$0xff]
      %v444 = vld [vmem:[%s306 + $0x20] sm:$0xff]
      %v445 = vld [vmem:[%s306 + $0x28] sm:$0xff]
      %v446 = vld [vmem:[%s306 + $0x30] sm:$0xff]
      %v447 = vld [vmem:[%s306 + $0x38] sm:$0xff]
      %v448 = vld [vmem:[%s306 + $0x40] sm:$0xff]
      %v449 = vld [vmem:[%s306 + $0x48] sm:$0xff]
      %v450 = vld [vmem:[%s306 + $0x50] sm:$0xff]
      %v451 = vld [vmem:[%s306 + $0x58] sm:$0xff]
      %v452 = vld [vmem:[%s306 + $0x60] sm:$0xff]
      %v453 = vld [vmem:[%s306 + $0x68] sm:$0xff]
      %v454 = vld [vmem:[%s306 + $0x70] sm:$0xff]
      %v455 = vld [vmem:[%s306 + $0x78] sm:$0xff]
      %v456 = vld [vmem:[%s306 + $0x80] sm:$0xff]
      %v457 = vld [vmem:[%s306 + $0x88] sm:$0xff]
      %v458 = vld [vmem:[%s306 + $0x90] sm:$0xff]
      %v459 = vld [vmem:[%s306 + $0x98] sm:$0xff]
      %v460 = vld [vmem:[%s306 + $0xa0] sm:$0xff]
      %v461 = vld [vmem:[%s306 + $0xa8] sm:$0xff]
      %v462 = vld [vmem:[%s306 + $0xb0] sm:$0xff]
      %v463 = vld [vmem:[%s306 + $0xb8] sm:$0xff]
      %v464 = vld [vmem:[%s306 + $0xc0] sm:$0xff]
      %v465 = vld [vmem:[%s306 + $0xc8] sm:$0xff]
      %v466 = vld [vmem:[%s306 + $0xd0] sm:$0xff]
      %v467 = vld [vmem:[%s306 + $0xd8] sm:$0xff]
      %v468 = vld [vmem:[%s306 + $0xe0] sm:$0xff]
      %v469 = vld [vmem:[%s306 + $0xe8] sm:$0xff]
      %v470 = vld [vmem:[%s306 + $0xf0] sm:$0xff]
      %v471 = vld [vmem:[%s306 + $0xf8] sm:$0xff]
      %v472 = vld [vmem:[%s311] sm:$0x1f]
      %v473 = vld [vmem:[%s311 + $0x8] sm:$0x1f]
      %v474 = vld [vmem:[%s311 + $0x10] sm:$0x1f]
      %v475 = vld [vmem:[%s311 + $0x18] sm:$0x1f]
      %v476 = vld [vmem:[%s311 + $0x20] sm:$0x1f]
      %v477 = vlaneseq
      %v478 = vshrl.u32 %v477, 7
      %v479 = vsub.s32 0, %v478
      %v480 = vrot.slane %v472, %v479
      %v481 = vmul.f32 %v440, %v480
      %v482 = vmul.f32 %v441, %v480
      %v483 = vmul.f32 %v442, %v480
      %v484 = vmul.f32 %v443, %v480
      %v485 = vmul.f32 %v444, %v480
      %v486 = vmul.f32 %v445, %v480
      %v487 = vmul.f32 %v446, %v480
      %v488 = vmul.f32 %v447, %v480
      %v489 = vmul.f32 %v448, %v480
      %v490 = vmul.f32 %v449, %v480
      %v491 = vmul.f32 %v450, %v480
      %v492 = vmul.f32 %v451, %v480
      %v493 = vmul.f32 %v452, %v480
      %v494 = vmul.f32 %v453, %v480
      %v495 = vmul.f32 %v454, %v480
      %v496 = vmul.f32 %v455, %v480
      %v497 = vmul.f32 %v456, %v480
      %v498 = vmul.f32 %v457, %v480
      %v499 = vmul.f32 %v458, %v480
      %v500 = vmul.f32 %v459, %v480
      %v501 = vmul.f32 %v460, %v480
      %v502 = vmul.f32 %v461, %v480
      %v503 = vmul.f32 %v462, %v480
      %v504 = vmul.f32 %v463, %v480
      %v505 = vadd.f32 %v481, 0.0
      %v506 = vadd.f32 %v482, 0.0
      %v507 = vadd.f32 %v483, 0.0
      %v508 = vadd.f32 %v484, 0.0
      %v509 = vadd.f32 %v485, 0.0
      %v510 = vadd.f32 %v486, 0.0
      %v511 = vadd.f32 %v487, 0.0
      %v512 = vadd.f32 %v488, 0.0
      %v513 = vadd.f32 %v489, 0.0
      %v514 = vadd.f32 %v490, 0.0
      %v515 = vadd.f32 %v491, 0.0
      %v516 = vadd.f32 %v492, 0.0
      %v517 = vadd.f32 %v493, 0.0
      %v518 = vadd.f32 %v494, 0.0
      %v519 = vadd.f32 %v495, 0.0
      %v520 = vadd.f32 %v496, 0.0
      %v521 = vadd.f32 %v497, 0.0
      %v522 = vadd.f32 %v498, 0.0
      %v523 = vadd.f32 %v499, 0.0
      %v524 = vadd.f32 %v500, 0.0
      %v525 = vadd.f32 %v501, 0.0
      %v526 = vadd.f32 %v502, 0.0
      %v527 = vadd.f32 %v503, 0.0
      %v528 = vadd.f32 %v504, 0.0
      %v529 = vlaneseq
      %v530 = vshrl.u32 %v529, 7
      %v531 = vsub.s32 0, %v530
      %v532 = vrot.slane %v473, %v531
      %v533 = vmul.f32 %v442, %v532
      %v534 = vmul.f32 %v443, %v532
      %v535 = vmul.f32 %v444, %v532
      %v536 = vmul.f32 %v445, %v532
      %v537 = vmul.f32 %v446, %v532
      %v538 = vmul.f32 %v447, %v532
      %v539 = vmul.f32 %v448, %v532
      %v540 = vmul.f32 %v449, %v532
      %v541 = vmul.f32 %v450, %v532
      %v542 = vmul.f32 %v451, %v532
      %v543 = vmul.f32 %v452, %v532
      %v544 = vmul.f32 %v453, %v532
      %v545 = vmul.f32 %v454, %v532
      %v546 = vmul.f32 %v455, %v532
      %v547 = vmul.f32 %v456, %v532
      %v548 = vmul.f32 %v457, %v532
      %v549 = vmul.f32 %v458, %v532
      %v550 = vmul.f32 %v459, %v532
      %v551 = vmul.f32 %v460, %v532
      %v552 = vmul.f32 %v461, %v532
      %v553 = vmul.f32 %v462, %v532
      %v554 = vmul.f32 %v463, %v532
      %v555 = vmul.f32 %v464, %v532
      %v556 = vmul.f32 %v465, %v532
      %v557 = vadd.f32 %v505, %v533
      %v558 = vadd.f32 %v506, %v534
      %v559 = vadd.f32 %v507, %v535
      %v560 = vadd.f32 %v508, %v536
      %v561 = vadd.f32 %v509, %v537
      %v562 = vadd.f32 %v510, %v538
      %v563 = vadd.f32 %v511, %v539
      %v564 = vadd.f32 %v512, %v540
      %v565 = vadd.f32 %v513, %v541
      %v566 = vadd.f32 %v514, %v542
      %v567 = vadd.f32 %v515, %v543
      %v568 = vadd.f32 %v516, %v544
      %v569 = vadd.f32 %v517, %v545
      %v570 = vadd.f32 %v518, %v546
      %v571 = vadd.f32 %v519, %v547
      %v572 = vadd.f32 %v520, %v548
      %v573 = vadd.f32 %v521, %v549
      %v574 = vadd.f32 %v522, %v550
      %v575 = vadd.f32 %v523, %v551
      %v576 = vadd.f32 %v524, %v552
      %v577 = vadd.f32 %v525, %v553
      %v578 = vadd.f32 %v526, %v554
      %v579 = vadd.f32 %v527, %v555
      %v580 = vadd.f32 %v528, %v556
      %v581 = vlaneseq
      %v582 = vshrl.u32 %v581, 7
      %v583 = vsub.s32 0, %v582
      %v584 = vrot.slane %v474, %v583
      %v585 = vmul.f32 %v444, %v584
      %v586 = vmul.f32 %v445, %v584
      %v587 = vmul.f32 %v446, %v584
      %v588 = vmul.f32 %v447, %v584
      %v589 = vmul.f32 %v448, %v584
      %v590 = vmul.f32 %v449, %v584
      %v591 = vmul.f32 %v450, %v584
      %v592 = vmul.f32 %v451, %v584
      %v593 = vmul.f32 %v452, %v584
      %v594 = vmul.f32 %v453, %v584
      %v595 = vmul.f32 %v454, %v584
      %v596 = vmul.f32 %v455, %v584
      %v597 = vmul.f32 %v456, %v584
      %v598 = vmul.f32 %v457, %v584
      %v599 = vmul.f32 %v458, %v584
      %v600 = vmul.f32 %v459, %v584
      %v601 = vmul.f32 %v460, %v584
      %v602 = vmul.f32 %v461, %v584
      %v603 = vmul.f32 %v462, %v584
      %v604 = vmul.f32 %v463, %v584
      %v605 = vmul.f32 %v464, %v584
      %v606 = vmul.f32 %v465, %v584
      %v607 = vmul.f32 %v466, %v584
      %v608 = vmul.f32 %v467, %v584
      %v609 = vadd.f32 %v557, %v585
      %v610 = vadd.f32 %v558, %v586
      %v611 = vadd.f32 %v559, %v587
      %v612 = vadd.f32 %v560, %v588
      %v613 = vadd.f32 %v561, %v589
      %v614 = vadd.f32 %v562, %v590
      %v615 = vadd.f32 %v563, %v591
      %v616 = vadd.f32 %v564, %v592
      %v617 = vadd.f32 %v565, %v593
      %v618 = vadd.f32 %v566, %v594
      %v619 = vadd.f32 %v567, %v595
      %v620 = vadd.f32 %v568, %v596
      %v621 = vadd.f32 %v569, %v597
      %v622 = vadd.f32 %v570, %v598
      %v623 = vadd.f32 %v571, %v599
      %v624 = vadd.f32 %v572, %v600
      %v625 = vadd.f32 %v573, %v601
      %v626 = vadd.f32 %v574, %v602
      %v627 = vadd.f32 %v575, %v603
      %v628 = vadd.f32 %v576, %v604
      %v629 = vadd.f32 %v577, %v605
      %v630 = vadd.f32 %v578, %v606
      %v631 = vadd.f32 %v579, %v607
      %v632 = vadd.f32 %v580, %v608
      %v633 = vlaneseq
      %v634 = vshrl.u32 %v633, 7
      %v635 = vsub.s32 0, %v634
      %v636 = vrot.slane %v475, %v635
      %v637 = vmul.f32 %v446, %v636
      %v638 = vmul.f32 %v447, %v636
      %v639 = vmul.f32 %v448, %v636
      %v640 = vmul.f32 %v449, %v636
      %v641 = vmul.f32 %v450, %v636
      %v642 = vmul.f32 %v451, %v636
      %v643 = vmul.f32 %v452, %v636
      %v644 = vmul.f32 %v453, %v636
      %v645 = vmul.f32 %v454, %v636
      %v646 = vmul.f32 %v455, %v636
      %v647 = vmul.f32 %v456, %v636
      %v648 = vmul.f32 %v457, %v636
      %v649 = vmul.f32 %v458, %v636
      %v650 = vmul.f32 %v459, %v636
      %v651 = vmul.f32 %v460, %v636
      %v652 = vmul.f32 %v461, %v636
      %v653 = vmul.f32 %v462, %v636
      %v654 = vmul.f32 %v463, %v636
      %v655 = vmul.f32 %v464, %v636
      %v656 = vmul.f32 %v465, %v636
      %v657 = vmul.f32 %v466, %v636
      %v658 = vmul.f32 %v467, %v636
      %v659 = vmul.f32 %v468, %v636
      %v660 = vmul.f32 %v469, %v636
      %v661 = vadd.f32 %v609, %v637
      %v662 = vadd.f32 %v610, %v638
      %v663 = vadd.f32 %v611, %v639
      %v664 = vadd.f32 %v612, %v640
      %v665 = vadd.f32 %v613, %v641
      %v666 = vadd.f32 %v614, %v642
      %v667 = vadd.f32 %v615, %v643
      %v668 = vadd.f32 %v616, %v644
      %v669 = vadd.f32 %v617, %v645
      %v670 = vadd.f32 %v618, %v646
      %v671 = vadd.f32 %v619, %v647
      %v672 = vadd.f32 %v620, %v648
      %v673 = vadd.f32 %v621, %v649
      %v674 = vadd.f32 %v622, %v650
      %v675 = vadd.f32 %v623, %v651
      %v676 = vadd.f32 %v624, %v652
      %v677 = vadd.f32 %v625, %v653
      %v678 = vadd.f32 %v626, %v654
      %v679 = vadd.f32 %v627, %v655
      %v680 = vadd.f32 %v628, %v656
      %v681 = vadd.f32 %v629, %v657
      %v682 = vadd.f32 %v630, %v658
      %v683 = vadd.f32 %v631, %v659
      %v684 = vadd.f32 %v632, %v660
      %v685 = vlaneseq
      %v686 = vshrl.u32 %v685, 7
      %v687 = vsub.s32 0, %v686
      %v688 = vrot.slane %v476, %v687
      %v689 = vmul.f32 %v448, %v688
      %v690 = vmul.f32 %v449, %v688
      %v691 = vmul.f32 %v450, %v688
      %v692 = vmul.f32 %v451, %v688
      %v693 = vmul.f32 %v452, %v688
      %v694 = vmul.f32 %v453, %v688
      %v695 = vmul.f32 %v454, %v688
      %v696 = vmul.f32 %v455, %v688
      %v697 = vmul.f32 %v456, %v688
      %v698 = vmul.f32 %v457, %v688
      %v699 = vmul.f32 %v458, %v688
      %v700 = vmul.f32 %v459, %v688
      %v701 = vmul.f32 %v460, %v688
      %v702 = vmul.f32 %v461, %v688
      %v703 = vmul.f32 %v462, %v688
      %v704 = vmul.f32 %v463, %v688
      %v705 = vmul.f32 %v464, %v688
      %v706 = vmul.f32 %v465, %v688
      %v707 = vmul.f32 %v466, %v688
      %v708 = vmul.f32 %v467, %v688
      %v709 = vmul.f32 %v468, %v688
      %v710 = vmul.f32 %v469, %v688
      %v711 = vmul.f32 %v470, %v688
      %v712 = vmul.f32 %v471, %v688
      %v713 = vadd.f32 %v661, %v689
      %v714 = vadd.f32 %v662, %v690
      %v715 = vadd.f32 %v663, %v691
      %v716 = vadd.f32 %v664, %v692
      %v717 = vadd.f32 %v665, %v693
      %v718 = vadd.f32 %v666, %v694
      %v719 = vadd.f32 %v667, %v695
      %v720 = vadd.f32 %v668, %v696
      %v721 = vadd.f32 %v669, %v697
      %v722 = vadd.f32 %v670, %v698
      %v723 = vadd.f32 %v671, %v699
      %v724 = vadd.f32 %v672, %v700
      %v725 = vadd.f32 %v673, %v701
      %v726 = vadd.f32 %v674, %v702
      %v727 = vadd.f32 %v675, %v703
      %v728 = vadd.f32 %v676, %v704
      %v729 = vadd.f32 %v677, %v705
      %v730 = vadd.f32 %v678, %v706
      %v731 = vadd.f32 %v679, %v707
      %v732 = vadd.f32 %v680, %v708
      %v733 = vadd.f32 %v681, %v709
      %v734 = vadd.f32 %v682, %v710
      %v735 = vadd.f32 %v683, %v711
      %v736 = vadd.f32 %v684, %v712
      %v737 = vlaneseq
      %v738 = vshrl.u32 %v737, 7
      %v739 = vsub.s32 1, %v738
      %v740 = vrot.slane %v472, %v739
      %v741 = vmul.f32 %v440, %v740
      %v742 = vmul.f32 %v441, %v740
      %v743 = vmul.f32 %v442, %v740
      %v744 = vmul.f32 %v443, %v740
      %v745 = vmul.f32 %v444, %v740
      %v746 = vmul.f32 %v445, %v740
      %v747 = vmul.f32 %v446, %v740
      %v748 = vmul.f32 %v447, %v740
      %v749 = vmul.f32 %v448, %v740
      %v750 = vmul.f32 %v449, %v740
      %v751 = vmul.f32 %v450, %v740
      %v752 = vmul.f32 %v451, %v740
      %v753 = vmul.f32 %v452, %v740
      %v754 = vmul.f32 %v453, %v740
      %v755 = vmul.f32 %v454, %v740
      %v756 = vmul.f32 %v455, %v740
      %v757 = vmul.f32 %v456, %v740
      %v758 = vmul.f32 %v457, %v740
      %v759 = vmul.f32 %v458, %v740
      %v760 = vmul.f32 %v459, %v740
      %v761 = vmul.f32 %v460, %v740
      %v762 = vmul.f32 %v461, %v740
      %v763 = vmul.f32 %v462, %v740
      %v764 = vmul.f32 %v463, %v740
      %vm789 = vcmask 1046528
      %v790 = vrot.slane %v741, 1
      %v791 = vrot.slane %v742, 1
      %v792 = vsel %vm789, %v790, %v791
      %v793 = vrot.slane %v743, 1
      %v794 = vrot.slane %v744, 1
      %v795 = vsel %vm789, %v793, %v794
      %v796 = vrot.slane %v745, 1
      %v797 = vrot.slane %v746, 1
      %v798 = vsel %vm789, %v796, %v797
      %v799 = vrot.slane %v747, 1
      %v800 = vrot.slane %v748, 1
      %v801 = vsel %vm789, %v799, %v800
      %v802 = vrot.slane %v749, 1
      %v803 = vrot.slane %v750, 1
      %v804 = vsel %vm789, %v802, %v803
      %v805 = vrot.slane %v751, 1
      %v806 = vrot.slane %v752, 1
      %v807 = vsel %vm789, %v805, %v806
      %v808 = vrot.slane %v753, 1
      %v809 = vrot.slane %v754, 1
      %v810 = vsel %vm789, %v808, %v809
      %v811 = vrot.slane %v755, 1
      %v812 = vrot.slane %v756, 1
      %v813 = vsel %vm789, %v811, %v812
      %v814 = vrot.slane %v757, 1
      %v815 = vrot.slane %v758, 1
      %v816 = vsel %vm789, %v814, %v815
      %v817 = vrot.slane %v759, 1
      %v818 = vrot.slane %v760, 1
      %v819 = vsel %vm789, %v817, %v818
      %v820 = vrot.slane %v761, 1
      %v821 = vrot.slane %v762, 1
      %v822 = vsel %vm789, %v820, %v821
      %v823 = vrot.slane %v763, 1
      %v824 = vrot.slane %v764, 1
      %v825 = vsel %vm789, %v823, %v824
      %v850 = vadd.f32 %v713, %v792
      %v851 = vadd.f32 %v714, %v791
      %v852 = vadd.f32 %v715, %v795
      %v853 = vadd.f32 %v716, %v794
      %v854 = vadd.f32 %v717, %v798
      %v855 = vadd.f32 %v718, %v797
      %v856 = vadd.f32 %v719, %v801
      %v857 = vadd.f32 %v720, %v800
      %v858 = vadd.f32 %v721, %v804
      %v859 = vadd.f32 %v722, %v803
      %v860 = vadd.f32 %v723, %v807
      %v861 = vadd.f32 %v724, %v806
      %v862 = vadd.f32 %v725, %v810
      %v863 = vadd.f32 %v726, %v809
      %v864 = vadd.f32 %v727, %v813
      %v865 = vadd.f32 %v728, %v812
      %v866 = vadd.f32 %v729, %v816
      %v867 = vadd.f32 %v730, %v815
      %v868 = vadd.f32 %v731, %v819
      %v869 = vadd.f32 %v732, %v818
      %v870 = vadd.f32 %v733, %v822
      %v871 = vadd.f32 %v734, %v821
      %v872 = vadd.f32 %v735, %v825
      %v873 = vadd.f32 %v736, %v824
      %v874 = vlaneseq
      %v875 = vshrl.u32 %v874, 7
      %v876 = vsub.s32 1, %v875
      %v877 = vrot.slane %v473, %v876
      %v878 = vmul.f32 %v442, %v877
      %v879 = vmul.f32 %v443, %v877
      %v880 = vmul.f32 %v444, %v877
      %v881 = vmul.f32 %v445, %v877
      %v882 = vmul.f32 %v446, %v877
      %v883 = vmul.f32 %v447, %v877
      %v884 = vmul.f32 %v448, %v877
      %v885 = vmul.f32 %v449, %v877
      %v886 = vmul.f32 %v450, %v877
      %v887 = vmul.f32 %v451, %v877
      %v888 = vmul.f32 %v452, %v877
      %v889 = vmul.f32 %v453, %v877
      %v890 = vmul.f32 %v454, %v877
      %v891 = vmul.f32 %v455, %v877
      %v892 = vmul.f32 %v456, %v877
      %v893 = vmul.f32 %v457, %v877
      %v894 = vmul.f32 %v458, %v877
      %v895 = vmul.f32 %v459, %v877
      %v896 = vmul.f32 %v460, %v877
      %v897 = vmul.f32 %v461, %v877
      %v898 = vmul.f32 %v462, %v877
      %v899 = vmul.f32 %v463, %v877
      %v900 = vmul.f32 %v464, %v877
      %v901 = vmul.f32 %v465, %v877
      %v926 = vrot.slane %v878, 1
      %v927 = vrot.slane %v879, 1
      %v928 = vsel %vm789, %v926, %v927
      %v929 = vrot.slane %v880, 1
      %v930 = vrot.slane %v881, 1
      %v931 = vsel %vm789, %v929, %v930
      %v932 = vrot.slane %v882, 1
      %v933 = vrot.slane %v883, 1
      %v934 = vsel %vm789, %v932, %v933
      %v935 = vrot.slane %v884, 1
      %v936 = vrot.slane %v885, 1
      %v937 = vsel %vm789, %v935, %v936
      %v938 = vrot.slane %v886, 1
      %v939 = vrot.slane %v887, 1
      %v940 = vsel %vm789, %v938, %v939
      %v941 = vrot.slane %v888, 1
      %v942 = vrot.slane %v889, 1
      %v943 = vsel %vm789, %v941, %v942
      %v944 = vrot.slane %v890, 1
      %v945 = vrot.slane %v891, 1
      %v946 = vsel %vm789, %v944, %v945
      %v947 = vrot.slane %v892, 1
      %v948 = vrot.slane %v893, 1
      %v949 = vsel %vm789, %v947, %v948
      %v950 = vrot.slane %v894, 1
      %v951 = vrot.slane %v895, 1
      %v952 = vsel %vm789, %v950, %v951
      %v953 = vrot.slane %v896, 1
      %v954 = vrot.slane %v897, 1
      %v955 = vsel %vm789, %v953, %v954
      %v956 = vrot.slane %v898, 1
      %v957 = vrot.slane %v899, 1
      %v958 = vsel %vm789, %v956, %v957
      %v959 = vrot.slane %v900, 1
      %v960 = vrot.slane %v901, 1
      %v961 = vsel %vm789, %v959, %v960
      %v986 = vadd.f32 %v850, %v928
      %v987 = vadd.f32 %v851, %v927
      %v988 = vadd.f32 %v852, %v931
      %v989 = vadd.f32 %v853, %v930
      %v990 = vadd.f32 %v854, %v934
      %v991 = vadd.f32 %v855, %v933
      %v992 = vadd.f32 %v856, %v937
      %v993 = vadd.f32 %v857, %v936
      %v994 = vadd.f32 %v858, %v940
      %v995 = vadd.f32 %v859, %v939
      %v996 = vadd.f32 %v860, %v943
      %v997 = vadd.f32 %v861, %v942
      %v998 = vadd.f32 %v862, %v946
      %v999 = vadd.f32 %v863, %v945
      %v1000 = vadd.f32 %v864, %v949
      %v1001 = vadd.f32 %v865, %v948
      %v1002 = vadd.f32 %v866, %v952
      %v1003 = vadd.f32 %v867, %v951
      %v1004 = vadd.f32 %v868, %v955
      %v1005 = vadd.f32 %v869, %v954
      %v1006 = vadd.f32 %v870, %v958
      %v1007 = vadd.f32 %v871, %v957
      %v1008 = vadd.f32 %v872, %v961
      %v1009 = vadd.f32 %v873, %v960
      %v1010 = vlaneseq
      %v1011 = vshrl.u32 %v1010, 7
      %v1012 = vsub.s32 1, %v1011
      %v1013 = vrot.slane %v474, %v1012
      %v1014 = vmul.f32 %v444, %v1013
      %v1015 = vmul.f32 %v445, %v1013
      %v1016 = vmul.f32 %v446, %v1013
      %v1017 = vmul.f32 %v447, %v1013
      %v1018 = vmul.f32 %v448, %v1013
      %v1019 = vmul.f32 %v449, %v1013
      %v1020 = vmul.f32 %v450, %v1013
      %v1021 = vmul.f32 %v451, %v1013
      %v1022 = vmul.f32 %v452, %v1013
      %v1023 = vmul.f32 %v453, %v1013
      %v1024 = vmul.f32 %v454, %v1013
      %v1025 = vmul.f32 %v455, %v1013
      %v1026 = vmul.f32 %v456, %v1013
      %v1027 = vmul.f32 %v457, %v1013
      %v1028 = vmul.f32 %v458, %v1013
      %v1029 = vmul.f32 %v459, %v1013
      %v1030 = vmul.f32 %v460, %v1013
      %v1031 = vmul.f32 %v461, %v1013
      %v1032 = vmul.f32 %v462, %v1013
      %v1033 = vmul.f32 %v463, %v1013
      %v1034 = vmul.f32 %v464, %v1013
      %v1035 = vmul.f32 %v465, %v1013
      %v1036 = vmul.f32 %v466, %v1013
      %v1037 = vmul.f32 %v467, %v1013
      %v1062 = vrot.slane %v1014, 1
      %v1063 = vrot.slane %v1015, 1
      %v1064 = vsel %vm789, %v1062, %v1063
      %v1065 = vrot.slane %v1016, 1
      %v1066 = vrot.slane %v1017, 1
      %v1067 = vsel %vm789, %v1065, %v1066
      %v1068 = vrot.slane %v1018, 1
      %v1069 = vrot.slane %v1019, 1
      %v1070 = vsel %vm789, %v1068, %v1069
      %v1071 = vrot.slane %v1020, 1
      %v1072 = vrot.slane %v1021, 1
      %v1073 = vsel %vm789, %v1071, %v1072
      %v1074 = vrot.slane %v1022, 1
      %v1075 = vrot.slane %v1023, 1
      %v1076 = vsel %vm789, %v1074, %v1075
      %v1077 = vrot.slane %v1024, 1
      %v1078 = vrot.slane %v1025, 1
      %v1079 = vsel %vm789, %v1077, %v1078
      %v1080 = vrot.slane %v1026, 1
      %v1081 = vrot.slane %v1027, 1
      %v1082 = vsel %vm789, %v1080, %v1081
      %v1083 = vrot.slane %v1028, 1
      %v1084 = vrot.slane %v1029, 1
      %v1085 = vsel %vm789, %v1083, %v1084
      %v1086 = vrot.slane %v1030, 1
      %v1087 = vrot.slane %v1031, 1
      %v1088 = vsel %vm789, %v1086, %v1087
      %v1089 = vrot.slane %v1032, 1
      %v1090 = vrot.slane %v1033, 1
      %v1091 = vsel %vm789, %v1089, %v1090
      %v1092 = vrot.slane %v1034, 1
      %v1093 = vrot.slane %v1035, 1
      %v1094 = vsel %vm789, %v1092, %v1093
      %v1095 = vrot.slane %v1036, 1
      %v1096 = vrot.slane %v1037, 1
      %v1097 = vsel %vm789, %v1095, %v1096
      %v1122 = vadd.f32 %v986, %v1064
      %v1123 = vadd.f32 %v987, %v1063
      %v1124 = vadd.f32 %v988, %v1067
      %v1125 = vadd.f32 %v989, %v1066
      %v1126 = vadd.f32 %v990, %v1070
      %v1127 = vadd.f32 %v991, %v1069
      %v1128 = vadd.f32 %v992, %v1073
      %v1129 = vadd.f32 %v993, %v1072
      %v1130 = vadd.f32 %v994, %v1076
      %v1131 = vadd.f32 %v995, %v1075
      %v1132 = vadd.f32 %v996, %v1079
      %v1133 = vadd.f32 %v997, %v1078
      %v1134 = vadd.f32 %v998, %v1082
      %v1135 = vadd.f32 %v999, %v1081
      %v1136 = vadd.f32 %v1000, %v1085
      %v1137 = vadd.f32 %v1001, %v1084
      %v1138 = vadd.f32 %v1002, %v1088
      %v1139 = vadd.f32 %v1003, %v1087
      %v1140 = vadd.f32 %v1004, %v1091
      %v1141 = vadd.f32 %v1005, %v1090
      %v1142 = vadd.f32 %v1006, %v1094
      %v1143 = vadd.f32 %v1007, %v1093
      %v1144 = vadd.f32 %v1008, %v1097
      %v1145 = vadd.f32 %v1009, %v1096
      %v1146 = vlaneseq
      %v1147 = vshrl.u32 %v1146, 7
      %v1148 = vsub.s32 1, %v1147
      %v1149 = vrot.slane %v475, %v1148
      %v1150 = vmul.f32 %v446, %v1149
      %v1151 = vmul.f32 %v447, %v1149
      %v1152 = vmul.f32 %v448, %v1149
      %v1153 = vmul.f32 %v449, %v1149
      %v1154 = vmul.f32 %v450, %v1149
      %v1155 = vmul.f32 %v451, %v1149
      %v1156 = vmul.f32 %v452, %v1149
      %v1157 = vmul.f32 %v453, %v1149
      %v1158 = vmul.f32 %v454, %v1149
      %v1159 = vmul.f32 %v455, %v1149
      %v1160 = vmul.f32 %v456, %v1149
      %v1161 = vmul.f32 %v457, %v1149
      %v1162 = vmul.f32 %v458, %v1149
      %v1163 = vmul.f32 %v459, %v1149
      %v1164 = vmul.f32 %v460, %v1149
      %v1165 = vmul.f32 %v461, %v1149
      %v1166 = vmul.f32 %v462, %v1149
      %v1167 = vmul.f32 %v463, %v1149
      %v1168 = vmul.f32 %v464, %v1149
      %v1169 = vmul.f32 %v465, %v1149
      %v1170 = vmul.f32 %v466, %v1149
      %v1171 = vmul.f32 %v467, %v1149
      %v1172 = vmul.f32 %v468, %v1149
      %v1173 = vmul.f32 %v469, %v1149
      %v1198 = vrot.slane %v1150, 1
      %v1199 = vrot.slane %v1151, 1
      %v1200 = vsel %vm789, %v1198, %v1199
      %v1201 = vrot.slane %v1152, 1
      %v1202 = vrot.slane %v1153, 1
      %v1203 = vsel %vm789, %v1201, %v1202
      %v1204 = vrot.slane %v1154, 1
      %v1205 = vrot.slane %v1155, 1
      %v1206 = vsel %vm789, %v1204, %v1205
      %v1207 = vrot.slane %v1156, 1
      %v1208 = vrot.slane %v1157, 1
      %v1209 = vsel %vm789, %v1207, %v1208
      %v1210 = vrot.slane %v1158, 1
      %v1211 = vrot.slane %v1159, 1
      %v1212 = vsel %vm789, %v1210, %v1211
      %v1213 = vrot.slane %v1160, 1
      %v1214 = vrot.slane %v1161, 1
      %v1215 = vsel %vm789, %v1213, %v1214
      %v1216 = vrot.slane %v1162, 1
      %v1217 = vrot.slane %v1163, 1
      %v1218 = vsel %vm789, %v1216, %v1217
      %v1219 = vrot.slane %v1164, 1
      %v1220 = vrot.slane %v1165, 1
      %v1221 = vsel %vm789, %v1219, %v1220
      %v1222 = vrot.slane %v1166, 1
      %v1223 = vrot.slane %v1167, 1
      %v1224 = vsel %vm789, %v1222, %v1223
      %v1225 = vrot.slane %v1168, 1
      %v1226 = vrot.slane %v1169, 1
      %v1227 = vsel %vm789, %v1225, %v1226
      %v1228 = vrot.slane %v1170, 1
      %v1229 = vrot.slane %v1171, 1
      %v1230 = vsel %vm789, %v1228, %v1229
      %v1231 = vrot.slane %v1172, 1
      %v1232 = vrot.slane %v1173, 1
      %v1233 = vsel %vm789, %v1231, %v1232
      %v1258 = vadd.f32 %v1122, %v1200
      %v1259 = vadd.f32 %v1123, %v1199
      %v1260 = vadd.f32 %v1124, %v1203
      %v1261 = vadd.f32 %v1125, %v1202
      %v1262 = vadd.f32 %v1126, %v1206
      %v1263 = vadd.f32 %v1127, %v1205
      %v1264 = vadd.f32 %v1128, %v1209
      %v1265 = vadd.f32 %v1129, %v1208
      %v1266 = vadd.f32 %v1130, %v1212
      %v1267 = vadd.f32 %v1131, %v1211
      %v1268 = vadd.f32 %v1132, %v1215
      %v1269 = vadd.f32 %v1133, %v1214
      %v1270 = vadd.f32 %v1134, %v1218
      %v1271 = vadd.f32 %v1135, %v1217
      %v1272 = vadd.f32 %v1136, %v1221
      %v1273 = vadd.f32 %v1137, %v1220
      %v1274 = vadd.f32 %v1138, %v1224
      %v1275 = vadd.f32 %v1139, %v1223
      %v1276 = vadd.f32 %v1140, %v1227
      %v1277 = vadd.f32 %v1141, %v1226
      %v1278 = vadd.f32 %v1142, %v1230
      %v1279 = vadd.f32 %v1143, %v1229
      %v1280 = vadd.f32 %v1144, %v1233
      %v1281 = vadd.f32 %v1145, %v1232
      %v1282 = vlaneseq
      %v1283 = vshrl.u32 %v1282, 7
      %v1284 = vsub.s32 1, %v1283
      %v1285 = vrot.slane %v476, %v1284
      %v1286 = vmul.f32 %v448, %v1285
      %v1287 = vmul.f32 %v449, %v1285
      %v1288 = vmul.f32 %v450, %v1285
      %v1289 = vmul.f32 %v451, %v1285
      %v1290 = vmul.f32 %v452, %v1285
      %v1291 = vmul.f32 %v453, %v1285
      %v1292 = vmul.f32 %v454, %v1285
      %v1293 = vmul.f32 %v455, %v1285
      %v1294 = vmul.f32 %v456, %v1285
      %v1295 = vmul.f32 %v457, %v1285
      %v1296 = vmul.f32 %v458, %v1285
      %v1297 = vmul.f32 %v459, %v1285
      %v1298 = vmul.f32 %v460, %v1285
      %v1299 = vmul.f32 %v461, %v1285
      %v1300 = vmul.f32 %v462, %v1285
      %v1301 = vmul.f32 %v463, %v1285
      %v1302 = vmul.f32 %v464, %v1285
      %v1303 = vmul.f32 %v465, %v1285
      %v1304 = vmul.f32 %v466, %v1285
      %v1305 = vmul.f32 %v467, %v1285
      %v1306 = vmul.f32 %v468, %v1285
      %v1307 = vmul.f32 %v469, %v1285
      %v1308 = vmul.f32 %v470, %v1285
      %v1309 = vmul.f32 %v471, %v1285
      %v1334 = vrot.slane %v1286, 1
      %v1335 = vrot.slane %v1287, 1
      %v1336 = vsel %vm789, %v1334, %v1335
      %v1337 = vrot.slane %v1288, 1
      %v1338 = vrot.slane %v1289, 1
      %v1339 = vsel %vm789, %v1337, %v1338
      %v1340 = vrot.slane %v1290, 1
      %v1341 = vrot.slane %v1291, 1
      %v1342 = vsel %vm789, %v1340, %v1341
      %v1343 = vrot.slane %v1292, 1
      %v1344 = vrot.slane %v1293, 1
      %v1345 = vsel %vm789, %v1343, %v1344
      %v1346 = vrot.slane %v1294, 1
      %v1347 = vrot.slane %v1295, 1
      %v1348 = vsel %vm789, %v1346, %v1347
      %v1349 = vrot.slane %v1296, 1
      %v1350 = vrot.slane %v1297, 1
      %v1351 = vsel %vm789, %v1349, %v1350
      %v1352 = vrot.slane %v1298, 1
      %v1353 = vrot.slane %v1299, 1
      %v1354 = vsel %vm789, %v1352, %v1353
      %v1355 = vrot.slane %v1300, 1
      %v1356 = vrot.slane %v1301, 1
      %v1357 = vsel %vm789, %v1355, %v1356
      %v1358 = vrot.slane %v1302, 1
      %v1359 = vrot.slane %v1303, 1
      %v1360 = vsel %vm789, %v1358, %v1359
      %v1361 = vrot.slane %v1304, 1
      %v1362 = vrot.slane %v1305, 1
      %v1363 = vsel %vm789, %v1361, %v1362
      %v1364 = vrot.slane %v1306, 1
      %v1365 = vrot.slane %v1307, 1
      %v1366 = vsel %vm789, %v1364, %v1365
      %v1367 = vrot.slane %v1308, 1
      %v1368 = vrot.slane %v1309, 1
      %v1369 = vsel %vm789, %v1367, %v1368
      %v1394 = vadd.f32 %v1258, %v1336
      %v1395 = vadd.f32 %v1259, %v1335
      %v1396 = vadd.f32 %v1260, %v1339
      %v1397 = vadd.f32 %v1261, %v1338
      %v1398 = vadd.f32 %v1262, %v1342
      %v1399 = vadd.f32 %v1263, %v1341
      %v1400 = vadd.f32 %v1264, %v1345
      %v1401 = vadd.f32 %v1265, %v1344
      %v1402 = vadd.f32 %v1266, %v1348
      %v1403 = vadd.f32 %v1267, %v1347
      %v1404 = vadd.f32 %v1268, %v1351
      %v1405 = vadd.f32 %v1269, %v1350
      %v1406 = vadd.f32 %v1270, %v1354
      %v1407 = vadd.f32 %v1271, %v1353
      %v1408 = vadd.f32 %v1272, %v1357
      %v1409 = vadd.f32 %v1273, %v1356
      %v1410 = vadd.f32 %v1274, %v1360
      %v1411 = vadd.f32 %v1275, %v1359
      %v1412 = vadd.f32 %v1276, %v1363
      %v1413 = vadd.f32 %v1277, %v1362
      %v1414 = vadd.f32 %v1278, %v1366
      %v1415 = vadd.f32 %v1279, %v1365
      %v1416 = vadd.f32 %v1280, %v1369
      %v1417 = vadd.f32 %v1281, %v1368
      %v1418 = vlaneseq
      %v1419 = vshrl.u32 %v1418, 7
      %v1420 = vsub.s32 2, %v1419
      %v1421 = vrot.slane %v472, %v1420
      %v1422 = vmul.f32 %v440, %v1421
      %v1423 = vmul.f32 %v441, %v1421
      %v1424 = vmul.f32 %v442, %v1421
      %v1425 = vmul.f32 %v443, %v1421
      %v1426 = vmul.f32 %v444, %v1421
      %v1427 = vmul.f32 %v445, %v1421
      %v1428 = vmul.f32 %v446, %v1421
      %v1429 = vmul.f32 %v447, %v1421
      %v1430 = vmul.f32 %v448, %v1421
      %v1431 = vmul.f32 %v449, %v1421
      %v1432 = vmul.f32 %v450, %v1421
      %v1433 = vmul.f32 %v451, %v1421
      %v1434 = vmul.f32 %v452, %v1421
      %v1435 = vmul.f32 %v453, %v1421
      %v1436 = vmul.f32 %v454, %v1421
      %v1437 = vmul.f32 %v455, %v1421
      %v1438 = vmul.f32 %v456, %v1421
      %v1439 = vmul.f32 %v457, %v1421
      %v1440 = vmul.f32 %v458, %v1421
      %v1441 = vmul.f32 %v459, %v1421
      %v1442 = vmul.f32 %v460, %v1421
      %v1443 = vmul.f32 %v461, %v1421
      %v1444 = vmul.f32 %v462, %v1421
      %v1445 = vmul.f32 %v463, %v1421
      %vm1470 = vcmask 1045504
      %v1471 = vrot.slane %v1422, 2
      %v1472 = vrot.slane %v1423, 2
      %v1473 = vsel %vm1470, %v1471, %v1472
      %v1474 = vrot.slane %v1424, 2
      %v1475 = vrot.slane %v1425, 2
      %v1476 = vsel %vm1470, %v1474, %v1475
      %v1477 = vrot.slane %v1426, 2
      %v1478 = vrot.slane %v1427, 2
      %v1479 = vsel %vm1470, %v1477, %v1478
      %v1480 = vrot.slane %v1428, 2
      %v1481 = vrot.slane %v1429, 2
      %v1482 = vsel %vm1470, %v1480, %v1481
      %v1483 = vrot.slane %v1430, 2
      %v1484 = vrot.slane %v1431, 2
      %v1485 = vsel %vm1470, %v1483, %v1484
      %v1486 = vrot.slane %v1432, 2
      %v1487 = vrot.slane %v1433, 2
      %v1488 = vsel %vm1470, %v1486, %v1487
      %v1489 = vrot.slane %v1434, 2
      %v1490 = vrot.slane %v1435, 2
      %v1491 = vsel %vm1470, %v1489, %v1490
      %v1492 = vrot.slane %v1436, 2
      %v1493 = vrot.slane %v1437, 2
      %v1494 = vsel %vm1470, %v1492, %v1493
      %v1495 = vrot.slane %v1438, 2
      %v1496 = vrot.slane %v1439, 2
      %v1497 = vsel %vm1470, %v1495, %v1496
      %v1498 = vrot.slane %v1440, 2
      %v1499 = vrot.slane %v1441, 2
      %v1500 = vsel %vm1470, %v1498, %v1499
      %v1501 = vrot.slane %v1442, 2
      %v1502 = vrot.slane %v1443, 2
      %v1503 = vsel %vm1470, %v1501, %v1502
      %v1504 = vrot.slane %v1444, 2
      %v1505 = vrot.slane %v1445, 2
      %v1506 = vsel %vm1470, %v1504, %v1505
      %v1531 = vadd.f32 %v1394, %v1473
      %v1532 = vadd.f32 %v1395, %v1472
      %v1533 = vadd.f32 %v1396, %v1476
      %v1534 = vadd.f32 %v1397, %v1475
      %v1535 = vadd.f32 %v1398, %v1479
      %v1536 = vadd.f32 %v1399, %v1478
      %v1537 = vadd.f32 %v1400, %v1482
      %v1538 = vadd.f32 %v1401, %v1481
      %v1539 = vadd.f32 %v1402, %v1485
      %v1540 = vadd.f32 %v1403, %v1484
      %v1541 = vadd.f32 %v1404, %v1488
      %v1542 = vadd.f32 %v1405, %v1487
      %v1543 = vadd.f32 %v1406, %v1491
      %v1544 = vadd.f32 %v1407, %v1490
      %v1545 = vadd.f32 %v1408, %v1494
      %v1546 = vadd.f32 %v1409, %v1493
      %v1547 = vadd.f32 %v1410, %v1497
      %v1548 = vadd.f32 %v1411, %v1496
      %v1549 = vadd.f32 %v1412, %v1500
      %v1550 = vadd.f32 %v1413, %v1499
      %v1551 = vadd.f32 %v1414, %v1503
      %v1552 = vadd.f32 %v1415, %v1502
      %v1553 = vadd.f32 %v1416, %v1506
      %v1554 = vadd.f32 %v1417, %v1505
      %v1555 = vlaneseq
      %v1556 = vshrl.u32 %v1555, 7
      %v1557 = vsub.s32 2, %v1556
      %v1558 = vrot.slane %v473, %v1557
      %v1559 = vmul.f32 %v442, %v1558
      %v1560 = vmul.f32 %v443, %v1558
      %v1561 = vmul.f32 %v444, %v1558
      %v1562 = vmul.f32 %v445, %v1558
      %v1563 = vmul.f32 %v446, %v1558
      %v1564 = vmul.f32 %v447, %v1558
      %v1565 = vmul.f32 %v448, %v1558
      %v1566 = vmul.f32 %v449, %v1558
      %v1567 = vmul.f32 %v450, %v1558
      %v1568 = vmul.f32 %v451, %v1558
      %v1569 = vmul.f32 %v452, %v1558
      %v1570 = vmul.f32 %v453, %v1558
      %v1571 = vmul.f32 %v454, %v1558
      %v1572 = vmul.f32 %v455, %v1558
      %v1573 = vmul.f32 %v456, %v1558
      %v1574 = vmul.f32 %v457, %v1558
      %v1575 = vmul.f32 %v458, %v1558
      %v1576 = vmul.f32 %v459, %v1558
      %v1577 = vmul.f32 %v460, %v1558
      %v1578 = vmul.f32 %v461, %v1558
      %v1579 = vmul.f32 %v462, %v1558
      %v1580 = vmul.f32 %v463, %v1558
      %v1581 = vmul.f32 %v464, %v1558
      %v1582 = vmul.f32 %v465, %v1558
      %v1607 = vrot.slane %v1559, 2
      %v1608 = vrot.slane %v1560, 2
      %v1609 = vsel %vm1470, %v1607, %v1608
      %v1610 = vrot.slane %v1561, 2
      %v1611 = vrot.slane %v1562, 2
      %v1612 = vsel %vm1470, %v1610, %v1611
      %v1613 = vrot.slane %v1563, 2
      %v1614 = vrot.slane %v1564, 2
      %v1615 = vsel %vm1470, %v1613, %v1614
      %v1616 = vrot.slane %v1565, 2
      %v1617 = vrot.slane %v1566, 2
      %v1618 = vsel %vm1470, %v1616, %v1617
      %v1619 = vrot.slane %v1567, 2
      %v1620 = vrot.slane %v1568, 2
      %v1621 = vsel %vm1470, %v1619, %v1620
      %v1622 = vrot.slane %v1569, 2
      %v1623 = vrot.slane %v1570, 2
      %v1624 = vsel %vm1470, %v1622, %v1623
      %v1625 = vrot.slane %v1571, 2
      %v1626 = vrot.slane %v1572, 2
      %v1627 = vsel %vm1470, %v1625, %v1626
      %v1628 = vrot.slane %v1573, 2
      %v1629 = vrot.slane %v1574, 2
      %v1630 = vsel %vm1470, %v1628, %v1629
      %v1631 = vrot.slane %v1575, 2
      %v1632 = vrot.slane %v1576, 2
      %v1633 = vsel %vm1470, %v1631, %v1632
      %v1634 = vrot.slane %v1577, 2
      %v1635 = vrot.slane %v1578, 2
      %v1636 = vsel %vm1470, %v1634, %v1635
      %v1637 = vrot.slane %v1579, 2
      %v1638 = vrot.slane %v1580, 2
      %v1639 = vsel %vm1470, %v1637, %v1638
      %v1640 = vrot.slane %v1581, 2
      %v1641 = vrot.slane %v1582, 2
      %v1642 = vsel %vm1470, %v1640, %v1641
      %v1667 = vadd.f32 %v1531, %v1609
      %v1668 = vadd.f32 %v1532, %v1608
      %v1669 = vadd.f32 %v1533, %v1612
      %v1670 = vadd.f32 %v1534, %v1611
      %v1671 = vadd.f32 %v1535, %v1615
      %v1672 = vadd.f32 %v1536, %v1614
      %v1673 = vadd.f32 %v1537, %v1618
      %v1674 = vadd.f32 %v1538, %v1617
      %v1675 = vadd.f32 %v1539, %v1621
      %v1676 = vadd.f32 %v1540, %v1620
      %v1677 = vadd.f32 %v1541, %v1624
      %v1678 = vadd.f32 %v1542, %v1623
      %v1679 = vadd.f32 %v1543, %v1627
      %v1680 = vadd.f32 %v1544, %v1626
      %v1681 = vadd.f32 %v1545, %v1630
      %v1682 = vadd.f32 %v1546, %v1629
      %v1683 = vadd.f32 %v1547, %v1633
      %v1684 = vadd.f32 %v1548, %v1632
      %v1685 = vadd.f32 %v1549, %v1636
      %v1686 = vadd.f32 %v1550, %v1635
      %v1687 = vadd.f32 %v1551, %v1639
      %v1688 = vadd.f32 %v1552, %v1638
      %v1689 = vadd.f32 %v1553, %v1642
      %v1690 = vadd.f32 %v1554, %v1641
      %v1691 = vlaneseq
      %v1692 = vshrl.u32 %v1691, 7
      %v1693 = vsub.s32 2, %v1692
      %v1694 = vrot.slane %v474, %v1693
      %v1695 = vmul.f32 %v444, %v1694
      %v1696 = vmul.f32 %v445, %v1694
      %v1697 = vmul.f32 %v446, %v1694
      %v1698 = vmul.f32 %v447, %v1694
      %v1699 = vmul.f32 %v448, %v1694
      %v1700 = vmul.f32 %v449, %v1694
      %v1701 = vmul.f32 %v450, %v1694
      %v1702 = vmul.f32 %v451, %v1694
      %v1703 = vmul.f32 %v452, %v1694
      %v1704 = vmul.f32 %v453, %v1694
      %v1705 = vmul.f32 %v454, %v1694
      %v1706 = vmul.f32 %v455, %v1694
      %v1707 = vmul.f32 %v456, %v1694
      %v1708 = vmul.f32 %v457, %v1694
      %v1709 = vmul.f32 %v458, %v1694
      %v1710 = vmul.f32 %v459, %v1694
      %v1711 = vmul.f32 %v460, %v1694
      %v1712 = vmul.f32 %v461, %v1694
      %v1713 = vmul.f32 %v462, %v1694
      %v1714 = vmul.f32 %v463, %v1694
      %v1715 = vmul.f32 %v464, %v1694
      %v1716 = vmul.f32 %v465, %v1694
      %v1717 = vmul.f32 %v466, %v1694
      %v1718 = vmul.f32 %v467, %v1694
      %v1743 = vrot.slane %v1695, 2
      %v1744 = vrot.slane %v1696, 2
      %v1745 = vsel %vm1470, %v1743, %v1744
      %v1746 = vrot.slane %v1697, 2
      %v1747 = vrot.slane %v1698, 2
      %v1748 = vsel %vm1470, %v1746, %v1747
      %v1749 = vrot.slane %v1699, 2
      %v1750 = vrot.slane %v1700, 2
      %v1751 = vsel %vm1470, %v1749, %v1750
      %v1752 = vrot.slane %v1701, 2
      %v1753 = vrot.slane %v1702, 2
      %v1754 = vsel %vm1470, %v1752, %v1753
      %v1755 = vrot.slane %v1703, 2
      %v1756 = vrot.slane %v1704, 2
      %v1757 = vsel %vm1470, %v1755, %v1756
      %v1758 = vrot.slane %v1705, 2
      %v1759 = vrot.slane %v1706, 2
      %v1760 = vsel %vm1470, %v1758, %v1759
      %v1761 = vrot.slane %v1707, 2
      %v1762 = vrot.slane %v1708, 2
      %v1763 = vsel %vm1470, %v1761, %v1762
      %v1764 = vrot.slane %v1709, 2
      %v1765 = vrot.slane %v1710, 2
      %v1766 = vsel %vm1470, %v1764, %v1765
      %v1767 = vrot.slane %v1711, 2
      %v1768 = vrot.slane %v1712, 2
      %v1769 = vsel %vm1470, %v1767, %v1768
      %v1770 = vrot.slane %v1713, 2
      %v1771 = vrot.slane %v1714, 2
      %v1772 = vsel %vm1470, %v1770, %v1771
      %v1773 = vrot.slane %v1715, 2
      %v1774 = vrot.slane %v1716, 2
      %v1775 = vsel %vm1470, %v1773, %v1774
      %v1776 = vrot.slane %v1717, 2
      %v1777 = vrot.slane %v1718, 2
      %v1778 = vsel %vm1470, %v1776, %v1777
      %v1803 = vadd.f32 %v1667, %v1745
      %v1804 = vadd.f32 %v1668, %v1744
      %v1805 = vadd.f32 %v1669, %v1748
      %v1806 = vadd.f32 %v1670, %v1747
      %v1807 = vadd.f32 %v1671, %v1751
      %v1808 = vadd.f32 %v1672, %v1750
      %v1809 = vadd.f32 %v1673, %v1754
      %v1810 = vadd.f32 %v1674, %v1753
      %v1811 = vadd.f32 %v1675, %v1757
      %v1812 = vadd.f32 %v1676, %v1756
      %v1813 = vadd.f32 %v1677, %v1760
      %v1814 = vadd.f32 %v1678, %v1759
      %v1815 = vadd.f32 %v1679, %v1763
      %v1816 = vadd.f32 %v1680, %v1762
      %v1817 = vadd.f32 %v1681, %v1766
      %v1818 = vadd.f32 %v1682, %v1765
      %v1819 = vadd.f32 %v1683, %v1769
      %v1820 = vadd.f32 %v1684, %v1768
      %v1821 = vadd.f32 %v1685, %v1772
      %v1822 = vadd.f32 %v1686, %v1771
      %v1823 = vadd.f32 %v1687, %v1775
      %v1824 = vadd.f32 %v1688, %v1774
      %v1825 = vadd.f32 %v1689, %v1778
      %v1826 = vadd.f32 %v1690, %v1777
      %v1827 = vlaneseq
      %v1828 = vshrl.u32 %v1827, 7
      %v1829 = vsub.s32 2, %v1828
      %v1830 = vrot.slane %v475, %v1829
      %v1831 = vmul.f32 %v446, %v1830
      %v1832 = vmul.f32 %v447, %v1830
      %v1833 = vmul.f32 %v448, %v1830
      %v1834 = vmul.f32 %v449, %v1830
      %v1835 = vmul.f32 %v450, %v1830
      %v1836 = vmul.f32 %v451, %v1830
      %v1837 = vmul.f32 %v452, %v1830
      %v1838 = vmul.f32 %v453, %v1830
      %v1839 = vmul.f32 %v454, %v1830
      %v1840 = vmul.f32 %v455, %v1830
      %v1841 = vmul.f32 %v456, %v1830
      %v1842 = vmul.f32 %v457, %v1830
      %v1843 = vmul.f32 %v458, %v1830
      %v1844 = vmul.f32 %v459, %v1830
      %v1845 = vmul.f32 %v460, %v1830
      %v1846 = vmul.f32 %v461, %v1830
      %v1847 = vmul.f32 %v462, %v1830
      %v1848 = vmul.f32 %v463, %v1830
      %v1849 = vmul.f32 %v464, %v1830
      %v1850 = vmul.f32 %v465, %v1830
      %v1851 = vmul.f32 %v466, %v1830
      %v1852 = vmul.f32 %v467, %v1830
      %v1853 = vmul.f32 %v468, %v1830
      %v1854 = vmul.f32 %v469, %v1830
      %v1879 = vrot.slane %v1831, 2
      %v1880 = vrot.slane %v1832, 2
      %v1881 = vsel %vm1470, %v1879, %v1880
      %v1882 = vrot.slane %v1833, 2
      %v1883 = vrot.slane %v1834, 2
      %v1884 = vsel %vm1470, %v1882, %v1883
      %v1885 = vrot.slane %v1835, 2
      %v1886 = vrot.slane %v1836, 2
      %v1887 = vsel %vm1470, %v1885, %v1886
      %v1888 = vrot.slane %v1837, 2
      %v1889 = vrot.slane %v1838, 2
      %v1890 = vsel %vm1470, %v1888, %v1889
      %v1891 = vrot.slane %v1839, 2
      %v1892 = vrot.slane %v1840, 2
      %v1893 = vsel %vm1470, %v1891, %v1892
      %v1894 = vrot.slane %v1841, 2
      %v1895 = vrot.slane %v1842, 2
      %v1896 = vsel %vm1470, %v1894, %v1895
      %v1897 = vrot.slane %v1843, 2
      %v1898 = vrot.slane %v1844, 2
      %v1899 = vsel %vm1470, %v1897, %v1898
      %v1900 = vrot.slane %v1845, 2
      %v1901 = vrot.slane %v1846, 2
      %v1902 = vsel %vm1470, %v1900, %v1901
      %v1903 = vrot.slane %v1847, 2
      %v1904 = vrot.slane %v1848, 2
      %v1905 = vsel %vm1470, %v1903, %v1904
      %v1906 = vrot.slane %v1849, 2
      %v1907 = vrot.slane %v1850, 2
      %v1908 = vsel %vm1470, %v1906, %v1907
      %v1909 = vrot.slane %v1851, 2
      %v1910 = vrot.slane %v1852, 2
      %v1911 = vsel %vm1470, %v1909, %v1910
      %v1912 = vrot.slane %v1853, 2
      %v1913 = vrot.slane %v1854, 2
      %v1914 = vsel %vm1470, %v1912, %v1913
      %v1939 = vadd.f32 %v1803, %v1881
      %v1940 = vadd.f32 %v1804, %v1880
      %v1941 = vadd.f32 %v1805, %v1884
      %v1942 = vadd.f32 %v1806, %v1883
      %v1943 = vadd.f32 %v1807, %v1887
      %v1944 = vadd.f32 %v1808, %v1886
      %v1945 = vadd.f32 %v1809, %v1890
      %v1946 = vadd.f32 %v1810, %v1889
      %v1947 = vadd.f32 %v1811, %v1893
      %v1948 = vadd.f32 %v1812, %v1892
      %v1949 = vadd.f32 %v1813, %v1896
      %v1950 = vadd.f32 %v1814, %v1895
      %v1951 = vadd.f32 %v1815, %v1899
      %v1952 = vadd.f32 %v1816, %v1898
      %v1953 = vadd.f32 %v1817, %v1902
      %v1954 = vadd.f32 %v1818, %v1901
      %v1955 = vadd.f32 %v1819, %v1905
      %v1956 = vadd.f32 %v1820, %v1904
      %v1957 = vadd.f32 %v1821, %v1908
      %v1958 = vadd.f32 %v1822, %v1907
      %v1959 = vadd.f32 %v1823, %v1911
      %v1960 = vadd.f32 %v1824, %v1910
      %v1961 = vadd.f32 %v1825, %v1914
      %v1962 = vadd.f32 %v1826, %v1913
      %v1963 = vlaneseq
      %v1964 = vshrl.u32 %v1963, 7
      %v1965 = vsub.s32 2, %v1964
      %v1966 = vrot.slane %v476, %v1965
      %v1967 = vmul.f32 %v448, %v1966
      %v1968 = vmul.f32 %v449, %v1966
      %v1969 = vmul.f32 %v450, %v1966
      %v1970 = vmul.f32 %v451, %v1966
      %v1971 = vmul.f32 %v452, %v1966
      %v1972 = vmul.f32 %v453, %v1966
      %v1973 = vmul.f32 %v454, %v1966
      %v1974 = vmul.f32 %v455, %v1966
      %v1975 = vmul.f32 %v456, %v1966
      %v1976 = vmul.f32 %v457, %v1966
      %v1977 = vmul.f32 %v458, %v1966
      %v1978 = vmul.f32 %v459, %v1966
      %v1979 = vmul.f32 %v460, %v1966
      %v1980 = vmul.f32 %v461, %v1966
      %v1981 = vmul.f32 %v462, %v1966
      %v1982 = vmul.f32 %v463, %v1966
      %v1983 = vmul.f32 %v464, %v1966
      %v1984 = vmul.f32 %v465, %v1966
      %v1985 = vmul.f32 %v466, %v1966
      %v1986 = vmul.f32 %v467, %v1966
      %v1987 = vmul.f32 %v468, %v1966
      %v1988 = vmul.f32 %v469, %v1966
      %v1989 = vmul.f32 %v470, %v1966
      %v1990 = vmul.f32 %v471, %v1966
      %v2015 = vrot.slane %v1967, 2
      %v2016 = vrot.slane %v1968, 2
      %v2017 = vsel %vm1470, %v2015, %v2016
      %v2018 = vrot.slane %v1969, 2
      %v2019 = vrot.slane %v1970, 2
      %v2020 = vsel %vm1470, %v2018, %v2019
      %v2021 = vrot.slane %v1971, 2
      %v2022 = vrot.slane %v1972, 2
      %v2023 = vsel %vm1470, %v2021, %v2022
      %v2024 = vrot.slane %v1973, 2
      %v2025 = vrot.slane %v1974, 2
      %v2026 = vsel %vm1470, %v2024, %v2025
      %v2027 = vrot.slane %v1975, 2
      %v2028 = vrot.slane %v1976, 2
      %v2029 = vsel %vm1470, %v2027, %v2028
      %v2030 = vrot.slane %v1977, 2
      %v2031 = vrot.slane %v1978, 2
      %v2032 = vsel %vm1470, %v2030, %v2031
      %v2033 = vrot.slane %v1979, 2
      %v2034 = vrot.slane %v1980, 2
      %v2035 = vsel %vm1470, %v2033, %v2034
      %v2036 = vrot.slane %v1981, 2
      %v2037 = vrot.slane %v1982, 2
      %v2038 = vsel %vm1470, %v2036, %v2037
      %v2039 = vrot.slane %v1983, 2
      %v2040 = vrot.slane %v1984, 2
      %v2041 = vsel %vm1470, %v2039, %v2040
      %v2042 = vrot.slane %v1985, 2
      %v2043 = vrot.slane %v1986, 2
      %v2044 = vsel %vm1470, %v2042, %v2043
      %v2045 = vrot.slane %v1987, 2
      %v2046 = vrot.slane %v1988, 2
      %v2047 = vsel %vm1470, %v2045, %v2046
      %v2048 = vrot.slane %v1989, 2
      %v2049 = vrot.slane %v1990, 2
      %v2050 = vsel %vm1470, %v2048, %v2049
      %v2075 = vadd.f32 %v1939, %v2017
      %v2076 = vadd.f32 %v1940, %v2016
      %v2077 = vadd.f32 %v1941, %v2020
      %v2078 = vadd.f32 %v1942, %v2019
      %v2079 = vadd.f32 %v1943, %v2023
      %v2080 = vadd.f32 %v1944, %v2022
      %v2081 = vadd.f32 %v1945, %v2026
      %v2082 = vadd.f32 %v1946, %v2025
      %v2083 = vadd.f32 %v1947, %v2029
      %v2084 = vadd.f32 %v1948, %v2028
      %v2085 = vadd.f32 %v1949, %v2032
      %v2086 = vadd.f32 %v1950, %v2031
      %v2087 = vadd.f32 %v1951, %v2035
      %v2088 = vadd.f32 %v1952, %v2034
      %v2089 = vadd.f32 %v1953, %v2038
      %v2090 = vadd.f32 %v1954, %v2037
      %v2091 = vadd.f32 %v1955, %v2041
      %v2092 = vadd.f32 %v1956, %v2040
      %v2093 = vadd.f32 %v1957, %v2044
      %v2094 = vadd.f32 %v1958, %v2043
      %v2095 = vadd.f32 %v1959, %v2047
      %v2096 = vadd.f32 %v1960, %v2046
      %v2097 = vadd.f32 %v1961, %v2050
      %v2098 = vadd.f32 %v1962, %v2049
      %v2099 = vlaneseq
      %v2100 = vshrl.u32 %v2099, 7
      %v2101 = vsub.s32 3, %v2100
      %v2102 = vrot.slane %v472, %v2101
      %v2103 = vmul.f32 %v440, %v2102
      %v2104 = vmul.f32 %v441, %v2102
      %v2105 = vmul.f32 %v442, %v2102
      %v2106 = vmul.f32 %v443, %v2102
      %v2107 = vmul.f32 %v444, %v2102
      %v2108 = vmul.f32 %v445, %v2102
      %v2109 = vmul.f32 %v446, %v2102
      %v2110 = vmul.f32 %v447, %v2102
      %v2111 = vmul.f32 %v448, %v2102
      %v2112 = vmul.f32 %v449, %v2102
      %v2113 = vmul.f32 %v450, %v2102
      %v2114 = vmul.f32 %v451, %v2102
      %v2115 = vmul.f32 %v452, %v2102
      %v2116 = vmul.f32 %v453, %v2102
      %v2117 = vmul.f32 %v454, %v2102
      %v2118 = vmul.f32 %v455, %v2102
      %v2119 = vmul.f32 %v456, %v2102
      %v2120 = vmul.f32 %v457, %v2102
      %v2121 = vmul.f32 %v458, %v2102
      %v2122 = vmul.f32 %v459, %v2102
      %v2123 = vmul.f32 %v460, %v2102
      %v2124 = vmul.f32 %v461, %v2102
      %v2125 = vmul.f32 %v462, %v2102
      %v2126 = vmul.f32 %v463, %v2102
      %vm2151 = vcmask 1044480
      %v2152 = vrot.slane %v2103, 3
      %v2153 = vrot.slane %v2104, 3
      %v2154 = vsel %vm2151, %v2152, %v2153
      %v2155 = vrot.slane %v2105, 3
      %v2156 = vrot.slane %v2106, 3
      %v2157 = vsel %vm2151, %v2155, %v2156
      %v2158 = vrot.slane %v2107, 3
      %v2159 = vrot.slane %v2108, 3
      %v2160 = vsel %vm2151, %v2158, %v2159
      %v2161 = vrot.slane %v2109, 3
      %v2162 = vrot.slane %v2110, 3
      %v2163 = vsel %vm2151, %v2161, %v2162
      %v2164 = vrot.slane %v2111, 3
      %v2165 = vrot.slane %v2112, 3
      %v2166 = vsel %vm2151, %v2164, %v2165
      %v2167 = vrot.slane %v2113, 3
      %v2168 = vrot.slane %v2114, 3
      %v2169 = vsel %vm2151, %v2167, %v2168
      %v2170 = vrot.slane %v2115, 3
      %v2171 = vrot.slane %v2116, 3
      %v2172 = vsel %vm2151, %v2170, %v2171
      %v2173 = vrot.slane %v2117, 3
      %v2174 = vrot.slane %v2118, 3
      %v2175 = vsel %vm2151, %v2173, %v2174
      %v2176 = vrot.slane %v2119, 3
      %v2177 = vrot.slane %v2120, 3
      %v2178 = vsel %vm2151, %v2176, %v2177
      %v2179 = vrot.slane %v2121, 3
      %v2180 = vrot.slane %v2122, 3
      %v2181 = vsel %vm2151, %v2179, %v2180
      %v2182 = vrot.slane %v2123, 3
      %v2183 = vrot.slane %v2124, 3
      %v2184 = vsel %vm2151, %v2182, %v2183
      %v2185 = vrot.slane %v2125, 3
      %v2186 = vrot.slane %v2126, 3
      %v2187 = vsel %vm2151, %v2185, %v2186
      %v2212 = vadd.f32 %v2075, %v2154
      %v2213 = vadd.f32 %v2076, %v2153
      %v2214 = vadd.f32 %v2077, %v2157
      %v2215 = vadd.f32 %v2078, %v2156
      %v2216 = vadd.f32 %v2079, %v2160
      %v2217 = vadd.f32 %v2080, %v2159
      %v2218 = vadd.f32 %v2081, %v2163
      %v2219 = vadd.f32 %v2082, %v2162
      %v2220 = vadd.f32 %v2083, %v2166
      %v2221 = vadd.f32 %v2084, %v2165
      %v2222 = vadd.f32 %v2085, %v2169
      %v2223 = vadd.f32 %v2086, %v2168
      %v2224 = vadd.f32 %v2087, %v2172
      %v2225 = vadd.f32 %v2088, %v2171
      %v2226 = vadd.f32 %v2089, %v2175
      %v2227 = vadd.f32 %v2090, %v2174
      %v2228 = vadd.f32 %v2091, %v2178
      %v2229 = vadd.f32 %v2092, %v2177
      %v2230 = vadd.f32 %v2093, %v2181
      %v2231 = vadd.f32 %v2094, %v2180
      %v2232 = vadd.f32 %v2095, %v2184
      %v2233 = vadd.f32 %v2096, %v2183
      %v2234 = vadd.f32 %v2097, %v2187
      %v2235 = vadd.f32 %v2098, %v2186
      %v2236 = vlaneseq
      %v2237 = vshrl.u32 %v2236, 7
      %v2238 = vsub.s32 3, %v2237
      %v2239 = vrot.slane %v473, %v2238
      %v2240 = vmul.f32 %v442, %v2239
      %v2241 = vmul.f32 %v443, %v2239
      %v2242 = vmul.f32 %v444, %v2239
      %v2243 = vmul.f32 %v445, %v2239
      %v2244 = vmul.f32 %v446, %v2239
      %v2245 = vmul.f32 %v447, %v2239
      %v2246 = vmul.f32 %v448, %v2239
      %v2247 = vmul.f32 %v449, %v2239
      %v2248 = vmul.f32 %v450, %v2239
      %v2249 = vmul.f32 %v451, %v2239
      %v2250 = vmul.f32 %v452, %v2239
      %v2251 = vmul.f32 %v453, %v2239
      %v2252 = vmul.f32 %v454, %v2239
      %v2253 = vmul.f32 %v455, %v2239
      %v2254 = vmul.f32 %v456, %v2239
      %v2255 = vmul.f32 %v457, %v2239
      %v2256 = vmul.f32 %v458, %v2239
      %v2257 = vmul.f32 %v459, %v2239
      %v2258 = vmul.f32 %v460, %v2239
      %v2259 = vmul.f32 %v461, %v2239
      %v2260 = vmul.f32 %v462, %v2239
      %v2261 = vmul.f32 %v463, %v2239
      %v2262 = vmul.f32 %v464, %v2239
      %v2263 = vmul.f32 %v465, %v2239
      %v2288 = vrot.slane %v2240, 3
      %v2289 = vrot.slane %v2241, 3
      %v2290 = vsel %vm2151, %v2288, %v2289
      %v2291 = vrot.slane %v2242, 3
      %v2292 = vrot.slane %v2243, 3
      %v2293 = vsel %vm2151, %v2291, %v2292
      %v2294 = vrot.slane %v2244, 3
      %v2295 = vrot.slane %v2245, 3
      %v2296 = vsel %vm2151, %v2294, %v2295
      %v2297 = vrot.slane %v2246, 3
      %v2298 = vrot.slane %v2247, 3
      %v2299 = vsel %vm2151, %v2297, %v2298
      %v2300 = vrot.slane %v2248, 3
      %v2301 = vrot.slane %v2249, 3
      %v2302 = vsel %vm2151, %v2300, %v2301
      %v2303 = vrot.slane %v2250, 3
      %v2304 = vrot.slane %v2251, 3
      %v2305 = vsel %vm2151, %v2303, %v2304
      %v2306 = vrot.slane %v2252, 3
      %v2307 = vrot.slane %v2253, 3
      %v2308 = vsel %vm2151, %v2306, %v2307
      %v2309 = vrot.slane %v2254, 3
      %v2310 = vrot.slane %v2255, 3
      %v2311 = vsel %vm2151, %v2309, %v2310
      %v2312 = vrot.slane %v2256, 3
      %v2313 = vrot.slane %v2257, 3
      %v2314 = vsel %vm2151, %v2312, %v2313
      %v2315 = vrot.slane %v2258, 3
      %v2316 = vrot.slane %v2259, 3
      %v2317 = vsel %vm2151, %v2315, %v2316
      %v2318 = vrot.slane %v2260, 3
      %v2319 = vrot.slane %v2261, 3
      %v2320 = vsel %vm2151, %v2318, %v2319
      %v2321 = vrot.slane %v2262, 3
      %v2322 = vrot.slane %v2263, 3
      %v2323 = vsel %vm2151, %v2321, %v2322
      %v2348 = vadd.f32 %v2212, %v2290
      %v2349 = vadd.f32 %v2213, %v2289
      %v2350 = vadd.f32 %v2214, %v2293
      %v2351 = vadd.f32 %v2215, %v2292
      %v2352 = vadd.f32 %v2216, %v2296
      %v2353 = vadd.f32 %v2217, %v2295
      %v2354 = vadd.f32 %v2218, %v2299
      %v2355 = vadd.f32 %v2219, %v2298
      %v2356 = vadd.f32 %v2220, %v2302
      %v2357 = vadd.f32 %v2221, %v2301
      %v2358 = vadd.f32 %v2222, %v2305
      %v2359 = vadd.f32 %v2223, %v2304
      %v2360 = vadd.f32 %v2224, %v2308
      %v2361 = vadd.f32 %v2225, %v2307
      %v2362 = vadd.f32 %v2226, %v2311
      %v2363 = vadd.f32 %v2227, %v2310
      %v2364 = vadd.f32 %v2228, %v2314
      %v2365 = vadd.f32 %v2229, %v2313
      %v2366 = vadd.f32 %v2230, %v2317
      %v2367 = vadd.f32 %v2231, %v2316
      %v2368 = vadd.f32 %v2232, %v2320
      %v2369 = vadd.f32 %v2233, %v2319
      %v2370 = vadd.f32 %v2234, %v2323
      %v2371 = vadd.f32 %v2235, %v2322
      %v2372 = vlaneseq
      %v2373 = vshrl.u32 %v2372, 7
      %v2374 = vsub.s32 3, %v2373
      %v2375 = vrot.slane %v474, %v2374
      %v2376 = vmul.f32 %v444, %v2375
      %v2377 = vmul.f32 %v445, %v2375
      %v2378 = vmul.f32 %v446, %v2375
      %v2379 = vmul.f32 %v447, %v2375
      %v2380 = vmul.f32 %v448, %v2375
      %v2381 = vmul.f32 %v449, %v2375
      %v2382 = vmul.f32 %v450, %v2375
      %v2383 = vmul.f32 %v451, %v2375
      %v2384 = vmul.f32 %v452, %v2375
      %v2385 = vmul.f32 %v453, %v2375
      %v2386 = vmul.f32 %v454, %v2375
      %v2387 = vmul.f32 %v455, %v2375
      %v2388 = vmul.f32 %v456, %v2375
      %v2389 = vmul.f32 %v457, %v2375
      %v2390 = vmul.f32 %v458, %v2375
      %v2391 = vmul.f32 %v459, %v2375
      %v2392 = vmul.f32 %v460, %v2375
      %v2393 = vmul.f32 %v461, %v2375
      %v2394 = vmul.f32 %v462, %v2375
      %v2395 = vmul.f32 %v463, %v2375
      %v2396 = vmul.f32 %v464, %v2375
      %v2397 = vmul.f32 %v465, %v2375
      %v2398 = vmul.f32 %v466, %v2375
      %v2399 = vmul.f32 %v467, %v2375
      %v2424 = vrot.slane %v2376, 3
      %v2425 = vrot.slane %v2377, 3
      %v2426 = vsel %vm2151, %v2424, %v2425
      %v2427 = vrot.slane %v2378, 3
      %v2428 = vrot.slane %v2379, 3
      %v2429 = vsel %vm2151, %v2427, %v2428
      %v2430 = vrot.slane %v2380, 3
      %v2431 = vrot.slane %v2381, 3
      %v2432 = vsel %vm2151, %v2430, %v2431
      %v2433 = vrot.slane %v2382, 3
      %v2434 = vrot.slane %v2383, 3
      %v2435 = vsel %vm2151, %v2433, %v2434
      %v2436 = vrot.slane %v2384, 3
      %v2437 = vrot.slane %v2385, 3
      %v2438 = vsel %vm2151, %v2436, %v2437
      %v2439 = vrot.slane %v2386, 3
      %v2440 = vrot.slane %v2387, 3
      %v2441 = vsel %vm2151, %v2439, %v2440
      %v2442 = vrot.slane %v2388, 3
      %v2443 = vrot.slane %v2389, 3
      %v2444 = vsel %vm2151, %v2442, %v2443
      %v2445 = vrot.slane %v2390, 3
      %v2446 = vrot.slane %v2391, 3
      %v2447 = vsel %vm2151, %v2445, %v2446
      %v2448 = vrot.slane %v2392, 3
      %v2449 = vrot.slane %v2393, 3
      %v2450 = vsel %vm2151, %v2448, %v2449
      %v2451 = vrot.slane %v2394, 3
      %v2452 = vrot.slane %v2395, 3
      %v2453 = vsel %vm2151, %v2451, %v2452
      %v2454 = vrot.slane %v2396, 3
      %v2455 = vrot.slane %v2397, 3
      %v2456 = vsel %vm2151, %v2454, %v2455
      %v2457 = vrot.slane %v2398, 3
      %v2458 = vrot.slane %v2399, 3
      %v2459 = vsel %vm2151, %v2457, %v2458
      %v2484 = vadd.f32 %v2348, %v2426
      %v2485 = vadd.f32 %v2349, %v2425
      %v2486 = vadd.f32 %v2350, %v2429
      %v2487 = vadd.f32 %v2351, %v2428
      %v2488 = vadd.f32 %v2352, %v2432
      %v2489 = vadd.f32 %v2353, %v2431
      %v2490 = vadd.f32 %v2354, %v2435
      %v2491 = vadd.f32 %v2355, %v2434
      %v2492 = vadd.f32 %v2356, %v2438
      %v2493 = vadd.f32 %v2357, %v2437
      %v2494 = vadd.f32 %v2358, %v2441
      %v2495 = vadd.f32 %v2359, %v2440
      %v2496 = vadd.f32 %v2360, %v2444
      %v2497 = vadd.f32 %v2361, %v2443
      %v2498 = vadd.f32 %v2362, %v2447
      %v2499 = vadd.f32 %v2363, %v2446
      %v2500 = vadd.f32 %v2364, %v2450
      %v2501 = vadd.f32 %v2365, %v2449
      %v2502 = vadd.f32 %v2366, %v2453
      %v2503 = vadd.f32 %v2367, %v2452
      %v2504 = vadd.f32 %v2368, %v2456
      %v2505 = vadd.f32 %v2369, %v2455
      %v2506 = vadd.f32 %v2370, %v2459
      %v2507 = vadd.f32 %v2371, %v2458
      %v2508 = vlaneseq
      %v2509 = vshrl.u32 %v2508, 7
      %v2510 = vsub.s32 3, %v2509
      %v2511 = vrot.slane %v475, %v2510
      %v2512 = vmul.f32 %v446, %v2511
      %v2513 = vmul.f32 %v447, %v2511
      %v2514 = vmul.f32 %v448, %v2511
      %v2515 = vmul.f32 %v449, %v2511
      %v2516 = vmul.f32 %v450, %v2511
      %v2517 = vmul.f32 %v451, %v2511
      %v2518 = vmul.f32 %v452, %v2511
      %v2519 = vmul.f32 %v453, %v2511
      %v2520 = vmul.f32 %v454, %v2511
      %v2521 = vmul.f32 %v455, %v2511
      %v2522 = vmul.f32 %v456, %v2511
      %v2523 = vmul.f32 %v457, %v2511
      %v2524 = vmul.f32 %v458, %v2511
      %v2525 = vmul.f32 %v459, %v2511
      %v2526 = vmul.f32 %v460, %v2511
      %v2527 = vmul.f32 %v461, %v2511
      %v2528 = vmul.f32 %v462, %v2511
      %v2529 = vmul.f32 %v463, %v2511
      %v2530 = vmul.f32 %v464, %v2511
      %v2531 = vmul.f32 %v465, %v2511
      %v2532 = vmul.f32 %v466, %v2511
      %v2533 = vmul.f32 %v467, %v2511
      %v2534 = vmul.f32 %v468, %v2511
      %v2535 = vmul.f32 %v469, %v2511
      %v2560 = vrot.slane %v2512, 3
      %v2561 = vrot.slane %v2513, 3
      %v2562 = vsel %vm2151, %v2560, %v2561
      %v2563 = vrot.slane %v2514, 3
      %v2564 = vrot.slane %v2515, 3
      %v2565 = vsel %vm2151, %v2563, %v2564
      %v2566 = vrot.slane %v2516, 3
      %v2567 = vrot.slane %v2517, 3
      %v2568 = vsel %vm2151, %v2566, %v2567
      %v2569 = vrot.slane %v2518, 3
      %v2570 = vrot.slane %v2519, 3
      %v2571 = vsel %vm2151, %v2569, %v2570
      %v2572 = vrot.slane %v2520, 3
      %v2573 = vrot.slane %v2521, 3
      %v2574 = vsel %vm2151, %v2572, %v2573
      %v2575 = vrot.slane %v2522, 3
      %v2576 = vrot.slane %v2523, 3
      %v2577 = vsel %vm2151, %v2575, %v2576
      %v2578 = vrot.slane %v2524, 3
      %v2579 = vrot.slane %v2525, 3
      %v2580 = vsel %vm2151, %v2578, %v2579
      %v2581 = vrot.slane %v2526, 3
      %v2582 = vrot.slane %v2527, 3
      %v2583 = vsel %vm2151, %v2581, %v2582
      %v2584 = vrot.slane %v2528, 3
      %v2585 = vrot.slane %v2529, 3
      %v2586 = vsel %vm2151, %v2584, %v2585
      %v2587 = vrot.slane %v2530, 3
      %v2588 = vrot.slane %v2531, 3
      %v2589 = vsel %vm2151, %v2587, %v2588
      %v2590 = vrot.slane %v2532, 3
      %v2591 = vrot.slane %v2533, 3
      %v2592 = vsel %vm2151, %v2590, %v2591
      %v2593 = vrot.slane %v2534, 3
      %v2594 = vrot.slane %v2535, 3
      %v2595 = vsel %vm2151, %v2593, %v2594
      %v2620 = vadd.f32 %v2484, %v2562
      %v2621 = vadd.f32 %v2485, %v2561
      %v2622 = vadd.f32 %v2486, %v2565
      %v2623 = vadd.f32 %v2487, %v2564
      %v2624 = vadd.f32 %v2488, %v2568
      %v2625 = vadd.f32 %v2489, %v2567
      %v2626 = vadd.f32 %v2490, %v2571
      %v2627 = vadd.f32 %v2491, %v2570
      %v2628 = vadd.f32 %v2492, %v2574
      %v2629 = vadd.f32 %v2493, %v2573
      %v2630 = vadd.f32 %v2494, %v2577
      %v2631 = vadd.f32 %v2495, %v2576
      %v2632 = vadd.f32 %v2496, %v2580
      %v2633 = vadd.f32 %v2497, %v2579
      %v2634 = vadd.f32 %v2498, %v2583
      %v2635 = vadd.f32 %v2499, %v2582
      %v2636 = vadd.f32 %v2500, %v2586
      %v2637 = vadd.f32 %v2501, %v2585
      %v2638 = vadd.f32 %v2502, %v2589
      %v2639 = vadd.f32 %v2503, %v2588
      %v2640 = vadd.f32 %v2504, %v2592
      %v2641 = vadd.f32 %v2505, %v2591
      %v2642 = vadd.f32 %v2506, %v2595
      %v2643 = vadd.f32 %v2507, %v2594
      %v2644 = vlaneseq
      %v2645 = vshrl.u32 %v2644, 7
      %v2646 = vsub.s32 3, %v2645
      %v2647 = vrot.slane %v476, %v2646
      %v2648 = vmul.f32 %v448, %v2647
      %v2649 = vmul.f32 %v449, %v2647
      %v2650 = vmul.f32 %v450, %v2647
      %v2651 = vmul.f32 %v451, %v2647
      %v2652 = vmul.f32 %v452, %v2647
      %v2653 = vmul.f32 %v453, %v2647
      %v2654 = vmul.f32 %v454, %v2647
      %v2655 = vmul.f32 %v455, %v2647
      %v2656 = vmul.f32 %v456, %v2647
      %v2657 = vmul.f32 %v457, %v2647
      %v2658 = vmul.f32 %v458, %v2647
      %v2659 = vmul.f32 %v459, %v2647
      %v2660 = vmul.f32 %v460, %v2647
      %v2661 = vmul.f32 %v461, %v2647
      %v2662 = vmul.f32 %v462, %v2647
      %v2663 = vmul.f32 %v463, %v2647
      %v2664 = vmul.f32 %v464, %v2647
      %v2665 = vmul.f32 %v465, %v2647
      %v2666 = vmul.f32 %v466, %v2647
      %v2667 = vmul.f32 %v467, %v2647
      %v2668 = vmul.f32 %v468, %v2647
      %v2669 = vmul.f32 %v469, %v2647
      %v2670 = vmul.f32 %v470, %v2647
      %v2671 = vmul.f32 %v471, %v2647
      %v2696 = vrot.slane %v2648, 3
      %v2697 = vrot.slane %v2649, 3
      %v2698 = vsel %vm2151, %v2696, %v2697
      %v2699 = vrot.slane %v2650, 3
      %v2700 = vrot.slane %v2651, 3
      %v2701 = vsel %vm2151, %v2699, %v2700
      %v2702 = vrot.slane %v2652, 3
      %v2703 = vrot.slane %v2653, 3
      %v2704 = vsel %vm2151, %v2702, %v2703
      %v2705 = vrot.slane %v2654, 3
      %v2706 = vrot.slane %v2655, 3
      %v2707 = vsel %vm2151, %v2705, %v2706
      %v2708 = vrot.slane %v2656, 3
      %v2709 = vrot.slane %v2657, 3
      %v2710 = vsel %vm2151, %v2708, %v2709
      %v2711 = vrot.slane %v2658, 3
      %v2712 = vrot.slane %v2659, 3
      %v2713 = vsel %vm2151, %v2711, %v2712
      %v2714 = vrot.slane %v2660, 3
      %v2715 = vrot.slane %v2661, 3
      %v2716 = vsel %vm2151, %v2714, %v2715
      %v2717 = vrot.slane %v2662, 3
      %v2718 = vrot.slane %v2663, 3
      %v2719 = vsel %vm2151, %v2717, %v2718
      %v2720 = vrot.slane %v2664, 3
      %v2721 = vrot.slane %v2665, 3
      %v2722 = vsel %vm2151, %v2720, %v2721
      %v2723 = vrot.slane %v2666, 3
      %v2724 = vrot.slane %v2667, 3
      %v2725 = vsel %vm2151, %v2723, %v2724
      %v2726 = vrot.slane %v2668, 3
      %v2727 = vrot.slane %v2669, 3
      %v2728 = vsel %vm2151, %v2726, %v2727
      %v2729 = vrot.slane %v2670, 3
      %v2730 = vrot.slane %v2671, 3
      %v2731 = vsel %vm2151, %v2729, %v2730
      %v2756 = vadd.f32 %v2620, %v2698
      %v2757 = vadd.f32 %v2621, %v2697
      %v2758 = vadd.f32 %v2622, %v2701
      %v2759 = vadd.f32 %v2623, %v2700
      %v2760 = vadd.f32 %v2624, %v2704
      %v2761 = vadd.f32 %v2625, %v2703
      %v2762 = vadd.f32 %v2626, %v2707
      %v2763 = vadd.f32 %v2627, %v2706
      %v2764 = vadd.f32 %v2628, %v2710
      %v2765 = vadd.f32 %v2629, %v2709
      %v2766 = vadd.f32 %v2630, %v2713
      %v2767 = vadd.f32 %v2631, %v2712
      %v2768 = vadd.f32 %v2632, %v2716
      %v2769 = vadd.f32 %v2633, %v2715
      %v2770 = vadd.f32 %v2634, %v2719
      %v2771 = vadd.f32 %v2635, %v2718
      %v2772 = vadd.f32 %v2636, %v2722
      %v2773 = vadd.f32 %v2637, %v2721
      %v2774 = vadd.f32 %v2638, %v2725
      %v2775 = vadd.f32 %v2639, %v2724
      %v2776 = vadd.f32 %v2640, %v2728
      %v2777 = vadd.f32 %v2641, %v2727
      %v2778 = vadd.f32 %v2642, %v2731
      %v2779 = vadd.f32 %v2643, %v2730
      %v2780 = vlaneseq
      %v2781 = vshrl.u32 %v2780, 7
      %v2782 = vsub.s32 4, %v2781
      %v2783 = vrot.slane %v472, %v2782
      %v2784 = vmul.f32 %v440, %v2783
      %v2785 = vmul.f32 %v441, %v2783
      %v2786 = vmul.f32 %v442, %v2783
      %v2787 = vmul.f32 %v443, %v2783
      %v2788 = vmul.f32 %v444, %v2783
      %v2789 = vmul.f32 %v445, %v2783
      %v2790 = vmul.f32 %v446, %v2783
      %v2791 = vmul.f32 %v447, %v2783
      %v2792 = vmul.f32 %v448, %v2783
      %v2793 = vmul.f32 %v449, %v2783
      %v2794 = vmul.f32 %v450, %v2783
      %v2795 = vmul.f32 %v451, %v2783
      %v2796 = vmul.f32 %v452, %v2783
      %v2797 = vmul.f32 %v453, %v2783
      %v2798 = vmul.f32 %v454, %v2783
      %v2799 = vmul.f32 %v455, %v2783
      %v2800 = vmul.f32 %v456, %v2783
      %v2801 = vmul.f32 %v457, %v2783
      %v2802 = vmul.f32 %v458, %v2783
      %v2803 = vmul.f32 %v459, %v2783
      %v2804 = vmul.f32 %v460, %v2783
      %v2805 = vmul.f32 %v461, %v2783
      %v2806 = vmul.f32 %v462, %v2783
      %v2807 = vmul.f32 %v463, %v2783
      %vm2832 = vcmask 1043456
      %v2833 = vrot.slane %v2784, 4
      %v2834 = vrot.slane %v2785, 4
      %v2835 = vsel %vm2832, %v2833, %v2834
      %v2836 = vrot.slane %v2786, 4
      %v2837 = vrot.slane %v2787, 4
      %v2838 = vsel %vm2832, %v2836, %v2837
      %v2839 = vrot.slane %v2788, 4
      %v2840 = vrot.slane %v2789, 4
      %v2841 = vsel %vm2832, %v2839, %v2840
      %v2842 = vrot.slane %v2790, 4
      %v2843 = vrot.slane %v2791, 4
      %v2844 = vsel %vm2832, %v2842, %v2843
      %v2845 = vrot.slane %v2792, 4
      %v2846 = vrot.slane %v2793, 4
      %v2847 = vsel %vm2832, %v2845, %v2846
      %v2848 = vrot.slane %v2794, 4
      %v2849 = vrot.slane %v2795, 4
      %v2850 = vsel %vm2832, %v2848, %v2849
      %v2851 = vrot.slane %v2796, 4
      %v2852 = vrot.slane %v2797, 4
      %v2853 = vsel %vm2832, %v2851, %v2852
      %v2854 = vrot.slane %v2798, 4
      %v2855 = vrot.slane %v2799, 4
      %v2856 = vsel %vm2832, %v2854, %v2855
      %v2857 = vrot.slane %v2800, 4
      %v2858 = vrot.slane %v2801, 4
      %v2859 = vsel %vm2832, %v2857, %v2858
      %v2860 = vrot.slane %v2802, 4
      %v2861 = vrot.slane %v2803, 4
      %v2862 = vsel %vm2832, %v2860, %v2861
      %v2863 = vrot.slane %v2804, 4
      %v2864 = vrot.slane %v2805, 4
      %v2865 = vsel %vm2832, %v2863, %v2864
      %v2866 = vrot.slane %v2806, 4
      %v2867 = vrot.slane %v2807, 4
      %v2868 = vsel %vm2832, %v2866, %v2867
      %v2893 = vadd.f32 %v2756, %v2835
      %v2894 = vadd.f32 %v2757, %v2834
      %v2895 = vadd.f32 %v2758, %v2838
      %v2896 = vadd.f32 %v2759, %v2837
      %v2897 = vadd.f32 %v2760, %v2841
      %v2898 = vadd.f32 %v2761, %v2840
      %v2899 = vadd.f32 %v2762, %v2844
      %v2900 = vadd.f32 %v2763, %v2843
      %v2901 = vadd.f32 %v2764, %v2847
      %v2902 = vadd.f32 %v2765, %v2846
      %v2903 = vadd.f32 %v2766, %v2850
      %v2904 = vadd.f32 %v2767, %v2849
      %v2905 = vadd.f32 %v2768, %v2853
      %v2906 = vadd.f32 %v2769, %v2852
      %v2907 = vadd.f32 %v2770, %v2856
      %v2908 = vadd.f32 %v2771, %v2855
      %v2909 = vadd.f32 %v2772, %v2859
      %v2910 = vadd.f32 %v2773, %v2858
      %v2911 = vadd.f32 %v2774, %v2862
      %v2912 = vadd.f32 %v2775, %v2861
      %v2913 = vadd.f32 %v2776, %v2865
      %v2914 = vadd.f32 %v2777, %v2864
      %v2915 = vadd.f32 %v2778, %v2868
      %v2916 = vadd.f32 %v2779, %v2867
      %v2917 = vlaneseq
      %v2918 = vshrl.u32 %v2917, 7
      %v2919 = vsub.s32 4, %v2918
      %v2920 = vrot.slane %v473, %v2919
      %v2921 = vmul.f32 %v442, %v2920
      %v2922 = vmul.f32 %v443, %v2920
      %v2923 = vmul.f32 %v444, %v2920
      %v2924 = vmul.f32 %v445, %v2920
      %v2925 = vmul.f32 %v446, %v2920
      %v2926 = vmul.f32 %v447, %v2920
      %v2927 = vmul.f32 %v448, %v2920
      %v2928 = vmul.f32 %v449, %v2920
      %v2929 = vmul.f32 %v450, %v2920
      %v2930 = vmul.f32 %v451, %v2920
      %v2931 = vmul.f32 %v452, %v2920
      %v2932 = vmul.f32 %v453, %v2920
      %v2933 = vmul.f32 %v454, %v2920
      %v2934 = vmul.f32 %v455, %v2920
      %v2935 = vmul.f32 %v456, %v2920
      %v2936 = vmul.f32 %v457, %v2920
      %v2937 = vmul.f32 %v458, %v2920
      %v2938 = vmul.f32 %v459, %v2920
      %v2939 = vmul.f32 %v460, %v2920
      %v2940 = vmul.f32 %v461, %v2920
      %v2941 = vmul.f32 %v462, %v2920
      %v2942 = vmul.f32 %v463, %v2920
      %v2943 = vmul.f32 %v464, %v2920
      %v2944 = vmul.f32 %v465, %v2920
      %v2969 = vrot.slane %v2921, 4
      %v2970 = vrot.slane %v2922, 4
      %v2971 = vsel %vm2832, %v2969, %v2970
      %v2972 = vrot.slane %v2923, 4
      %v2973 = vrot.slane %v2924, 4
      %v2974 = vsel %vm2832, %v2972, %v2973
      %v2975 = vrot.slane %v2925, 4
      %v2976 = vrot.slane %v2926, 4
      %v2977 = vsel %vm2832, %v2975, %v2976
      %v2978 = vrot.slane %v2927, 4
      %v2979 = vrot.slane %v2928, 4
      %v2980 = vsel %vm2832, %v2978, %v2979
      %v2981 = vrot.slane %v2929, 4
      %v2982 = vrot.slane %v2930, 4
      %v2983 = vsel %vm2832, %v2981, %v2982
      %v2984 = vrot.slane %v2931, 4
      %v2985 = vrot.slane %v2932, 4
      %v2986 = vsel %vm2832, %v2984, %v2985
      %v2987 = vrot.slane %v2933, 4
      %v2988 = vrot.slane %v2934, 4
      %v2989 = vsel %vm2832, %v2987, %v2988
      %v2990 = vrot.slane %v2935, 4
      %v2991 = vrot.slane %v2936, 4
      %v2992 = vsel %vm2832, %v2990, %v2991
      %v2993 = vrot.slane %v2937, 4
      %v2994 = vrot.slane %v2938, 4
      %v2995 = vsel %vm2832, %v2993, %v2994
      %v2996 = vrot.slane %v2939, 4
      %v2997 = vrot.slane %v2940, 4
      %v2998 = vsel %vm2832, %v2996, %v2997
      %v2999 = vrot.slane %v2941, 4
      %v3000 = vrot.slane %v2942, 4
      %v3001 = vsel %vm2832, %v2999, %v3000
      %v3002 = vrot.slane %v2943, 4
      %v3003 = vrot.slane %v2944, 4
      %v3004 = vsel %vm2832, %v3002, %v3003
      %v3029 = vadd.f32 %v2893, %v2971
      %v3030 = vadd.f32 %v2894, %v2970
      %v3031 = vadd.f32 %v2895, %v2974
      %v3032 = vadd.f32 %v2896, %v2973
      %v3033 = vadd.f32 %v2897, %v2977
      %v3034 = vadd.f32 %v2898, %v2976
      %v3035 = vadd.f32 %v2899, %v2980
      %v3036 = vadd.f32 %v2900, %v2979
      %v3037 = vadd.f32 %v2901, %v2983
      %v3038 = vadd.f32 %v2902, %v2982
      %v3039 = vadd.f32 %v2903, %v2986
      %v3040 = vadd.f32 %v2904, %v2985
      %v3041 = vadd.f32 %v2905, %v2989
      %v3042 = vadd.f32 %v2906, %v2988
      %v3043 = vadd.f32 %v2907, %v2992
      %v3044 = vadd.f32 %v2908, %v2991
      %v3045 = vadd.f32 %v2909, %v2995
      %v3046 = vadd.f32 %v2910, %v2994
      %v3047 = vadd.f32 %v2911, %v2998
      %v3048 = vadd.f32 %v2912, %v2997
      %v3049 = vadd.f32 %v2913, %v3001
      %v3050 = vadd.f32 %v2914, %v3000
      %v3051 = vadd.f32 %v2915, %v3004
      %v3052 = vadd.f32 %v2916, %v3003
      %v3053 = vlaneseq
      %v3054 = vshrl.u32 %v3053, 7
      %v3055 = vsub.s32 4, %v3054
      %v3056 = vrot.slane %v474, %v3055
      %v3057 = vmul.f32 %v444, %v3056
      %v3058 = vmul.f32 %v445, %v3056
      %v3059 = vmul.f32 %v446, %v3056
      %v3060 = vmul.f32 %v447, %v3056
      %v3061 = vmul.f32 %v448, %v3056
      %v3062 = vmul.f32 %v449, %v3056
      %v3063 = vmul.f32 %v450, %v3056
      %v3064 = vmul.f32 %v451, %v3056
      %v3065 = vmul.f32 %v452, %v3056
      %v3066 = vmul.f32 %v453, %v3056
      %v3067 = vmul.f32 %v454, %v3056
      %v3068 = vmul.f32 %v455, %v3056
      %v3069 = vmul.f32 %v456, %v3056
      %v3070 = vmul.f32 %v457, %v3056
      %v3071 = vmul.f32 %v458, %v3056
      %v3072 = vmul.f32 %v459, %v3056
      %v3073 = vmul.f32 %v460, %v3056
      %v3074 = vmul.f32 %v461, %v3056
      %v3075 = vmul.f32 %v462, %v3056
      %v3076 = vmul.f32 %v463, %v3056
      %v3077 = vmul.f32 %v464, %v3056
      %v3078 = vmul.f32 %v465, %v3056
      %v3079 = vmul.f32 %v466, %v3056
      %v3080 = vmul.f32 %v467, %v3056
      %v3105 = vrot.slane %v3057, 4
      %v3106 = vrot.slane %v3058, 4
      %v3107 = vsel %vm2832, %v3105, %v3106
      %v3108 = vrot.slane %v3059, 4
      %v3109 = vrot.slane %v3060, 4
      %v3110 = vsel %vm2832, %v3108, %v3109
      %v3111 = vrot.slane %v3061, 4
      %v3112 = vrot.slane %v3062, 4
      %v3113 = vsel %vm2832, %v3111, %v3112
      %v3114 = vrot.slane %v3063, 4
      %v3115 = vrot.slane %v3064, 4
      %v3116 = vsel %vm2832, %v3114, %v3115
      %v3117 = vrot.slane %v3065, 4
      %v3118 = vrot.slane %v3066, 4
      %v3119 = vsel %vm2832, %v3117, %v3118
      %v3120 = vrot.slane %v3067, 4
      %v3121 = vrot.slane %v3068, 4
      %v3122 = vsel %vm2832, %v3120, %v3121
      %v3123 = vrot.slane %v3069, 4
      %v3124 = vrot.slane %v3070, 4
      %v3125 = vsel %vm2832, %v3123, %v3124
      %v3126 = vrot.slane %v3071, 4
      %v3127 = vrot.slane %v3072, 4
      %v3128 = vsel %vm2832, %v3126, %v3127
      %v3129 = vrot.slane %v3073, 4
      %v3130 = vrot.slane %v3074, 4
      %v3131 = vsel %vm2832, %v3129, %v3130
      %v3132 = vrot.slane %v3075, 4
      %v3133 = vrot.slane %v3076, 4
      %v3134 = vsel %vm2832, %v3132, %v3133
      %v3135 = vrot.slane %v3077, 4
      %v3136 = vrot.slane %v3078, 4
      %v3137 = vsel %vm2832, %v3135, %v3136
      %v3138 = vrot.slane %v3079, 4
      %v3139 = vrot.slane %v3080, 4
      %v3140 = vsel %vm2832, %v3138, %v3139
      %v3165 = vadd.f32 %v3029, %v3107
      %v3166 = vadd.f32 %v3030, %v3106
      %v3167 = vadd.f32 %v3031, %v3110
      %v3168 = vadd.f32 %v3032, %v3109
      %v3169 = vadd.f32 %v3033, %v3113
      %v3170 = vadd.f32 %v3034, %v3112
      %v3171 = vadd.f32 %v3035, %v3116
      %v3172 = vadd.f32 %v3036, %v3115
      %v3173 = vadd.f32 %v3037, %v3119
      %v3174 = vadd.f32 %v3038, %v3118
      %v3175 = vadd.f32 %v3039, %v3122
      %v3176 = vadd.f32 %v3040, %v3121
      %v3177 = vadd.f32 %v3041, %v3125
      %v3178 = vadd.f32 %v3042, %v3124
      %v3179 = vadd.f32 %v3043, %v3128
      %v3180 = vadd.f32 %v3044, %v3127
      %v3181 = vadd.f32 %v3045, %v3131
      %v3182 = vadd.f32 %v3046, %v3130
      %v3183 = vadd.f32 %v3047, %v3134
      %v3184 = vadd.f32 %v3048, %v3133
      %v3185 = vadd.f32 %v3049, %v3137
      %v3186 = vadd.f32 %v3050, %v3136
      %v3187 = vadd.f32 %v3051, %v3140
      %v3188 = vadd.f32 %v3052, %v3139
      %v3189 = vlaneseq
      %v3190 = vshrl.u32 %v3189, 7
      %v3191 = vsub.s32 4, %v3190
      %v3192 = vrot.slane %v475, %v3191
      %v3193 = vmul.f32 %v446, %v3192
      %v3194 = vmul.f32 %v447, %v3192
      %v3195 = vmul.f32 %v448, %v3192
      %v3196 = vmul.f32 %v449, %v3192
      %v3197 = vmul.f32 %v450, %v3192
      %v3198 = vmul.f32 %v451, %v3192
      %v3199 = vmul.f32 %v452, %v3192
      %v3200 = vmul.f32 %v453, %v3192
      %v3201 = vmul.f32 %v454, %v3192
      %v3202 = vmul.f32 %v455, %v3192
      %v3203 = vmul.f32 %v456, %v3192
      %v3204 = vmul.f32 %v457, %v3192
      %v3205 = vmul.f32 %v458, %v3192
      %v3206 = vmul.f32 %v459, %v3192
      %v3207 = vmul.f32 %v460, %v3192
      %v3208 = vmul.f32 %v461, %v3192
      %v3209 = vmul.f32 %v462, %v3192
      %v3210 = vmul.f32 %v463, %v3192
      %v3211 = vmul.f32 %v464, %v3192
      %v3212 = vmul.f32 %v465, %v3192
      %v3213 = vmul.f32 %v466, %v3192
      %v3214 = vmul.f32 %v467, %v3192
      %v3215 = vmul.f32 %v468, %v3192
      %v3216 = vmul.f32 %v469, %v3192
      %v3241 = vrot.slane %v3193, 4
      %v3242 = vrot.slane %v3194, 4
      %v3243 = vsel %vm2832, %v3241, %v3242
      %v3244 = vrot.slane %v3195, 4
      %v3245 = vrot.slane %v3196, 4
      %v3246 = vsel %vm2832, %v3244, %v3245
      %v3247 = vrot.slane %v3197, 4
      %v3248 = vrot.slane %v3198, 4
      %v3249 = vsel %vm2832, %v3247, %v3248
      %v3250 = vrot.slane %v3199, 4
      %v3251 = vrot.slane %v3200, 4
      %v3252 = vsel %vm2832, %v3250, %v3251
      %v3253 = vrot.slane %v3201, 4
      %v3254 = vrot.slane %v3202, 4
      %v3255 = vsel %vm2832, %v3253, %v3254
      %v3256 = vrot.slane %v3203, 4
      %v3257 = vrot.slane %v3204, 4
      %v3258 = vsel %vm2832, %v3256, %v3257
      %v3259 = vrot.slane %v3205, 4
      %v3260 = vrot.slane %v3206, 4
      %v3261 = vsel %vm2832, %v3259, %v3260
      %v3262 = vrot.slane %v3207, 4
      %v3263 = vrot.slane %v3208, 4
      %v3264 = vsel %vm2832, %v3262, %v3263
      %v3265 = vrot.slane %v3209, 4
      %v3266 = vrot.slane %v3210, 4
      %v3267 = vsel %vm2832, %v3265, %v3266
      %v3268 = vrot.slane %v3211, 4
      %v3269 = vrot.slane %v3212, 4
      %v3270 = vsel %vm2832, %v3268, %v3269
      %v3271 = vrot.slane %v3213, 4
      %v3272 = vrot.slane %v3214, 4
      %v3273 = vsel %vm2832, %v3271, %v3272
      %v3274 = vrot.slane %v3215, 4
      %v3275 = vrot.slane %v3216, 4
      %v3276 = vsel %vm2832, %v3274, %v3275
      %v3301 = vadd.f32 %v3165, %v3243
      %v3302 = vadd.f32 %v3166, %v3242
      %v3303 = vadd.f32 %v3167, %v3246
      %v3304 = vadd.f32 %v3168, %v3245
      %v3305 = vadd.f32 %v3169, %v3249
      %v3306 = vadd.f32 %v3170, %v3248
      %v3307 = vadd.f32 %v3171, %v3252
      %v3308 = vadd.f32 %v3172, %v3251
      %v3309 = vadd.f32 %v3173, %v3255
      %v3310 = vadd.f32 %v3174, %v3254
      %v3311 = vadd.f32 %v3175, %v3258
      %v3312 = vadd.f32 %v3176, %v3257
      %v3313 = vadd.f32 %v3177, %v3261
      %v3314 = vadd.f32 %v3178, %v3260
      %v3315 = vadd.f32 %v3179, %v3264
      %v3316 = vadd.f32 %v3180, %v3263
      %v3317 = vadd.f32 %v3181, %v3267
      %v3318 = vadd.f32 %v3182, %v3266
      %v3319 = vadd.f32 %v3183, %v3270
      %v3320 = vadd.f32 %v3184, %v3269
      %v3321 = vadd.f32 %v3185, %v3273
      %v3322 = vadd.f32 %v3186, %v3272
      %v3323 = vadd.f32 %v3187, %v3276
      %v3324 = vadd.f32 %v3188, %v3275
      %v3325 = vlaneseq
      %v3326 = vshrl.u32 %v3325, 7
      %v3327 = vsub.s32 4, %v3326
      %v3328 = vrot.slane %v476, %v3327
      %v3329 = vmul.f32 %v448, %v3328
      %v3330 = vmul.f32 %v449, %v3328
      %v3331 = vmul.f32 %v450, %v3328
      %v3332 = vmul.f32 %v451, %v3328
      %v3333 = vmul.f32 %v452, %v3328
      %v3334 = vmul.f32 %v453, %v3328
      %v3335 = vmul.f32 %v454, %v3328
      %v3336 = vmul.f32 %v455, %v3328
      %v3337 = vmul.f32 %v456, %v3328
      %v3338 = vmul.f32 %v457, %v3328
      %v3339 = vmul.f32 %v458, %v3328
      %v3340 = vmul.f32 %v459, %v3328
      %v3341 = vmul.f32 %v460, %v3328
      %v3342 = vmul.f32 %v461, %v3328
      %v3343 = vmul.f32 %v462, %v3328
      %v3344 = vmul.f32 %v463, %v3328
      %v3345 = vmul.f32 %v464, %v3328
      %v3346 = vmul.f32 %v465, %v3328
      %v3347 = vmul.f32 %v466, %v3328
      %v3348 = vmul.f32 %v467, %v3328
      %v3349 = vmul.f32 %v468, %v3328
      %v3350 = vmul.f32 %v469, %v3328
      %v3351 = vmul.f32 %v470, %v3328
      %v3352 = vmul.f32 %v471, %v3328
      %v3377 = vrot.slane %v3329, 4
      %v3378 = vrot.slane %v3330, 4
      %v3379 = vsel %vm2832, %v3377, %v3378
      %v3380 = vrot.slane %v3331, 4
      %v3381 = vrot.slane %v3332, 4
      %v3382 = vsel %vm2832, %v3380, %v3381
      %v3383 = vrot.slane %v3333, 4
      %v3384 = vrot.slane %v3334, 4
      %v3385 = vsel %vm2832, %v3383, %v3384
      %v3386 = vrot.slane %v3335, 4
      %v3387 = vrot.slane %v3336, 4
      %v3388 = vsel %vm2832, %v3386, %v3387
      %v3389 = vrot.slane %v3337, 4
      %v3390 = vrot.slane %v3338, 4
      %v3391 = vsel %vm2832, %v3389, %v3390
      %v3392 = vrot.slane %v3339, 4
      %v3393 = vrot.slane %v3340, 4
      %v3394 = vsel %vm2832, %v3392, %v3393
      %v3395 = vrot.slane %v3341, 4
      %v3396 = vrot.slane %v3342, 4
      %v3397 = vsel %vm2832, %v3395, %v3396
      %v3398 = vrot.slane %v3343, 4
      %v3399 = vrot.slane %v3344, 4
      %v3400 = vsel %vm2832, %v3398, %v3399
      %v3401 = vrot.slane %v3345, 4
      %v3402 = vrot.slane %v3346, 4
      %v3403 = vsel %vm2832, %v3401, %v3402
      %v3404 = vrot.slane %v3347, 4
      %v3405 = vrot.slane %v3348, 4
      %v3406 = vsel %vm2832, %v3404, %v3405
      %v3407 = vrot.slane %v3349, 4
      %v3408 = vrot.slane %v3350, 4
      %v3409 = vsel %vm2832, %v3407, %v3408
      %v3410 = vrot.slane %v3351, 4
      %v3411 = vrot.slane %v3352, 4
      %v3412 = vsel %vm2832, %v3410, %v3411
      %v3437 = vadd.f32 %v3301, %v3379
      %v3438 = vadd.f32 %v3302, %v3378
      %v3439 = vadd.f32 %v3303, %v3382
      %v3440 = vadd.f32 %v3304, %v3381
      %v3441 = vadd.f32 %v3305, %v3385
      %v3442 = vadd.f32 %v3306, %v3384
      %v3443 = vadd.f32 %v3307, %v3388
      %v3444 = vadd.f32 %v3308, %v3387
      %v3445 = vadd.f32 %v3309, %v3391
      %v3446 = vadd.f32 %v3310, %v3390
      %v3447 = vadd.f32 %v3311, %v3394
      %v3448 = vadd.f32 %v3312, %v3393
      %v3449 = vadd.f32 %v3313, %v3397
      %v3450 = vadd.f32 %v3314, %v3396
      %v3451 = vadd.f32 %v3315, %v3400
      %v3452 = vadd.f32 %v3316, %v3399
      %v3453 = vadd.f32 %v3317, %v3403
      %v3454 = vadd.f32 %v3318, %v3402
      %v3455 = vadd.f32 %v3319, %v3406
      %v3456 = vadd.f32 %v3320, %v3405
      %v3457 = vadd.f32 %v3321, %v3409
      %v3458 = vadd.f32 %v3322, %v3408
      %v3459 = vadd.f32 %v3323, %v3412
      %v3460 = vadd.f32 %v3324, %v3411
      %3461 = vst [vmem:[%s316] sm:$0xff] %v3437
      %3462 = vst [vmem:[%s316 + $0x8] sm:$0xf] %v3438
      %3463 = vst [vmem:[%s316 + $0x10] sm:$0xff] %v3439
      %3464 = vst [vmem:[%s316 + $0x18] sm:$0xf] %v3440
      %3465 = vst [vmem:[%s316 + $0x20] sm:$0xff] %v3441
      %3466 = vst [vmem:[%s316 + $0x28] sm:$0xf] %v3442
      %3467 = vst [vmem:[%s316 + $0x30] sm:$0xff] %v3443
      %3468 = vst [vmem:[%s316 + $0x38] sm:$0xf] %v3444
      %3469 = vst [vmem:[%s316 + $0x40] sm:$0xff] %v3445
      %3470 = vst [vmem:[%s316 + $0x48] sm:$0xf] %v3446
      %3471 = vst [vmem:[%s316 + $0x50] sm:$0xff] %v3447
      %3472 = vst [vmem:[%s316 + $0x58] sm:$0xf] %v3448
      %3473 = vst [vmem:[%s316 + $0x60] sm:$0xff] %v3449
      %3474 = vst [vmem:[%s316 + $0x68] sm:$0xf] %v3450
      %3475 = vst [vmem:[%s316 + $0x70] sm:$0xff] %v3451
      %3476 = vst [vmem:[%s316 + $0x78] sm:$0xf] %v3452
      %3477 = vst [vmem:[%s316 + $0x80] sm:$0xff] %v3453
      %3478 = vst [vmem:[%s316 + $0x88] sm:$0xf] %v3454
      %3479 = vst [vmem:[%s316 + $0x90] sm:$0xff] %v3455
      %3480 = vst [vmem:[%s316 + $0x98] sm:$0xf] %v3456
      %3481 = vst [vmem:[%s316 + $0xa0] sm:$0xff] %v3457
      %3482 = vst [vmem:[%s316 + $0xa8] sm:$0xf] %v3458
      %3483 = vst [vmem:[%s316 + $0xb0] sm:$0xff] %v3459
      %3484 = vst [vmem:[%s316 + $0xb8] sm:$0xf] %v3460
      %v3485 = vpack.c.bf16 %v3438, %v3437
      %v3486 = vpack.c.bf16 %v3440, %v3439
      %v3487 = vpack.c.bf16 %v3442, %v3441
      %v3488 = vpack.c.bf16 %v3444, %v3443
      %v3489 = vpack.c.bf16 %v3446, %v3445
      %v3490 = vpack.c.bf16 %v3448, %v3447
      %v3491 = vpack.c.bf16 %v3450, %v3449
      %v3492 = vpack.c.bf16 %v3452, %v3451
      %v3493 = vpack.c.bf16 %v3454, %v3453
      %v3494 = vpack.c.bf16 %v3456, %v3455
      %v3495 = vpack.c.bf16 %v3458, %v3457
      %v3496 = vpack.c.bf16 %v3460, %v3459
      %v3509 = vunpack.c.l.b16 %v3485
      %v3510 = vunpack.c.h.b16 %v3485
      %v3511 = vunpack.c.l.b16 %v3486
      %v3512 = vunpack.c.h.b16 %v3486
      %v3513 = vunpack.c.l.b16 %v3487
      %v3514 = vunpack.c.h.b16 %v3487
      %v3515 = vunpack.c.l.b16 %v3488
      %v3516 = vunpack.c.h.b16 %v3488
      %v3517 = vunpack.c.l.b16 %v3489
      %v3518 = vunpack.c.h.b16 %v3489
      %v3519 = vunpack.c.l.b16 %v3490
      %v3520 = vunpack.c.h.b16 %v3490
      %v3521 = vunpack.c.l.b16 %v3491
      %v3522 = vunpack.c.h.b16 %v3491
      %v3523 = vunpack.c.l.b16 %v3492
      %v3524 = vunpack.c.h.b16 %v3492
      %v3525 = vunpack.c.l.b16 %v3493
      %v3526 = vunpack.c.h.b16 %v3493
      %v3527 = vunpack.c.l.b16 %v3494
      %v3528 = vunpack.c.h.b16 %v3494
      %v3529 = vunpack.c.l.b16 %v3495
      %v3530 = vunpack.c.h.b16 %v3495
      %v3531 = vunpack.c.l.b16 %v3496
      %v3532 = vunpack.c.h.b16 %v3496
      %v3533 = vpack.c.b16 %v3509, %v3509
      %v3534 = vpack.c.b16 %v3510, %v3510
      %v3535 = vpack.c.b16 %v3511, %v3511
      %v3536 = vpack.c.b16 %v3512, %v3512
      %v3537 = vpack.c.b16 %v3513, %v3513
      %v3538 = vpack.c.b16 %v3514, %v3514
      %v3539 = vpack.c.b16 %v3515, %v3515
      %v3540 = vpack.c.b16 %v3516, %v3516
      %v3541 = vpack.c.b16 %v3517, %v3517
      %v3542 = vpack.c.b16 %v3518, %v3518
      %v3543 = vpack.c.b16 %v3519, %v3519
      %v3544 = vpack.c.b16 %v3520, %v3520
      %v3545 = vpack.c.b16 %v3521, %v3521
      %v3546 = vpack.c.b16 %v3522, %v3522
      %v3547 = vpack.c.b16 %v3523, %v3523
      %v3548 = vpack.c.b16 %v3524, %v3524
      %v3549 = vpack.c.b16 %v3525, %v3525
      %v3550 = vpack.c.b16 %v3526, %v3526
      %v3551 = vpack.c.b16 %v3527, %v3527
      %v3552 = vpack.c.b16 %v3528, %v3528
      %v3553 = vpack.c.b16 %v3529, %v3529
      %v3554 = vpack.c.b16 %v3530, %v3530
      %v3555 = vpack.c.b16 %v3531, %v3531
      %v3556 = vpack.c.b16 %v3532, %v3532
      %vm3557 = vsmask.f32 4368
      %vm3558 = vmor %vm337, %vm3557
      %v3560 = vshrl.u32 %v3533, 16
      %v3562 = vrot.slane %v3560, 7
      %v3563 = vshll.u32 %v3533, 16
      %v3565 = vor.u32 %v3562, %v3563
      %v3566 = vrot.slane %v3562, 4
      %v3568 = vshrl.u32 %v3534, 16
      %v3570 = vrot.slane %v3568, 7
      %v3571 = vshll.u32 %v3534, 16
      %v3573 = vor.u32 %v3570, %v3571
      %v3574 = vsel %vm3558, %v3566, %v3573
      %v3576 = vshrl.u32 %v3535, 16
      %v3578 = vrot.slane %v3576, 7
      %v3579 = vshll.u32 %v3535, 16
      %v3581 = vor.u32 %v3578, %v3579
      %v3582 = vrot.slane %v3578, 4
      %v3584 = vshrl.u32 %v3536, 16
      %v3586 = vrot.slane %v3584, 7
      %v3587 = vshll.u32 %v3536, 16
      %v3589 = vor.u32 %v3586, %v3587
      %v3590 = vsel %vm3558, %v3582, %v3589
      %v3592 = vshrl.u32 %v3537, 16
      %v3594 = vrot.slane %v3592, 7
      %v3595 = vshll.u32 %v3537, 16
      %v3597 = vor.u32 %v3594, %v3595
      %v3598 = vrot.slane %v3594, 4
      %v3600 = vshrl.u32 %v3538, 16
      %v3602 = vrot.slane %v3600, 7
      %v3603 = vshll.u32 %v3538, 16
      %v3605 = vor.u32 %v3602, %v3603
      %v3606 = vsel %vm3558, %v3598, %v3605
      %v3608 = vshrl.u32 %v3539, 16
      %v3610 = vrot.slane %v3608, 7
      %v3611 = vshll.u32 %v3539, 16
      %v3613 = vor.u32 %v3610, %v3611
      %v3614 = vrot.slane %v3610, 4
      %v3616 = vshrl.u32 %v3540, 16
      %v3618 = vrot.slane %v3616, 7
      %v3619 = vshll.u32 %v3540, 16
      %v3621 = vor.u32 %v3618, %v3619
      %v3622 = vsel %vm3558, %v3614, %v3621
      %v3624 = vshrl.u32 %v3541, 16
      %v3626 = vrot.slane %v3624, 7
      %v3627 = vshll.u32 %v3541, 16
      %v3629 = vor.u32 %v3626, %v3627
      %v3630 = vrot.slane %v3626, 4
      %v3632 = vshrl.u32 %v3542, 16
      %v3634 = vrot.slane %v3632, 7
      %v3635 = vshll.u32 %v3542, 16
      %v3637 = vor.u32 %v3634, %v3635
      %v3638 = vsel %vm3558, %v3630, %v3637
      %v3640 = vshrl.u32 %v3543, 16
      %v3642 = vrot.slane %v3640, 7
      %v3643 = vshll.u32 %v3543, 16
      %v3645 = vor.u32 %v3642, %v3643
      %v3646 = vrot.slane %v3642, 4
      %v3648 = vshrl.u32 %v3544, 16
      %v3650 = vrot.slane %v3648, 7
      %v3651 = vshll.u32 %v3544, 16
      %v3653 = vor.u32 %v3650, %v3651
      %v3654 = vsel %vm3558, %v3646, %v3653
      %v3656 = vshrl.u32 %v3545, 16
      %v3658 = vrot.slane %v3656, 7
      %v3659 = vshll.u32 %v3545, 16
      %v3661 = vor.u32 %v3658, %v3659
      %v3662 = vrot.slane %v3658, 4
      %v3664 = vshrl.u32 %v3546, 16
      %v3666 = vrot.slane %v3664, 7
      %v3667 = vshll.u32 %v3546, 16
      %v3669 = vor.u32 %v3666, %v3667
      %v3670 = vsel %vm3558, %v3662, %v3669
      %v3672 = vshrl.u32 %v3547, 16
      %v3674 = vrot.slane %v3672, 7
      %v3675 = vshll.u32 %v3547, 16
      %v3677 = vor.u32 %v3674, %v3675
      %v3678 = vrot.slane %v3674, 4
      %v3680 = vshrl.u32 %v3548, 16
      %v3682 = vrot.slane %v3680, 7
      %v3683 = vshll.u32 %v3548, 16
      %v3685 = vor.u32 %v3682, %v3683
      %v3686 = vsel %vm3558, %v3678, %v3685
      %v3688 = vshrl.u32 %v3549, 16
      %v3690 = vrot.slane %v3688, 7
      %v3691 = vshll.u32 %v3549, 16
      %v3693 = vor.u32 %v3690, %v3691
      %v3694 = vrot.slane %v3690, 4
      %v3696 = vshrl.u32 %v3550, 16
      %v3698 = vrot.slane %v3696, 7
      %v3699 = vshll.u32 %v3550, 16
      %v3701 = vor.u32 %v3698, %v3699
      %v3702 = vsel %vm3558, %v3694, %v3701
      %v3704 = vshrl.u32 %v3551, 16
      %v3706 = vrot.slane %v3704, 7
      %v3707 = vshll.u32 %v3551, 16
      %v3709 = vor.u32 %v3706, %v3707
      %v3710 = vrot.slane %v3706, 4
      %v3712 = vshrl.u32 %v3552, 16
      %v3714 = vrot.slane %v3712, 7
      %v3715 = vshll.u32 %v3552, 16
      %v3717 = vor.u32 %v3714, %v3715
      %v3718 = vsel %vm3558, %v3710, %v3717
      %v3720 = vshrl.u32 %v3553, 16
      %v3722 = vrot.slane %v3720, 7
      %v3723 = vshll.u32 %v3553, 16
      %v3725 = vor.u32 %v3722, %v3723
      %v3726 = vrot.slane %v3722, 4
      %v3728 = vshrl.u32 %v3554, 16
      %v3730 = vrot.slane %v3728, 7
      %v3731 = vshll.u32 %v3554, 16
      %v3733 = vor.u32 %v3730, %v3731
      %v3734 = vsel %vm3558, %v3726, %v3733
      %v3736 = vshrl.u32 %v3555, 16
      %v3738 = vrot.slane %v3736, 7
      %v3739 = vshll.u32 %v3555, 16
      %v3741 = vor.u32 %v3738, %v3739
      %v3742 = vrot.slane %v3738, 4
      %v3744 = vshrl.u32 %v3556, 16
      %v3746 = vrot.slane %v3744, 7
      %v3747 = vshll.u32 %v3556, 16
      %v3749 = vor.u32 %v3746, %v3747
      %v3750 = vsel %vm3558, %v3742, %v3749
      %s3775 = scalar_lea.vmem [#allocation2], 12
      %vm3776 = vcmask 1043456
      %vm3777 = vsmask.f32 7938
      %vm3778 = vmand %vm3776, %vm3777
      %v3779 = vld [vmem:[%s3775] sm:$0xf]
      %v3780 = vsel %vm3778, %v3565, %v3779
      %3781 = vst [vmem:[%s3775] sm:$0xf] %v3780
      %vm3782 = vcmask 1042432
      %vm3783 = vsmask.f32 2304
      %vm3784 = vmand %vm3782, %vm3783
      %v3785 = vld [vmem:[%s3775 + $0x4] sm:$0x7]
      %v3786 = vsel %vm3784, %v3574, %v3785
      %3787 = vst [vmem:[%s3775 + $0x4] sm:$0x7] %v3786
      %v3788 = vld [vmem:[%s3775 + $0xc] sm:$0xf]
      %v3789 = vsel %vm3778, %v3581, %v3788
      %3790 = vst [vmem:[%s3775 + $0xc] sm:$0xf] %v3789
      %v3791 = vld [vmem:[%s3775 + $0x10] sm:$0x7]
      %v3792 = vsel %vm3784, %v3590, %v3791
      %3793 = vst [vmem:[%s3775 + $0x10] sm:$0x7] %v3792
      %v3794 = vld [vmem:[%s3775 + $0x18] sm:$0xf]
      %v3795 = vsel %vm3778, %v3597, %v3794
      %3796 = vst [vmem:[%s3775 + $0x18] sm:$0xf] %v3795
      %v3797 = vld [vmem:[%s3775 + $0x1c] sm:$0x7]
      %v3798 = vsel %vm3784, %v3606, %v3797
      %3799 = vst [vmem:[%s3775 + $0x1c] sm:$0x7] %v3798
      %v3800 = vld [vmem:[%s3775 + $0x24] sm:$0xf]
      %v3801 = vsel %vm3778, %v3613, %v3800
      %3802 = vst [vmem:[%s3775 + $0x24] sm:$0xf] %v3801
      %v3803 = vld [vmem:[%s3775 + $0x28] sm:$0x7]
      %v3804 = vsel %vm3784, %v3622, %v3803
      %3805 = vst [vmem:[%s3775 + $0x28] sm:$0x7] %v3804
      %v3806 = vld [vmem:[%s3775 + $0x30] sm:$0xf]
      %v3807 = vsel %vm3778, %v3629, %v3806
      %3808 = vst [vmem:[%s3775 + $0x30] sm:$0xf] %v3807
      %v3809 = vld [vmem:[%s3775 + $0x34] sm:$0x7]
      %v3810 = vsel %vm3784, %v3638, %v3809
      %3811 = vst [vmem:[%s3775 + $0x34] sm:$0x7] %v3810
      %v3812 = vld [vmem:[%s3775 + $0x3c] sm:$0xf]
      %v3813 = vsel %vm3778, %v3645, %v3812
      %3814 = vst [vmem:[%s3775 + $0x3c] sm:$0xf] %v3813
      %v3815 = vld [vmem:[%s3775 + $0x40] sm:$0x7]
      %v3816 = vsel %vm3784, %v3654, %v3815
      %3817 = vst [vmem:[%s3775 + $0x40] sm:$0x7] %v3816
      %v3818 = vld [vmem:[%s3775 + $0x48] sm:$0xf]
      %v3819 = vsel %vm3778, %v3661, %v3818
      %3820 = vst [vmem:[%s3775 + $0x48] sm:$0xf] %v3819
      %v3821 = vld [vmem:[%s3775 + $0x4c] sm:$0x7]
      %v3822 = vsel %vm3784, %v3670, %v3821
      %3823 = vst [vmem:[%s3775 + $0x4c] sm:$0x7] %v3822
      %v3824 = vld [vmem:[%s3775 + $0x54] sm:$0xf]
      %v3825 = vsel %vm3778, %v3677, %v3824
      %3826 = vst [vmem:[%s3775 + $0x54] sm:$0xf] %v3825
      %v3827 = vld [vmem:[%s3775 + $0x58] sm:$0x7]
      %v3828 = vsel %vm3784, %v3686, %v3827
      %3829 = vst [vmem:[%s3775 + $0x58] sm:$0x7] %v3828
      %v3830 = vld [vmem:[%s3775 + $0x60] sm:$0xf]
      %v3831 = vsel %vm3778, %v3693, %v3830
      %3832 = vst [vmem:[%s3775 + $0x60] sm:$0xf] %v3831
      %v3833 = vld [vmem:[%s3775 + $0x64] sm:$0x7]
      %v3834 = vsel %vm3784, %v3702, %v3833
      %3835 = vst [vmem:[%s3775 + $0x64] sm:$0x7] %v3834
      %v3836 = vld [vmem:[%s3775 + $0x6c] sm:$0xf]
      %v3837 = vsel %vm3778, %v3709, %v3836
      %3838 = vst [vmem:[%s3775 + $0x6c] sm:$0xf] %v3837
      %v3839 = vld [vmem:[%s3775 + $0x70] sm:$0x7]
      %v3840 = vsel %vm3784, %v3718, %v3839
      %3841 = vst [vmem:[%s3775 + $0x70] sm:$0x7] %v3840
      %v3842 = vld [vmem:[%s3775 + $0x78] sm:$0xf]
      %v3843 = vsel %vm3778, %v3725, %v3842
      %3844 = vst [vmem:[%s3775 + $0x78] sm:$0xf] %v3843
      %v3845 = vld [vmem:[%s3775 + $0x7c] sm:$0x7]
      %v3846 = vsel %vm3784, %v3734, %v3845
      %3847 = vst [vmem:[%s3775 + $0x7c] sm:$0x7] %v3846
      %v3848 = vld [vmem:[%s3775 + $0x84] sm:$0xf]
      %v3849 = vsel %vm3778, %v3741, %v3848
      %3850 = vst [vmem:[%s3775 + $0x84] sm:$0xf] %v3849
      %v3851 = vld [vmem:[%s3775 + $0x88] sm:$0x7]
      %v3852 = vsel %vm3784, %v3750, %v3851
      %3853 = vst [vmem:[%s3775 + $0x88] sm:$0x7] %v3852
      %v3854 = vld [vmem:[#allocation2] sm:$0xf]
      %v3855 = vld [vmem:[#allocation2 + $0x4] sm:$0xf]
      %v3856 = vld [vmem:[#allocation2 + $0x8] sm:$0xf]
      %v3857 = vld [vmem:[#allocation2 + $0xc] sm:$0xf]
      %v3858 = vld [vmem:[#allocation2 + $0x10] sm:$0xf]
      %v3859 = vld [vmem:[#allocation2 + $0x14] sm:$0xf]
      %v3860 = vld [vmem:[#allocation2 + $0x18] sm:$0xf]
      %v3861 = vld [vmem:[#allocation2 + $0x1c] sm:$0xf]
      %v3862 = vld [vmem:[#allocation2 + $0x20] sm:$0xf]
      %v3863 = vld [vmem:[#allocation2 + $0x24] sm:$0xf]
      %v3864 = vld [vmem:[#allocation2 + $0x28] sm:$0xf]
      %v3865 = vld [vmem:[#allocation2 + $0x2c] sm:$0xf]
      %v3866 = vld [vmem:[#allocation2 + $0x30] sm:$0xf]
      %v3867 = vld [vmem:[#allocation2 + $0x34] sm:$0xf]
      %v3868 = vld [vmem:[#allocation2 + $0x38] sm:$0xf]
      %v3869 = vld [vmem:[#allocation2 + $0x3c] sm:$0xf]
      %v3870 = vld [vmem:[#allocation2 + $0x40] sm:$0xf]
      %v3871 = vld [vmem:[#allocation2 + $0x44] sm:$0xf]
      %v3872 = vld [vmem:[#allocation2 + $0x48] sm:$0xf]
      %v3873 = vld [vmem:[#allocation2 + $0x4c] sm:$0xf]
      %v3874 = vld [vmem:[#allocation2 + $0x50] sm:$0xf]
      %v3875 = vld [vmem:[#allocation2 + $0x54] sm:$0xf]
      %v3876 = vld [vmem:[#allocation2 + $0x58] sm:$0xf]
      %v3877 = vld [vmem:[#allocation2 + $0x5c] sm:$0xf]
      %v3878 = vld [vmem:[#allocation2 + $0x60] sm:$0xf]
      %v3879 = vld [vmem:[#allocation2 + $0x64] sm:$0xf]
      %v3880 = vld [vmem:[#allocation2 + $0x68] sm:$0xf]
      %v3881 = vld [vmem:[#allocation2 + $0x6c] sm:$0xf]
      %v3882 = vld [vmem:[#allocation2 + $0x70] sm:$0xf]
      %v3883 = vld [vmem:[#allocation2 + $0x74] sm:$0xf]
      %v3884 = vld [vmem:[#allocation2 + $0x78] sm:$0xf]
      %v3885 = vld [vmem:[#allocation2 + $0x7c] sm:$0xf]
      %v3886 = vld [vmem:[#allocation2 + $0x80] sm:$0xf]
      %v3887 = vld [vmem:[#allocation2 + $0x84] sm:$0xf]
      %v3888 = vld [vmem:[#allocation2 + $0x88] sm:$0xf]
      %v3889 = vld [vmem:[#allocation2 + $0x8c] sm:$0xf]
      %v3890 = vld [vmem:[#allocation2 + $0x90] sm:$0xf]
      %v3891 = vld [vmem:[#allocation2 + $0x94] sm:$0xf]
      %v3892 = vld [vmem:[#allocation2 + $0x98] sm:$0xf]
      %v3893 = vld [vmem:[#allocation2 + $0x9c] sm:$0xf]
      %v3894 = vld [vmem:[#allocation2 + $0xa0] sm:$0xf]
      %v3895 = vld [vmem:[#allocation2 + $0xa4] sm:$0xf]
      %v3924 = vunpack.c.l.b16 %v3854
      %v3925 = vunpack.c.l.b16 %v3855
      %v3926 = vunpack.c.l.b16 %v3857
      %v3927 = vunpack.c.l.b16 %v3858
      %v3928 = vunpack.c.l.b16 %v3860
      %v3929 = vunpack.c.l.b16 %v3861
      %v3930 = vunpack.c.l.b16 %v3863
      %v3931 = vunpack.c.l.b16 %v3864
      %v3932 = vunpack.c.l.b16 %v3866
      %v3933 = vunpack.c.l.b16 %v3867
      %v3934 = vunpack.c.l.b16 %v3869
      %v3935 = vunpack.c.l.b16 %v3870
      %v3936 = vunpack.c.l.b16 %v3872
      %v3937 = vunpack.c.l.b16 %v3873
      %v3938 = vunpack.c.l.b16 %v3875
      %v3939 = vunpack.c.l.b16 %v3876
      %v3940 = vunpack.c.l.b16 %v3878
      %v3941 = vunpack.c.l.b16 %v3879
      %v3942 = vunpack.c.l.b16 %v3881
      %v3943 = vunpack.c.l.b16 %v3882
      %v3944 = vunpack.c.l.b16 %v3884
      %v3945 = vunpack.c.l.b16 %v3885
      %v3946 = vunpack.c.l.b16 %v3887
      %v3947 = vunpack.c.l.b16 %v3888
      %v3948 = vunpack.c.l.b16 %v3890
      %v3949 = vunpack.c.l.b16 %v3891
      %v3950 = vunpack.c.l.b16 %v3893
      %v3951 = vunpack.c.l.b16 %v3894
      %v3952 = vpack.c.b16 %v3925, %v3924
      %v3953 = vpack.c.b16 %v3927, %v3926
      %v3954 = vpack.c.b16 %v3929, %v3928
      %v3955 = vpack.c.b16 %v3931, %v3930
      %v3956 = vpack.c.b16 %v3933, %v3932
      %v3957 = vpack.c.b16 %v3935, %v3934
      %v3958 = vpack.c.b16 %v3937, %v3936
      %v3959 = vpack.c.b16 %v3939, %v3938
      %v3960 = vpack.c.b16 %v3941, %v3940
      %v3961 = vpack.c.b16 %v3943, %v3942
      %v3962 = vpack.c.b16 %v3945, %v3944
      %v3963 = vpack.c.b16 %v3947, %v3946
      %v3964 = vpack.c.b16 %v3949, %v3948
      %v3965 = vpack.c.b16 %v3951, %v3950
      %v3994 = vunpack.c.l.b16 %v3856
      %v3995 = vunpack.c.l.b16 %v3859
      %v3996 = vunpack.c.l.b16 %v3862
      %v3997 = vunpack.c.l.b16 %v3865
      %v3998 = vunpack.c.l.b16 %v3868
      %v3999 = vunpack.c.l.b16 %v3871
      %v4000 = vunpack.c.l.b16 %v3874
      %v4001 = vunpack.c.l.b16 %v3877
      %v4002 = vunpack.c.l.b16 %v3880
      %v4003 = vunpack.c.l.b16 %v3883
      %v4004 = vunpack.c.l.b16 %v3886
      %v4005 = vunpack.c.l.b16 %v3889
      %v4006 = vunpack.c.l.b16 %v3892
      %v4007 = vunpack.c.l.b16 %v3895
      %v4008 = vpack.c.b16 %v3994, %v3994
      %v4009 = vpack.c.b16 %v3995, %v3995
      %v4010 = vpack.c.b16 %v3996, %v3996
      %v4011 = vpack.c.b16 %v3997, %v3997
      %v4012 = vpack.c.b16 %v3998, %v3998
      %v4013 = vpack.c.b16 %v3999, %v3999
      %v4014 = vpack.c.b16 %v4000, %v4000
      %v4015 = vpack.c.b16 %v4001, %v4001
      %v4016 = vpack.c.b16 %v4002, %v4002
      %v4017 = vpack.c.b16 %v4003, %v4003
      %v4018 = vpack.c.b16 %v4004, %v4004
      %v4019 = vpack.c.b16 %v4005, %v4005
      %v4020 = vpack.c.b16 %v4006, %v4006
      %v4021 = vpack.c.b16 %v4007, %v4007
      %vm4022 = vsmask.f32 7424
      %v4024 = vshrl.u32 %v3952, 16
      %v4026 = vshll.u32 %v3952, 16
      %v4028 = vrot.slane %v4026, 1
      %v4029 = vor.u32 %v4024, %v4028
      %v4031 = vshll.u32 %v4008, 16
      %v4033 = vrot.slane %v4031, 1
      %v4034 = vsel %vm4022, %v4029, %v4033
      %v4036 = vshrl.u32 %v3953, 16
      %v4038 = vshll.u32 %v3953, 16
      %v4040 = vrot.slane %v4038, 1
      %v4041 = vor.u32 %v4036, %v4040
      %v4043 = vshll.u32 %v4009, 16
      %v4045 = vrot.slane %v4043, 1
      %v4046 = vsel %vm4022, %v4041, %v4045
      %v4048 = vshrl.u32 %v3954, 16
      %v4050 = vshll.u32 %v3954, 16
      %v4052 = vrot.slane %v4050, 1
      %v4053 = vor.u32 %v4048, %v4052
      %v4055 = vshll.u32 %v4010, 16
      %v4057 = vrot.slane %v4055, 1
      %v4058 = vsel %vm4022, %v4053, %v4057
      %v4060 = vshrl.u32 %v3955, 16
      %v4062 = vshll.u32 %v3955, 16
      %v4064 = vrot.slane %v4062, 1
      %v4065 = vor.u32 %v4060, %v4064
      %v4067 = vshll.u32 %v4011, 16
      %v4069 = vrot.slane %v4067, 1
      %v4070 = vsel %vm4022, %v4065, %v4069
      %v4072 = vshrl.u32 %v3956, 16
      %v4074 = vshll.u32 %v3956, 16
      %v4076 = vrot.slane %v4074, 1
      %v4077 = vor.u32 %v4072, %v4076
      %v4079 = vshll.u32 %v4012, 16
      %v4081 = vrot.slane %v4079, 1
      %v4082 = vsel %vm4022, %v4077, %v4081
      %v4084 = vshrl.u32 %v3957, 16
      %v4086 = vshll.u32 %v3957, 16
      %v4088 = vrot.slane %v4086, 1
      %v4089 = vor.u32 %v4084, %v4088
      %v4091 = vshll.u32 %v4013, 16
      %v4093 = vrot.slane %v4091, 1
      %v4094 = vsel %vm4022, %v4089, %v4093
      %v4096 = vshrl.u32 %v3958, 16
      %v4098 = vshll.u32 %v3958, 16
      %v4100 = vrot.slane %v4098, 1
      %v4101 = vor.u32 %v4096, %v4100
      %v4103 = vshll.u32 %v4014, 16
      %v4105 = vrot.slane %v4103, 1
      %v4106 = vsel %vm4022, %v4101, %v4105
      %v4108 = vshrl.u32 %v3959, 16
      %v4110 = vshll.u32 %v3959, 16
      %v4112 = vrot.slane %v4110, 1
      %v4113 = vor.u32 %v4108, %v4112
      %v4115 = vshll.u32 %v4015, 16
      %v4117 = vrot.slane %v4115, 1
      %v4118 = vsel %vm4022, %v4113, %v4117
      %v4120 = vshrl.u32 %v3960, 16
      %v4122 = vshll.u32 %v3960, 16
      %v4124 = vrot.slane %v4122, 1
      %v4125 = vor.u32 %v4120, %v4124
      %v4127 = vshll.u32 %v4016, 16
      %v4129 = vrot.slane %v4127, 1
      %v4130 = vsel %vm4022, %v4125, %v4129
      %v4132 = vshrl.u32 %v3961, 16
      %v4134 = vshll.u32 %v3961, 16
      %v4136 = vrot.slane %v4134, 1
      %v4137 = vor.u32 %v4132, %v4136
      %v4139 = vshll.u32 %v4017, 16
      %v4141 = vrot.slane %v4139, 1
      %v4142 = vsel %vm4022, %v4137, %v4141
      %v4144 = vshrl.u32 %v3962, 16
      %v4146 = vshll.u32 %v3962, 16
      %v4148 = vrot.slane %v4146, 1
      %v4149 = vor.u32 %v4144, %v4148
      %v4151 = vshll.u32 %v4018, 16
      %v4153 = vrot.slane %v4151, 1
      %v4154 = vsel %vm4022, %v4149, %v4153
      %v4156 = vshrl.u32 %v3963, 16
      %v4158 = vshll.u32 %v3963, 16
      %v4160 = vrot.slane %v4158, 1
      %v4161 = vor.u32 %v4156, %v4160
      %v4163 = vshll.u32 %v4019, 16
      %v4165 = vrot.slane %v4163, 1
      %v4166 = vsel %vm4022, %v4161, %v4165
      %v4168 = vshrl.u32 %v3964, 16
      %v4170 = vshll.u32 %v3964, 16
      %v4172 = vrot.slane %v4170, 1
      %v4173 = vor.u32 %v4168, %v4172
      %v4175 = vshll.u32 %v4020, 16
      %v4177 = vrot.slane %v4175, 1
      %v4178 = vsel %vm4022, %v4173, %v4177
      %v4180 = vshrl.u32 %v3965, 16
      %v4182 = vshll.u32 %v3965, 16
      %v4184 = vrot.slane %v4182, 1
      %v4185 = vor.u32 %v4180, %v4184
      %v4187 = vshll.u32 %v4021, 16
      %v4189 = vrot.slane %v4187, 1
      %v4190 = vsel %vm4022, %v4185, %v4189
      %vm4205 = vcmask 1046528
      %v4206 = vrot.slane %v3952, 1
      %v4207 = vrot.slane %v4008, 1
      %v4208 = vsel %vm4205, %v4206, %v4207
      %v4209 = vrot.slane %v3953, 1
      %v4210 = vrot.slane %v4009, 1
      %v4211 = vsel %vm4205, %v4209, %v4210
      %v4212 = vrot.slane %v3954, 1
      %v4213 = vrot.slane %v4010, 1
      %v4214 = vsel %vm4205, %v4212, %v4213
      %v4215 = vrot.slane %v3955, 1
      %v4216 = vrot.slane %v4011, 1
      %v4217 = vsel %vm4205, %v4215, %v4216
      %v4218 = vrot.slane %v3956, 1
      %v4219 = vrot.slane %v4012, 1
      %v4220 = vsel %vm4205, %v4218, %v4219
      %v4221 = vrot.slane %v3957, 1
      %v4222 = vrot.slane %v4013, 1
      %v4223 = vsel %vm4205, %v4221, %v4222
      %v4224 = vrot.slane %v3958, 1
      %v4225 = vrot.slane %v4014, 1
      %v4226 = vsel %vm4205, %v4224, %v4225
      %v4227 = vrot.slane %v3959, 1
      %v4228 = vrot.slane %v4015, 1
      %v4229 = vsel %vm4205, %v4227, %v4228
      %v4230 = vrot.slane %v3960, 1
      %v4231 = vrot.slane %v4016, 1
      %v4232 = vsel %vm4205, %v4230, %v4231
      %v4233 = vrot.slane %v3961, 1
      %v4234 = vrot.slane %v4017, 1
      %v4235 = vsel %vm4205, %v4233, %v4234
      %v4236 = vrot.slane %v3962, 1
      %v4237 = vrot.slane %v4018, 1
      %v4238 = vsel %vm4205, %v4236, %v4237
      %v4239 = vrot.slane %v3963, 1
      %v4240 = vrot.slane %v4019, 1
      %v4241 = vsel %vm4205, %v4239, %v4240
      %v4242 = vrot.slane %v3964, 1
      %v4243 = vrot.slane %v4020, 1
      %v4244 = vsel %vm4205, %v4242, %v4243
      %v4245 = vrot.slane %v3965, 1
      %v4246 = vrot.slane %v4021, 1
      %v4247 = vsel %vm4205, %v4245, %v4246
      %v4262 = vld [vmem:[%s2] sm:$0xf]
      %v4263 = vld [vmem:[%s2 + $0x4] sm:$0xf]
      %v4264 = vld [vmem:[%s2 + $0x8] sm:$0xf]
      %v4265 = vld [vmem:[%s2 + $0xc] sm:$0xf]
      %v4266 = vld [vmem:[%s2 + $0x10] sm:$0xf]
      %v4267 = vld [vmem:[%s2 + $0x14] sm:$0xf]
      %v4268 = vld [vmem:[%s2 + $0x18] sm:$0xf]
      %v4269 = vld [vmem:[%s2 + $0x1c] sm:$0xf]
      %v4270 = vld [vmem:[%s2 + $0x20] sm:$0xf]
      %v4271 = vld [vmem:[%s2 + $0x24] sm:$0xf]
      %v4272 = vld [vmem:[%s2 + $0x28] sm:$0xf]
      %v4273 = vld [vmem:[%s2 + $0x2c] sm:$0xf]
      %v4274 = vld [vmem:[%s2 + $0x30] sm:$0xf]
      %v4275 = vld [vmem:[%s2 + $0x34] sm:$0xf]
      %v4276 = vld [vmem:[%s2 + $0x38] sm:$0xf]
      %v4277 = vld [vmem:[%s2 + $0x3c] sm:$0xf]
      %v4278 = vld [vmem:[%s2 + $0x40] sm:$0xf]
      %v4279 = vld [vmem:[%s2 + $0x44] sm:$0xf]
      %v4280 = vld [vmem:[%s2 + $0x48] sm:$0xf]
      %v4281 = vld [vmem:[%s2 + $0x4c] sm:$0xf]
      %v4282 = vld [vmem:[%s2 + $0x50] sm:$0xf]
      %v4283 = vld [vmem:[%s2 + $0x54] sm:$0xf]
      %v4284 = vld [vmem:[%s2 + $0x58] sm:$0xf]
      %v4285 = vld [vmem:[%s2 + $0x5c] sm:$0xf]
      %v4286 = vld [vmem:[%s2 + $0x60] sm:$0xf]
      %v4287 = vld [vmem:[%s2 + $0x64] sm:$0xf]
      %v4288 = vld [vmem:[%s2 + $0x68] sm:$0xf]
      %v4289 = vld [vmem:[%s2 + $0x6c] sm:$0xf]
      %v4290 = vld [vmem:[%s2 + $0x70] sm:$0xf]
      %v4291 = vld [vmem:[%s2 + $0x74] sm:$0xf]
      %v4292 = vld [vmem:[%s2 + $0x78] sm:$0xf]
      %v4293 = vld [vmem:[%s2 + $0x7c] sm:$0xf]
      %v4294 = vld [vmem:[%s2 + $0x80] sm:$0xf]
      %v4295 = vld [vmem:[%s2 + $0x84] sm:$0xf]
      %v4296 = vld [vmem:[%s2 + $0x88] sm:$0xf]
      %v4297 = vld [vmem:[%s2 + $0x8c] sm:$0xf]
      %v4298 = vld [vmem:[%s2 + $0x90] sm:$0xf]
      %v4299 = vld [vmem:[%s2 + $0x94] sm:$0xf]
      %v4300 = vld [vmem:[%s2 + $0x98] sm:$0xf]
      %v4301 = vld [vmem:[%s2 + $0x9c] sm:$0xf]
      %v4302 = vld [vmem:[%s2 + $0xa0] sm:$0xf]
      %v4303 = vld [vmem:[%s2 + $0xa4] sm:$0xf]
      %v4304 = vld [vmem:[%s2 + $0xa8] sm:$0xf]
      %v4305 = vld [vmem:[%s2 + $0xac] sm:$0xf]
      %v4306 = vld [vmem:[%s2 + $0xb0] sm:$0xf]
      %v4307 = vld [vmem:[%s2 + $0xb4] sm:$0xf]
      %v4308 = vld [vmem:[%s2 + $0xb8] sm:$0xf]
      %v4309 = vld [vmem:[%s2 + $0xbc] sm:$0xf]
      %s4310 = scalar_lea.vmem %s2, 192
      %v4311 = vld [vmem:[%s4310] sm:$0xf]
      %v4312 = vld [vmem:[%s4310 + $0x4] sm:$0xf]
      %v4313 = vld [vmem:[%s4310 + $0x8] sm:$0xf]
      %v4314 = vld [vmem:[%s4310 + $0xc] sm:$0xf]
      %v4315 = vld [vmem:[%s4310 + $0x10] sm:$0xf]
      %v4316 = vld [vmem:[%s4310 + $0x14] sm:$0xf]
      %v4317 = vld [vmem:[%s4310 + $0x18] sm:$0xf]
      %v4318 = vld [vmem:[%s4310 + $0x1c] sm:$0xf]
      %v4319 = vld [vmem:[%s4310 + $0x20] sm:$0xf]
      %v4320 = vld [vmem:[%s4310 + $0x24] sm:$0xf]
      %v4321 = vld [vmem:[%s4310 + $0x28] sm:$0xf]
      %v4322 = vld [vmem:[%s4310 + $0x2c] sm:$0xf]
      %v4323 = vld [vmem:[%s4310 + $0x30] sm:$0xf]
      %v4324 = vld [vmem:[%s4310 + $0x34] sm:$0xf]
      %v4325 = vld [vmem:[%s4310 + $0x38] sm:$0xf]
      %v4326 = vld [vmem:[%s4310 + $0x3c] sm:$0xf]
      %v4327 = vld [vmem:[%s4310 + $0x40] sm:$0xf]
      %v4328 = vld [vmem:[%s4310 + $0x44] sm:$0xf]
      %v4329 = vld [vmem:[%s4310 + $0x48] sm:$0xf]
      %v4330 = vld [vmem:[%s4310 + $0x4c] sm:$0xf]
      %v4331 = vld [vmem:[%s4310 + $0x50] sm:$0xf]
      %v4332 = vld [vmem:[%s4310 + $0x54] sm:$0xf]
      %v4333 = vld [vmem:[%s4310 + $0x58] sm:$0xf]
      %v4334 = vld [vmem:[%s4310 + $0x5c] sm:$0xf]
      %v4335 = vld [vmem:[%s4310 + $0x60] sm:$0xf]
      %v4336 = vld [vmem:[%s4310 + $0x64] sm:$0xf]
      %v4337 = vld [vmem:[%s4310 + $0x68] sm:$0xf]
      %v4338 = vld [vmem:[%s4310 + $0x6c] sm:$0xf]
      %v4339 = vld [vmem:[%s4310 + $0x70] sm:$0xf]
      %v4340 = vld [vmem:[%s4310 + $0x74] sm:$0xf]
      %v4341 = vld [vmem:[%s4310 + $0x78] sm:$0xf]
      %v4342 = vld [vmem:[%s4310 + $0x7c] sm:$0xf]
      %v4343 = vld [vmem:[%s4310 + $0x80] sm:$0xf]
      %v4344 = vld [vmem:[%s4310 + $0x84] sm:$0xf]
      %v4345 = vld [vmem:[%s4310 + $0x88] sm:$0xf]
      %v4346 = vld [vmem:[%s4310 + $0x8c] sm:$0xf]
      %v4347 = vld [vmem:[%s4310 + $0x90] sm:$0xf]
      %v4348 = vld [vmem:[%s4310 + $0x94] sm:$0xf]
      %v4349 = vld [vmem:[%s4310 + $0x98] sm:$0xf]
      %v4350 = vld [vmem:[%s4310 + $0x9c] sm:$0xf]
      %v4351 = vld [vmem:[%s4310 + $0xa0] sm:$0xf]
      %v4352 = vld [vmem:[%s4310 + $0xa4] sm:$0xf]
      %v4353 = vld [vmem:[%s4310 + $0xa8] sm:$0xf]
      %v4354 = vld [vmem:[%s4310 + $0xac] sm:$0xf]
      %v4355 = vld [vmem:[%s4310 + $0xb0] sm:$0xf]
      %v4356 = vld [vmem:[%s4310 + $0xb4] sm:$0xf]
      %v4357 = vld [vmem:[%s4310 + $0xb8] sm:$0xf]
      %v4358 = vld [vmem:[%s4310 + $0xbc] sm:$0xf]
      %v4407 = vunpack.c.l.b16 %v4311
      %v4408 = vunpack.c.l.b16 %v4312
      %v4409 = vunpack.c.l.b16 %v4313
      %v4410 = vunpack.c.l.b16 %v4314
      %v4411 = vunpack.c.l.b16 %v4315
      %v4412 = vunpack.c.l.b16 %v4316
      %v4413 = vunpack.c.l.b16 %v4317
      %v4414 = vunpack.c.l.b16 %v4318
      %v4415 = vunpack.c.l.b16 %v4319
      %v4416 = vunpack.c.l.b16 %v4320
      %v4417 = vunpack.c.l.b16 %v4321
      %v4418 = vunpack.c.l.b16 %v4322
      %v4419 = vunpack.c.l.b16 %v4323
      %v4420 = vunpack.c.l.b16 %v4324
      %v4421 = vunpack.c.l.b16 %v4325
      %v4422 = vunpack.c.l.b16 %v4326
      %v4423 = vunpack.c.l.b16 %v4327
      %v4424 = vunpack.c.l.b16 %v4328
      %v4425 = vunpack.c.l.b16 %v4329
      %v4426 = vunpack.c.l.b16 %v4330
      %v4427 = vunpack.c.l.b16 %v4331
      %v4428 = vunpack.c.l.b16 %v4332
      %v4429 = vunpack.c.l.b16 %v4333
      %v4430 = vunpack.c.l.b16 %v4334
      %v4431 = vunpack.c.l.b16 %v4335
      %v4432 = vunpack.c.l.b16 %v4336
      %v4433 = vunpack.c.l.b16 %v4337
      %v4434 = vunpack.c.l.b16 %v4338
      %v4435 = vunpack.c.l.b16 %v4339
      %v4436 = vunpack.c.l.b16 %v4340
      %v4437 = vunpack.c.l.b16 %v4341
      %v4438 = vunpack.c.l.b16 %v4342
      %v4439 = vunpack.c.l.b16 %v4343
      %v4440 = vunpack.c.l.b16 %v4344
      %v4441 = vunpack.c.l.b16 %v4345
      %v4442 = vunpack.c.l.b16 %v4346
      %v4443 = vunpack.c.l.b16 %v4347
      %v4444 = vunpack.c.l.b16 %v4348
      %v4445 = vunpack.c.l.b16 %v4349
      %v4446 = vunpack.c.l.b16 %v4350
      %v4447 = vunpack.c.l.b16 %v4351
      %v4448 = vunpack.c.l.b16 %v4352
      %v4449 = vunpack.c.l.b16 %v4353
      %v4450 = vunpack.c.l.b16 %v4354
      %v4451 = vunpack.c.l.b16 %v4355
      %v4452 = vunpack.c.l.b16 %v4356
      %v4453 = vunpack.c.l.b16 %v4357
      %v4454 = vunpack.c.l.b16 %v4358
      %v4455 = vpack.c.b16 %v4408, %v4407
      %v4456 = vpack.c.b16 %v4410, %v4409
      %v4457 = vpack.c.b16 %v4412, %v4411
      %v4458 = vpack.c.b16 %v4414, %v4413
      %v4459 = vpack.c.b16 %v4416, %v4415
      %v4460 = vpack.c.b16 %v4418, %v4417
      %v4461 = vpack.c.b16 %v4420, %v4419
      %v4462 = vpack.c.b16 %v4422, %v4421
      %v4463 = vpack.c.b16 %v4424, %v4423
      %v4464 = vpack.c.b16 %v4426, %v4425
      %v4465 = vpack.c.b16 %v4428, %v4427
      %v4466 = vpack.c.b16 %v4430, %v4429
      %v4467 = vpack.c.b16 %v4432, %v4431
      %v4468 = vpack.c.b16 %v4434, %v4433
      %v4469 = vpack.c.b16 %v4436, %v4435
      %v4470 = vpack.c.b16 %v4438, %v4437
      %v4471 = vpack.c.b16 %v4440, %v4439
      %v4472 = vpack.c.b16 %v4442, %v4441
      %v4473 = vpack.c.b16 %v4444, %v4443
      %v4474 = vpack.c.b16 %v4446, %v4445
      %v4475 = vpack.c.b16 %v4448, %v4447
      %v4476 = vpack.c.b16 %v4450, %v4449
      %v4477 = vpack.c.b16 %v4452, %v4451
      %v4478 = vpack.c.b16 %v4454, %v4453
      %4503 = vmatprep.subr.bf16.mxu0 0
      %4504 = vmatpush1.bf16.msra.mxu0 %v4455
      %4505 = vmatprep.subr.bf16.mxu0 0
      %4506 = vmatpush1.bf16.msra.mxu0 %v4456
      %4507 = vmatprep.subr.bf16.mxu0 0
      %4508 = vmatpush1.bf16.msra.mxu0 %v4457
      %4509 = vmatprep.subr.bf16.mxu0 0
      %4510 = vmatpush1.bf16.msra.mxu0 %v4458
      %4511 = vmatprep.subr.bf16.mxu0 0
      %4512 = vmatpush1.bf16.msra.mxu0 %v4459
      %4513 = vmatprep.subr.bf16.mxu0 0
      %4514 = vmatpush1.bf16.msra.mxu0 %v4460
      %4515 = vmatprep.subr.bf16.mxu0 0
      %4516 = vmatpush1.bf16.msra.mxu0 %v4461
      %4517 = vmatprep.subr.bf16.mxu0 0
      %4518 = vmatpush1.bf16.msra.mxu0 %v4462
      %4519 = vmatprep.subr.bf16.mxu0 0
      %4520 = vmatpush1.bf16.msra.mxu0 %v4463
      %4521 = vmatprep.subr.bf16.mxu0 0
      %4522 = vmatpush1.bf16.msra.mxu0 %v4464
      %4523 = vmatprep.subr.bf16.mxu0 0
      %4524 = vmatpush1.bf16.msra.mxu0 %v4465
      %4525 = vmatprep.subr.bf16.mxu0 0
      %4526 = vmatpush1.bf16.msra.mxu0 %v4466
      %4527 = vmatprep.subr.bf16.mxu0 0
      %4528 = vmatpush1.bf16.msra.mxu0 %v4467
      %4529 = vmatprep.subr.bf16.mxu0 0
      %4530 = vmatpush1.bf16.msra.mxu0 %v4468
      %4531 = vmatprep.subr.bf16.mxu0 0
      %4532 = vmatpush1.bf16.msra.mxu0 %v4469
      %4533 = vmatprep.subr.bf16.mxu0 0
      %4534 = vmatpush1.bf16.msra.mxu0 %v4470
      %4535 = vmatprep.mubr.bf16.mxu0 %v4046
      %4536 = vmatmul.mubr.bf16.gmra.mrb[0].mxu0 %v3953
      %v4537 = vpop.f32.mrb[0].mxu0
      %v4538 = vadd.f32 0.0, %v4537
      %v4539 = vpop.f32.mrb[0].mxu0
      %v4540 = vpop.f32.mrb[0].mxu0
      %v4541 = vadd.f32 0.0, %v4540
      %v4542 = vpop.f32.mrb[0].mxu0
      %4543 = vmatprep.mubr.bf16.mxu0 %v4058
      %4544 = vmatmul.mubr.bf16.gmra.mrb[0].mxu0 %v3954
      %v4545 = vpop.f32.mrb[0].mxu0
      %v4546 = vadd.f32 0.0, %v4545
      %v4547 = vpop.f32.mrb[0].mxu0
      %v4548 = vpop.f32.mrb[0].mxu0
      %v4549 = vadd.f32 0.0, %v4548
      %v4550 = vpop.f32.mrb[0].mxu0
      %4551 = vmatprep.mubr.bf16.mxu0 %v4070
      %4552 = vmatmul.mubr.bf16.gmra.mrb[0].mxu0 %v3955
      %v4553 = vpop.f32.mrb[0].mxu0
      %v4554 = vadd.f32 0.0, %v4553
      %v4555 = vpop.f32.mrb[0].mxu0
      %v4556 = vpop.f32.mrb[0].mxu0
      %v4557 = vadd.f32 0.0, %v4556
      %v4558 = vpop.f32.mrb[0].mxu0
      %4559 = vmatprep.mubr.bf16.mxu0 %v4082
      %4560 = vmatmul.mubr.bf16.gmra.mrb[0].mxu0 %v3956
      %v4561 = vpop.f32.mrb[0].mxu0
      %v4562 = vadd.f32 0.0, %v4561
      %v4563 = vpop.f32.mrb[0].mxu0
      %v4564 = vpop.f32.mrb[0].mxu0
      %v4565 = vadd.f32 0.0, %v4564
      %v4566 = vpop.f32.mrb[0].mxu0
      %4567 = vmatprep.mubr.bf16.mxu0 %v4094
      %4568 = vmatmul.mubr.bf16.gmra.mrb[0].mxu0 %v3957
      %v4569 = vpop.f32.mrb[0].mxu0
      %v4570 = vadd.f32 0.0, %v4569
      %v4571 = vpop.f32.mrb[0].mxu0
      %v4572 = vpop.f32.mrb[0].mxu0
      %v4573 = vadd.f32 0.0, %v4572
      %v4574 = vpop.f32.mrb[0].mxu0
      %4575 = vmatprep.mubr.bf16.mxu0 %v4106
      %4576 = vmatmul.mubr.bf16.gmra.mrb[0].mxu0 %v3958
      %v4577 = vpop.f32.mrb[0].mxu0
      %v4578 = vadd.f32 0.0, %v4577
      %v4579 = vpop.f32.mrb[0].mxu0
      %v4580 = vpop.f32.mrb[0].mxu0
      %v4581 = vadd.f32 0.0, %v4580
      %v4582 = vpop.f32.mrb[0].mxu0
      %4583 = vmatprep.mubr.bf16.mxu0 %v4118
      %4584 = vmatmul.mubr.bf16.gmra.mrb[0].mxu0 %v3959
      %v4585 = vpop.f32.mrb[0].mxu0
      %v4586 = vadd.f32 0.0, %v4585
      %v4587 = vpop.f32.mrb[0].mxu0
      %v4588 = vpop.f32.mrb[0].mxu0
      %v4589 = vadd.f32 0.0, %v4588
      %v4590 = vpop.f32.mrb[0].mxu0
      %4591 = vmatprep.mubr.bf16.mxu0 %v4130
      %4592 = vmatmul.mubr.bf16.gmra.mrb[0].mxu0 %v3960
      %v4593 = vpop.f32.mrb[0].mxu0
      %v4594 = vadd.f32 0.0, %v4593
      %v4595 = vpop.f32.mrb[0].mxu0
      %v4596 = vpop.f32.mrb[0].mxu0
      %v4597 = vadd.f32 0.0, %v4596
      %v4598 = vpop.f32.mrb[0].mxu0
      %4599 = vmatprep.mubr.bf16.mxu0 %v4142
      %4600 = vmatmul.mubr.bf16.gmra.mrb[0].mxu0 %v3961
      %v4601 = vpop.f32.mrb[0].mxu0
      %v4602 = vadd.f32 0.0, %v4601
      %v4603 = vpop.f32.mrb[0].mxu0
      %v4604 = vpop.f32.mrb[0].mxu0
      %v4605 = vadd.f32 0.0, %v4604
      %v4606 = vpop.f32.mrb[0].mxu0
      %4607 = vmatprep.mubr.bf16.mxu0 %v4154
      %4608 = vmatmul.mubr.bf16.gmra.mrb[0].mxu0 %v3962
      %v4609 = vpop.f32.mrb[0].mxu0
      %v4610 = vadd.f32 0.0, %v4609
      %v4611 = vpop.f32.mrb[0].mxu0
      %v4612 = vpop.f32.mrb[0].mxu0
      %v4613 = vadd.f32 0.0, %v4612
      %v4614 = vpop.f32.mrb[0].mxu0
      %4615 = vmatprep.mubr.bf16.mxu0 %v4166
      %4616 = vmatmul.mubr.bf16.gmra.mrb[0].mxu0 %v3963
      %v4617 = vpop.f32.mrb[0].mxu0
      %v4618 = vadd.f32 0.0, %v4617
      %v4619 = vpop.f32.mrb[0].mxu0
      %v4620 = vpop.f32.mrb[0].mxu0
      %v4621 = vadd.f32 0.0, %v4620
      %v4622 = vpop.f32.mrb[0].mxu0
      %4623 = vmatprep.mubr.bf16.mxu0 %v4178
      %4624 = vmatmul.mubr.bf16.gmra.mrb[0].mxu0 %v3964
      %v4625 = vpop.f32.mrb[0].mxu0
      %v4626 = vadd.f32 0.0, %v4625
      %v4627 = vpop.f32.mrb[0].mxu0
      %v4628 = vpop.f32.mrb[0].mxu0
      %v4629 = vadd.f32 0.0, %v4628
      %v4630 = vpop.f32.mrb[0].mxu0
      %4631 = vdwg.mxu0
      %4632 = vmatprep.subr.bf16.mxu0 0
      %4633 = vmatpush1.bf16.msra.mxu0 %v4471
      %4634 = vmatprep.subr.bf16.mxu0 0
      %4635 = vmatpush1.bf16.msra.mxu0 %v4472
      %4636 = vmatprep.subr.bf16.mxu0 0
      %4637 = vmatpush1.bf16.msra.mxu0 %v4473
      %4638 = vmatprep.subr.bf16.mxu0 0
      %4639 = vmatpush1.bf16.msra.mxu0 %v4474
      %4640 = vmatprep.subr.bf16.mxu0 0
      %4641 = vmatpush1.bf16.msra.mxu0 %v4475
      %4642 = vmatprep.subr.bf16.mxu0 0
      %4643 = vmatpush1.bf16.msra.mxu0 %v4476
      %4644 = vmatprep.subr.bf16.mxu0 0
      %4645 = vmatpush1.bf16.msra.mxu0 %v4477
      %4646 = vmatprep.subr.bf16.mxu0 0
      %4647 = vmatpush1.bf16.msra.mxu0 %v4478
      %4648 = vmatprep.subr.bf16.mxu0 0
      %4649 = vmatpush1.bf16.msra.mxu0 0
      %4650 = vmatprep.subr.bf16.mxu0 0
      %4651 = vmatpush1.bf16.msra.mxu0 0
      %4652 = vmatprep.subr.bf16.mxu0 0
      %4653 = vmatpush1.bf16.msra.mxu0 0
      %4654 = vmatprep.subr.bf16.mxu0 0
      %4655 = vmatpush1.bf16.msra.mxu0 0
      %4656 = vmatprep.subr.bf16.mxu0 0
      %4657 = vmatpush1.bf16.msra.mxu0 0
      %4658 = vmatprep.subr.bf16.mxu0 0
      %4659 = vmatpush1.bf16.msra.mxu0 0
      %4660 = vmatprep.subr.bf16.mxu0 0
      %4661 = vmatpush1.bf16.msra.mxu0 0
      %4662 = vmatprep.subr.bf16.mxu0 0
      %4663 = vmatpush1.bf16.msra.mxu0 0
      %4664 = vmatprep.mubr.bf16.mxu0 0
      %4665 = vmatmul.mubr.bf16.gmra.mrb[0].mxu0 %v4211
      %v4666 = vpop.f32.mrb[0].mxu0
      %v4667 = vadd.f32 %v4538, %v4666
      %v4668 = vpop.f32.mrb[0].mxu0
      %v4669 = vpop.f32.mrb[0].mxu0
      %v4670 = vadd.f32 %v4541, %v4669
      %v4671 = vpop.f32.mrb[0].mxu0
      %4672 = vmatprep.mubr.bf16.mxu0 0
      %4673 = vmatmul.mubr.bf16.gmra.mrb[0].mxu0 %v4214
      %v4674 = vpop.f32.mrb[0].mxu0
      %v4675 = vadd.f32 %v4546, %v4674
      %v4676 = vpop.f32.mrb[0].mxu0
      %v4677 = vpop.f32.mrb[0].mxu0
      %v4678 = vadd.f32 %v4549, %v4677
      %v4679 = vpop.f32.mrb[0].mxu0
      %4680 = vmatprep.mubr.bf16.mxu0 0
      %4681 = vmatmul.mubr.bf16.gmra.mrb[0].mxu0 %v4217
      %v4682 = vpop.f32.mrb[0].mxu0
      %v4683 = vadd.f32 %v4554, %v4682
      %v4684 = vpop.f32.mrb[0].mxu0
      %v4685 = vpop.f32.mrb[0].mxu0
      %v4686 = vadd.f32 %v4557, %v4685
      %v4687 = vpop.f32.mrb[0].mxu0
      %4688 = vmatprep.mubr.bf16.mxu0 0
      %4689 = vmatmul.mubr.bf16.gmra.mrb[0].mxu0 %v4220
      %v4690 = vpop.f32.mrb[0].mxu0
      %v4691 = vadd.f32 %v4562, %v4690
      %v4692 = vpop.f32.mrb[0].mxu0
      %v4693 = vpop.f32.mrb[0].mxu0
      %v4694 = vadd.f32 %v4565, %v4693
      %v4695 = vpop.f32.mrb[0].mxu0
      %4696 = vmatprep.mubr.bf16.mxu0 0
      %4697 = vmatmul.mubr.bf16.gmra.mrb[0].mxu0 %v4223
      %v4698 = vpop.f32.mrb[0].mxu0
      %v4699 = vadd.f32 %v4570, %v4698
      %v4700 = vpop.f32.mrb[0].mxu0
      %v4701 = vpop.f32.mrb[0].mxu0
      %v4702 = vadd.f32 %v4573, %v4701
      %v4703 = vpop.f32.mrb[0].mxu0
      %4704 = vmatprep.mubr.bf16.mxu0 0
      %4705 = vmatmul.mubr.bf16.gmra.mrb[0].mxu0 %v4226
      %v4706 = vpop.f32.mrb[0].mxu0
      %v4707 = vadd.f32 %v4578, %v4706
      %v4708 = vpop.f32.mrb[0].mxu0
      %v4709 = vpop.f32.mrb[0].mxu0
      %v4710 = vadd.f32 %v4581, %v4709
      %v4711 = vpop.f32.mrb[0].mxu0
      %4712 = vmatprep.mubr.bf16.mxu0 0
      %4713 = vmatmul.mubr.bf16.gmra.mrb[0].mxu0 %v4229
      %v4714 = vpop.f32.mrb[0].mxu0
      %v4715 = vadd.f32 %v4586, %v4714
      %v4716 = vpop.f32.mrb[0].mxu0
      %v4717 = vpop.f32.mrb[0].mxu0
      %v4718 = vadd.f32 %v4589, %v4717
      %v4719 = vpop.f32.mrb[0].mxu0
      %4720 = vmatprep.mubr.bf16.mxu0 0
      %4721 = vmatmul.mubr.bf16.gmra.mrb[0].mxu0 %v4232
      %v4722 = vpop.f32.mrb[0].mxu0
      %v4723 = vadd.f32 %v4594, %v4722
      %v4724 = vpop.f32.mrb[0].mxu0
      %v4725 = vpop.f32.mrb[0].mxu0
      %v4726 = vadd.f32 %v4597, %v4725
      %v4727 = vpop.f32.mrb[0].mxu0
      %4728 = vmatprep.mubr.bf16.mxu0 0
      %4729 = vmatmul.mubr.bf16.gmra.mrb[0].mxu0 %v4235
      %v4730 = vpop.f32.mrb[0].mxu0
      %v4731 = vadd.f32 %v4602, %v4730
      %v4732 = vpop.f32.mrb[0].mxu0
      %v4733 = vpop.f32.mrb[0].mxu0
      %v4734 = vadd.f32 %v4605, %v4733
      %v4735 = vpop.f32.mrb[0].mxu0
      %4736 = vmatprep.mubr.bf16.mxu0 0
      %4737 = vmatmul.mubr.bf16.gmra.mrb[0].mxu0 %v4238
      %v4738 = vpop.f32.mrb[0].mxu0
      %v4739 = vadd.f32 %v4610, %v4738
      %v4740 = vpop.f32.mrb[0].mxu0
      %v4741 = vpop.f32.mrb[0].mxu0
      %v4742 = vadd.f32 %v4613, %v4741
      %v4743 = vpop.f32.mrb[0].mxu0
      %4744 = vmatprep.mubr.bf16.mxu0 0
      %4745 = vmatmul.mubr.bf16.gmra.mrb[0].mxu0 %v4241
      %v4746 = vpop.f32.mrb[0].mxu0
      %v4747 = vadd.f32 %v4618, %v4746
      %v4748 = vpop.f32.mrb[0].mxu0
      %v4749 = vpop.f32.mrb[0].mxu0
      %v4750 = vadd.f32 %v4621, %v4749
      %v4751 = vpop.f32.mrb[0].mxu0
      %4752 = vmatprep.mubr.bf16.mxu0 0
      %4753 = vmatmul.mubr.bf16.gmra.mrb[0].mxu0 %v4244
      %v4754 = vpop.f32.mrb[0].mxu0
      %v4755 = vadd.f32 %v4626, %v4754
      %v4756 = vpop.f32.mrb[0].mxu0
      %v4757 = vpop.f32.mrb[0].mxu0
      %v4758 = vadd.f32 %v4629, %v4757
      %v4759 = vpop.f32.mrb[0].mxu0
      %4760 = vdwg.mxu0
      %v4809 = vunpack.c.l.b16 %v4262
      %v4810 = vunpack.c.l.b16 %v4263
      %v4811 = vunpack.c.l.b16 %v4264
      %v4812 = vunpack.c.l.b16 %v4265
      %v4813 = vunpack.c.l.b16 %v4266
      %v4814 = vunpack.c.l.b16 %v4267
      %v4815 = vunpack.c.l.b16 %v4268
      %v4816 = vunpack.c.l.b16 %v4269
      %v4817 = vunpack.c.l.b16 %v4270
      %v4818 = vunpack.c.l.b16 %v4271
      %v4819 = vunpack.c.l.b16 %v4272
      %v4820 = vunpack.c.l.b16 %v4273
      %v4821 = vunpack.c.l.b16 %v4274
      %v4822 = vunpack.c.l.b16 %v4275
      %v4823 = vunpack.c.l.b16 %v4276
      %v4824 = vunpack.c.l.b16 %v4277
      %v4825 = vunpack.c.l.b16 %v4278
      %v4826 = vunpack.c.l.b16 %v4279
      %v4827 = vunpack.c.l.b16 %v4280
      %v4828 = vunpack.c.l.b16 %v4281
      %v4829 = vunpack.c.l.b16 %v4282
      %v4830 = vunpack.c.l.b16 %v4283
      %v4831 = vunpack.c.l.b16 %v4284
      %v4832 = vunpack.c.l.b16 %v4285
      %v4833 = vunpack.c.l.b16 %v4286
      %v4834 = vunpack.c.l.b16 %v4287
      %v4835 = vunpack.c.l.b16 %v4288
      %v4836 = vunpack.c.l.b16 %v4289
      %v4837 = vunpack.c.l.b16 %v4290
      %v4838 = vunpack.c.l.b16 %v4291
      %v4839 = vunpack.c.l.b16 %v4292
      %v4840 = vunpack.c.l.b16 %v4293
      %v4841 = vunpack.c.l.b16 %v4294
      %v4842 = vunpack.c.l.b16 %v4295
      %v4843 = vunpack.c.l.b16 %v4296
      %v4844 = vunpack.c.l.b16 %v4297
      %v4845 = vunpack.c.l.b16 %v4298
      %v4846 = vunpack.c.l.b16 %v4299
      %v4847 = vunpack.c.l.b16 %v4300
      %v4848 = vunpack.c.l.b16 %v4301
      %v4849 = vunpack.c.l.b16 %v4302
      %v4850 = vunpack.c.l.b16 %v4303
      %v4851 = vunpack.c.l.b16 %v4304
      %v4852 = vunpack.c.l.b16 %v4305
      %v4853 = vunpack.c.l.b16 %v4306
      %v4854 = vunpack.c.l.b16 %v4307
      %v4855 = vunpack.c.l.b16 %v4308
      %v4856 = vunpack.c.l.b16 %v4309
      %v4857 = vpack.c.b16 %v4810, %v4809
      %v4858 = vpack.c.b16 %v4812, %v4811
      %v4859 = vpack.c.b16 %v4814, %v4813
      %v4860 = vpack.c.b16 %v4816, %v4815
      %v4861 = vpack.c.b16 %v4818, %v4817
      %v4862 = vpack.c.b16 %v4820, %v4819
      %v4863 = vpack.c.b16 %v4822, %v4821
      %v4864 = vpack.c.b16 %v4824, %v4823
      %v4865 = vpack.c.b16 %v4826, %v4825
      %v4866 = vpack.c.b16 %v4828, %v4827
      %v4867 = vpack.c.b16 %v4830, %v4829
      %v4868 = vpack.c.b16 %v4832, %v4831
      %v4869 = vpack.c.b16 %v4834, %v4833
      %v4870 = vpack.c.b16 %v4836, %v4835
      %v4871 = vpack.c.b16 %v4838, %v4837
      %v4872 = vpack.c.b16 %v4840, %v4839
      %v4873 = vpack.c.b16 %v4842, %v4841
      %v4874 = vpack.c.b16 %v4844, %v4843
      %v4875 = vpack.c.b16 %v4846, %v4845
      %v4876 = vpack.c.b16 %v4848, %v4847
      %v4877 = vpack.c.b16 %v4850, %v4849
      %v4878 = vpack.c.b16 %v4852, %v4851
      %v4879 = vpack.c.b16 %v4854, %v4853
      %v4880 = vpack.c.b16 %v4856, %v4855
      %4905 = vmatprep.subr.bf16.mxu0 0
      %4906 = vmatpush1.bf16.msra.mxu0 %v4857
      %4907 = vmatprep.subr.bf16.mxu0 0
      %4908 = vmatpush1.bf16.msra.mxu0 %v4858
      %4909 = vmatprep.subr.bf16.mxu0 0
      %4910 = vmatpush1.bf16.msra.mxu0 %v4859
      %4911 = vmatprep.subr.bf16.mxu0 0
      %4912 = vmatpush1.bf16.msra.mxu0 %v4860
      %4913 = vmatprep.subr.bf16.mxu0 0
      %4914 = vmatpush1.bf16.msra.mxu0 %v4861
      %4915 = vmatprep.subr.bf16.mxu0 0
      %4916 = vmatpush1.bf16.msra.mxu0 %v4862
      %4917 = vmatprep.subr.bf16.mxu0 0
      %4918 = vmatpush1.bf16.msra.mxu0 %v4863
      %4919 = vmatprep.subr.bf16.mxu0 0
      %4920 = vmatpush1.bf16.msra.mxu0 %v4864
      %4921 = vmatprep.subr.bf16.mxu0 0
      %4922 = vmatpush1.bf16.msra.mxu0 %v4865
      %4923 = vmatprep.subr.bf16.mxu0 0
      %4924 = vmatpush1.bf16.msra.mxu0 %v4866
      %4925 = vmatprep.subr.bf16.mxu0 0
      %4926 = vmatpush1.bf16.msra.mxu0 %v4867
      %4927 = vmatprep.subr.bf16.mxu0 0
      %4928 = vmatpush1.bf16.msra.mxu0 %v4868
      %4929 = vmatprep.subr.bf16.mxu0 0
      %4930 = vmatpush1.bf16.msra.mxu0 %v4869
      %4931 = vmatprep.subr.bf16.mxu0 0
      %4932 = vmatpush1.bf16.msra.mxu0 %v4870
      %4933 = vmatprep.subr.bf16.mxu0 0
      %4934 = vmatpush1.bf16.msra.mxu0 %v4871
      %4935 = vmatprep.subr.bf16.mxu0 0
      %4936 = vmatpush1.bf16.msra.mxu0 %v4872
      %4937 = vmatprep.mubr.bf16.mxu0 %v4034
      %4938 = vmatmul.mubr.bf16.gmra.mrb[0].mxu0 %v3952
      %v4939 = vpop.f32.mrb[0].mxu0
      %v4940 = vadd.f32 %v4667, %v4939
      %v4941 = vpop.f32.mrb[0].mxu0
      %v4942 = vpop.f32.mrb[0].mxu0
      %v4943 = vadd.f32 %v4670, %v4942
      %v4944 = vpop.f32.mrb[0].mxu0
      %4945 = vmatprep.mubr.bf16.mxu0 %v4046
      %4946 = vmatmul.mubr.bf16.gmra.mrb[0].mxu0 %v3953
      %v4947 = vpop.f32.mrb[0].mxu0
      %v4948 = vadd.f32 %v4675, %v4947
      %v4949 = vpop.f32.mrb[0].mxu0
      %v4950 = vpop.f32.mrb[0].mxu0
      %v4951 = vadd.f32 %v4678, %v4950
      %v4952 = vpop.f32.mrb[0].mxu0
      %4953 = vmatprep.mubr.bf16.mxu0 %v4058
      %4954 = vmatmul.mubr.bf16.gmra.mrb[0].mxu0 %v3954
      %v4955 = vpop.f32.mrb[0].mxu0
      %v4956 = vadd.f32 %v4683, %v4955
      %v4957 = vpop.f32.mrb[0].mxu0
      %v4958 = vpop.f32.mrb[0].mxu0
      %v4959 = vadd.f32 %v4686, %v4958
      %v4960 = vpop.f32.mrb[0].mxu0
      %4961 = vmatprep.mubr.bf16.mxu0 %v4070
      %4962 = vmatmul.mubr.bf16.gmra.mrb[0].mxu0 %v3955
      %v4963 = vpop.f32.mrb[0].mxu0
      %v4964 = vadd.f32 %v4691, %v4963
      %v4965 = vpop.f32.mrb[0].mxu0
      %v4966 = vpop.f32.mrb[0].mxu0
      %v4967 = vadd.f32 %v4694, %v4966
      %v4968 = vpop.f32.mrb[0].mxu0
      %4969 = vmatprep.mubr.bf16.mxu0 %v4082
      %4970 = vmatmul.mubr.bf16.gmra.mrb[0].mxu0 %v3956
      %v4971 = vpop.f32.mrb[0].mxu0
      %v4972 = vadd.f32 %v4699, %v4971
      %v4973 = vpop.f32.mrb[0].mxu0
      %v4974 = vpop.f32.mrb[0].mxu0
      %v4975 = vadd.f32 %v4702, %v4974
      %v4976 = vpop.f32.mrb[0].mxu0
      %4977 = vmatprep.mubr.bf16.mxu0 %v4094
      %4978 = vmatmul.mubr.bf16.gmra.mrb[0].mxu0 %v3957
      %v4979 = vpop.f32.mrb[0].mxu0
      %v4980 = vadd.f32 %v4707, %v4979
      %v4981 = vpop.f32.mrb[0].mxu0
      %v4982 = vpop.f32.mrb[0].mxu0
      %v4983 = vadd.f32 %v4710, %v4982
      %v4984 = vpop.f32.mrb[0].mxu0
      %4985 = vmatprep.mubr.bf16.mxu0 %v4106
      %4986 = vmatmul.mubr.bf16.gmra.mrb[0].mxu0 %v3958
      %v4987 = vpop.f32.mrb[0].mxu0
      %v4988 = vadd.f32 %v4715, %v4987
      %v4989 = vpop.f32.mrb[0].mxu0
      %v4990 = vpop.f32.mrb[0].mxu0
      %v4991 = vadd.f32 %v4718, %v4990
      %v4992 = vpop.f32.mrb[0].mxu0
      %4993 = vmatprep.mubr.bf16.mxu0 %v4118
      %4994 = vmatmul.mubr.bf16.gmra.mrb[0].mxu0 %v3959
      %v4995 = vpop.f32.mrb[0].mxu0
      %v4996 = vadd.f32 %v4723, %v4995
      %v4997 = vpop.f32.mrb[0].mxu0
      %v4998 = vpop.f32.mrb[0].mxu0
      %v4999 = vadd.f32 %v4726, %v4998
      %v5000 = vpop.f32.mrb[0].mxu0
      %5001 = vmatprep.mubr.bf16.mxu0 %v4130
      %5002 = vmatmul.mubr.bf16.gmra.mrb[0].mxu0 %v3960
      %v5003 = vpop.f32.mrb[0].mxu0
      %v5004 = vadd.f32 %v4731, %v5003
      %v5005 = vpop.f32.mrb[0].mxu0
      %v5006 = vpop.f32.mrb[0].mxu0
      %v5007 = vadd.f32 %v4734, %v5006
      %v5008 = vpop.f32.mrb[0].mxu0
      %5009 = vmatprep.mubr.bf16.mxu0 %v4142
      %5010 = vmatmul.mubr.bf16.gmra.mrb[0].mxu0 %v3961
      %v5011 = vpop.f32.mrb[0].mxu0
      %v5012 = vadd.f32 %v4739, %v5011
      %v5013 = vpop.f32.mrb[0].mxu0
      %v5014 = vpop.f32.mrb[0].mxu0
      %v5015 = vadd.f32 %v4742, %v5014
      %v5016 = vpop.f32.mrb[0].mxu0
      %5017 = vmatprep.mubr.bf16.mxu0 %v4154
      %5018 = vmatmul.mubr.bf16.gmra.mrb[0].mxu0 %v3962
      %v5019 = vpop.f32.mrb[0].mxu0
      %v5020 = vadd.f32 %v4747, %v5019
      %v5021 = vpop.f32.mrb[0].mxu0
      %v5022 = vpop.f32.mrb[0].mxu0
      %v5023 = vadd.f32 %v4750, %v5022
      %v5024 = vpop.f32.mrb[0].mxu0
      %5025 = vmatprep.mubr.bf16.mxu0 %v4166
      %5026 = vmatmul.mubr.bf16.gmra.mrb[0].mxu0 %v3963
      %v5027 = vpop.f32.mrb[0].mxu0
      %v5028 = vadd.f32 %v4755, %v5027
      %v5029 = vpop.f32.mrb[0].mxu0
      %v5030 = vpop.f32.mrb[0].mxu0
      %v5031 = vadd.f32 %v4758, %v5030
      %v5032 = vpop.f32.mrb[0].mxu0
      %5033 = vdwg.mxu0
      %5034 = vmatprep.subr.bf16.mxu0 0
      %5035 = vmatpush1.bf16.msra.mxu0 %v4873
      %5036 = vmatprep.subr.bf16.mxu0 0
      %5037 = vmatpush1.bf16.msra.mxu0 %v4874
      %5038 = vmatprep.subr.bf16.mxu0 0
      %5039 = vmatpush1.bf16.msra.mxu0 %v4875
      %5040 = vmatprep.subr.bf16.mxu0 0
      %5041 = vmatpush1.bf16.msra.mxu0 %v4876
      %5042 = vmatprep.subr.bf16.mxu0 0
      %5043 = vmatpush1.bf16.msra.mxu0 %v4877
      %5044 = vmatprep.subr.bf16.mxu0 0
      %5045 = vmatpush1.bf16.msra.mxu0 %v4878
      %5046 = vmatprep.subr.bf16.mxu0 0
      %5047 = vmatpush1.bf16.msra.mxu0 %v4879
      %5048 = vmatprep.subr.bf16.mxu0 0
      %5049 = vmatpush1.bf16.msra.mxu0 %v4880
      %5050 = vmatprep.subr.bf16.mxu0 0
      %5051 = vmatpush1.bf16.msra.mxu0 0
      %5052 = vmatprep.subr.bf16.mxu0 0
      %5053 = vmatpush1.bf16.msra.mxu0 0
      %5054 = vmatprep.subr.bf16.mxu0 0
      %5055 = vmatpush1.bf16.msra.mxu0 0
      %5056 = vmatprep.subr.bf16.mxu0 0
      %5057 = vmatpush1.bf16.msra.mxu0 0
      %5058 = vmatprep.subr.bf16.mxu0 0
      %5059 = vmatpush1.bf16.msra.mxu0 0
      %5060 = vmatprep.subr.bf16.mxu0 0
      %5061 = vmatpush1.bf16.msra.mxu0 0
      %5062 = vmatprep.subr.bf16.mxu0 0
      %5063 = vmatpush1.bf16.msra.mxu0 0
      %5064 = vmatprep.subr.bf16.mxu0 0
      %5065 = vmatpush1.bf16.msra.mxu0 0
      %5066 = vmatprep.mubr.bf16.mxu0 0
      %5067 = vmatmul.mubr.bf16.gmra.mrb[0].mxu0 %v4208
      %v5068 = vpop.f32.mrb[0].mxu0
      %v5069 = vadd.f32 %v4940, %v5068
      %v5070 = vpop.f32.mrb[0].mxu0
      %v5071 = vpop.f32.mrb[0].mxu0
      %v5072 = vadd.f32 %v4943, %v5071
      %v5073 = vpop.f32.mrb[0].mxu0
      %5074 = vmatprep.mubr.bf16.mxu0 0
      %5075 = vmatmul.mubr.bf16.gmra.mrb[0].mxu0 %v4211
      %v5076 = vpop.f32.mrb[0].mxu0
      %v5077 = vadd.f32 %v4948, %v5076
      %v5078 = vpop.f32.mrb[0].mxu0
      %v5079 = vpop.f32.mrb[0].mxu0
      %v5080 = vadd.f32 %v4951, %v5079
      %v5081 = vpop.f32.mrb[0].mxu0
      %5082 = vmatprep.mubr.bf16.mxu0 0
      %5083 = vmatmul.mubr.bf16.gmra.mrb[0].mxu0 %v4214
      %v5084 = vpop.f32.mrb[0].mxu0
      %v5085 = vadd.f32 %v4956, %v5084
      %v5086 = vpop.f32.mrb[0].mxu0
      %v5087 = vpop.f32.mrb[0].mxu0
      %v5088 = vadd.f32 %v4959, %v5087
      %v5089 = vpop.f32.mrb[0].mxu0
      %5090 = vmatprep.mubr.bf16.mxu0 0
      %5091 = vmatmul.mubr.bf16.gmra.mrb[0].mxu0 %v4217
      %v5092 = vpop.f32.mrb[0].mxu0
      %v5093 = vadd.f32 %v4964, %v5092
      %v5094 = vpop.f32.mrb[0].mxu0
      %v5095 = vpop.f32.mrb[0].mxu0
      %v5096 = vadd.f32 %v4967, %v5095
      %v5097 = vpop.f32.mrb[0].mxu0
      %5098 = vmatprep.mubr.bf16.mxu0 0
      %5099 = vmatmul.mubr.bf16.gmra.mrb[0].mxu0 %v4220
      %v5100 = vpop.f32.mrb[0].mxu0
      %v5101 = vadd.f32 %v4972, %v5100
      %v5102 = vpop.f32.mrb[0].mxu0
      %v5103 = vpop.f32.mrb[0].mxu0
      %v5104 = vadd.f32 %v4975, %v5103
      %v5105 = vpop.f32.mrb[0].mxu0
      %5106 = vmatprep.mubr.bf16.mxu0 0
      %5107 = vmatmul.mubr.bf16.gmra.mrb[0].mxu0 %v4223
      %v5108 = vpop.f32.mrb[0].mxu0
      %v5109 = vadd.f32 %v4980, %v5108
      %v5110 = vpop.f32.mrb[0].mxu0
      %v5111 = vpop.f32.mrb[0].mxu0
      %v5112 = vadd.f32 %v4983, %v5111
      %v5113 = vpop.f32.mrb[0].mxu0
      %5114 = vmatprep.mubr.bf16.mxu0 0
      %5115 = vmatmul.mubr.bf16.gmra.mrb[0].mxu0 %v4226
      %v5116 = vpop.f32.mrb[0].mxu0
      %v5117 = vadd.f32 %v4988, %v5116
      %v5118 = vpop.f32.mrb[0].mxu0
      %v5119 = vpop.f32.mrb[0].mxu0
      %v5120 = vadd.f32 %v4991, %v5119
      %v5121 = vpop.f32.mrb[0].mxu0
      %5122 = vmatprep.mubr.bf16.mxu0 0
      %5123 = vmatmul.mubr.bf16.gmra.mrb[0].mxu0 %v4229
      %v5124 = vpop.f32.mrb[0].mxu0
      %v5125 = vadd.f32 %v4996, %v5124
      %v5126 = vpop.f32.mrb[0].mxu0
      %v5127 = vpop.f32.mrb[0].mxu0
      %v5128 = vadd.f32 %v4999, %v5127
      %v5129 = vpop.f32.mrb[0].mxu0
      %5130 = vmatprep.mubr.bf16.mxu0 0
      %5131 = vmatmul.mubr.bf16.gmra.mrb[0].mxu0 %v4232
      %v5132 = vpop.f32.mrb[0].mxu0
      %v5133 = vadd.f32 %v5004, %v5132
      %v5134 = vpop.f32.mrb[0].mxu0
      %v5135 = vpop.f32.mrb[0].mxu0
      %v5136 = vadd.f32 %v5007, %v5135
      %v5137 = vpop.f32.mrb[0].mxu0
      %5138 = vmatprep.mubr.bf16.mxu0 0
      %5139 = vmatmul.mubr.bf16.gmra.mrb[0].mxu0 %v4235
      %v5140 = vpop.f32.mrb[0].mxu0
      %v5141 = vadd.f32 %v5012, %v5140
      %v5142 = vpop.f32.mrb[0].mxu0
      %v5143 = vpop.f32.mrb[0].mxu0
      %v5144 = vadd.f32 %v5015, %v5143
      %v5145 = vpop.f32.mrb[0].mxu0
      %5146 = vmatprep.mubr.bf16.mxu0 0
      %5147 = vmatmul.mubr.bf16.gmra.mrb[0].mxu0 %v4238
      %v5148 = vpop.f32.mrb[0].mxu0
      %v5149 = vadd.f32 %v5020, %v5148
      %v5150 = vpop.f32.mrb[0].mxu0
      %v5151 = vpop.f32.mrb[0].mxu0
      %v5152 = vadd.f32 %v5023, %v5151
      %v5153 = vpop.f32.mrb[0].mxu0
      %5154 = vmatprep.mubr.bf16.mxu0 0
      %5155 = vmatmul.mubr.bf16.gmra.mrb[0].mxu0 %v4241
      %v5156 = vpop.f32.mrb[0].mxu0
      %v5157 = vadd.f32 %v5028, %v5156
      %v5158 = vpop.f32.mrb[0].mxu0
      %v5159 = vpop.f32.mrb[0].mxu0
      %v5160 = vadd.f32 %v5031, %v5159
      %v5161 = vpop.f32.mrb[0].mxu0
      %5162 = vdwg.mxu0
      %s5163 = scalar_lea.vmem %s2, 384
      %v5164 = vld [vmem:[%s5163] sm:$0xf]
      %v5165 = vld [vmem:[%s5163 + $0x4] sm:$0xf]
      %v5166 = vld [vmem:[%s5163 + $0x8] sm:$0xf]
      %v5167 = vld [vmem:[%s5163 + $0xc] sm:$0xf]
      %v5168 = vld [vmem:[%s5163 + $0x10] sm:$0xf]
      %v5169 = vld [vmem:[%s5163 + $0x14] sm:$0xf]
      %v5170 = vld [vmem:[%s5163 + $0x18] sm:$0xf]
      %v5171 = vld [vmem:[%s5163 + $0x1c] sm:$0xf]
      %v5172 = vld [vmem:[%s5163 + $0x20] sm:$0xf]
      %v5173 = vld [vmem:[%s5163 + $0x24] sm:$0xf]
      %v5174 = vld [vmem:[%s5163 + $0x28] sm:$0xf]
      %v5175 = vld [vmem:[%s5163 + $0x2c] sm:$0xf]
      %v5176 = vld [vmem:[%s5163 + $0x30] sm:$0xf]
      %v5177 = vld [vmem:[%s5163 + $0x34] sm:$0xf]
      %v5178 = vld [vmem:[%s5163 + $0x38] sm:$0xf]
      %v5179 = vld [vmem:[%s5163 + $0x3c] sm:$0xf]
      %v5180 = vld [vmem:[%s5163 + $0x40] sm:$0xf]
      %v5181 = vld [vmem:[%s5163 + $0x44] sm:$0xf]
      %v5182 = vld [vmem:[%s5163 + $0x48] sm:$0xf]
      %v5183 = vld [vmem:[%s5163 + $0x4c] sm:$0xf]
      %v5184 = vld [vmem:[%s5163 + $0x50] sm:$0xf]
      %v5185 = vld [vmem:[%s5163 + $0x54] sm:$0xf]
      %v5186 = vld [vmem:[%s5163 + $0x58] sm:$0xf]
      %v5187 = vld [vmem:[%s5163 + $0x5c] sm:$0xf]
      %v5188 = vld [vmem:[%s5163 + $0x60] sm:$0xf]
      %v5189 = vld [vmem:[%s5163 + $0x64] sm:$0xf]
      %v5190 = vld [vmem:[%s5163 + $0x68] sm:$0xf]
      %v5191 = vld [vmem:[%s5163 + $0x6c] sm:$0xf]
      %v5192 = vld [vmem:[%s5163 + $0x70] sm:$0xf]
      %v5193 = vld [vmem:[%s5163 + $0x74] sm:$0xf]
      %v5194 = vld [vmem:[%s5163 + $0x78] sm:$0xf]
      %v5195 = vld [vmem:[%s5163 + $0x7c] sm:$0xf]
      %v5196 = vld [vmem:[%s5163 + $0x80] sm:$0xf]
      %v5197 = vld [vmem:[%s5163 + $0x84] sm:$0xf]
      %v5198 = vld [vmem:[%s5163 + $0x88] sm:$0xf]
      %v5199 = vld [vmem:[%s5163 + $0x8c] sm:$0xf]
      %v5200 = vld [vmem:[%s5163 + $0x90] sm:$0xf]
      %v5201 = vld [vmem:[%s5163 + $0x94] sm:$0xf]
      %v5202 = vld [vmem:[%s5163 + $0x98] sm:$0xf]
      %v5203 = vld [vmem:[%s5163 + $0x9c] sm:$0xf]
      %v5204 = vld [vmem:[%s5163 + $0xa0] sm:$0xf]
      %v5205 = vld [vmem:[%s5163 + $0xa4] sm:$0xf]
      %v5206 = vld [vmem:[%s5163 + $0xa8] sm:$0xf]
      %v5207 = vld [vmem:[%s5163 + $0xac] sm:$0xf]
      %v5208 = vld [vmem:[%s5163 + $0xb0] sm:$0xf]
      %v5209 = vld [vmem:[%s5163 + $0xb4] sm:$0xf]
      %v5210 = vld [vmem:[%s5163 + $0xb8] sm:$0xf]
      %v5211 = vld [vmem:[%s5163 + $0xbc] sm:$0xf]
      %v5260 = vunpack.c.l.b16 %v5164
      %v5261 = vunpack.c.l.b16 %v5165
      %v5262 = vunpack.c.l.b16 %v5166
      %v5263 = vunpack.c.l.b16 %v5167
      %v5264 = vunpack.c.l.b16 %v5168
      %v5265 = vunpack.c.l.b16 %v5169
      %v5266 = vunpack.c.l.b16 %v5170
      %v5267 = vunpack.c.l.b16 %v5171
      %v5268 = vunpack.c.l.b16 %v5172
      %v5269 = vunpack.c.l.b16 %v5173
      %v5270 = vunpack.c.l.b16 %v5174
      %v5271 = vunpack.c.l.b16 %v5175
      %v5272 = vunpack.c.l.b16 %v5176
      %v5273 = vunpack.c.l.b16 %v5177
      %v5274 = vunpack.c.l.b16 %v5178
      %v5275 = vunpack.c.l.b16 %v5179
      %v5276 = vunpack.c.l.b16 %v5180
      %v5277 = vunpack.c.l.b16 %v5181
      %v5278 = vunpack.c.l.b16 %v5182
      %v5279 = vunpack.c.l.b16 %v5183
      %v5280 = vunpack.c.l.b16 %v5184
      %v5281 = vunpack.c.l.b16 %v5185
      %v5282 = vunpack.c.l.b16 %v5186
      %v5283 = vunpack.c.l.b16 %v5187
      %v5284 = vunpack.c.l.b16 %v5188
      %v5285 = vunpack.c.l.b16 %v5189
      %v5286 = vunpack.c.l.b16 %v5190
      %v5287 = vunpack.c.l.b16 %v5191
      %v5288 = vunpack.c.l.b16 %v5192
      %v5289 = vunpack.c.l.b16 %v5193
      %v5290 = vunpack.c.l.b16 %v5194
      %v5291 = vunpack.c.l.b16 %v5195
      %v5292 = vunpack.c.l.b16 %v5196
      %v5293 = vunpack.c.l.b16 %v5197
      %v5294 = vunpack.c.l.b16 %v5198
      %v5295 = vunpack.c.l.b16 %v5199
      %v5296 = vunpack.c.l.b16 %v5200
      %v5297 = vunpack.c.l.b16 %v5201
      %v5298 = vunpack.c.l.b16 %v5202
      %v5299 = vunpack.c.l.b16 %v5203
      %v5300 = vunpack.c.l.b16 %v5204
      %v5301 = vunpack.c.l.b16 %v5205
      %v5302 = vunpack.c.l.b16 %v5206
      %v5303 = vunpack.c.l.b16 %v5207
      %v5304 = vunpack.c.l.b16 %v5208
      %v5305 = vunpack.c.l.b16 %v5209
      %v5306 = vunpack.c.l.b16 %v5210
      %v5307 = vunpack.c.l.b16 %v5211
      %v5308 = vpack.c.b16 %v5261, %v5260
      %v5309 = vpack.c.b16 %v5263, %v5262
      %v5310 = vpack.c.b16 %v5265, %v5264
      %v5311 = vpack.c.b16 %v5267, %v5266
      %v5312 = vpack.c.b16 %v5269, %v5268
      %v5313 = vpack.c.b16 %v5271, %v5270
      %v5314 = vpack.c.b16 %v5273, %v5272
      %v5315 = vpack.c.b16 %v5275, %v5274
      %v5316 = vpack.c.b16 %v5277, %v5276
      %v5317 = vpack.c.b16 %v5279, %v5278
      %v5318 = vpack.c.b16 %v5281, %v5280
      %v5319 = vpack.c.b16 %v5283, %v5282
      %v5320 = vpack.c.b16 %v5285, %v5284
      %v5321 = vpack.c.b16 %v5287, %v5286
      %v5322 = vpack.c.b16 %v5289, %v5288
      %v5323 = vpack.c.b16 %v5291, %v5290
      %v5324 = vpack.c.b16 %v5293, %v5292
      %v5325 = vpack.c.b16 %v5295, %v5294
      %v5326 = vpack.c.b16 %v5297, %v5296
      %v5327 = vpack.c.b16 %v5299, %v5298
      %v5328 = vpack.c.b16 %v5301, %v5300
      %v5329 = vpack.c.b16 %v5303, %v5302
      %v5330 = vpack.c.b16 %v5305, %v5304
      %v5331 = vpack.c.b16 %v5307, %v5306
      %5356 = vmatprep.subr.bf16.mxu0 0
      %5357 = vmatpush1.bf16.msra.mxu0 %v5308
      %5358 = vmatprep.subr.bf16.mxu0 0
      %5359 = vmatpush1.bf16.msra.mxu0 %v5309
      %5360 = vmatprep.subr.bf16.mxu0 0
      %5361 = vmatpush1.bf16.msra.mxu0 %v5310
      %5362 = vmatprep.subr.bf16.mxu0 0
      %5363 = vmatpush1.bf16.msra.mxu0 %v5311
      %5364 = vmatprep.subr.bf16.mxu0 0
      %5365 = vmatpush1.bf16.msra.mxu0 %v5312
      %5366 = vmatprep.subr.bf16.mxu0 0
      %5367 = vmatpush1.bf16.msra.mxu0 %v5313
      %5368 = vmatprep.subr.bf16.mxu0 0
      %5369 = vmatpush1.bf16.msra.mxu0 %v5314
      %5370 = vmatprep.subr.bf16.mxu0 0
      %5371 = vmatpush1.bf16.msra.mxu0 %v5315
      %5372 = vmatprep.subr.bf16.mxu0 0
      %5373 = vmatpush1.bf16.msra.mxu0 %v5316
      %5374 = vmatprep.subr.bf16.mxu0 0
      %5375 = vmatpush1.bf16.msra.mxu0 %v5317
      %5376 = vmatprep.subr.bf16.mxu0 0
      %5377 = vmatpush1.bf16.msra.mxu0 %v5318
      %5378 = vmatprep.subr.bf16.mxu0 0
      %5379 = vmatpush1.bf16.msra.mxu0 %v5319
      %5380 = vmatprep.subr.bf16.mxu0 0
      %5381 = vmatpush1.bf16.msra.mxu0 %v5320
      %5382 = vmatprep.subr.bf16.mxu0 0
      %5383 = vmatpush1.bf16.msra.mxu0 %v5321
      %5384 = vmatprep.subr.bf16.mxu0 0
      %5385 = vmatpush1.bf16.msra.mxu0 %v5322
      %5386 = vmatprep.subr.bf16.mxu0 0
      %5387 = vmatpush1.bf16.msra.mxu0 %v5323
      %5388 = vmatprep.mubr.bf16.mxu0 %v4058
      %5389 = vmatmul.mubr.bf16.gmra.mrb[0].mxu0 %v3954
      %v5390 = vpop.f32.mrb[0].mxu0
      %v5391 = vadd.f32 0.0, %v5390
      %v5392 = vpop.f32.mrb[0].mxu0
      %v5393 = vpop.f32.mrb[0].mxu0
      %v5394 = vadd.f32 0.0, %v5393
      %v5395 = vpop.f32.mrb[0].mxu0
      %5396 = vmatprep.mubr.bf16.mxu0 %v4070
      %5397 = vmatmul.mubr.bf16.gmra.mrb[0].mxu0 %v3955
      %v5398 = vpop.f32.mrb[0].mxu0
      %v5399 = vadd.f32 0.0, %v5398
      %v5400 = vpop.f32.mrb[0].mxu0
      %v5401 = vpop.f32.mrb[0].mxu0
      %v5402 = vadd.f32 0.0, %v5401
      %v5403 = vpop.f32.mrb[0].mxu0
      %5404 = vmatprep.mubr.bf16.mxu0 %v4082
      %5405 = vmatmul.mubr.bf16.gmra.mrb[0].mxu0 %v3956
      %v5406 = vpop.f32.mrb[0].mxu0
      %v5407 = vadd.f32 0.0, %v5406
      %v5408 = vpop.f32.mrb[0].mxu0
      %v5409 = vpop.f32.mrb[0].mxu0
      %v5410 = vadd.f32 0.0, %v5409
      %v5411 = vpop.f32.mrb[0].mxu0
      %5412 = vmatprep.mubr.bf16.mxu0 %v4094
      %5413 = vmatmul.mubr.bf16.gmra.mrb[0].mxu0 %v3957
      %v5414 = vpop.f32.mrb[0].mxu0
      %v5415 = vadd.f32 0.0, %v5414
      %v5416 = vpop.f32.mrb[0].mxu0
      %v5417 = vpop.f32.mrb[0].mxu0
      %v5418 = vadd.f32 0.0, %v5417
      %v5419 = vpop.f32.mrb[0].mxu0
      %5420 = vmatprep.mubr.bf16.mxu0 %v4106
      %5421 = vmatmul.mubr.bf16.gmra.mrb[0].mxu0 %v3958
      %v5422 = vpop.f32.mrb[0].mxu0
      %v5423 = vadd.f32 0.0, %v5422
      %v5424 = vpop.f32.mrb[0].mxu0
      %v5425 = vpop.f32.mrb[0].mxu0
      %v5426 = vadd.f32 0.0, %v5425
      %v5427 = vpop.f32.mrb[0].mxu0
      %5428 = vmatprep.mubr.bf16.mxu0 %v4118
      %5429 = vmatmul.mubr.bf16.gmra.mrb[0].mxu0 %v3959
      %v5430 = vpop.f32.mrb[0].mxu0
      %v5431 = vadd.f32 0.0, %v5430
      %v5432 = vpop.f32.mrb[0].mxu0
      %v5433 = vpop.f32.mrb[0].mxu0
      %v5434 = vadd.f32 0.0, %v5433
      %v5435 = vpop.f32.mrb[0].mxu0
      %5436 = vmatprep.mubr.bf16.mxu0 %v4130
      %5437 = vmatmul.mubr.bf16.gmra.mrb[0].mxu0 %v3960
      %v5438 = vpop.f32.mrb[0].mxu0
      %v5439 = vadd.f32 0.0, %v5438
      %v5440 = vpop.f32.mrb[0].mxu0
      %v5441 = vpop.f32.mrb[0].mxu0
      %v5442 = vadd.f32 0.0, %v5441
      %v5443 = vpop.f32.mrb[0].mxu0
      %5444 = vmatprep.mubr.bf16.mxu0 %v4142
      %5445 = vmatmul.mubr.bf16.gmra.mrb[0].mxu0 %v3961
      %v5446 = vpop.f32.mrb[0].mxu0
      %v5447 = vadd.f32 0.0, %v5446
      %v5448 = vpop.f32.mrb[0].mxu0
      %v5449 = vpop.f32.mrb[0].mxu0
      %v5450 = vadd.f32 0.0, %v5449
      %v5451 = vpop.f32.mrb[0].mxu0
      %5452 = vmatprep.mubr.bf16.mxu0 %v4154
      %5453 = vmatmul.mubr.bf16.gmra.mrb[0].mxu0 %v3962
      %v5454 = vpop.f32.mrb[0].mxu0
      %v5455 = vadd.f32 0.0, %v5454
      %v5456 = vpop.f32.mrb[0].mxu0
      %v5457 = vpop.f32.mrb[0].mxu0
      %v5458 = vadd.f32 0.0, %v5457
      %v5459 = vpop.f32.mrb[0].mxu0
      %5460 = vmatprep.mubr.bf16.mxu0 %v4166
      %5461 = vmatmul.mubr.bf16.gmra.mrb[0].mxu0 %v3963
      %v5462 = vpop.f32.mrb[0].mxu0
      %v5463 = vadd.f32 0.0, %v5462
      %v5464 = vpop.f32.mrb[0].mxu0
      %v5465 = vpop.f32.mrb[0].mxu0
      %v5466 = vadd.f32 0.0, %v5465
      %v5467 = vpop.f32.mrb[0].mxu0
      %5468 = vmatprep.mubr.bf16.mxu0 %v4178
      %5469 = vmatmul.mubr.bf16.gmra.mrb[0].mxu0 %v3964
      %v5470 = vpop.f32.mrb[0].mxu0
      %v5471 = vadd.f32 0.0, %v5470
      %v5472 = vpop.f32.mrb[0].mxu0
      %v5473 = vpop.f32.mrb[0].mxu0
      %v5474 = vadd.f32 0.0, %v5473
      %v5475 = vpop.f32.mrb[0].mxu0
      %5476 = vmatprep.mubr.bf16.mxu0 %v4190
      %5477 = vmatmul.mubr.bf16.gmra.mrb[0].mxu0 %v3965
      %v5478 = vpop.f32.mrb[0].mxu0
      %v5479 = vadd.f32 0.0, %v5478
      %v5480 = vpop.f32.mrb[0].mxu0
      %v5481 = vpop.f32.mrb[0].mxu0
      %v5482 = vadd.f32 0.0, %v5481
      %v5483 = vpop.f32.mrb[0].mxu0
      %5484 = vdwg.mxu0
      %5485 = vmatprep.subr.bf16.mxu0 0
      %5486 = vmatpush1.bf16.msra.mxu0 %v5324
      %5487 = vmatprep.subr.bf16.mxu0 0
      %5488 = vmatpush1.bf16.msra.mxu0 %v5325
      %5489 = vmatprep.subr.bf16.mxu0 0
      %5490 = vmatpush1.bf16.msra.mxu0 %v5326
      %5491 = vmatprep.subr.bf16.mxu0 0
      %5492 = vmatpush1.bf16.msra.mxu0 %v5327
      %5493 = vmatprep.subr.bf16.mxu0 0
      %5494 = vmatpush1.bf16.msra.mxu0 %v5328
      %5495 = vmatprep.subr.bf16.mxu0 0
      %5496 = vmatpush1.bf16.msra.mxu0 %v5329
      %5497 = vmatprep.subr.bf16.mxu0 0
      %5498 = vmatpush1.bf16.msra.mxu0 %v5330
      %5499 = vmatprep.subr.bf16.mxu0 0
      %5500 = vmatpush1.bf16.msra.mxu0 %v5331
      %5501 = vmatprep.subr.bf16.mxu0 0
      %5502 = vmatpush1.bf16.msra.mxu0 0
      %5503 = vmatprep.subr.bf16.mxu0 0
      %5504 = vmatpush1.bf16.msra.mxu0 0
      %5505 = vmatprep.subr.bf16.mxu0 0
      %5506 = vmatpush1.bf16.msra.mxu0 0
      %5507 = vmatprep.subr.bf16.mxu0 0
      %5508 = vmatpush1.bf16.msra.mxu0 0
      %5509 = vmatprep.subr.bf16.mxu0 0
      %5510 = vmatpush1.bf16.msra.mxu0 0
      %5511 = vmatprep.subr.bf16.mxu0 0
      %5512 = vmatpush1.bf16.msra.mxu0 0
      %5513 = vmatprep.subr.bf16.mxu0 0
      %5514 = vmatpush1.bf16.msra.mxu0 0
      %5515 = vmatprep.subr.bf16.mxu0 0
      %5516 = vmatpush1.bf16.msra.mxu0 0
      %5517 = vmatprep.mubr.bf16.mxu0 0
      %5518 = vmatmul.mubr.bf16.gmra.mrb[0].mxu0 %v4214
      %v5519 = vpop.f32.mrb[0].mxu0
      %v5520 = vadd.f32 %v5391, %v5519
      %v5521 = vpop.f32.mrb[0].mxu0
      %v5522 = vpop.f32.mrb[0].mxu0
      %v5523 = vadd.f32 %v5394, %v5522
      %v5524 = vpop.f32.mrb[0].mxu0
      %5525 = vmatprep.mubr.bf16.mxu0 0
      %5526 = vmatmul.mubr.bf16.gmra.mrb[0].mxu0 %v4217
      %v5527 = vpop.f32.mrb[0].mxu0
      %v5528 = vadd.f32 %v5399, %v5527
      %v5529 = vpop.f32.mrb[0].mxu0
      %v5530 = vpop.f32.mrb[0].mxu0
      %v5531 = vadd.f32 %v5402, %v5530
      %v5532 = vpop.f32.mrb[0].mxu0
      %5533 = vmatprep.mubr.bf16.mxu0 0
      %5534 = vmatmul.mubr.bf16.gmra.mrb[0].mxu0 %v4220
      %v5535 = vpop.f32.mrb[0].mxu0
      %v5536 = vadd.f32 %v5407, %v5535
      %v5537 = vpop.f32.mrb[0].mxu0
      %v5538 = vpop.f32.mrb[0].mxu0
      %v5539 = vadd.f32 %v5410, %v5538
      %v5540 = vpop.f32.mrb[0].mxu0
      %5541 = vmatprep.mubr.bf16.mxu0 0
      %5542 = vmatmul.mubr.bf16.gmra.mrb[0].mxu0 %v4223
      %v5543 = vpop.f32.mrb[0].mxu0
      %v5544 = vadd.f32 %v5415, %v5543
      %v5545 = vpop.f32.mrb[0].mxu0
      %v5546 = vpop.f32.mrb[0].mxu0
      %v5547 = vadd.f32 %v5418, %v5546
      %v5548 = vpop.f32.mrb[0].mxu0
      %5549 = vmatprep.mubr.bf16.mxu0 0
      %5550 = vmatmul.mubr.bf16.gmra.mrb[0].mxu0 %v4226
      %v5551 = vpop.f32.mrb[0].mxu0
      %v5552 = vadd.f32 %v5423, %v5551
      %v5553 = vpop.f32.mrb[0].mxu0
      %v5554 = vpop.f32.mrb[0].mxu0
      %v5555 = vadd.f32 %v5426, %v5554
      %v5556 = vpop.f32.mrb[0].mxu0
      %5557 = vmatprep.mubr.bf16.mxu0 0
      %5558 = vmatmul.mubr.bf16.gmra.mrb[0].mxu0 %v4229
      %v5559 = vpop.f32.mrb[0].mxu0
      %v5560 = vadd.f32 %v5431, %v5559
      %v5561 = vpop.f32.mrb[0].mxu0
      %v5562 = vpop.f32.mrb[0].mxu0
      %v5563 = vadd.f32 %v5434, %v5562
      %v5564 = vpop.f32.mrb[0].mxu0
      %5565 = vmatprep.mubr.bf16.mxu0 0
      %5566 = vmatmul.mubr.bf16.gmra.mrb[0].mxu0 %v4232
      %v5567 = vpop.f32.mrb[0].mxu0
      %v5568 = vadd.f32 %v5439, %v5567
      %v5569 = vpop.f32.mrb[0].mxu0
      %v5570 = vpop.f32.mrb[0].mxu0
      %v5571 = vadd.f32 %v5442, %v5570
      %v5572 = vpop.f32.mrb[0].mxu0
      %5573 = vmatprep.mubr.bf16.mxu0 0
      %5574 = vmatmul.mubr.bf16.gmra.mrb[0].mxu0 %v4235
      %v5575 = vpop.f32.mrb[0].mxu0
      %v5576 = vadd.f32 %v5447, %v5575
      %v5577 = vpop.f32.mrb[0].mxu0
      %v5578 = vpop.f32.mrb[0].mxu0
      %v5579 = vadd.f32 %v5450, %v5578
      %v5580 = vpop.f32.mrb[0].mxu0
      %5581 = vmatprep.mubr.bf16.mxu0 0
      %5582 = vmatmul.mubr.bf16.gmra.mrb[0].mxu0 %v4238
      %v5583 = vpop.f32.mrb[0].mxu0
      %v5584 = vadd.f32 %v5455, %v5583
      %v5585 = vpop.f32.mrb[0].mxu0
      %v5586 = vpop.f32.mrb[0].mxu0
      %v5587 = vadd.f32 %v5458, %v5586
      %v5588 = vpop.f32.mrb[0].mxu0
      %5589 = vmatprep.mubr.bf16.mxu0 0
      %5590 = vmatmul.mubr.bf16.gmra.mrb[0].mxu0 %v4241
      %v5591 = vpop.f32.mrb[0].mxu0
      %v5592 = vadd.f32 %v5463, %v5591
      %v5593 = vpop.f32.mrb[0].mxu0
      %v5594 = vpop.f32.mrb[0].mxu0
      %v5595 = vadd.f32 %v5466, %v5594
      %v5596 = vpop.f32.mrb[0].mxu0
      %5597 = vmatprep.mubr.bf16.mxu0 0
      %5598 = vmatmul.mubr.bf16.gmra.mrb[0].mxu0 %v4244
      %v5599 = vpop.f32.mrb[0].mxu0
      %v5600 = vadd.f32 %v5471, %v5599
      %v5601 = vpop.f32.mrb[0].mxu0
      %v5602 = vpop.f32.mrb[0].mxu0
      %v5603 = vadd.f32 %v5474, %v5602
      %v5604 = vpop.f32.mrb[0].mxu0
      %5605 = vmatprep.mubr.bf16.mxu0 0
      %5606 = vmatmul.mubr.bf16.gmra.mrb[0].mxu0 %v4247
      %v5607 = vpop.f32.mrb[0].mxu0
      %v5608 = vadd.f32 %v5479, %v5607
      %v5609 = vpop.f32.mrb[0].mxu0
      %v5610 = vpop.f32.mrb[0].mxu0
      %v5611 = vadd.f32 %v5482, %v5610
      %v5612 = vpop.f32.mrb[0].mxu0
      %5613 = vdwg.mxu0
      %v5614 = vadd.f32 %v5069, %v5520
      %v5615 = vadd.f32 %v5072, %v5523
      %v5616 = vadd.f32 %v5077, %v5528
      %v5617 = vadd.f32 %v5080, %v5531
      %v5618 = vadd.f32 %v5085, %v5536
      %v5619 = vadd.f32 %v5088, %v5539
      %v5620 = vadd.f32 %v5093, %v5544
      %v5621 = vadd.f32 %v5096, %v5547
      %v5622 = vadd.f32 %v5101, %v5552
      %v5623 = vadd.f32 %v5104, %v5555
      %v5624 = vadd.f32 %v5109, %v5560
      %v5625 = vadd.f32 %v5112, %v5563
      %v5626 = vadd.f32 %v5117, %v5568
      %v5627 = vadd.f32 %v5120, %v5571
      %v5628 = vadd.f32 %v5125, %v5576
      %v5629 = vadd.f32 %v5128, %v5579
      %v5630 = vadd.f32 %v5133, %v5584
      %v5631 = vadd.f32 %v5136, %v5587
      %v5632 = vadd.f32 %v5141, %v5592
      %v5633 = vadd.f32 %v5144, %v5595
      %v5634 = vadd.f32 %v5149, %v5600
      %v5635 = vadd.f32 %v5152, %v5603
      %v5636 = vadd.f32 %v5157, %v5608
      %v5637 = vadd.f32 %v5160, %v5611
      %v5638 = vld [vmem:[%s3] sm:$0x1]
      %v5640 = vlaneseq
      %v5641 = vshrl.u32 %v5640, 7
      %v5642 = vsub.s32 0, %v5641
      %v5643 = vrot.slane %v5638, %v5642
      %v5645 = vadd.f32 %v5614, %v5643
      %v5646 = vadd.f32 %v5615, %v5643
      %v5647 = vadd.f32 %v5616, %v5643
      %v5648 = vadd.f32 %v5617, %v5643
      %v5649 = vadd.f32 %v5618, %v5643
      %v5650 = vadd.f32 %v5619, %v5643
      %v5651 = vadd.f32 %v5620, %v5643
      %v5652 = vadd.f32 %v5621, %v5643
      %v5653 = vadd.f32 %v5622, %v5643
      %v5654 = vadd.f32 %v5623, %v5643
      %v5655 = vadd.f32 %v5624, %v5643
      %v5656 = vadd.f32 %v5625, %v5643
      %v5657 = vadd.f32 %v5626, %v5643
      %v5658 = vadd.f32 %v5627, %v5643
      %v5659 = vadd.f32 %v5628, %v5643
      %v5660 = vadd.f32 %v5629, %v5643
      %v5661 = vadd.f32 %v5630, %v5643
      %v5662 = vadd.f32 %v5631, %v5643
      %v5663 = vadd.f32 %v5632, %v5643
      %v5664 = vadd.f32 %v5633, %v5643
      %v5665 = vadd.f32 %v5634, %v5643
      %v5666 = vadd.f32 %v5635, %v5643
      %v5667 = vadd.f32 %v5636, %v5643
      %v5668 = vadd.f32 %v5637, %v5643
      %v5669 = vpack.c.bf16 %v5646, %v5645
      %v5670 = vpack.c.bf16 %v5648, %v5647
      %v5671 = vpack.c.bf16 %v5650, %v5649
      %v5672 = vpack.c.bf16 %v5652, %v5651
      %v5673 = vpack.c.bf16 %v5654, %v5653
      %v5674 = vpack.c.bf16 %v5656, %v5655
      %v5675 = vpack.c.bf16 %v5658, %v5657
      %v5676 = vpack.c.bf16 %v5660, %v5659
      %v5677 = vpack.c.bf16 %v5662, %v5661
      %v5678 = vpack.c.bf16 %v5664, %v5663
      %v5679 = vpack.c.bf16 %v5666, %v5665
      %v5680 = vpack.c.bf16 %v5668, %v5667
      %v5693 = vunpack.c.l.b16 %v5669
      %v5694 = vunpack.c.h.b16 %v5669
      %v5695 = vunpack.c.l.b16 %v5670
      %v5696 = vunpack.c.h.b16 %v5670
      %v5697 = vunpack.c.l.b16 %v5671
      %v5698 = vunpack.c.h.b16 %v5671
      %v5699 = vunpack.c.l.b16 %v5672
      %v5700 = vunpack.c.h.b16 %v5672
      %v5701 = vunpack.c.l.b16 %v5673
      %v5702 = vunpack.c.h.b16 %v5673
      %v5703 = vunpack.c.l.b16 %v5674
      %v5704 = vunpack.c.h.b16 %v5674
      %v5705 = vunpack.c.l.b16 %v5675
      %v5706 = vunpack.c.h.b16 %v5675
      %v5707 = vunpack.c.l.b16 %v5676
      %v5708 = vunpack.c.h.b16 %v5676
      %v5709 = vunpack.c.l.b16 %v5677
      %v5710 = vunpack.c.h.b16 %v5677
      %v5711 = vunpack.c.l.b16 %v5678
      %v5712 = vunpack.c.h.b16 %v5678
      %v5713 = vunpack.c.l.b16 %v5679
      %v5714 = vunpack.c.h.b16 %v5679
      %v5715 = vunpack.c.l.b16 %v5680
      %v5716 = vunpack.c.h.b16 %v5680
      %v5717 = vpack.c.b16 %v5693, %v5693
      %v5718 = vpack.c.b16 %v5694, %v5694
      %v5719 = vpack.c.b16 %v5695, %v5695
      %v5720 = vpack.c.b16 %v5696, %v5696
      %v5721 = vpack.c.b16 %v5697, %v5697
      %v5722 = vpack.c.b16 %v5698, %v5698
      %v5723 = vpack.c.b16 %v5699, %v5699
      %v5724 = vpack.c.b16 %v5700, %v5700
      %v5725 = vpack.c.b16 %v5701, %v5701
      %v5726 = vpack.c.b16 %v5702, %v5702
      %v5727 = vpack.c.b16 %v5703, %v5703
      %v5728 = vpack.c.b16 %v5704, %v5704
      %v5729 = vpack.c.b16 %v5705, %v5705
      %v5730 = vpack.c.b16 %v5706, %v5706
      %v5731 = vpack.c.b16 %v5707, %v5707
      %v5732 = vpack.c.b16 %v5708, %v5708
      %v5733 = vpack.c.b16 %v5709, %v5709
      %v5734 = vpack.c.b16 %v5710, %v5710
      %v5735 = vpack.c.b16 %v5711, %v5711
      %v5736 = vpack.c.b16 %v5712, %v5712
      %v5737 = vpack.c.b16 %v5713, %v5713
      %v5738 = vpack.c.b16 %v5714, %v5714
      %v5739 = vpack.c.b16 %v5715, %v5715
      %v5740 = vpack.c.b16 %v5716, %v5716
      %5765 = vst [vmem:[%s321] sm:$0xf] %v5717
      %5766 = vst [vmem:[%s321 + $0x4] sm:$0xf] %v5718
      %5767 = vst [vmem:[%s321 + $0x8] sm:$0xf] %v5719
      %5768 = vst [vmem:[%s321 + $0xc] sm:$0xf] %v5720
      %5769 = vst [vmem:[%s321 + $0x10] sm:$0xf] %v5721
      %5770 = vst [vmem:[%s321 + $0x14] sm:$0xf] %v5722
      %5771 = vst [vmem:[%s321 + $0x18] sm:$0xf] %v5723
      %5772 = vst [vmem:[%s321 + $0x1c] sm:$0xf] %v5724
      %5773 = vst [vmem:[%s321 + $0x20] sm:$0xf] %v5725
      %5774 = vst [vmem:[%s321 + $0x24] sm:$0xf] %v5726
      %5775 = vst [vmem:[%s321 + $0x28] sm:$0xf] %v5727
      %5776 = vst [vmem:[%s321 + $0x2c] sm:$0xf] %v5728
      %5777 = vst [vmem:[%s321 + $0x30] sm:$0xf] %v5729
      %5778 = vst [vmem:[%s321 + $0x34] sm:$0xf] %v5730
      %5779 = vst [vmem:[%s321 + $0x38] sm:$0xf] %v5731
      %5780 = vst [vmem:[%s321 + $0x3c] sm:$0xf] %v5732
      %5781 = vst [vmem:[%s321 + $0x40] sm:$0xf] %v5733
      %5782 = vst [vmem:[%s321 + $0x44] sm:$0xf] %v5734
      %5783 = vst [vmem:[%s321 + $0x48] sm:$0xf] %v5735
      %5784 = vst [vmem:[%s321 + $0x4c] sm:$0xf] %v5736
      %5785 = vst [vmem:[%s321 + $0x50] sm:$0xf] %v5737
      %5786 = vst [vmem:[%s321 + $0x54] sm:$0xf] %v5738
      %5787 = vst [vmem:[%s321 + $0x58] sm:$0xf] %v5739
      %5788 = vst [vmem:[%s321 + $0x5c] sm:$0xf] %v5740
      %v5789 = vlaneseq
      %v5790 = vshrl.u32 %v5789, 7
      %v5791 = vadd.s32 %v5790, 8
      %v5792 = vadd.s32 %v5790, 16
      %v5793 = vadd.s32 %v5790, 24
      %v5794 = vadd.s32 %v5790, 32
      %v5795 = vadd.s32 %v5790, 40
      %v5796 = vadd.s32 %v5790, 48
      %v5797 = vadd.s32 %v5790, 56
      %v5798 = vadd.s32 %v5790, 64
      %v5799 = vadd.s32 %v5790, 72
      %v5800 = vadd.s32 %v5790, 80
      %v5801 = vadd.s32 %v5790, 88
      %v5802 = vadd.s32 %v5790, 96
      %v5803 = vadd.s32 %v5790, 104
      %v5804 = vadd.s32 %v5790, 112
      %v5805 = vadd.s32 %v5790, 120
      %v5806 = vadd.s32 %v5790, 128
      %v5807 = vadd.s32 %v5790, 136
      %v5808 = vadd.s32 %v5790, 144
      %v5809 = vadd.s32 %v5790, 152
      %v5810 = vadd.s32 %v5790, 160
      %v5811 = vadd.s32 %v5790, 168
      %v5812 = vadd.s32 %v5790, 176
      %v5813 = vadd.s32 %v5790, 184
      %vm5814 = vcmp.lt.s32.totalorder %v5790, 0
      %v5815 = vsub.s32 0, %v5790
      %v5816 = vsel %vm5814, %v5815, %v5790
      %v5817 = vshrl.u32 %v5816, 4
      %v5818 = vand.u32 %v5816, 15
      %v5819 = vsub.s32 0, %v5818
      %v5820 = vsel %vm5814, %v5819, %v5818
      %vm5821 = vcmp.lt.s32.totalorder %v5791, 0
      %v5822 = vsub.s32 0, %v5791
      %v5823 = vsel %vm5821, %v5822, %v5791
      %v5824 = vshrl.u32 %v5823, 4
      %v5825 = vand.u32 %v5823, 15
      %v5826 = vsub.s32 0, %v5825
      %v5827 = vsel %vm5821, %v5826, %v5825
      %vm5828 = vcmp.lt.s32.totalorder %v5792, 0
      %v5829 = vsub.s32 0, %v5792
      %v5830 = vsel %vm5828, %v5829, %v5792
      %v5831 = vshrl.u32 %v5830, 4
      %v5832 = vand.u32 %v5830, 15
      %v5833 = vsub.s32 0, %v5832
      %v5834 = vsel %vm5828, %v5833, %v5832
      %vm5835 = vcmp.lt.s32.totalorder %v5793, 0
      %v5836 = vsub.s32 0, %v5793
      %v5837 = vsel %vm5835, %v5836, %v5793
      %v5838 = vshrl.u32 %v5837, 4
      %v5839 = vand.u32 %v5837, 15
      %v5840 = vsub.s32 0, %v5839
      %v5841 = vsel %vm5835, %v5840, %v5839
      %vm5842 = vcmp.lt.s32.totalorder %v5794, 0
      %v5843 = vsub.s32 0, %v5794
      %v5844 = vsel %vm5842, %v5843, %v5794
      %v5845 = vshrl.u32 %v5844, 4
      %v5846 = vand.u32 %v5844, 15
      %v5847 = vsub.s32 0, %v5846
      %v5848 = vsel %vm5842, %v5847, %v5846
      %vm5849 = vcmp.lt.s32.totalorder %v5795, 0
      %v5850 = vsub.s32 0, %v5795
      %v5851 = vsel %vm5849, %v5850, %v5795
      %v5852 = vshrl.u32 %v5851, 4
      %v5853 = vand.u32 %v5851, 15
      %v5854 = vsub.s32 0, %v5853
      %v5855 = vsel %vm5849, %v5854, %v5853
      %vm5856 = vcmp.lt.s32.totalorder %v5796, 0
      %v5857 = vsub.s32 0, %v5796
      %v5858 = vsel %vm5856, %v5857, %v5796
      %v5859 = vshrl.u32 %v5858, 4
      %v5860 = vand.u32 %v5858, 15
      %v5861 = vsub.s32 0, %v5860
      %v5862 = vsel %vm5856, %v5861, %v5860
      %vm5863 = vcmp.lt.s32.totalorder %v5797, 0
      %v5864 = vsub.s32 0, %v5797
      %v5865 = vsel %vm5863, %v5864, %v5797
      %v5866 = vshrl.u32 %v5865, 4
      %v5867 = vand.u32 %v5865, 15
      %v5868 = vsub.s32 0, %v5867
      %v5869 = vsel %vm5863, %v5868, %v5867
      %vm5870 = vcmp.lt.s32.totalorder %v5798, 0
      %v5871 = vsub.s32 0, %v5798
      %v5872 = vsel %vm5870, %v5871, %v5798
      %v5873 = vshrl.u32 %v5872, 4
      %v5874 = vand.u32 %v5872, 15
      %v5875 = vsub.s32 0, %v5874
      %v5876 = vsel %vm5870, %v5875, %v5874
      %vm5877 = vcmp.lt.s32.totalorder %v5799, 0
      %v5878 = vsub.s32 0, %v5799
      %v5879 = vsel %vm5877, %v5878, %v5799
      %v5880 = vshrl.u32 %v5879, 4
      %v5881 = vand.u32 %v5879, 15
      %v5882 = vsub.s32 0, %v5881
      %v5883 = vsel %vm5877, %v5882, %v5881
      %vm5884 = vcmp.lt.s32.totalorder %v5800, 0
      %v5885 = vsub.s32 0, %v5800
      %v5886 = vsel %vm5884, %v5885, %v5800
      %v5887 = vshrl.u32 %v5886, 4
      %v5888 = vand.u32 %v5886, 15
      %v5889 = vsub.s32 0, %v5888
      %v5890 = vsel %vm5884, %v5889, %v5888
      %vm5891 = vcmp.lt.s32.totalorder %v5801, 0
      %v5892 = vsub.s32 0, %v5801
      %v5893 = vsel %vm5891, %v5892, %v5801
      %v5894 = vshrl.u32 %v5893, 4
      %v5895 = vand.u32 %v5893, 15
      %v5896 = vsub.s32 0, %v5895
      %v5897 = vsel %vm5891, %v5896, %v5895
      %vm5898 = vcmp.lt.s32.totalorder %v5802, 0
      %v5899 = vsub.s32 0, %v5802
      %v5900 = vsel %vm5898, %v5899, %v5802
      %v5901 = vshrl.u32 %v5900, 4
      %v5902 = vand.u32 %v5900, 15
      %v5903 = vsub.s32 0, %v5902
      %v5904 = vsel %vm5898, %v5903, %v5902
      %vm5905 = vcmp.lt.s32.totalorder %v5803, 0
      %v5906 = vsub.s32 0, %v5803
      %v5907 = vsel %vm5905, %v5906, %v5803
      %v5908 = vshrl.u32 %v5907, 4
      %v5909 = vand.u32 %v5907, 15
      %v5910 = vsub.s32 0, %v5909
      %v5911 = vsel %vm5905, %v5910, %v5909
      %vm5912 = vcmp.lt.s32.totalorder %v5804, 0
      %v5913 = vsub.s32 0, %v5804
      %v5914 = vsel %vm5912, %v5913, %v5804
      %v5915 = vshrl.u32 %v5914, 4
      %v5916 = vand.u32 %v5914, 15
      %v5917 = vsub.s32 0, %v5916
      %v5918 = vsel %vm5912, %v5917, %v5916
      %vm5919 = vcmp.lt.s32.totalorder %v5805, 0
      %v5920 = vsub.s32 0, %v5805
      %v5921 = vsel %vm5919, %v5920, %v5805
      %v5922 = vshrl.u32 %v5921, 4
      %v5923 = vand.u32 %v5921, 15
      %v5924 = vsub.s32 0, %v5923
      %v5925 = vsel %vm5919, %v5924, %v5923
      %vm5926 = vcmp.lt.s32.totalorder %v5806, 0
      %v5927 = vsub.s32 0, %v5806
      %v5928 = vsel %vm5926, %v5927, %v5806
      %v5929 = vshrl.u32 %v5928, 4
      %v5930 = vand.u32 %v5928, 15
      %v5931 = vsub.s32 0, %v5930
      %v5932 = vsel %vm5926, %v5931, %v5930
      %vm5933 = vcmp.lt.s32.totalorder %v5807, 0
      %v5934 = vsub.s32 0, %v5807
      %v5935 = vsel %vm5933, %v5934, %v5807
      %v5936 = vshrl.u32 %v5935, 4
      %v5937 = vand.u32 %v5935, 15
      %v5938 = vsub.s32 0, %v5937
      %v5939 = vsel %vm5933, %v5938, %v5937
      %vm5940 = vcmp.lt.s32.totalorder %v5808, 0
      %v5941 = vsub.s32 0, %v5808
      %v5942 = vsel %vm5940, %v5941, %v5808
      %v5943 = vshrl.u32 %v5942, 4
      %v5944 = vand.u32 %v5942, 15
      %v5945 = vsub.s32 0, %v5944
      %v5946 = vsel %vm5940, %v5945, %v5944
      %vm5947 = vcmp.lt.s32.totalorder %v5809, 0
      %v5948 = vsub.s32 0, %v5809
      %v5949 = vsel %vm5947, %v5948, %v5809
      %v5950 = vshrl.u32 %v5949, 4
      %v5951 = vand.u32 %v5949, 15
      %v5952 = vsub.s32 0, %v5951
      %v5953 = vsel %vm5947, %v5952, %v5951
      %vm5954 = vcmp.lt.s32.totalorder %v5810, 0
      %v5955 = vsub.s32 0, %v5810
      %v5956 = vsel %vm5954, %v5955, %v5810
      %v5957 = vshrl.u32 %v5956, 4
      %v5958 = vand.u32 %v5956, 15
      %v5959 = vsub.s32 0, %v5958
      %v5960 = vsel %vm5954, %v5959, %v5958
      %vm5961 = vcmp.lt.s32.totalorder %v5811, 0
      %v5962 = vsub.s32 0, %v5811
      %v5963 = vsel %vm5961, %v5962, %v5811
      %v5964 = vshrl.u32 %v5963, 4
      %v5965 = vand.u32 %v5963, 15
      %v5966 = vsub.s32 0, %v5965
      %v5967 = vsel %vm5961, %v5966, %v5965
      %vm5968 = vcmp.lt.s32.totalorder %v5812, 0
      %v5969 = vsub.s32 0, %v5812
      %v5970 = vsel %vm5968, %v5969, %v5812
      %v5971 = vshrl.u32 %v5970, 4
      %v5972 = vand.u32 %v5970, 15
      %v5973 = vsub.s32 0, %v5972
      %v5974 = vsel %vm5968, %v5973, %v5972
      %vm5975 = vcmp.lt.s32.totalorder %v5813, 0
      %v5976 = vsub.s32 0, %v5813
      %v5977 = vsel %vm5975, %v5976, %v5813
      %v5978 = vshrl.u32 %v5977, 4
      %v5979 = vand.u32 %v5977, 15
      %v5980 = vsub.s32 0, %v5979
      %v5981 = vsel %vm5975, %v5980, %v5979
      %vm5982 = vcmp.ne.s32.totalorder %v5820, 0
      %vm5983 = vcmp.ne.s32.totalorder %v5827, 0
      %vm5984 = vcmp.ne.s32.totalorder %v5834, 0
      %vm5985 = vcmp.ne.s32.totalorder %v5841, 0
      %vm5986 = vcmp.ne.s32.totalorder %v5848, 0
      %vm5987 = vcmp.ne.s32.totalorder %v5855, 0
      %vm5988 = vcmp.ne.s32.totalorder %v5862, 0
      %vm5989 = vcmp.ne.s32.totalorder %v5869, 0
      %vm5990 = vcmp.ne.s32.totalorder %v5876, 0
      %vm5991 = vcmp.ne.s32.totalorder %v5883, 0
      %vm5992 = vcmp.ne.s32.totalorder %v5890, 0
      %vm5993 = vcmp.ne.s32.totalorder %v5897, 0
      %vm5994 = vcmp.ne.s32.totalorder %v5904, 0
      %vm5995 = vcmp.ne.s32.totalorder %v5911, 0
      %vm5996 = vcmp.ne.s32.totalorder %v5918, 0
      %vm5997 = vcmp.ne.s32.totalorder %v5925, 0
      %vm5998 = vcmp.ne.s32.totalorder %v5932, 0
      %vm5999 = vcmp.ne.s32.totalorder %v5939, 0
      %vm6000 = vcmp.ne.s32.totalorder %v5946, 0
      %vm6001 = vcmp.ne.s32.totalorder %v5953, 0
      %vm6002 = vcmp.ne.s32.totalorder %v5960, 0
      %vm6003 = vcmp.ne.s32.totalorder %v5967, 0
      %vm6004 = vcmp.ne.s32.totalorder %v5974, 0
      %vm6005 = vcmp.ne.s32.totalorder %v5981, 0
      %vm6006 = vcmp.lt.s32.totalorder %v5820, 0
      %vm6007 = vcmp.lt.s32.totalorder %v5827, 0
      %vm6008 = vcmp.lt.s32.totalorder %v5834, 0
      %vm6009 = vcmp.lt.s32.totalorder %v5841, 0
      %vm6010 = vcmp.lt.s32.totalorder %v5848, 0
      %vm6011 = vcmp.lt.s32.totalorder %v5855, 0
      %vm6012 = vcmp.lt.s32.totalorder %v5862, 0
      %vm6013 = vcmp.lt.s32.totalorder %v5869, 0
      %vm6014 = vcmp.lt.s32.totalorder %v5876, 0
      %vm6015 = vcmp.lt.s32.totalorder %v5883, 0
      %vm6016 = vcmp.lt.s32.totalorder %v5890, 0
      %vm6017 = vcmp.lt.s32.totalorder %v5897, 0
      %vm6018 = vcmp.lt.s32.totalorder %v5904, 0
      %vm6019 = vcmp.lt.s32.totalorder %v5911, 0
      %vm6020 = vcmp.lt.s32.totalorder %v5918, 0
      %vm6021 = vcmp.lt.s32.totalorder %v5925, 0
      %vm6022 = vcmp.lt.s32.totalorder %v5932, 0
      %vm6023 = vcmp.lt.s32.totalorder %v5939, 0
      %vm6024 = vcmp.lt.s32.totalorder %v5946, 0
      %vm6025 = vcmp.lt.s32.totalorder %v5953, 0
      %vm6026 = vcmp.lt.s32.totalorder %v5960, 0
      %vm6027 = vcmp.lt.s32.totalorder %v5967, 0
      %vm6028 = vcmp.lt.s32.totalorder %v5974, 0
      %vm6029 = vcmp.lt.s32.totalorder %v5981, 0
      %vm6030 = vmand %vm6006, %vm5982
      %vm6031 = vmand %vm6007, %vm5983
      %vm6032 = vmand %vm6008, %vm5984
      %vm6033 = vmand %vm6009, %vm5985
      %vm6034 = vmand %vm6010, %vm5986
      %vm6035 = vmand %vm6011, %vm5987
      %vm6036 = vmand %vm6012, %vm5988
      %vm6037 = vmand %vm6013, %vm5989
      %vm6038 = vmand %vm6014, %vm5990
      %vm6039 = vmand %vm6015, %vm5991
      %vm6040 = vmand %vm6016, %vm5992
      %vm6041 = vmand %vm6017, %vm5993
      %vm6042 = vmand %vm6018, %vm5994
      %vm6043 = vmand %vm6019, %vm5995
      %vm6044 = vmand %vm6020, %vm5996
      %vm6045 = vmand %vm6021, %vm5997
      %vm6046 = vmand %vm6022, %vm5998
      %vm6047 = vmand %vm6023, %vm5999
      %vm6048 = vmand %vm6024, %vm6000
      %vm6049 = vmand %vm6025, %vm6001
      %vm6050 = vmand %vm6026, %vm6002
      %vm6051 = vmand %vm6027, %vm6003
      %vm6052 = vmand %vm6028, %vm6004
      %vm6053 = vmand %vm6029, %vm6005
      %v6054 = vadd.s32 %v5820, 16
      %v6055 = vadd.s32 %v5827, 16
      %v6056 = vadd.s32 %v5834, 16
      %v6057 = vadd.s32 %v5841, 16
      %v6058 = vadd.s32 %v5848, 16
      %v6059 = vadd.s32 %v5855, 16
      %v6060 = vadd.s32 %v5862, 16
      %v6061 = vadd.s32 %v5869, 16
      %v6062 = vadd.s32 %v5876, 16
      %v6063 = vadd.s32 %v5883, 16
      %v6064 = vadd.s32 %v5890, 16
      %v6065 = vadd.s32 %v5897, 16
      %v6066 = vadd.s32 %v5904, 16
      %v6067 = vadd.s32 %v5911, 16
      %v6068 = vadd.s32 %v5918, 16
      %v6069 = vadd.s32 %v5925, 16
      %v6070 = vadd.s32 %v5932, 16
      %v6071 = vadd.s32 %v5939, 16
      %v6072 = vadd.s32 %v5946, 16
      %v6073 = vadd.s32 %v5953, 16
      %v6074 = vadd.s32 %v5960, 16
      %v6075 = vadd.s32 %v5967, 16
      %v6076 = vadd.s32 %v5974, 16
      %v6077 = vadd.s32 %v5981, 16
      %v6078 = vsel %vm6030, %v6054, %v5820
      %v6079 = vsel %vm6031, %v6055, %v5827
      %v6080 = vsel %vm6032, %v6056, %v5834
      %v6081 = vsel %vm6033, %v6057, %v5841
      %v6082 = vsel %vm6034, %v6058, %v5848
      %v6083 = vsel %vm6035, %v6059, %v5855
      %v6084 = vsel %vm6036, %v6060, %v5862
      %v6085 = vsel %vm6037, %v6061, %v5869
      %v6086 = vsel %vm6038, %v6062, %v5876
      %v6087 = vsel %vm6039, %v6063, %v5883
      %v6088 = vsel %vm6040, %v6064, %v5890
      %v6089 = vsel %vm6041, %v6065, %v5897
      %v6090 = vsel %vm6042, %v6066, %v5904
      %v6091 = vsel %vm6043, %v6067, %v5911
      %v6092 = vsel %vm6044, %v6068, %v5918
      %v6093 = vsel %vm6045, %v6069, %v5925
      %v6094 = vsel %vm6046, %v6070, %v5932
      %v6095 = vsel %vm6047, %v6071, %v5939
      %v6096 = vsel %vm6048, %v6072, %v5946
      %v6097 = vsel %vm6049, %v6073, %v5953
      %v6098 = vsel %vm6050, %v6074, %v5960
      %v6099 = vsel %vm6051, %v6075, %v5967
      %v6100 = vsel %vm6052, %v6076, %v5974
      %v6101 = vsel %vm6053, %v6077, %v5981
      %vm6102 = vcmp.lt.s32.totalorder %v6078, 12
      %vm6103 = vcmp.lt.s32.totalorder %v6079, 12
      %vm6104 = vcmp.lt.s32.totalorder %v6080, 12
      %vm6105 = vcmp.lt.s32.totalorder %v6081, 12
      %vm6106 = vcmp.lt.s32.totalorder %v6082, 12
      %vm6107 = vcmp.lt.s32.totalorder %v6083, 12
      %vm6108 = vcmp.lt.s32.totalorder %v6084, 12
      %vm6109 = vcmp.lt.s32.totalorder %v6085, 12
      %vm6110 = vcmp.lt.s32.totalorder %v6086, 12
      %vm6111 = vcmp.lt.s32.totalorder %v6087, 12
      %vm6112 = vcmp.lt.s32.totalorder %v6088, 12
      %vm6113 = vcmp.lt.s32.totalorder %v6089, 12
      %vm6114 = vcmp.lt.s32.totalorder %v6090, 12
      %vm6115 = vcmp.lt.s32.totalorder %v6091, 12
      %vm6116 = vcmp.lt.s32.totalorder %v6092, 12
      %vm6117 = vcmp.lt.s32.totalorder %v6093, 12
      %vm6118 = vcmp.lt.s32.totalorder %v6094, 12
      %vm6119 = vcmp.lt.s32.totalorder %v6095, 12
      %vm6120 = vcmp.lt.s32.totalorder %v6096, 12
      %vm6121 = vcmp.lt.s32.totalorder %v6097, 12
      %vm6122 = vcmp.lt.s32.totalorder %v6098, 12
      %vm6123 = vcmp.lt.s32.totalorder %v6099, 12
      %vm6124 = vcmp.lt.s32.totalorder %v6100, 12
      %vm6125 = vcmp.lt.s32.totalorder %v6101, 12
      %v6126 = vsel %vm6102, %v5645, 0.0
      %v6127 = vsel %vm6103, %v5646, 0.0
      %v6128 = vsel %vm6104, %v5647, 0.0
      %v6129 = vsel %vm6105, %v5648, 0.0
      %v6130 = vsel %vm6106, %v5649, 0.0
      %v6131 = vsel %vm6107, %v5650, 0.0
      %v6132 = vsel %vm6108, %v5651, 0.0
      %v6133 = vsel %vm6109, %v5652, 0.0
      %v6134 = vsel %vm6110, %v5653, 0.0
      %v6135 = vsel %vm6111, %v5654, 0.0
      %v6136 = vsel %vm6112, %v5655, 0.0
      %v6137 = vsel %vm6113, %v5656, 0.0
      %v6138 = vsel %vm6114, %v5657, 0.0
      %v6139 = vsel %vm6115, %v5658, 0.0
      %v6140 = vsel %vm6116, %v5659, 0.0
      %v6141 = vsel %vm6117, %v5660, 0.0
      %v6142 = vsel %vm6118, %v5661, 0.0
      %v6143 = vsel %vm6119, %v5662, 0.0
      %v6144 = vsel %vm6120, %v5663, 0.0
      %v6145 = vsel %vm6121, %v5664, 0.0
      %v6146 = vsel %vm6122, %v5665, 0.0
      %v6147 = vsel %vm6123, %v5666, 0.0
      %v6148 = vsel %vm6124, %v5667, 0.0
      %v6149 = vsel %vm6125, %v5668, 0.0
      %v6150 = vadd.f32 %v6126, %v6127
      %v6151 = vadd.f32 %v6150, %v6128
      %v6152 = vadd.f32 %v6151, %v6129
      %v6153 = vadd.f32 %v6152, %v6130
      %v6154 = vadd.f32 %v6153, %v6131
      %v6155 = vadd.f32 %v6154, %v6132
      %v6156 = vadd.f32 %v6155, %v6133
      %v6157 = vadd.f32 %v6156, %v6134
      %v6158 = vadd.f32 %v6157, %v6135
      %v6159 = vadd.f32 %v6158, %v6136
      %v6160 = vadd.f32 %v6159, %v6137
      %v6161 = vadd.f32 %v6160, %v6138
      %v6162 = vadd.f32 %v6161, %v6139
      %v6163 = vadd.f32 %v6162, %v6140
      %v6164 = vadd.f32 %v6163, %v6141
      %v6165 = vadd.f32 %v6164, %v6142
      %v6166 = vadd.f32 %v6165, %v6143
      %v6167 = vadd.f32 %v6166, %v6144
      %v6168 = vadd.f32 %v6167, %v6145
      %v6169 = vadd.f32 %v6168, %v6146
      %v6170 = vadd.f32 %v6169, %v6147
      %v6171 = vadd.f32 %v6170, %v6148
      %v6172 = vadd.f32 %v6171, %v6149
      %v6173 = vrot.slane %v6172, 4
      %v6174 = vadd.f32 %v6172, %v6173
      %v6175 = vrot.slane %v6174, 2
      %v6176 = vadd.f32 %v6174, %v6175
      %v6177 = vrot.slane %v6176, 1
      %v6178 = vadd.f32 %v6176, %v6177
      %6179 = vst [vmem:[%s324] sm:$0x1] %v6178
      %v6180 = vmul.f32 %v6126, %v5645
      %v6181 = vmul.f32 %v6127, %v5646
      %v6182 = vmul.f32 %v6128, %v5647
      %v6183 = vmul.f32 %v6129, %v5648
      %v6184 = vmul.f32 %v6130, %v5649
      %v6185 = vmul.f32 %v6131, %v5650
      %v6186 = vmul.f32 %v6132, %v5651
      %v6187 = vmul.f32 %v6133, %v5652
      %v6188 = vmul.f32 %v6134, %v5653
      %v6189 = vmul.f32 %v6135, %v5654
      %v6190 = vmul.f32 %v6136, %v5655
      %v6191 = vmul.f32 %v6137, %v5656
      %v6192 = vmul.f32 %v6138, %v5657
      %v6193 = vmul.f32 %v6139, %v5658
      %v6194 = vmul.f32 %v6140, %v5659
      %v6195 = vmul.f32 %v6141, %v5660
      %v6196 = vmul.f32 %v6142, %v5661
      %v6197 = vmul.f32 %v6143, %v5662
      %v6198 = vmul.f32 %v6144, %v5663
      %v6199 = vmul.f32 %v6145, %v5664
      %v6200 = vmul.f32 %v6146, %v5665
      %v6201 = vmul.f32 %v6147, %v5666
      %v6202 = vmul.f32 %v6148, %v5667
      %v6203 = vmul.f32 %v6149, %v5668
      %v6204 = vadd.f32 %v6180, %v6181
      %v6205 = vadd.f32 %v6204, %v6182
      %v6206 = vadd.f32 %v6205, %v6183
      %v6207 = vadd.f32 %v6206, %v6184
      %v6208 = vadd.f32 %v6207, %v6185
      %v6209 = vadd.f32 %v6208, %v6186
      %v6210 = vadd.f32 %v6209, %v6187
      %v6211 = vadd.f32 %v6210, %v6188
      %v6212 = vadd.f32 %v6211, %v6189
      %v6213 = vadd.f32 %v6212, %v6190
      %v6214 = vadd.f32 %v6213, %v6191
      %v6215 = vadd.f32 %v6214, %v6192
      %v6216 = vadd.f32 %v6215, %v6193
      %v6217 = vadd.f32 %v6216, %v6194
      %v6218 = vadd.f32 %v6217, %v6195
      %v6219 = vadd.f32 %v6218, %v6196
      %v6220 = vadd.f32 %v6219, %v6197
      %v6221 = vadd.f32 %v6220, %v6198
      %v6222 = vadd.f32 %v6221, %v6199
      %v6223 = vadd.f32 %v6222, %v6200
      %v6224 = vadd.f32 %v6223, %v6201
      %v6225 = vadd.f32 %v6224, %v6202
      %v6226 = vadd.f32 %v6225, %v6203
      %v6227 = vrot.slane %v6226, 4
      %v6228 = vadd.f32 %v6226, %v6227
      %v6229 = vrot.slane %v6228, 2
      %v6230 = vadd.f32 %v6228, %v6229
      %v6231 = vrot.slane %v6230, 1
      %v6232 = vadd.f32 %v6230, %v6231
      %6233 = vst [vmem:[%s327] sm:$0x1] %v6232
      %p6234 = scmp.lt.s32.totalorder %s19, 1
      %s6235 = scalar_select %p6234, %s19, 1
      %s6236 = smul.addr %s6235, 24
      %s6237 = smul.addr %s6236, 8
      %s6238 = scalar_lea.vmem %s4, %s6237
      %p6239 = scmp.lt.s32.totalorder %s19, 1
      %s6240 = scalar_select %p6239, %s19, 1
      %s6241 = smul.addr %s6240, 24
      %s6242 = smul.addr %s6241, 4
      %s6243 = scalar_lea.vmem %s5, %s6242
      %p6244 = scmp.lt.s32.totalorder %s19, 1
      %s6245 = scalar_select %p6244, %s19, 1
      %s6246 = scalar_lea.vmem %s6, %s6245
      %p6247 = scmp.lt.s32.totalorder %s19, 1
      %s6248 = scalar_select %p6247, %s19, 1
      %s6249 = scalar_lea.vmem %s7, %s6248
      // Predicated region
      $region37: #{grader_forward.2} parent=35 // pred_check
        %p6250 = pneg %p131
      $region38: #{grader_forward.2} parent=35 // pred_check_branch
        %6252 = sbr.rel (%p6250) target = $region40
      $region39: #{grader_forward.2} parent=35 // pred_region
        _
      $region40: #{grader_forward.2} parent=35 // pred_fallthru
        _
      // Predicated region
      $region41: #{grader_forward.2} parent=35 // pred_check
        %p6253 = pneg %p157
      $region42: #{grader_forward.2} parent=35 // pred_check_branch
        %6255 = sbr.rel (%p6253) target = $region44
      $region43: #{grader_forward.2} parent=35 // pred_region
        _
      $region44: #{grader_forward.2} parent=35 // pred_fallthru
        _
      // Predicated region
      $region45: #{grader_forward.2} parent=35 // pred_check
        %p6256 = pneg %p183
      $region46: #{grader_forward.2} parent=35 // pred_check_branch
        %6258 = sbr.rel (%p6256) target = $region48
      $region47: #{grader_forward.2} parent=35 // pred_region
        _
      $region48: #{grader_forward.2} parent=35 // pred_fallthru
        _
      // Predicated region
      $region49: #{grader_forward.2} parent=35 // pred_check
        %p6259 = pneg %p209
      $region50: #{grader_forward.2} parent=35 // pred_check_branch
        %6261 = sbr.rel (%p6259) target = $region52
      $region51: #{grader_forward.2} parent=35 // pred_region
        _
      $region52: #{grader_forward.2} parent=35 // pred_fallthru
        _
    $region36: #{grader_forward.2} parent=5 // pred_fallthru
      _
    %p6262 = scmp.le.s32.totalorder 2, %s14
    // Predicated region
    $region53: #{grader_forward.2} parent=5 // pred_check
      %p6263 = pneg %p6262
    $region54: #{grader_forward.2} parent=5 // pred_check_branch
      %6265 = sbr.rel (%p6263) target = $region56
    $region55: #{grader_forward.2} parent=5 // pred_region
      %s6266 = ssub.s32 %s14, 2
      // Predicated region
      $region57: #{grader_forward.2} parent=55 // pred_check
        %p6267 = pneg %p137
      $region58: #{grader_forward.2} parent=55 // pred_check_branch
        %6269 = sbr.rel (%p6267) target = $region60
      $region59: #{grader_forward.2} parent=55 // pred_region
        %p6270 = scmp.lt.s32.totalorder %s20, 1
        %s6271 = scalar_select %p6270, %s20, 1
        %s6272 = smul.addr %s6271, 24
        %s6273 = smul.addr %s6272, 8
        %s6274 = scalar_lea.vmem %s4, %s6273
      $region60: #{grader_forward.2} parent=55 // pred_fallthru
        _
      // Predicated region
      $region61: #{grader_forward.2} parent=55 // pred_check
        %p6275 = pneg %p163
      $region62: #{grader_forward.2} parent=55 // pred_check_branch
        %6277 = sbr.rel (%p6275) target = $region64
      $region63: #{grader_forward.2} parent=55 // pred_region
        %p6278 = scmp.lt.s32.totalorder %s20, 1
        %s6279 = scalar_select %p6278, %s20, 1
        %s6280 = smul.addr %s6279, 24
        %s6281 = smul.addr %s6280, 4
        %s6282 = scalar_lea.vmem %s5, %s6281
      $region64: #{grader_forward.2} parent=55 // pred_fallthru
        _
      // Predicated region
      $region65: #{grader_forward.2} parent=55 // pred_check
        %p6283 = pneg %p189
      $region66: #{grader_forward.2} parent=55 // pred_check_branch
        %6285 = sbr.rel (%p6283) target = $region68
      $region67: #{grader_forward.2} parent=55 // pred_region
        %p6286 = scmp.lt.s32.totalorder %s20, 1
        %s6287 = scalar_select %p6286, %s20, 1
        %s6288 = scalar_lea.vmem %s6, %s6287
      $region68: #{grader_forward.2} parent=55 // pred_fallthru
        _
      // Predicated region
      $region69: #{grader_forward.2} parent=55 // pred_check
        %p6289 = pneg %p215
      $region70: #{grader_forward.2} parent=55 // pred_check_branch
        %6291 = sbr.rel (%p6289) target = $region72
      $region71: #{grader_forward.2} parent=55 // pred_region
        %p6292 = scmp.lt.s32.totalorder %s20, 1
        %s6293 = scalar_select %p6292, %s20, 1
        %s6294 = scalar_lea.vmem %s7, %s6293
      $region72: #{grader_forward.2} parent=55 // pred_fallthru
        _
    $region56: #{grader_forward.2} parent=5 // pred_fallthru
      _
  $region6: #{grader_forward.2} parent=0 // loop_footer
    %s18 = sadd.s32 1, %s14
  $region7: #{grader_forward.2} parent=0 // loop_footer_branch
    %13 = sbr.rel target = $region3
  $region8: #{grader_forward.2} parent=0 // loop_exit
    _

</llo_original>
